<compile_context>
chip_gen: v5e
topology: v5e:2x2
jax: 0.10.0
libtpu: 0.0.40
codegen_flags: <defaults>
</compile_context>

<pallas_src>
import functools
import numpy as np

import jax
import jax.numpy as jnp
from jax.experimental import pallas as pl
from jax.experimental.pallas import tpu as pltpu

MAX_CLAMP_NORM = 40.0
EPS = 1e-6

PARAM_ORDER = ("mask", "w1", "b1", "wh", "bh", "wo", "bo")


# ----------------------------- in-kernel math helpers -----------------------------
def _clamp(x):
    return jnp.clip(x, -MAX_CLAMP_NORM, MAX_CLAMP_NORM)


def _leaky_relu(x):
    return jnp.where(x > 0, x, 0.01 * x)


def _logsor(r):
    """log(sinh(r)/r) >= 0, overflow-safe (never forms exp(+r))."""
    rs = jnp.maximum(r, EPS)
    return jnp.maximum(rs + jnp.log1p(-jnp.exp(-2.0 * rs)) - jnp.log(2.0 * rs), 0.0)


def _cosh_sor_logsor(r):
    """cosh(r), sinh(r)/r, log(sinh(r)/r); log term via the overflow-safe exp(-2r) form."""
    rs = jnp.maximum(r, EPS)
    er = jnp.exp(rs)
    em = jnp.exp(-rs)
    cosh = 0.5 * (er + em)
    sor = 0.5 * (er - em) / rs
    log_sor = jnp.maximum(rs + jnp.log1p(-em * em) - jnp.log(2.0 * rs), 0.0)
    return cosh, sor, log_sor


def _acosh_and_coef(a):
    """acosh(a) and acosh(a)/sqrt(a^2-1) for a >= 1+EPS; (a-1)(a+1) avoids cancellation."""
    d = a - 1.0
    sq = jnp.sqrt(d * (a + 1.0))
    ac = jnp.log1p(d + sq)
    return ac, ac / sq


def _fused_mlp(z, w1, b1, wh, bh, wo, bo, i, n_hidden, matmul_dtype):
    """Fused s/t coupling nets (feature-major; weights are (out, in)):
       Linear -> LeakyReLU -> [Linear -> LeakyReLU]*n_hidden -> Linear (no final act).
    The coupling mask is already folded into w1's columns on the host.
    The block-diagonal s/t fusion is only worthwhile while 2H fits one MXU tile
    (<=128 on v5e, <=256 on v6e/v7x); beyond that split wh back into two HxH matmuls."""
    h = jnp.dot(w1[i], z.astype(matmul_dtype), preferred_element_type=jnp.float32) + b1[i]
    h = _leaky_relu(h)
    for j in range(n_hidden):
        k = i * n_hidden + j
        h = jnp.dot(wh[k], h.astype(matmul_dtype), preferred_element_type=jnp.float32) + bh[k]
        h = _leaky_relu(h)
    return jnp.dot(wo[i], h.astype(matmul_dtype), preferred_element_type=jnp.float32) + bo[i]


# ----------------------------------- kernel ---------------------------------------
def wrapped_realnvp_fwd_kernel(
        x0_ref, xs_ref, mask_ref, w1, b1, wh, bh, wo, bo,
        z0_ref, zs_ref, ld_ref,
        *, n_blocks, n_hidden, radius, subdims, matmul_dtype):
    R = radius
    x0 = x0_ref[...]                     # (1, TN) hyperboloid time component
    xs = xs_ref[...]                     # (D, TN) hyperboloid spatial components
    D = xs.shape[0]

    # ---- z = inverse_exp_map_mu0(x_hyper, R)[..., 1:]   (time comp of logmap is 0)
    alpha = jnp.maximum(x0 / R, 1.0 + EPS)
    r0, coef = _acosh_and_coef(alpha)    # r0 = acosh(x0/R) = ||log_mu0(x)|| / R
    z = coef * xs                        # (D, TN)

    # log_det_J = -logmap_logdet(x, R) = +(D-1) * log(sinh(r0)/r0)
    log_det = (D - 1.0) * _logsor(r0)    # (1, TN)

    # TODO(synk): for n_blocks >~ 4 switch to lax.fori_loop with dynamic ref[i] weight
    # indexing + SMEM subdims (static unroll inflates live ranges / code size).
    for i in reversed(range(n_blocks)):
        m = mask_ref[i]                  # (D, 1)
        one_m = 1.0 - m
        sub = float(subdims[i])          # mask[i].sum(), static

        # fused s / t coupling nets; mask is inside w1, so feed z directly (3 MXU matmuls).
        out = _fused_mlp(z, w1, b1, wh, bh, wo, bo, i, n_hidden, matmul_dtype)   # (2D, TN)
        s = jnp.tanh(out[:D, :])         # (D, TN); D==8 keeps this slice tile-aligned
        t_sp = out[D:, :]                # t spatial part, already scattered (0 at mask==1)

        # proj_vec onto hyperboloid: t0 = sqrt(R^2 + |t_spatial|^2)
        # (axis-0 reductions stay on the XLU — not the bottleneck at D=8; revisit only
        #  if a bundle dump shows the XLU saturating.)
        t0 = jnp.sqrt(R * R + jnp.sum(t_sp * t_sp, axis=0, keepdims=True))   # (1, TN)

        # z_2 = clamp(expand_proj_dims((1-m) * z)); z_exp_2 = clamp(exp_map_mu0(z_2))
        z2 = _clamp(one_m * z)
        r2 = jnp.sqrt(jnp.maximum(jnp.sum(z2 * z2, axis=0, keepdims=True), EPS)) / R
        cosh2, sor2, lsor2 = _cosh_sor_logsor(r2)
        ze0 = _clamp(R * cosh2)
        ze_sp = _clamp(sor2 * z2)
        # log_det_J -= _logdet(z_2, R, subdim)
        log_det = log_det - (sub - 1.0) * lsor2

        # v = inverse_exp_map(z_exp_2, at_point=t, radius=R)
        lp = jnp.sum(t_sp * ze_sp, axis=0, keepdims=True) - t0 * ze0   # Lorentz <t, z_exp_2>
        a2 = jnp.maximum(-lp / (R * R), 1.0 + EPS)
        _, c2 = _acosh_and_coef(a2)
        v0 = c2 * (ze0 - a2 * t0)
        v_sp = c2 * (ze_sp - a2 * t_sp)

        # log_det_J -= logmap_logdet(v, R, subdim)   (== += (sub-1)*log(sinh(rv)/rv))
        rv = jnp.sqrt(jnp.maximum(
            jnp.sum(v_sp * v_sp, axis=0, keepdims=True) - v0 * v0, EPS)) / R
        log_det = log_det + (sub - 1.0) * _logsor(rv)

        v0, v_sp = _clamp(v0), _clamp(v_sp)
        # pt = inverse_parallel_transport_mu0(v, src=t, R)[..., 1:]
        factor = v0 / (R + t0)
        pt_sp = v_sp - factor * t_sp

        # z = (1-m) * pt * exp(-s) + m * z
        z = jnp.where(m > 0.0, z, pt_sp * jnp.exp(-s))
        log_det = log_det - jnp.sum(one_m * s, axis=0, keepdims=True)

    # ---- z_out = exp_map_mu0(expand_proj_dims(z), R); log_det -= _logdet(z_mu0, R)
    rz = jnp.sqrt(jnp.maximum(jnp.sum(z * z, axis=0, keepdims=True), EPS)) / R
    coshz, sorz, lsorz = _cosh_sor_logsor(rz)
    z0_ref[...] = R * coshz              # (1, TN) lane-dense full-block store
    zs_ref[...] = sorz * z               # (D, TN) (8,128)-aligned full-block store
    ld_ref[...] = log_det - (D - 1.0) * lsorz


# ----------------------------------- wrappers ---------------------------------------
def _choose_tile_n(N):
    """Per-generation tile width (overridable): 2-TC v7x wants an even grid count so
    neither TensorCore idles; 1-TC v5e/v6e want few, large steps (per-step overhead
    ~0.35us dominates this tiny kernel).  TODO(synk): sweep {256,512,1024,N} per chip."""
    if N % 128 != 0:
        return N                                     # full-extent single-step block
    try:
        kind = jax.devices()[0].device_kind.lower()
    except Exception:
        kind = ""
    two_tc = "v7" in kind
    divisors = [t for t in (2048, 1024, 512, 256, 128) if N % t == 0]
    if two_tc:
        for t in divisors:
            if (N // t) % 2 == 0:                    # even grid count across 2 TCs
                return t
        return divisors[-1]
    if N <= 1024:
        return N
    for t in divisors:
        if t <= 1024:                                # cap live set, keep pipelining
            return t
    return divisors[-1]


def wrapped_realnvp_forward_fm(x0, xs, params, *, n_blocks, n_hidden, radius, subdims,
                               tile_n=None, matmul_dtype=jnp.float32):
    """Feature-major entry point: x0 (1, N) time row, xs (D, N) spatial slab (batch on
    lanes).  Returns (z0 (1, N), zs (D, N), log_det (N,)).  Staying feature-major
    end-to-end avoids the HBM transpose round trips of the batch-major wrapper."""
    D, N = xs.shape
    assert x0.shape == (1, N)
    tile_n = _choose_tile_n(N) if tile_n is None else tile_n
    assert N % tile_n == 0 and (tile_n % 128 == 0 or tile_n == N), \
        "tile_n must divide N and be a multiple of 128 (or equal N)"
    grid = (N // tile_n,)

    if np.dtype(matmul_dtype) != np.dtype(jnp.float32):
        # bf16 matmul operands (weights converted here, activations cast in-kernel).
        params = dict(params, **{k: params[k].astype(matmul_dtype)
                                 for k in ("w1", "wh", "wo")})

    # Single-buffer the grid-constant weight inputs only when double-buffering them would
    # meaningfully eat VMEM (matters when scaling H / n_blocks, esp. on 64-MiB v7x).
    weight_bytes = sum(int(np.prod(params[k].shape)) * params[k].dtype.itemsize
                       for k in PARAM_ORDER)
    single_buffer_weights = weight_bytes > (8 << 20)

    def weight_spec(a):
        nd = a.ndim
        if single_buffer_weights:
            return pl.BlockSpec(a.shape, lambda i, _nd=nd: (0,) * _nd,
                                pipeline_mode=pl.Buffered(1))
        return pl.BlockSpec(a.shape, lambda i, _nd=nd: (0,) * _nd)

    in_specs = [pl.BlockSpec((1, tile_n), lambda i: (0, i)),
                pl.BlockSpec((D, tile_n), lambda i: (0, i))]
    in_specs += [weight_spec(params[k]) for k in PARAM_ORDER]
    out_specs = [pl.BlockSpec((1, tile_n), lambda i: (0, i)),
                 pl.BlockSpec((D, tile_n), lambda i: (0, i)),
                 pl.BlockSpec((1, tile_n), lambda i: (0, i))]
    out_shape = (jax.ShapeDtypeStruct((1, N), jnp.float32),
                 jax.ShapeDtypeStruct((D, N), jnp.float32),
                 jax.ShapeDtypeStruct((1, N), jnp.float32))

    kernel = functools.partial(wrapped_realnvp_fwd_kernel, n_blocks=n_blocks,
                               n_hidden=n_hidden, radius=radius, subdims=subdims,
                               matmul_dtype=matmul_dtype)
    z0, zs, ld = pl.pallas_call(
        kernel,
        out_shape=out_shape,
        grid_spec=pltpu.PrefetchScalarGridSpec(
            num_scalar_prefetch=0, grid=grid,
            in_specs=in_specs, out_specs=out_specs),
        compiler_params=pltpu.CompilerParams(
            dimension_semantics=("parallel",),
            vmem_limit_bytes=(96 << 20) if single_buffer_weights else None),
    )(x0, xs, *[params[k] for k in PARAM_ORDER])
    return z0, zs, ld[0]


def wrapped_realnvp_forward(x_hyper, params, **kwargs):
    """Batch-major wrapper matching the PyTorch module interface: (N, D+1) -> (N, D+1).
    Prefer wrapped_realnvp_forward_fm end-to-end — the transposes below are pure layout
    plumbing with a full HBM round trip each."""
    x_fm = jnp.transpose(x_hyper)                    # (D+1, N)
    z0, zs, ld = wrapped_realnvp_forward_fm(x_fm[0:1, :], x_fm[1:, :], params, **kwargs)
    return jnp.transpose(jnp.concatenate([z0, zs], axis=0)), ld


# ----------------------------- deterministic parameter setup ------------------------
def make_mask(n_blocks, D):
    base = (np.arange(D) % 2).astype(np.float32)
    m = np.stack([base, 1.0 - base], axis=0)
    return np.tile(m, (n_blocks // 2, 1))            # (n_blocks, D)


def init_flow_params(key, n_blocks, n_hidden, D, H, mask_np):
    """Sample per-layer Linear weights (PyTorch-style uniform ±1/sqrt(fan_in)) and pack
    them into the fused, feature-major (out, in) layout used by the kernel:
      w1: (n_blocks, 2H, D)     [s-net first layer ; t-net first layer], with the coupling
                                mask folded in (columns at mask==0 positions zeroed)
      wh: (n_blocks*nh, 2H, 2H) block-diagonal [s hidden | t hidden]
      wo: (n_blocks, 2D, 2H)    rows 0..D-1: s output; rows D..2D-1: t spatial output
                                scattered into mask==0 positions in ascending index order
                                (create_masked_t); the t-net's first output column is
                                dropped (replaced by proj_vec's time recomputation).
                                NOTE: verify this ordering against the PyTorch reference.
    """
    Dh1 = D // 2 + 1
    H2, D2 = 2 * H, 2 * D
    nh = max(n_hidden, 1)
    n_lin = n_blocks * 2 * (2 + n_hidden)
    keys = iter(jax.random.split(key, 2 * n_lin))

    def lin(fi, fo):
        bnd = 1.0 / float(np.sqrt(fi))
        W = np.asarray(jax.random.uniform(next(keys), (fi, fo), jnp.float32, -bnd, bnd))
        b = np.asarray(jax.random.uniform(next(keys), (fo,), jnp.float32, -bnd, bnd))
        return W, b

    w1 = np.zeros((n_blocks, H2, D), np.float32)
    b1 = np.zeros((n_blocks, H2, 1), np.float32)
    wh = np.zeros((n_blocks * nh, H2, H2), np.float32)
    bh = np.zeros((n_blocks * nh, H2, 1), np.float32)
    wo = np.zeros((n_blocks, D2, H2), np.float32)
    bo = np.zeros((n_blocks, D2, 1), np.float32)

    for i in range(n_blocks):
        # s-net: Linear(D,H)->LeakyReLU->[Linear(H,H)->LeakyReLU]*nh->Linear(H,D) (tanh in kernel)
        Ws1, bs1 = lin(D, H)
        s_hid = [lin(H, H) for _ in range(n_hidden)]
        Wso, bso = lin(H, D)
        # t-net: Linear(D,H)->LeakyReLU->[Linear(H,H)->LeakyReLU]*nh->Linear(H, D//2+1)
        Wt1, bt1 = lin(D, H)
        t_hid = [lin(H, H) for _ in range(n_hidden)]
        Wto, bto = lin(H, Dh1)

        w1[i, :H, :] = Ws1.T; b1[i, :H, 0] = bs1
        w1[i, H:, :] = Wt1.T; b1[i, H:, 0] = bt1
        w1[i] *= mask_np[i][None, :]                 # fold z_ = mask*z into the matmul
        for j in range(n_hidden):
            Wsh, bsh = s_hid[j]
            Wth, bth = t_hid[j]
            wh[i * nh + j, :H, :H] = Wsh.T; bh[i * nh + j, :H, 0] = bsh
            wh[i * nh + j, H:, H:] = Wth.T; bh[i * nh + j, H:, 0] = bth
        wo[i, :D, :H] = Wso.T; bo[i, :D, 0] = bso
        zero_pos = np.where(mask_np[i] == 0)[0]      # create_masked_t scatter positions
        for c, p in enumerate(zero_pos):
            wo[i, D + p, H:] = Wto[:, 1 + c]
            bo[i, D + p, 0] = bto[1 + c]

    return dict(w1=jnp.asarray(w1), b1=jnp.asarray(b1),
                wh=jnp.asarray(wh), bh=jnp.asarray(bh),
                wo=jnp.asarray(wo), bo=jnp.asarray(bo),
                mask=jnp.asarray(mask_np)[:, :, None])       # (n_blocks, D, 1)


# -------------------------------------- main ----------------------------------------
if __name__ == "__main__":
    # WrappedRealNVP(n_blocks=2, input_size=8, hidden_size=32, n_hidden=1, radius=1.0)
    n_blocks, n_hidden = 2, 1
    D, H = 8, 32
    radius = 1.0
    N = 1024

    key = jax.random.PRNGKey(0)
    k_x, k_p = jax.random.split(key)

    mask_np = make_mask(n_blocks, D)
    subdims = tuple(float(v) for v in mask_np.sum(axis=1))
    params = init_flow_params(k_p, n_blocks, n_hidden, D, H, mask_np)

    # Build inputs on the hyperboloid directly in feature-major layout (batch on lanes),
    # so no wrapper transpose is needed:  x_hyper = exp_map_mu0(expand_proj_dims(u), R).
    u = 0.3 * jax.random.normal(k_x, (D, N), jnp.float32)
    r = jnp.maximum(jnp.linalg.norm(u, axis=0, keepdims=True), 1e-6) / radius
    x0 = radius * jnp.cosh(r)                        # (1, N)  time components
    xs = (jnp.sinh(r) / r) * u                       # (D, N)  spatial components

    z0, zs, log_det = wrapped_realnvp_forward_fm(
        x0, xs, params, n_blocks=n_blocks, n_hidden=n_hidden,
        radius=radius, subdims=subdims)              # matmul_dtype=jnp.float32 default
    z0, zs, log_det = jax.block_until_ready((z0, zs, log_det))

    assert z0.shape == (1, N) and zs.shape == (D, N) and log_det.shape == (N,)
    assert bool(jnp.all(jnp.isfinite(z0))) and bool(jnp.all(jnp.isfinite(zs)))
    assert bool(jnp.all(jnp.isfinite(log_det)))
    # Output must lie on the hyperboloid: -z0^2 + |z_spatial|^2 == -R^2
    constraint = -z0[0] ** 2 + jnp.sum(zs * zs, axis=0) + radius ** 2
    assert bool(jnp.all(jnp.abs(constraint) < 1e-3 * (1.0 + z0[0] ** 2)))
    print("KERNEL_OK")
</pallas_src>

<mosaic_0001>
module attributes {stable_mosaic.version = 11 : i64} {
  func.func @wrapped_realnvp_fwd_kernel(%arg0: i32, %arg1: memref<1x1024xf32, #tpu.memory_space<vmem>>, %arg2: memref<8x1024xf32, #tpu.memory_space<vmem>>, %arg3: memref<2x8x1xf32, #tpu.memory_space<vmem>>, %arg4: memref<2x64x8xf32, #tpu.memory_space<vmem>>, %arg5: memref<2x64x1xf32, #tpu.memory_space<vmem>>, %arg6: memref<2x64x64xf32, #tpu.memory_space<vmem>>, %arg7: memref<2x64x1xf32, #tpu.memory_space<vmem>>, %arg8: memref<2x16x64xf32, #tpu.memory_space<vmem>>, %arg9: memref<2x16x1xf32, #tpu.memory_space<vmem>>, %arg10: memref<1x1024xf32, #tpu.memory_space<vmem>>, %arg11: memref<8x1024xf32, #tpu.memory_space<vmem>>, %arg12: memref<1x1024xf32, #tpu.memory_space<vmem>>) attributes {dimension_semantics = [#tpu.dimension_semantics<parallel>], iteration_bounds = array<i64: 1>, scalar_prefetch = 0 : i64, scratch_operands = 0 : i64, tpu.core_type = #tpu.core_type<tc>, window_params = [{transform_indices = @transform_0, window_bounds = array<i64: 1, 1024>}, {transform_indices = @transform_1, window_bounds = array<i64: 8, 1024>}, {pipeline_mode = #tpu.pipeline_mode<synchronous>, transform_indices = @transform_2, window_bounds = array<i64: 2, 8, 1>}, {pipeline_mode = #tpu.pipeline_mode<synchronous>, transform_indices = @transform_3, window_bounds = array<i64: 2, 64, 8>}, {pipeline_mode = #tpu.pipeline_mode<synchronous>, transform_indices = @transform_4, window_bounds = array<i64: 2, 64, 1>}, {pipeline_mode = #tpu.pipeline_mode<synchronous>, transform_indices = @transform_5, window_bounds = array<i64: 2, 64, 64>}, {pipeline_mode = #tpu.pipeline_mode<synchronous>, transform_indices = @transform_6, window_bounds = array<i64: 2, 64, 1>}, {pipeline_mode = #tpu.pipeline_mode<synchronous>, transform_indices = @transform_7, window_bounds = array<i64: 2, 16, 64>}, {pipeline_mode = #tpu.pipeline_mode<synchronous>, transform_indices = @transform_8, window_bounds = array<i64: 2, 16, 1>}, {transform_indices = @transform_9, window_bounds = array<i64: 1, 1024>}, {transform_indices = @transform_10, window_bounds = array<i64: 8, 1024>}, {transform_indices = @transform_11, window_bounds = array<i64: 1, 1024>}]} {
    %c0 = arith.constant 0 : index
    %c0_0 = arith.constant 0 : index
    %0 = vector.load %arg1[%c0, %c0_0] : memref<1x1024xf32, #tpu.memory_space<vmem>>, vector<1x1024xf32>
    %c0_1 = arith.constant 0 : index
    %c0_2 = arith.constant 0 : index
    %1 = vector.load %arg2[%c0_1, %c0_2] : memref<8x1024xf32, #tpu.memory_space<vmem>>, vector<8x1024xf32>
    %cst = arith.constant 1.000000e+00 : f32
    %2 = vector.broadcast %cst : f32 to vector<1x1024xf32>
    %3 = arith.divf %0, %2 : vector<1x1024xf32>
    %cst_3 = arith.constant 1.00000095 : f32
    %4 = vector.broadcast %cst_3 : f32 to vector<1x1024xf32>
    %5 = arith.maximumf %3, %4 : vector<1x1024xf32>
    %cst_4 = arith.constant 1.000000e+00 : f32
    %6 = vector.broadcast %cst_4 : f32 to vector<1x1024xf32>
    %7 = arith.subf %5, %6 : vector<1x1024xf32>
    %cst_5 = arith.constant 1.000000e+00 : f32
    %8 = vector.broadcast %cst_5 : f32 to vector<1x1024xf32>
    %9 = arith.addf %5, %8 : vector<1x1024xf32>
    %10 = arith.mulf %7, %9 : vector<1x1024xf32>
    %11 = math.sqrt %10 : vector<1x1024xf32>
    %12 = arith.addf %7, %11 : vector<1x1024xf32>
    %13 = math.log1p %12 : vector<1x1024xf32>
    %14 = arith.divf %13, %11 : vector<1x1024xf32>
    %15 = vector.broadcast %14 : vector<1x1024xf32> to vector<8x1024xf32>
    %16 = arith.mulf %15, %1 : vector<8x1024xf32>
    %cst_6 = arith.constant 9.99999997E-7 : f32
    %17 = vector.broadcast %cst_6 : f32 to vector<1x1024xf32>
    %18 = arith.maximumf %13, %17 : vector<1x1024xf32>
    %cst_7 = arith.constant -2.000000e+00 : f32
    %19 = vector.broadcast %cst_7 : f32 to vector<1x1024xf32>
    %20 = arith.mulf %19, %18 : vector<1x1024xf32>
    %21 = math.exp %20 : vector<1x1024xf32>
    %cst_8 = arith.constant 0.000000e+00 : f32
    %22 = vector.broadcast %cst_8 : f32 to vector<1x1024xf32>
    %23 = arith.subf %22, %21 : vector<1x1024xf32>
    %24 = math.log1p %23 : vector<1x1024xf32>
    %25 = arith.addf %18, %24 : vector<1x1024xf32>
    %cst_9 = arith.constant 2.000000e+00 : f32
    %26 = vector.broadcast %cst_9 : f32 to vector<1x1024xf32>
    %27 = arith.mulf %26, %18 : vector<1x1024xf32>
    %28 = math.log %27 : vector<1x1024xf32>
    %29 = arith.subf %25, %28 : vector<1x1024xf32>
    %cst_10 = arith.constant 0.000000e+00 : f32
    %30 = vector.broadcast %cst_10 : f32 to vector<1x1024xf32>
    %31 = arith.maximumf %29, %30 : vector<1x1024xf32>
    %cst_11 = arith.constant 7.000000e+00 : f32
    %32 = vector.broadcast %cst_11 : f32 to vector<1x1024xf32>
    %33 = arith.mulf %32, %31 : vector<1x1024xf32>
    %c1 = arith.constant 1 : index
    %c0_12 = arith.constant 0 : index
    %c0_13 = arith.constant 0 : index
    %34 = vector.load %arg3[%c1, %c0_12, %c0_13] : memref<2x8x1xf32, #tpu.memory_space<vmem>>, vector<1x8x1xf32>
    %35 = vector.shape_cast %34 : vector<1x8x1xf32> to vector<8x1xf32>
    %cst_14 = arith.constant 1.000000e+00 : f32
    %36 = vector.broadcast %cst_14 : f32 to vector<8x1xf32>
    %37 = arith.subf %36, %35 : vector<8x1xf32>
    %c1_15 = arith.constant 1 : index
    %c0_16 = arith.constant 0 : index
    %c0_17 = arith.constant 0 : index
    %38 = vector.load %arg4[%c1_15, %c0_16, %c0_17] : memref<2x64x8xf32, #tpu.memory_space<vmem>>, vector<1x64x8xf32>
    %39 = vector.shape_cast %38 : vector<1x64x8xf32> to vector<64x8xf32>
    %cst_18 = arith.constant dense<0.000000e+00> : vector<64x1024xf32>
    %40 = tpu.matmul %39, %16, %cst_18 {dimension_numbers = #tpu.dot_dimension_numbers<[1], [0], [0], [1], [0, 0, 1, 1], [], []>} : vector<64x8xf32>, vector<8x1024xf32>, vector<64x1024xf32> -> vector<64x1024xf32>
    %c1_19 = arith.constant 1 : index
    %c0_20 = arith.constant 0 : index
    %c0_21 = arith.constant 0 : index
    %41 = vector.load %arg5[%c1_19, %c0_20, %c0_21] : memref<2x64x1xf32, #tpu.memory_space<vmem>>, vector<1x64x1xf32>
    %42 = vector.shape_cast %41 : vector<1x64x1xf32> to vector<64x1xf32>
    %43 = vector.broadcast %42 : vector<64x1xf32> to vector<64x1024xf32>
    %44 = arith.addf %40, %43 : vector<64x1024xf32>
    %cst_22 = arith.constant 0.000000e+00 : f32
    %45 = vector.broadcast %cst_22 : f32 to vector<64x1024xf32>
    %46 = arith.cmpf ogt, %44, %45 : vector<64x1024xf32>
    %cst_23 = arith.constant 0.00999999977 : f32
    %47 = vector.broadcast %cst_23 : f32 to vector<64x1024xf32>
    %48 = arith.mulf %47, %44 : vector<64x1024xf32>
    %49 = arith.select %46, %44, %48 : vector<64x1024xi1>, vector<64x1024xf32>
    %c1_24 = arith.constant 1 : index
    %c0_25 = arith.constant 0 : index
    %c0_26 = arith.constant 0 : index
    %50 = vector.load %arg6[%c1_24, %c0_25, %c0_26] : memref<2x64x64xf32, #tpu.memory_space<vmem>>, vector<1x64x64xf32>
    %51 = vector.shape_cast %50 : vector<1x64x64xf32> to vector<64x64xf32>
    %cst_27 = arith.constant dense<0.000000e+00> : vector<64x1024xf32>
    %52 = tpu.matmul %51, %49, %cst_27 {dimension_numbers = #tpu.dot_dimension_numbers<[1], [0], [0], [1], [0, 0, 1, 1], [], []>} : vector<64x64xf32>, vector<64x1024xf32>, vector<64x1024xf32> -> vector<64x1024xf32>
    %c1_28 = arith.constant 1 : index
    %c0_29 = arith.constant 0 : index
    %c0_30 = arith.constant 0 : index
    %53 = vector.load %arg7[%c1_28, %c0_29, %c0_30] : memref<2x64x1xf32, #tpu.memory_space<vmem>>, vector<1x64x1xf32>
    %54 = vector.shape_cast %53 : vector<1x64x1xf32> to vector<64x1xf32>
    %55 = vector.broadcast %54 : vector<64x1xf32> to vector<64x1024xf32>
    %56 = arith.addf %52, %55 : vector<64x1024xf32>
    %cst_31 = arith.constant 0.000000e+00 : f32
    %57 = vector.broadcast %cst_31 : f32 to vector<64x1024xf32>
    %58 = arith.cmpf ogt, %56, %57 : vector<64x1024xf32>
    %cst_32 = arith.constant 0.00999999977 : f32
    %59 = vector.broadcast %cst_32 : f32 to vector<64x1024xf32>
    %60 = arith.mulf %59, %56 : vector<64x1024xf32>
    %61 = arith.select %58, %56, %60 : vector<64x1024xi1>, vector<64x1024xf32>
    %c1_33 = arith.constant 1 : index
    %c0_34 = arith.constant 0 : index
    %c0_35 = arith.constant 0 : index
    %62 = vector.load %arg8[%c1_33, %c0_34, %c0_35] : memref<2x16x64xf32, #tpu.memory_space<vmem>>, vector<1x16x64xf32>
    %63 = vector.shape_cast %62 : vector<1x16x64xf32> to vector<16x64xf32>
    %cst_36 = arith.constant dense<0.000000e+00> : vector<16x1024xf32>
    %64 = tpu.matmul %63, %61, %cst_36 {dimension_numbers = #tpu.dot_dimension_numbers<[1], [0], [0], [1], [0, 0, 1, 1], [], []>} : vector<16x64xf32>, vector<64x1024xf32>, vector<16x1024xf32> -> vector<16x1024xf32>
    %c1_37 = arith.constant 1 : index
    %c0_38 = arith.constant 0 : index
    %c0_39 = arith.constant 0 : index
    %65 = vector.load %arg9[%c1_37, %c0_38, %c0_39] : memref<2x16x1xf32, #tpu.memory_space<vmem>>, vector<1x16x1xf32>
    %66 = vector.shape_cast %65 : vector<1x16x1xf32> to vector<16x1xf32>
    %67 = vector.broadcast %66 : vector<16x1xf32> to vector<16x1024xf32>
    %68 = arith.addf %64, %67 : vector<16x1024xf32>
    %69 = vector.extract_strided_slice %68 {offsets = [0, 0], sizes = [8, 1024], strides = [1, 1]} : vector<16x1024xf32> to vector<8x1024xf32>
    %70 = math.tanh %69 : vector<8x1024xf32>
    %71 = vector.extract_strided_slice %68 {offsets = [8, 0], sizes = [8, 1024], strides = [1, 1]} : vector<16x1024xf32> to vector<8x1024xf32>
    %72 = arith.mulf %71, %71 : vector<8x1024xf32>
    %cst_40 = arith.constant dense<0.000000e+00> : vector<1024xf32>
    %73 = vector.multi_reduction <add>, %72, %cst_40 [0] : vector<8x1024xf32> to vector<1024xf32>
    %74 = vector.shape_cast %73 : vector<1024xf32> to vector<1x1024xf32>
    %cst_41 = arith.constant 1.000000e+00 : f32
    %75 = vector.broadcast %cst_41 : f32 to vector<1x1024xf32>
    %76 = arith.addf %75, %74 : vector<1x1024xf32>
    %77 = math.sqrt %76 : vector<1x1024xf32>
    %78 = vector.broadcast %37 : vector<8x1xf32> to vector<8x1024xf32>
    %79 = arith.mulf %78, %16 : vector<8x1024xf32>
    %cst_42 = arith.constant -4.000000e+01 : f32
    %cst_43 = arith.constant 4.000000e+01 : f32
    %80 = vector.broadcast %cst_42 : f32 to vector<8x1024xf32>
    %81 = arith.maximumf %80, %79 : vector<8x1024xf32>
    %82 = vector.broadcast %cst_43 : f32 to vector<8x1024xf32>
    %83 = arith.minimumf %82, %81 : vector<8x1024xf32>
    %84 = arith.mulf %83, %83 : vector<8x1024xf32>
    %cst_44 = arith.constant dense<0.000000e+00> : vector<1024xf32>
    %85 = vector.multi_reduction <add>, %84, %cst_44 [0] : vector<8x1024xf32> to vector<1024xf32>
    %86 = vector.shape_cast %85 : vector<1024xf32> to vector<1x1024xf32>
    %cst_45 = arith.constant 9.99999997E-7 : f32
    %87 = vector.broadcast %cst_45 : f32 to vector<1x1024xf32>
    %88 = arith.maximumf %86, %87 : vector<1x1024xf32>
    %89 = math.sqrt %88 : vector<1x1024xf32>
    %cst_46 = arith.constant 1.000000e+00 : f32
    %90 = vector.broadcast %cst_46 : f32 to vector<1x1024xf32>
    %91 = arith.divf %89, %90 : vector<1x1024xf32>
    %cst_47 = arith.constant 9.99999997E-7 : f32
    %92 = vector.broadcast %cst_47 : f32 to vector<1x1024xf32>
    %93 = arith.maximumf %91, %92 : vector<1x1024xf32>
    %94 = math.exp %93 : vector<1x1024xf32>
    %cst_48 = arith.constant 0.000000e+00 : f32
    %95 = vector.broadcast %cst_48 : f32 to vector<1x1024xf32>
    %96 = arith.subf %95, %93 : vector<1x1024xf32>
    %97 = math.exp %96 : vector<1x1024xf32>
    %98 = arith.addf %94, %97 : vector<1x1024xf32>
    %cst_49 = arith.constant 5.000000e-01 : f32
    %99 = vector.broadcast %cst_49 : f32 to vector<1x1024xf32>
    %100 = arith.mulf %99, %98 : vector<1x1024xf32>
    %101 = arith.subf %94, %97 : vector<1x1024xf32>
    %cst_50 = arith.constant 5.000000e-01 : f32
    %102 = vector.broadcast %cst_50 : f32 to vector<1x1024xf32>
    %103 = arith.mulf %102, %101 : vector<1x1024xf32>
    %104 = arith.divf %103, %93 : vector<1x1024xf32>
    %cst_51 = arith.constant 0.000000e+00 : f32
    %105 = vector.broadcast %cst_51 : f32 to vector<1x1024xf32>
    %106 = arith.subf %105, %97 : vector<1x1024xf32>
    %107 = arith.mulf %106, %97 : vector<1x1024xf32>
    %108 = math.log1p %107 : vector<1x1024xf32>
    %109 = arith.addf %93, %108 : vector<1x1024xf32>
    %cst_52 = arith.constant 2.000000e+00 : f32
    %110 = vector.broadcast %cst_52 : f32 to vector<1x1024xf32>
    %111 = arith.mulf %110, %93 : vector<1x1024xf32>
    %112 = math.log %111 : vector<1x1024xf32>
    %113 = arith.subf %109, %112 : vector<1x1024xf32>
    %cst_53 = arith.constant 0.000000e+00 : f32
    %114 = vector.broadcast %cst_53 : f32 to vector<1x1024xf32>
    %115 = arith.maximumf %113, %114 : vector<1x1024xf32>
    %cst_54 = arith.constant 1.000000e+00 : f32
    %116 = vector.broadcast %cst_54 : f32 to vector<1x1024xf32>
    %117 = arith.mulf %116, %100 : vector<1x1024xf32>
    %cst_55 = arith.constant -4.000000e+01 : f32
    %cst_56 = arith.constant 4.000000e+01 : f32
    %118 = vector.broadcast %cst_55 : f32 to vector<1x1024xf32>
    %119 = arith.maximumf %118, %117 : vector<1x1024xf32>
    %120 = vector.broadcast %cst_56 : f32 to vector<1x1024xf32>
    %121 = arith.minimumf %120, %119 : vector<1x1024xf32>
    %122 = vector.broadcast %104 : vector<1x1024xf32> to vector<8x1024xf32>
    %123 = arith.mulf %122, %83 : vector<8x1024xf32>
    %cst_57 = arith.constant -4.000000e+01 : f32
    %cst_58 = arith.constant 4.000000e+01 : f32
    %124 = vector.broadcast %cst_57 : f32 to vector<8x1024xf32>
    %125 = arith.maximumf %124, %123 : vector<8x1024xf32>
    %126 = vector.broadcast %cst_58 : f32 to vector<8x1024xf32>
    %127 = arith.minimumf %126, %125 : vector<8x1024xf32>
    %cst_59 = arith.constant 3.000000e+00 : f32
    %128 = vector.broadcast %cst_59 : f32 to vector<1x1024xf32>
    %129 = arith.mulf %128, %115 : vector<1x1024xf32>
    %130 = arith.subf %33, %129 : vector<1x1024xf32>
    %131 = arith.mulf %71, %127 : vector<8x1024xf32>
    %cst_60 = arith.constant dense<0.000000e+00> : vector<1024xf32>
    %132 = vector.multi_reduction <add>, %131, %cst_60 [0] : vector<8x1024xf32> to vector<1024xf32>
    %133 = vector.shape_cast %132 : vector<1024xf32> to vector<1x1024xf32>
    %134 = arith.mulf %77, %121 : vector<1x1024xf32>
    %135 = arith.subf %133, %134 : vector<1x1024xf32>
    %cst_61 = arith.constant 0.000000e+00 : f32
    %136 = vector.broadcast %cst_61 : f32 to vector<1x1024xf32>
    %137 = arith.subf %136, %135 : vector<1x1024xf32>
    %cst_62 = arith.constant 1.000000e+00 : f32
    %138 = vector.broadcast %cst_62 : f32 to vector<1x1024xf32>
    %139 = arith.divf %137, %138 : vector<1x1024xf32>
    %cst_63 = arith.constant 1.00000095 : f32
    %140 = vector.broadcast %cst_63 : f32 to vector<1x1024xf32>
    %141 = arith.maximumf %139, %140 : vector<1x1024xf32>
    %cst_64 = arith.constant 1.000000e+00 : f32
    %142 = vector.broadcast %cst_64 : f32 to vector<1x1024xf32>
    %143 = arith.subf %141, %142 : vector<1x1024xf32>
    %cst_65 = arith.constant 1.000000e+00 : f32
    %144 = vector.broadcast %cst_65 : f32 to vector<1x1024xf32>
    %145 = arith.addf %141, %144 : vector<1x1024xf32>
    %146 = arith.mulf %143, %145 : vector<1x1024xf32>
    %147 = math.sqrt %146 : vector<1x1024xf32>
    %148 = arith.addf %143, %147 : vector<1x1024xf32>
    %149 = math.log1p %148 : vector<1x1024xf32>
    %150 = arith.divf %149, %147 : vector<1x1024xf32>
    %151 = arith.mulf %141, %77 : vector<1x1024xf32>
    %152 = arith.subf %121, %151 : vector<1x1024xf32>
    %153 = arith.mulf %150, %152 : vector<1x1024xf32>
    %154 = vector.broadcast %141 : vector<1x1024xf32> to vector<8x1024xf32>
    %155 = arith.mulf %154, %71 : vector<8x1024xf32>
    %156 = arith.subf %127, %155 : vector<8x1024xf32>
    %157 = vector.broadcast %150 : vector<1x1024xf32> to vector<8x1024xf32>
    %158 = arith.mulf %157, %156 : vector<8x1024xf32>
    %159 = arith.mulf %158, %158 : vector<8x1024xf32>
    %cst_66 = arith.constant dense<0.000000e+00> : vector<1024xf32>
    %160 = vector.multi_reduction <add>, %159, %cst_66 [0] : vector<8x1024xf32> to vector<1024xf32>
    %161 = vector.shape_cast %160 : vector<1024xf32> to vector<1x1024xf32>
    %162 = arith.mulf %153, %153 : vector<1x1024xf32>
    %163 = arith.subf %161, %162 : vector<1x1024xf32>
    %cst_67 = arith.constant 9.99999997E-7 : f32
    %164 = vector.broadcast %cst_67 : f32 to vector<1x1024xf32>
    %165 = arith.maximumf %163, %164 : vector<1x1024xf32>
    %166 = math.sqrt %165 : vector<1x1024xf32>
    %cst_68 = arith.constant 1.000000e+00 : f32
    %167 = vector.broadcast %cst_68 : f32 to vector<1x1024xf32>
    %168 = arith.divf %166, %167 : vector<1x1024xf32>
    %cst_69 = arith.constant 9.99999997E-7 : f32
    %169 = vector.broadcast %cst_69 : f32 to vector<1x1024xf32>
    %170 = arith.maximumf %168, %169 : vector<1x1024xf32>
    %cst_70 = arith.constant -2.000000e+00 : f32
    %171 = vector.broadcast %cst_70 : f32 to vector<1x1024xf32>
    %172 = arith.mulf %171, %170 : vector<1x1024xf32>
    %173 = math.exp %172 : vector<1x1024xf32>
    %cst_71 = arith.constant 0.000000e+00 : f32
    %174 = vector.broadcast %cst_71 : f32 to vector<1x1024xf32>
    %175 = arith.subf %174, %173 : vector<1x1024xf32>
    %176 = math.log1p %175 : vector<1x1024xf32>
    %177 = arith.addf %170, %176 : vector<1x1024xf32>
    %cst_72 = arith.constant 2.000000e+00 : f32
    %178 = vector.broadcast %cst_72 : f32 to vector<1x1024xf32>
    %179 = arith.mulf %178, %170 : vector<1x1024xf32>
    %180 = math.log %179 : vector<1x1024xf32>
    %181 = arith.subf %177, %180 : vector<1x1024xf32>
    %cst_73 = arith.constant 0.000000e+00 : f32
    %182 = vector.broadcast %cst_73 : f32 to vector<1x1024xf32>
    %183 = arith.maximumf %181, %182 : vector<1x1024xf32>
    %cst_74 = arith.constant 3.000000e+00 : f32
    %184 = vector.broadcast %cst_74 : f32 to vector<1x1024xf32>
    %185 = arith.mulf %184, %183 : vector<1x1024xf32>
    %186 = arith.addf %130, %185 : vector<1x1024xf32>
    %cst_75 = arith.constant -4.000000e+01 : f32
    %cst_76 = arith.constant 4.000000e+01 : f32
    %187 = vector.broadcast %cst_75 : f32 to vector<1x1024xf32>
    %188 = arith.maximumf %187, %153 : vector<1x1024xf32>
    %189 = vector.broadcast %cst_76 : f32 to vector<1x1024xf32>
    %190 = arith.minimumf %189, %188 : vector<1x1024xf32>
    %cst_77 = arith.constant -4.000000e+01 : f32
    %cst_78 = arith.constant 4.000000e+01 : f32
    %191 = vector.broadcast %cst_77 : f32 to vector<8x1024xf32>
    %192 = arith.maximumf %191, %158 : vector<8x1024xf32>
    %193 = vector.broadcast %cst_78 : f32 to vector<8x1024xf32>
    %194 = arith.minimumf %193, %192 : vector<8x1024xf32>
    %cst_79 = arith.constant 1.000000e+00 : f32
    %195 = vector.broadcast %cst_79 : f32 to vector<1x1024xf32>
    %196 = arith.addf %195, %77 : vector<1x1024xf32>
    %197 = arith.divf %190, %196 : vector<1x1024xf32>
    %198 = vector.broadcast %197 : vector<1x1024xf32> to vector<8x1024xf32>
    %199 = arith.mulf %198, %71 : vector<8x1024xf32>
    %200 = arith.subf %194, %199 : vector<8x1024xf32>
    %cst_80 = arith.constant 0.000000e+00 : f32
    %201 = vector.broadcast %cst_80 : f32 to vector<8x1xf32>
    %202 = arith.cmpf ogt, %35, %201 : vector<8x1xf32>
    %cst_81 = arith.constant 0.000000e+00 : f32
    %203 = vector.broadcast %cst_81 : f32 to vector<8x1024xf32>
    %204 = arith.subf %203, %70 : vector<8x1024xf32>
    %205 = math.exp %204 : vector<8x1024xf32>
    %206 = arith.mulf %200, %205 : vector<8x1024xf32>
    %207 = vector.shape_cast %202 : vector<8x1xi1> to vector<8x1xi1>
    %208 = vector.broadcast %207 : vector<8x1xi1> to vector<8x1024xi1>
    %209 = arith.select %208, %16, %206 : vector<8x1024xi1>, vector<8x1024xf32>
    %210 = vector.broadcast %37 : vector<8x1xf32> to vector<8x1024xf32>
    %211 = arith.mulf %210, %70 : vector<8x1024xf32>
    %cst_82 = arith.constant dense<0.000000e+00> : vector<1024xf32>
    %212 = vector.multi_reduction <add>, %211, %cst_82 [0] : vector<8x1024xf32> to vector<1024xf32>
    %213 = vector.shape_cast %212 : vector<1024xf32> to vector<1x1024xf32>
    %214 = arith.subf %186, %213 : vector<1x1024xf32>
    %c0_83 = arith.constant 0 : index
    %c0_84 = arith.constant 0 : index
    %c0_85 = arith.constant 0 : index
    %215 = vector.load %arg3[%c0_83, %c0_84, %c0_85] : memref<2x8x1xf32, #tpu.memory_space<vmem>>, vector<1x8x1xf32>
    %216 = vector.shape_cast %215 : vector<1x8x1xf32> to vector<8x1xf32>
    %cst_86 = arith.constant 1.000000e+00 : f32
    %217 = vector.broadcast %cst_86 : f32 to vector<8x1xf32>
    %218 = arith.subf %217, %216 : vector<8x1xf32>
    %c0_87 = arith.constant 0 : index
    %c0_88 = arith.constant 0 : index
    %c0_89 = arith.constant 0 : index
    %219 = vector.load %arg4[%c0_87, %c0_88, %c0_89] : memref<2x64x8xf32, #tpu.memory_space<vmem>>, vector<1x64x8xf32>
    %220 = vector.shape_cast %219 : vector<1x64x8xf32> to vector<64x8xf32>
    %cst_90 = arith.constant dense<0.000000e+00> : vector<64x1024xf32>
    %221 = tpu.matmul %220, %209, %cst_90 {dimension_numbers = #tpu.dot_dimension_numbers<[1], [0], [0], [1], [0, 0, 1, 1], [], []>} : vector<64x8xf32>, vector<8x1024xf32>, vector<64x1024xf32> -> vector<64x1024xf32>
    %c0_91 = arith.constant 0 : index
    %c0_92 = arith.constant 0 : index
    %c0_93 = arith.constant 0 : index
    %222 = vector.load %arg5[%c0_91, %c0_92, %c0_93] : memref<2x64x1xf32, #tpu.memory_space<vmem>>, vector<1x64x1xf32>
    %223 = vector.shape_cast %222 : vector<1x64x1xf32> to vector<64x1xf32>
    %224 = vector.broadcast %223 : vector<64x1xf32> to vector<64x1024xf32>
    %225 = arith.addf %221, %224 : vector<64x1024xf32>
    %cst_94 = arith.constant 0.000000e+00 : f32
    %226 = vector.broadcast %cst_94 : f32 to vector<64x1024xf32>
    %227 = arith.cmpf ogt, %225, %226 : vector<64x1024xf32>
    %cst_95 = arith.constant 0.00999999977 : f32
    %228 = vector.broadcast %cst_95 : f32 to vector<64x1024xf32>
    %229 = arith.mulf %228, %225 : vector<64x1024xf32>
    %230 = arith.select %227, %225, %229 : vector<64x1024xi1>, vector<64x1024xf32>
    %c0_96 = arith.constant 0 : index
    %c0_97 = arith.constant 0 : index
    %c0_98 = arith.constant 0 : index
    %231 = vector.load %arg6[%c0_96, %c0_97, %c0_98] : memref<2x64x64xf32, #tpu.memory_space<vmem>>, vector<1x64x64xf32>
    %232 = vector.shape_cast %231 : vector<1x64x64xf32> to vector<64x64xf32>
    %cst_99 = arith.constant dense<0.000000e+00> : vector<64x1024xf32>
    %233 = tpu.matmul %232, %230, %cst_99 {dimension_numbers = #tpu.dot_dimension_numbers<[1], [0], [0], [1], [0, 0, 1, 1], [], []>} : vector<64x64xf32>, vector<64x1024xf32>, vector<64x1024xf32> -> vector<64x1024xf32>
    %c0_100 = arith.constant 0 : index
    %c0_101 = arith.constant 0 : index
    %c0_102 = arith.constant 0 : index
    %234 = vector.load %arg7[%c0_100, %c0_101, %c0_102] : memref<2x64x1xf32, #tpu.memory_space<vmem>>, vector<1x64x1xf32>
    %235 = vector.shape_cast %234 : vector<1x64x1xf32> to vector<64x1xf32>
    %236 = vector.broadcast %235 : vector<64x1xf32> to vector<64x1024xf32>
    %237 = arith.addf %233, %236 : vector<64x1024xf32>
    %cst_103 = arith.constant 0.000000e+00 : f32
    %238 = vector.broadcast %cst_103 : f32 to vector<64x1024xf32>
    %239 = arith.cmpf ogt, %237, %238 : vector<64x1024xf32>
    %cst_104 = arith.constant 0.00999999977 : f32
    %240 = vector.broadcast %cst_104 : f32 to vector<64x1024xf32>
    %241 = arith.mulf %240, %237 : vector<64x1024xf32>
    %242 = arith.select %239, %237, %241 : vector<64x1024xi1>, vector<64x1024xf32>
    %c0_105 = arith.constant 0 : index
    %c0_106 = arith.constant 0 : index
    %c0_107 = arith.constant 0 : index
    %243 = vector.load %arg8[%c0_105, %c0_106, %c0_107] : memref<2x16x64xf32, #tpu.memory_space<vmem>>, vector<1x16x64xf32>
    %244 = vector.shape_cast %243 : vector<1x16x64xf32> to vector<16x64xf32>
    %cst_108 = arith.constant dense<0.000000e+00> : vector<16x1024xf32>
    %245 = tpu.matmul %244, %242, %cst_108 {dimension_numbers = #tpu.dot_dimension_numbers<[1], [0], [0], [1], [0, 0, 1, 1], [], []>} : vector<16x64xf32>, vector<64x1024xf32>, vector<16x1024xf32> -> vector<16x1024xf32>
    %c0_109 = arith.constant 0 : index
    %c0_110 = arith.constant 0 : index
    %c0_111 = arith.constant 0 : index
    %246 = vector.load %arg9[%c0_109, %c0_110, %c0_111] : memref<2x16x1xf32, #tpu.memory_space<vmem>>, vector<1x16x1xf32>
    %247 = vector.shape_cast %246 : vector<1x16x1xf32> to vector<16x1xf32>
    %248 = vector.broadcast %247 : vector<16x1xf32> to vector<16x1024xf32>
    %249 = arith.addf %245, %248 : vector<16x1024xf32>
    %250 = vector.extract_strided_slice %249 {offsets = [0, 0], sizes = [8, 1024], strides = [1, 1]} : vector<16x1024xf32> to vector<8x1024xf32>
    %251 = math.tanh %250 : vector<8x1024xf32>
    %252 = vector.extract_strided_slice %249 {offsets = [8, 0], sizes = [8, 1024], strides = [1, 1]} : vector<16x1024xf32> to vector<8x1024xf32>
    %253 = arith.mulf %252, %252 : vector<8x1024xf32>
    %cst_112 = arith.constant dense<0.000000e+00> : vector<1024xf32>
    %254 = vector.multi_reduction <add>, %253, %cst_112 [0] : vector<8x1024xf32> to vector<1024xf32>
    %255 = vector.shape_cast %254 : vector<1024xf32> to vector<1x1024xf32>
    %cst_113 = arith.constant 1.000000e+00 : f32
    %256 = vector.broadcast %cst_113 : f32 to vector<1x1024xf32>
    %257 = arith.addf %256, %255 : vector<1x1024xf32>
    %258 = math.sqrt %257 : vector<1x1024xf32>
    %259 = vector.broadcast %218 : vector<8x1xf32> to vector<8x1024xf32>
    %260 = arith.mulf %259, %209 : vector<8x1024xf32>
    %cst_114 = arith.constant -4.000000e+01 : f32
    %cst_115 = arith.constant 4.000000e+01 : f32
    %261 = vector.broadcast %cst_114 : f32 to vector<8x1024xf32>
    %262 = arith.maximumf %261, %260 : vector<8x1024xf32>
    %263 = vector.broadcast %cst_115 : f32 to vector<8x1024xf32>
    %264 = arith.minimumf %263, %262 : vector<8x1024xf32>
    %265 = arith.mulf %264, %264 : vector<8x1024xf32>
    %cst_116 = arith.constant dense<0.000000e+00> : vector<1024xf32>
    %266 = vector.multi_reduction <add>, %265, %cst_116 [0] : vector<8x1024xf32> to vector<1024xf32>
    %267 = vector.shape_cast %266 : vector<1024xf32> to vector<1x1024xf32>
    %cst_117 = arith.constant 9.99999997E-7 : f32
    %268 = vector.broadcast %cst_117 : f32 to vector<1x1024xf32>
    %269 = arith.maximumf %267, %268 : vector<1x1024xf32>
    %270 = math.sqrt %269 : vector<1x1024xf32>
    %cst_118 = arith.constant 1.000000e+00 : f32
    %271 = vector.broadcast %cst_118 : f32 to vector<1x1024xf32>
    %272 = arith.divf %270, %271 : vector<1x1024xf32>
    %cst_119 = arith.constant 9.99999997E-7 : f32
    %273 = vector.broadcast %cst_119 : f32 to vector<1x1024xf32>
    %274 = arith.maximumf %272, %273 : vector<1x1024xf32>
    %275 = math.exp %274 : vector<1x1024xf32>
    %cst_120 = arith.constant 0.000000e+00 : f32
    %276 = vector.broadcast %cst_120 : f32 to vector<1x1024xf32>
    %277 = arith.subf %276, %274 : vector<1x1024xf32>
    %278 = math.exp %277 : vector<1x1024xf32>
    %279 = arith.addf %275, %278 : vector<1x1024xf32>
    %cst_121 = arith.constant 5.000000e-01 : f32
    %280 = vector.broadcast %cst_121 : f32 to vector<1x1024xf32>
    %281 = arith.mulf %280, %279 : vector<1x1024xf32>
    %282 = arith.subf %275, %278 : vector<1x1024xf32>
    %cst_122 = arith.constant 5.000000e-01 : f32
    %283 = vector.broadcast %cst_122 : f32 to vector<1x1024xf32>
    %284 = arith.mulf %283, %282 : vector<1x1024xf32>
    %285 = arith.divf %284, %274 : vector<1x1024xf32>
    %cst_123 = arith.constant 0.000000e+00 : f32
    %286 = vector.broadcast %cst_123 : f32 to vector<1x1024xf32>
    %287 = arith.subf %286, %278 : vector<1x1024xf32>
    %288 = arith.mulf %287, %278 : vector<1x1024xf32>
    %289 = math.log1p %288 : vector<1x1024xf32>
    %290 = arith.addf %274, %289 : vector<1x1024xf32>
    %cst_124 = arith.constant 2.000000e+00 : f32
    %291 = vector.broadcast %cst_124 : f32 to vector<1x1024xf32>
    %292 = arith.mulf %291, %274 : vector<1x1024xf32>
    %293 = math.log %292 : vector<1x1024xf32>
    %294 = arith.subf %290, %293 : vector<1x1024xf32>
    %cst_125 = arith.constant 0.000000e+00 : f32
    %295 = vector.broadcast %cst_125 : f32 to vector<1x1024xf32>
    %296 = arith.maximumf %294, %295 : vector<1x1024xf32>
    %cst_126 = arith.constant 1.000000e+00 : f32
    %297 = vector.broadcast %cst_126 : f32 to vector<1x1024xf32>
    %298 = arith.mulf %297, %281 : vector<1x1024xf32>
    %cst_127 = arith.constant -4.000000e+01 : f32
    %cst_128 = arith.constant 4.000000e+01 : f32
    %299 = vector.broadcast %cst_127 : f32 to vector<1x1024xf32>
    %300 = arith.maximumf %299, %298 : vector<1x1024xf32>
    %301 = vector.broadcast %cst_128 : f32 to vector<1x1024xf32>
    %302 = arith.minimumf %301, %300 : vector<1x1024xf32>
    %303 = vector.broadcast %285 : vector<1x1024xf32> to vector<8x1024xf32>
    %304 = arith.mulf %303, %264 : vector<8x1024xf32>
    %cst_129 = arith.constant -4.000000e+01 : f32
    %cst_130 = arith.constant 4.000000e+01 : f32
    %305 = vector.broadcast %cst_129 : f32 to vector<8x1024xf32>
    %306 = arith.maximumf %305, %304 : vector<8x1024xf32>
    %307 = vector.broadcast %cst_130 : f32 to vector<8x1024xf32>
    %308 = arith.minimumf %307, %306 : vector<8x1024xf32>
    %cst_131 = arith.constant 3.000000e+00 : f32
    %309 = vector.broadcast %cst_131 : f32 to vector<1x1024xf32>
    %310 = arith.mulf %309, %296 : vector<1x1024xf32>
    %311 = arith.subf %214, %310 : vector<1x1024xf32>
    %312 = arith.mulf %252, %308 : vector<8x1024xf32>
    %cst_132 = arith.constant dense<0.000000e+00> : vector<1024xf32>
    %313 = vector.multi_reduction <add>, %312, %cst_132 [0] : vector<8x1024xf32> to vector<1024xf32>
    %314 = vector.shape_cast %313 : vector<1024xf32> to vector<1x1024xf32>
    %315 = arith.mulf %258, %302 : vector<1x1024xf32>
    %316 = arith.subf %314, %315 : vector<1x1024xf32>
    %cst_133 = arith.constant 0.000000e+00 : f32
    %317 = vector.broadcast %cst_133 : f32 to vector<1x1024xf32>
    %318 = arith.subf %317, %316 : vector<1x1024xf32>
    %cst_134 = arith.constant 1.000000e+00 : f32
    %319 = vector.broadcast %cst_134 : f32 to vector<1x1024xf32>
    %320 = arith.divf %318, %319 : vector<1x1024xf32>
    %cst_135 = arith.constant 1.00000095 : f32
    %321 = vector.broadcast %cst_135 : f32 to vector<1x1024xf32>
    %322 = arith.maximumf %320, %321 : vector<1x1024xf32>
    %cst_136 = arith.constant 1.000000e+00 : f32
    %323 = vector.broadcast %cst_136 : f32 to vector<1x1024xf32>
    %324 = arith.subf %322, %323 : vector<1x1024xf32>
    %cst_137 = arith.constant 1.000000e+00 : f32
    %325 = vector.broadcast %cst_137 : f32 to vector<1x1024xf32>
    %326 = arith.addf %322, %325 : vector<1x1024xf32>
    %327 = arith.mulf %324, %326 : vector<1x1024xf32>
    %328 = math.sqrt %327 : vector<1x1024xf32>
    %329 = arith.addf %324, %328 : vector<1x1024xf32>
    %330 = math.log1p %329 : vector<1x1024xf32>
    %331 = arith.divf %330, %328 : vector<1x1024xf32>
    %332 = arith.mulf %322, %258 : vector<1x1024xf32>
    %333 = arith.subf %302, %332 : vector<1x1024xf32>
    %334 = arith.mulf %331, %333 : vector<1x1024xf32>
    %335 = vector.broadcast %322 : vector<1x1024xf32> to vector<8x1024xf32>
    %336 = arith.mulf %335, %252 : vector<8x1024xf32>
    %337 = arith.subf %308, %336 : vector<8x1024xf32>
    %338 = vector.broadcast %331 : vector<1x1024xf32> to vector<8x1024xf32>
    %339 = arith.mulf %338, %337 : vector<8x1024xf32>
    %340 = arith.mulf %339, %339 : vector<8x1024xf32>
    %cst_138 = arith.constant dense<0.000000e+00> : vector<1024xf32>
    %341 = vector.multi_reduction <add>, %340, %cst_138 [0] : vector<8x1024xf32> to vector<1024xf32>
    %342 = vector.shape_cast %341 : vector<1024xf32> to vector<1x1024xf32>
    %343 = arith.mulf %334, %334 : vector<1x1024xf32>
    %344 = arith.subf %342, %343 : vector<1x1024xf32>
    %cst_139 = arith.constant 9.99999997E-7 : f32
    %345 = vector.broadcast %cst_139 : f32 to vector<1x1024xf32>
    %346 = arith.maximumf %344, %345 : vector<1x1024xf32>
    %347 = math.sqrt %346 : vector<1x1024xf32>
    %cst_140 = arith.constant 1.000000e+00 : f32
    %348 = vector.broadcast %cst_140 : f32 to vector<1x1024xf32>
    %349 = arith.divf %347, %348 : vector<1x1024xf32>
    %cst_141 = arith.constant 9.99999997E-7 : f32
    %350 = vector.broadcast %cst_141 : f32 to vector<1x1024xf32>
    %351 = arith.maximumf %349, %350 : vector<1x1024xf32>
    %cst_142 = arith.constant -2.000000e+00 : f32
    %352 = vector.broadcast %cst_142 : f32 to vector<1x1024xf32>
    %353 = arith.mulf %352, %351 : vector<1x1024xf32>
    %354 = math.exp %353 : vector<1x1024xf32>
    %cst_143 = arith.constant 0.000000e+00 : f32
    %355 = vector.broadcast %cst_143 : f32 to vector<1x1024xf32>
    %356 = arith.subf %355, %354 : vector<1x1024xf32>
    %357 = math.log1p %356 : vector<1x1024xf32>
    %358 = arith.addf %351, %357 : vector<1x1024xf32>
    %cst_144 = arith.constant 2.000000e+00 : f32
    %359 = vector.broadcast %cst_144 : f32 to vector<1x1024xf32>
    %360 = arith.mulf %359, %351 : vector<1x1024xf32>
    %361 = math.log %360 : vector<1x1024xf32>
    %362 = arith.subf %358, %361 : vector<1x1024xf32>
    %cst_145 = arith.constant 0.000000e+00 : f32
    %363 = vector.broadcast %cst_145 : f32 to vector<1x1024xf32>
    %364 = arith.maximumf %362, %363 : vector<1x1024xf32>
    %cst_146 = arith.constant 3.000000e+00 : f32
    %365 = vector.broadcast %cst_146 : f32 to vector<1x1024xf32>
    %366 = arith.mulf %365, %364 : vector<1x1024xf32>
    %367 = arith.addf %311, %366 : vector<1x1024xf32>
    %cst_147 = arith.constant -4.000000e+01 : f32
    %cst_148 = arith.constant 4.000000e+01 : f32
    %368 = vector.broadcast %cst_147 : f32 to vector<1x1024xf32>
    %369 = arith.maximumf %368, %334 : vector<1x1024xf32>
    %370 = vector.broadcast %cst_148 : f32 to vector<1x1024xf32>
    %371 = arith.minimumf %370, %369 : vector<1x1024xf32>
    %cst_149 = arith.constant -4.000000e+01 : f32
    %cst_150 = arith.constant 4.000000e+01 : f32
    %372 = vector.broadcast %cst_149 : f32 to vector<8x1024xf32>
    %373 = arith.maximumf %372, %339 : vector<8x1024xf32>
    %374 = vector.broadcast %cst_150 : f32 to vector<8x1024xf32>
    %375 = arith.minimumf %374, %373 : vector<8x1024xf32>
    %cst_151 = arith.constant 1.000000e+00 : f32
    %376 = vector.broadcast %cst_151 : f32 to vector<1x1024xf32>
    %377 = arith.addf %376, %258 : vector<1x1024xf32>
    %378 = arith.divf %371, %377 : vector<1x1024xf32>
    %379 = vector.broadcast %378 : vector<1x1024xf32> to vector<8x1024xf32>
    %380 = arith.mulf %379, %252 : vector<8x1024xf32>
    %381 = arith.subf %375, %380 : vector<8x1024xf32>
    %cst_152 = arith.constant 0.000000e+00 : f32
    %382 = vector.broadcast %cst_152 : f32 to vector<8x1xf32>
    %383 = arith.cmpf ogt, %216, %382 : vector<8x1xf32>
    %cst_153 = arith.constant 0.000000e+00 : f32
    %384 = vector.broadcast %cst_153 : f32 to vector<8x1024xf32>
    %385 = arith.subf %384, %251 : vector<8x1024xf32>
    %386 = math.exp %385 : vector<8x1024xf32>
    %387 = arith.mulf %381, %386 : vector<8x1024xf32>
    %388 = vector.shape_cast %383 : vector<8x1xi1> to vector<8x1xi1>
    %389 = vector.broadcast %388 : vector<8x1xi1> to vector<8x1024xi1>
    %390 = arith.select %389, %209, %387 : vector<8x1024xi1>, vector<8x1024xf32>
    %391 = vector.broadcast %218 : vector<8x1xf32> to vector<8x1024xf32>
    %392 = arith.mulf %391, %251 : vector<8x1024xf32>
    %cst_154 = arith.constant dense<0.000000e+00> : vector<1024xf32>
    %393 = vector.multi_reduction <add>, %392, %cst_154 [0] : vector<8x1024xf32> to vector<1024xf32>
    %394 = vector.shape_cast %393 : vector<1024xf32> to vector<1x1024xf32>
    %395 = arith.subf %367, %394 : vector<1x1024xf32>
    %396 = arith.mulf %390, %390 : vector<8x1024xf32>
    %cst_155 = arith.constant dense<0.000000e+00> : vector<1024xf32>
    %397 = vector.multi_reduction <add>, %396, %cst_155 [0] : vector<8x1024xf32> to vector<1024xf32>
    %398 = vector.shape_cast %397 : vector<1024xf32> to vector<1x1024xf32>
    %cst_156 = arith.constant 9.99999997E-7 : f32
    %399 = vector.broadcast %cst_156 : f32 to vector<1x1024xf32>
    %400 = arith.maximumf %398, %399 : vector<1x1024xf32>
    %401 = math.sqrt %400 : vector<1x1024xf32>
    %cst_157 = arith.constant 1.000000e+00 : f32
    %402 = vector.broadcast %cst_157 : f32 to vector<1x1024xf32>
    %403 = arith.divf %401, %402 : vector<1x1024xf32>
    %cst_158 = arith.constant 9.99999997E-7 : f32
    %404 = vector.broadcast %cst_158 : f32 to vector<1x1024xf32>
    %405 = arith.maximumf %403, %404 : vector<1x1024xf32>
    %406 = math.exp %405 : vector<1x1024xf32>
    %cst_159 = arith.constant 0.000000e+00 : f32
    %407 = vector.broadcast %cst_159 : f32 to vector<1x1024xf32>
    %408 = arith.subf %407, %405 : vector<1x1024xf32>
    %409 = math.exp %408 : vector<1x1024xf32>
    %410 = arith.addf %406, %409 : vector<1x1024xf32>
    %cst_160 = arith.constant 5.000000e-01 : f32
    %411 = vector.broadcast %cst_160 : f32 to vector<1x1024xf32>
    %412 = arith.mulf %411, %410 : vector<1x1024xf32>
    %413 = arith.subf %406, %409 : vector<1x1024xf32>
    %cst_161 = arith.constant 5.000000e-01 : f32
    %414 = vector.broadcast %cst_161 : f32 to vector<1x1024xf32>
    %415 = arith.mulf %414, %413 : vector<1x1024xf32>
    %416 = arith.divf %415, %405 : vector<1x1024xf32>
    %cst_162 = arith.constant 0.000000e+00 : f32
    %417 = vector.broadcast %cst_162 : f32 to vector<1x1024xf32>
    %418 = arith.subf %417, %409 : vector<1x1024xf32>
    %419 = arith.mulf %418, %409 : vector<1x1024xf32>
    %420 = math.log1p %419 : vector<1x1024xf32>
    %421 = arith.addf %405, %420 : vector<1x1024xf32>
    %cst_163 = arith.constant 2.000000e+00 : f32
    %422 = vector.broadcast %cst_163 : f32 to vector<1x1024xf32>
    %423 = arith.mulf %422, %405 : vector<1x1024xf32>
    %424 = math.log %423 : vector<1x1024xf32>
    %425 = arith.subf %421, %424 : vector<1x1024xf32>
    %cst_164 = arith.constant 0.000000e+00 : f32
    %426 = vector.broadcast %cst_164 : f32 to vector<1x1024xf32>
    %427 = arith.maximumf %425, %426 : vector<1x1024xf32>
    %cst_165 = arith.constant 1.000000e+00 : f32
    %428 = vector.broadcast %cst_165 : f32 to vector<1x1024xf32>
    %429 = arith.mulf %428, %412 : vector<1x1024xf32>
    %c0_166 = arith.constant 0 : index
    %c0_167 = arith.constant 0 : index
    %430 = vector.load %arg10[%c0_166, %c0_167] : memref<1x1024xf32, #tpu.memory_space<vmem>>, vector<1x1024xf32>
    tpu.vector_store %arg10[%c0_166, %c0_167], %429 {strides = array<i32>} : memref<1x1024xf32, #tpu.memory_space<vmem>>, vector<1x1024xf32>,
    %431 = vector.broadcast %416 : vector<1x1024xf32> to vector<8x1024xf32>
    %432 = arith.mulf %431, %390 : vector<8x1024xf32>
    %c0_168 = arith.constant 0 : index
    %c0_169 = arith.constant 0 : index
    %433 = vector.load %arg11[%c0_168, %c0_169] : memref<8x1024xf32, #tpu.memory_space<vmem>>, vector<8x1024xf32>
    tpu.vector_store %arg11[%c0_168, %c0_169], %432 {strides = array<i32>} : memref<8x1024xf32, #tpu.memory_space<vmem>>, vector<8x1024xf32>,
    %cst_170 = arith.constant 7.000000e+00 : f32
    %434 = vector.broadcast %cst_170 : f32 to vector<1x1024xf32>
    %435 = arith.mulf %434, %427 : vector<1x1024xf32>
    %436 = arith.subf %395, %435 : vector<1x1024xf32>
    %c0_171 = arith.constant 0 : index
    %c0_172 = arith.constant 0 : index
    %437 = vector.load %arg12[%c0_171, %c0_172] : memref<1x1024xf32, #tpu.memory_space<vmem>>, vector<1x1024xf32>
    tpu.vector_store %arg12[%c0_171, %c0_172], %436 {strides = array<i32>} : memref<1x1024xf32, #tpu.memory_space<vmem>>, vector<1x1024xf32>,
    return
  }
  func.func @transform_0(%arg0: i32) -> (i32, i32) {
    %c0_i32 = arith.constant 0 : i32
    %c0_i32_0 = arith.constant 0 : i32
    return %c0_i32, %arg0 : i32, i32
  }
  func.func @transform_1(%arg0: i32) -> (i32, i32) {
    %c0_i32 = arith.constant 0 : i32
    %c0_i32_0 = arith.constant 0 : i32
    return %c0_i32, %arg0 : i32, i32
  }
  func.func @transform_2(%arg0: i32) -> (i32, i32, i32) {
    %c0_i32 = arith.constant 0 : i32
    %c0_i32_0 = arith.constant 0 : i32
    %c0_i32_1 = arith.constant 0 : i32
    %c0_i32_2 = arith.constant 0 : i32
    return %c0_i32, %c0_i32_0, %c0_i32_1 : i32, i32, i32
  }
  func.func @transform_3(%arg0: i32) -> (i32, i32, i32) {
    %c0_i32 = arith.constant 0 : i32
    %c0_i32_0 = arith.constant 0 : i32
    %c0_i32_1 = arith.constant 0 : i32
    %c0_i32_2 = arith.constant 0 : i32
    return %c0_i32, %c0_i32_0, %c0_i32_1 : i32, i32, i32
  }
  func.func @transform_4(%arg0: i32) -> (i32, i32, i32) {
    %c0_i32 = arith.constant 0 : i32
    %c0_i32_0 = arith.constant 0 : i32
    %c0_i32_1 = arith.constant 0 : i32
    %c0_i32_2 = arith.constant 0 : i32
    return %c0_i32, %c0_i32_0, %c0_i32_1 : i32, i32, i32
  }
  func.func @transform_5(%arg0: i32) -> (i32, i32, i32) {
    %c0_i32 = arith.constant 0 : i32
    %c0_i32_0 = arith.constant 0 : i32
    %c0_i32_1 = arith.constant 0 : i32
    %c0_i32_2 = arith.constant 0 : i32
    return %c0_i32, %c0_i32_0, %c0_i32_1 : i32, i32, i32
  }
  func.func @transform_6(%arg0: i32) -> (i32, i32, i32) {
    %c0_i32 = arith.constant 0 : i32
    %c0_i32_0 = arith.constant 0 : i32
    %c0_i32_1 = arith.constant 0 : i32
    %c0_i32_2 = arith.constant 0 : i32
    return %c0_i32, %c0_i32_0, %c0_i32_1 : i32, i32, i32
  }
  func.func @transform_7(%arg0: i32) -> (i32, i32, i32) {
    %c0_i32 = arith.constant 0 : i32
    %c0_i32_0 = arith.constant 0 : i32
    %c0_i32_1 = arith.constant 0 : i32
    %c0_i32_2 = arith.constant 0 : i32
    return %c0_i32, %c0_i32_0, %c0_i32_1 : i32, i32, i32
  }
  func.func @transform_8(%arg0: i32) -> (i32, i32, i32) {
    %c0_i32 = arith.constant 0 : i32
    %c0_i32_0 = arith.constant 0 : i32
    %c0_i32_1 = arith.constant 0 : i32
    %c0_i32_2 = arith.constant 0 : i32
    return %c0_i32, %c0_i32_0, %c0_i32_1 : i32, i32, i32
  }
  func.func @transform_9(%arg0: i32) -> (i32, i32) {
    %c0_i32 = arith.constant 0 : i32
    %c0_i32_0 = arith.constant 0 : i32
    return %c0_i32, %arg0 : i32, i32
  }
  func.func @transform_10(%arg0: i32) -> (i32, i32) {
    %c0_i32 = arith.constant 0 : i32
    %c0_i32_0 = arith.constant 0 : i32
    return %c0_i32, %arg0 : i32, i32
  }
  func.func @transform_11(%arg0: i32) -> (i32, i32) {
    %c0_i32 = arith.constant 0 : i32
    %c0_i32_0 = arith.constant 0 : i32
    return %c0_i32, %arg0 : i32, i32
  }
}

</mosaic_0001>

<llo_original>
// kernel: tpu_custom_call.1
$region0: #{tpu_custom_call.1}
  #allocation0 [shape = 'u32[]', space=smem, size = 0x4, offset = 0x4, fixed_abs, tag = 'smem constant byte address 0x4 - core index']
  #allocation1 [shape = 'u32[72,128]{1,0:T(1,128)}', space=vmem, size = 0x9000, scoped, tag = 'internal scratch']
  %s0 = inlined_call_operand.vmem [shape: f32[1,1024], index: 0, kind: input, shape index: {}]
  %s1 = inlined_call_operand.vmem [shape: f32[8,1024], index: 1, kind: input, shape index: {}]
  %s2 = inlined_call_operand.vmem [shape: f32[2,8,1], index: 2, kind: input, shape index: {}]
  %s3 = inlined_call_operand.vmem [shape: f32[2,64,8], index: 3, kind: input, shape index: {}]
  %s4 = inlined_call_operand.vmem [shape: f32[2,64,1], index: 4, kind: input, shape index: {}]
  %s5 = inlined_call_operand.vmem [shape: f32[2,64,64], index: 5, kind: input, shape index: {}]
  %s6 = inlined_call_operand.vmem [shape: f32[2,64,1], index: 6, kind: input, shape index: {}]
  %s7 = inlined_call_operand.vmem [shape: f32[2,16,64], index: 7, kind: input, shape index: {}]
  %s8 = inlined_call_operand.vmem [shape: f32[2,16,1], index: 8, kind: input, shape index: {}]
  %s9 = inlined_call_operand.hbm [shape: f32[1,1024], index: 9, kind: output, shape index: {0}]
  %s10 = inlined_call_operand.hbm [shape: f32[8,1024], index: 10, kind: output, shape index: {1}]
  %s11 = inlined_call_operand.hbm [shape: f32[1,1024], index: 11, kind: output, shape index: {2}]
  %12 = xla_tuple %s9, %s10, %s11
  %s13 = sld [smem:[#allocation0]]
  $region62: #{tpu_custom_call.1} parent=0
    _
  %s15 = ssub.s32 1, %s13
  %s16 = scalar_select 0, %s15, %s13
  $region1: #{tpu_custom_call.1} parent=0
    #allocation2 [shape = 'u8[4096]{0}', space=vmem, size = 0x1000, scoped, tag = 'output window, operand 0, single buffered']
    #allocation3 [shape = 's32[1]{0}', space=sflag, size = 0x4, scoped, tag = 'scoped memory for tpu_custom_call.1']
    #allocation4 [shape = 'u8[32768]{0}', space=vmem, size = 0x8000, scoped, tag = 'output window, operand 1, single buffered']
    #allocation5 [shape = 's32[1]{0}', space=sflag, size = 0x4, scoped, tag = 'scoped memory for tpu_custom_call.1']
    #allocation6 [shape = 'u8[4096]{0}', space=vmem, size = 0x1000, scoped, tag = 'output window, operand 2, single buffered']
    %17 = vsyncpa [#allocation3], 0
    %18 = vsyncpa [#allocation5], 0
    // Predicated region
    $region2: #{tpu_custom_call.1} parent=1 // pred_check
      _
    $region3: #{tpu_custom_call.1} parent=1 // pred_check_branch
      %20 = sbr.rel (0) target = $region5
    $region4: #{tpu_custom_call.1} parent=1 // pred_region
      _
    $region5: #{tpu_custom_call.1} parent=1 // pred_fallthru
      _
    // Predicated region
    $region6: #{tpu_custom_call.1} parent=1 // pred_check
      _
    $region7: #{tpu_custom_call.1} parent=1 // pred_check_branch
      %22 = sbr.rel (0) target = $region9
    $region8: #{tpu_custom_call.1} parent=1 // pred_region
      _
    $region9: #{tpu_custom_call.1} parent=1 // pred_fallthru
      _
    // Predicated region
    $region10: #{tpu_custom_call.1} parent=1 // pred_check
      _
    $region11: #{tpu_custom_call.1} parent=1 // pred_check_branch
      %24 = sbr.rel (0) target = $region13
    $region12: #{tpu_custom_call.1} parent=1 // pred_region
      _
    $region13: #{tpu_custom_call.1} parent=1 // pred_fallthru
      _
    // Predicated region
    $region14: #{tpu_custom_call.1} parent=1 // pred_check
      _
    $region15: #{tpu_custom_call.1} parent=1 // pred_check_branch
      %26 = sbr.rel (0) target = $region17
    $region16: #{tpu_custom_call.1} parent=1 // pred_region
      _
    $region17: #{tpu_custom_call.1} parent=1 // pred_fallthru
      _
    // Predicated region
    $region18: #{tpu_custom_call.1} parent=1 // pred_check
      _
    $region19: #{tpu_custom_call.1} parent=1 // pred_check_branch
      %28 = sbr.rel (0) target = $region21
    $region20: #{tpu_custom_call.1} parent=1 // pred_region
      _
    $region21: #{tpu_custom_call.1} parent=1 // pred_fallthru
      _
    // Predicated region
    $region22: #{tpu_custom_call.1} parent=1 // pred_check
      _
    $region23: #{tpu_custom_call.1} parent=1 // pred_check_branch
      %30 = sbr.rel (0) target = $region25
    $region24: #{tpu_custom_call.1} parent=1 // pred_region
      _
    $region25: #{tpu_custom_call.1} parent=1 // pred_fallthru
      _
    // Predicated region
    $region26: #{tpu_custom_call.1} parent=1 // pred_check
      _
    $region27: #{tpu_custom_call.1} parent=1 // pred_check_branch
      %32 = sbr.rel (0) target = $region29
    $region28: #{tpu_custom_call.1} parent=1 // pred_region
      _
    $region29: #{tpu_custom_call.1} parent=1 // pred_fallthru
      _
    // Predicated region
    $region30: #{tpu_custom_call.1} parent=1 // pred_check
      _
    $region31: #{tpu_custom_call.1} parent=1 // pred_check_branch
      %34 = sbr.rel (0) target = $region33
    $region32: #{tpu_custom_call.1} parent=1 // pred_region
      _
    $region33: #{tpu_custom_call.1} parent=1 // pred_fallthru
      _
    // Predicated region
    $region34: #{tpu_custom_call.1} parent=1 // pred_check
      _
    $region35: #{tpu_custom_call.1} parent=1 // pred_check_branch
      %36 = sbr.rel (0) target = $region37
    $region36: #{tpu_custom_call.1} parent=1 // pred_region
      _
    $region37: #{tpu_custom_call.1} parent=1 // pred_fallthru
      _
    %v37 = vld [vmem:[%s0] sm:$0xff]
    %v38 = vld [vmem:[%s1] sm:$0xff]
    %v39 = vld [vmem:[%s1 + $0x8] sm:$0xff]
    %v40 = vld [vmem:[%s1 + $0x10] sm:$0xff]
    %v41 = vld [vmem:[%s1 + $0x18] sm:$0xff]
    %v42 = vld [vmem:[%s1 + $0x20] sm:$0xff]
    %v43 = vld [vmem:[%s1 + $0x28] sm:$0xff]
    %v44 = vld [vmem:[%s1 + $0x30] sm:$0xff]
    %v45 = vld [vmem:[%s1 + $0x38] sm:$0xff]
    %v46 = vmax.f32 %v37, 1.000001
    %v47 = vsub.f32 %v46, 1.0
    %v48 = vadd.f32 %v46, 1.0
    %v49 = vmul.f32 %v47, %v48
    %v50 = vrsqrt.pop %v49
    %v51 = vmul.f32 %v50, %v49
    %v52 = vmul.f32 %v51, %v50
    %v53 = vmul.f32 0.5, %v52
    %v54 = vsub.f32 1.5, %v53
    %v55 = vmul.f32 %v50, %v54
    %v56 = vmul.f32 %v49, %v55
    %vm57 = vcmp.eq.f32.partialorder %v49, inf
    %v58 = vsel %vm57, %v49, %v56
    %vm59 = vcmp.eq.f32.partialorder %v49, 0.0
    %v60 = vand.u32 %v49, 2147483648
    %v61 = vsel %vm59, %v60, %v58
    %v62 = vadd.f32 %v47, %v61
    %v63 = vadd.f32 %v62, 1.0
    %v64 = vlog2.pop %v63
    %v65 = vmul.f32 %v64, 0.6931472
    %v66 = vmul.f32 -0.5, %v62
    %v67 = vadd.f32 %v66, 1.0
    %v68 = vmul.f32 %v67, %v62
    %v69 = vand.u32 2147483647, %v62
    %vm70 = vcmp.lt.f32.partialorder %v69, 0.0004427343
    %v71 = vsel %vm70, %v68, %v65
    %v72 = vrcp.pop %v61
    %v73 = vmul.f32 %v61, %v72
    %v74 = vsub.f32 1.0, %v73
    %v75 = vmul.f32 %v72, %v74
    %v76 = vadd.f32 %v72, %v75
    %vm77 = vweird.f32 %v61
    %vm78 = vweird.f32 %v72
    %vm79 = vmor %vm77, %vm78
    %v80 = vsel %vm79, %v72, %v76
    %v81 = vand.u32 2147483647, %v61
    %vm82 = vcmp.eq.f32.partialorder %v81, 8.507059e+37
    %v83 = vand.u32 %v61, 2147483648
    %v84 = vor.u32 1.1754944e-38, %v83
    %v85 = vsel %vm82, %v84, %v80
    %v86 = vmul.f32 %v71, %v85
    %v88 = vperm.slane %v86, 0
    %v89 = vperm.slane %v86, 1
    %v90 = vperm.slane %v86, 2
    %v91 = vperm.slane %v86, 3
    %v92 = vperm.slane %v86, 4
    %v93 = vperm.slane %v86, 5
    %v94 = vperm.slane %v86, 6
    %v95 = vperm.slane %v86, 7
    %v104 = vmul.f32 %v88, %v38
    %v105 = vmul.f32 %v89, %v39
    %v106 = vmul.f32 %v90, %v40
    %v107 = vmul.f32 %v91, %v41
    %v108 = vmul.f32 %v92, %v42
    %v109 = vmul.f32 %v93, %v43
    %v110 = vmul.f32 %v94, %v44
    %v111 = vmul.f32 %v95, %v45
    %v112 = vmax.f32 %v71, 1e-06
    %v113 = vmul.f32 %v112, -2.0
    %v114 = vmul.f32 %v113, 1.442695
    %v115 = vpow.pop %v114
    %v116 = vsub.f32 0.0, %v115
    %v117 = vadd.f32 %v116, 1.0
    %v118 = vlog2.pop %v117
    %v119 = vmul.f32 %v118, 0.6931472
    %v120 = vmul.f32 -0.5, %v116
    %v121 = vadd.f32 %v120, 1.0
    %v122 = vmul.f32 %v121, %v116
    %v123 = vand.u32 2147483647, %v116
    %vm124 = vcmp.lt.f32.partialorder %v123, 0.0004427343
    %v125 = vsel %vm124, %v122, %v119
    %v126 = vadd.f32 %v112, %v125
    %v127 = vmul.f32 %v112, 2.0
    %v128 = vlog2.pop %v127
    %v129 = vmul.f32 %v128, 0.6931472
    %v130 = vsub.f32 %v126, %v129
    %v131 = vmax.f32 %v130, 0.0
    %v132 = vmul.f32 %v131, 7.0
    %s133 = scalar_lea.vmem %s2, 8
    %v134 = vld [vmem:[%s133] sm:$0xff]
    %v135 = vsub.f32 1.0, %v134
    %s136 = scalar_lea.vmem %s3, 64
    %v137 = vld [vmem:[%s136] sm:$0xff]
    %v138 = vld [vmem:[%s136 + $0x8] sm:$0xff]
    %v139 = vld [vmem:[%s136 + $0x10] sm:$0xff]
    %v140 = vld [vmem:[%s136 + $0x18] sm:$0xff]
    %v141 = vld [vmem:[%s136 + $0x20] sm:$0xff]
    %v142 = vld [vmem:[%s136 + $0x28] sm:$0xff]
    %v143 = vld [vmem:[%s136 + $0x30] sm:$0xff]
    %v144 = vld [vmem:[%s136 + $0x38] sm:$0xff]
    %s145 = scalar_lea.vmem %s4, 64
    %v146 = vld [vmem:[%s145] sm:$0xff]
    %v147 = vld [vmem:[%s145 + $0x8] sm:$0xff]
    %v148 = vld [vmem:[%s145 + $0x10] sm:$0xff]
    %v149 = vld [vmem:[%s145 + $0x18] sm:$0xff]
    %v150 = vld [vmem:[%s145 + $0x20] sm:$0xff]
    %v151 = vld [vmem:[%s145 + $0x28] sm:$0xff]
    %v152 = vld [vmem:[%s145 + $0x30] sm:$0xff]
    %v153 = vld [vmem:[%s145 + $0x38] sm:$0xff]
    %155 = vset.pattern.permute.xlu0 0
    %156 = vperm.xlu0 %155, %v146
    %v157 = vpop.permute.xlu0 %156
    %160 = vset.pattern.permute.xlu0 0
    %161 = vperm.xlu0 %160, %v147
    %v162 = vpop.permute.xlu0 %161
    %165 = vset.pattern.permute.xlu0 0
    %166 = vperm.xlu0 %165, %v148
    %v167 = vpop.permute.xlu0 %166
    %170 = vset.pattern.permute.xlu0 0
    %171 = vperm.xlu0 %170, %v149
    %v172 = vpop.permute.xlu0 %171
    %175 = vset.pattern.permute.xlu0 0
    %176 = vperm.xlu0 %175, %v150
    %v177 = vpop.permute.xlu0 %176
    %180 = vset.pattern.permute.xlu0 0
    %181 = vperm.xlu0 %180, %v151
    %v182 = vpop.permute.xlu0 %181
    %185 = vset.pattern.permute.xlu0 0
    %186 = vperm.xlu0 %185, %v152
    %v187 = vpop.permute.xlu0 %186
    %190 = vset.pattern.permute.xlu0 0
    %191 = vperm.xlu0 %190, %v153
    %v192 = vpop.permute.xlu0 %191
    %vm194 = vcmask 64512
    %v196 = vsel %vm194, %v137, 0
    %v199 = vsel %vm194, %v138, 0
    %v202 = vsel %vm194, %v139, 0
    %v205 = vsel %vm194, %v140, 0
    %v208 = vsel %vm194, %v141, 0
    %v211 = vsel %vm194, %v142, 0
    %v214 = vsel %vm194, %v143, 0
    %v217 = vsel %vm194, %v144, 0
    %219 = vmatpush.msra.mxu0 0.0
    %220 = vmatpush.msra.mxu0 0.0
    %221 = vmatpush.msra.mxu0 0.0
    %222 = vmatpush.msra.mxu0 0.0
    %223 = vmatpush.msra.mxu0 0.0
    %224 = vmatpush.msra.mxu0 0.0
    %225 = vmatpush.msra.mxu0 0.0
    %226 = vmatpush.msra.mxu0 0.0
    %227 = vmatpush.msra.mxu0 0.0
    %228 = vmatpush.msra.mxu0 0.0
    %229 = vmatpush.msra.mxu0 0.0
    %230 = vmatpush.msra.mxu0 0.0
    %231 = vmatpush.msra.mxu0 0.0
    %232 = vmatpush.msra.mxu0 0.0
    %233 = vmatpush.msra.mxu0 0.0
    %234 = vmatpush.msra.mxu0 %v104
    %235 = vmatmul.f32.gmra.mxu0 %v196
    %v236 = vpop.f32.mrf.mxu0
    %v237 = vadd.f32 %v157, %v236
    %238 = vmatmul.f32.gmra.mxu0 %v199
    %v239 = vpop.f32.mrf.mxu0
    %v240 = vadd.f32 %v162, %v239
    %241 = vmatmul.f32.gmra.mxu0 %v202
    %v242 = vpop.f32.mrf.mxu0
    %v243 = vadd.f32 %v167, %v242
    %244 = vmatmul.f32.gmra.mxu0 %v205
    %v245 = vpop.f32.mrf.mxu0
    %v246 = vadd.f32 %v172, %v245
    %247 = vmatmul.f32.gmra.mxu0 %v208
    %v248 = vpop.f32.mrf.mxu0
    %v249 = vadd.f32 %v177, %v248
    %250 = vmatmul.f32.gmra.mxu0 %v211
    %v251 = vpop.f32.mrf.mxu0
    %v252 = vadd.f32 %v182, %v251
    %253 = vmatmul.f32.gmra.mxu0 %v214
    %v254 = vpop.f32.mrf.mxu0
    %v255 = vadd.f32 %v187, %v254
    %256 = vmatmul.f32.gmra.mxu0 %v217
    %v257 = vpop.f32.mrf.mxu0
    %v258 = vadd.f32 %v192, %v257
    %259 = vdwg.mxu0
    %260 = vmatpush.msra.mxu0 0.0
    %261 = vmatpush.msra.mxu0 0.0
    %262 = vmatpush.msra.mxu0 0.0
    %263 = vmatpush.msra.mxu0 0.0
    %264 = vmatpush.msra.mxu0 0.0
    %265 = vmatpush.msra.mxu0 0.0
    %266 = vmatpush.msra.mxu0 0.0
    %267 = vmatpush.msra.mxu0 0.0
    %268 = vmatpush.msra.mxu0 0.0
    %269 = vmatpush.msra.mxu0 0.0
    %270 = vmatpush.msra.mxu0 0.0
    %271 = vmatpush.msra.mxu0 0.0
    %272 = vmatpush.msra.mxu0 0.0
    %273 = vmatpush.msra.mxu0 0.0
    %274 = vmatpush.msra.mxu0 0.0
    %275 = vmatpush.msra.mxu0 %v105
    %276 = vmatmul.f32.gmra.mxu0 %v196
    %v277 = vpop.f32.mrf.mxu0
    %v278 = vadd.f32 %v157, %v277
    %279 = vmatmul.f32.gmra.mxu0 %v199
    %v280 = vpop.f32.mrf.mxu0
    %v281 = vadd.f32 %v162, %v280
    %282 = vmatmul.f32.gmra.mxu0 %v202
    %v283 = vpop.f32.mrf.mxu0
    %v284 = vadd.f32 %v167, %v283
    %285 = vmatmul.f32.gmra.mxu0 %v205
    %v286 = vpop.f32.mrf.mxu0
    %v287 = vadd.f32 %v172, %v286
    %288 = vmatmul.f32.gmra.mxu0 %v208
    %v289 = vpop.f32.mrf.mxu0
    %v290 = vadd.f32 %v177, %v289
    %291 = vmatmul.f32.gmra.mxu0 %v211
    %v292 = vpop.f32.mrf.mxu0
    %v293 = vadd.f32 %v182, %v292
    %294 = vmatmul.f32.gmra.mxu0 %v214
    %v295 = vpop.f32.mrf.mxu0
    %v296 = vadd.f32 %v187, %v295
    %297 = vmatmul.f32.gmra.mxu0 %v217
    %v298 = vpop.f32.mrf.mxu0
    %v299 = vadd.f32 %v192, %v298
    %300 = vdwg.mxu0
    %301 = vmatpush.msra.mxu0 0.0
    %302 = vmatpush.msra.mxu0 0.0
    %303 = vmatpush.msra.mxu0 0.0
    %304 = vmatpush.msra.mxu0 0.0
    %305 = vmatpush.msra.mxu0 0.0
    %306 = vmatpush.msra.mxu0 0.0
    %307 = vmatpush.msra.mxu0 0.0
    %308 = vmatpush.msra.mxu0 0.0
    %309 = vmatpush.msra.mxu0 0.0
    %310 = vmatpush.msra.mxu0 0.0
    %311 = vmatpush.msra.mxu0 0.0
    %312 = vmatpush.msra.mxu0 0.0
    %313 = vmatpush.msra.mxu0 0.0
    %314 = vmatpush.msra.mxu0 0.0
    %315 = vmatpush.msra.mxu0 0.0
    %316 = vmatpush.msra.mxu0 %v106
    %317 = vmatmul.f32.gmra.mxu0 %v196
    %v318 = vpop.f32.mrf.mxu0
    %v319 = vadd.f32 %v157, %v318
    %320 = vmatmul.f32.gmra.mxu0 %v199
    %v321 = vpop.f32.mrf.mxu0
    %v322 = vadd.f32 %v162, %v321
    %323 = vmatmul.f32.gmra.mxu0 %v202
    %v324 = vpop.f32.mrf.mxu0
    %v325 = vadd.f32 %v167, %v324
    %326 = vmatmul.f32.gmra.mxu0 %v205
    %v327 = vpop.f32.mrf.mxu0
    %v328 = vadd.f32 %v172, %v327
    %329 = vmatmul.f32.gmra.mxu0 %v208
    %v330 = vpop.f32.mrf.mxu0
    %v331 = vadd.f32 %v177, %v330
    %332 = vmatmul.f32.gmra.mxu0 %v211
    %v333 = vpop.f32.mrf.mxu0
    %v334 = vadd.f32 %v182, %v333
    %335 = vmatmul.f32.gmra.mxu0 %v214
    %v336 = vpop.f32.mrf.mxu0
    %v337 = vadd.f32 %v187, %v336
    %338 = vmatmul.f32.gmra.mxu0 %v217
    %v339 = vpop.f32.mrf.mxu0
    %v340 = vadd.f32 %v192, %v339
    %341 = vdwg.mxu0
    %342 = vmatpush.msra.mxu0 0.0
    %343 = vmatpush.msra.mxu0 0.0
    %344 = vmatpush.msra.mxu0 0.0
    %345 = vmatpush.msra.mxu0 0.0
    %346 = vmatpush.msra.mxu0 0.0
    %347 = vmatpush.msra.mxu0 0.0
    %348 = vmatpush.msra.mxu0 0.0
    %349 = vmatpush.msra.mxu0 0.0
    %350 = vmatpush.msra.mxu0 0.0
    %351 = vmatpush.msra.mxu0 0.0
    %352 = vmatpush.msra.mxu0 0.0
    %353 = vmatpush.msra.mxu0 0.0
    %354 = vmatpush.msra.mxu0 0.0
    %355 = vmatpush.msra.mxu0 0.0
    %356 = vmatpush.msra.mxu0 0.0
    %357 = vmatpush.msra.mxu0 %v107
    %358 = vmatmul.f32.gmra.mxu0 %v196
    %v359 = vpop.f32.mrf.mxu0
    %v360 = vadd.f32 %v157, %v359
    %361 = vmatmul.f32.gmra.mxu0 %v199
    %v362 = vpop.f32.mrf.mxu0
    %v363 = vadd.f32 %v162, %v362
    %364 = vmatmul.f32.gmra.mxu0 %v202
    %v365 = vpop.f32.mrf.mxu0
    %v366 = vadd.f32 %v167, %v365
    %367 = vmatmul.f32.gmra.mxu0 %v205
    %v368 = vpop.f32.mrf.mxu0
    %v369 = vadd.f32 %v172, %v368
    %370 = vmatmul.f32.gmra.mxu0 %v208
    %v371 = vpop.f32.mrf.mxu0
    %v372 = vadd.f32 %v177, %v371
    %373 = vmatmul.f32.gmra.mxu0 %v211
    %v374 = vpop.f32.mrf.mxu0
    %v375 = vadd.f32 %v182, %v374
    %376 = vmatmul.f32.gmra.mxu0 %v214
    %v377 = vpop.f32.mrf.mxu0
    %v378 = vadd.f32 %v187, %v377
    %379 = vmatmul.f32.gmra.mxu0 %v217
    %v380 = vpop.f32.mrf.mxu0
    %v381 = vadd.f32 %v192, %v380
    %382 = vdwg.mxu0
    %383 = vmatpush.msra.mxu0 0.0
    %384 = vmatpush.msra.mxu0 0.0
    %385 = vmatpush.msra.mxu0 0.0
    %386 = vmatpush.msra.mxu0 0.0
    %387 = vmatpush.msra.mxu0 0.0
    %388 = vmatpush.msra.mxu0 0.0
    %389 = vmatpush.msra.mxu0 0.0
    %390 = vmatpush.msra.mxu0 0.0
    %391 = vmatpush.msra.mxu0 0.0
    %392 = vmatpush.msra.mxu0 0.0
    %393 = vmatpush.msra.mxu0 0.0
    %394 = vmatpush.msra.mxu0 0.0
    %395 = vmatpush.msra.mxu0 0.0
    %396 = vmatpush.msra.mxu0 0.0
    %397 = vmatpush.msra.mxu0 0.0
    %398 = vmatpush.msra.mxu0 %v108
    %399 = vmatmul.f32.gmra.mxu0 %v196
    %v400 = vpop.f32.mrf.mxu0
    %v401 = vadd.f32 %v157, %v400
    %402 = vmatmul.f32.gmra.mxu0 %v199
    %v403 = vpop.f32.mrf.mxu0
    %v404 = vadd.f32 %v162, %v403
    %405 = vmatmul.f32.gmra.mxu0 %v202
    %v406 = vpop.f32.mrf.mxu0
    %v407 = vadd.f32 %v167, %v406
    %408 = vmatmul.f32.gmra.mxu0 %v205
    %v409 = vpop.f32.mrf.mxu0
    %v410 = vadd.f32 %v172, %v409
    %411 = vmatmul.f32.gmra.mxu0 %v208
    %v412 = vpop.f32.mrf.mxu0
    %v413 = vadd.f32 %v177, %v412
    %414 = vmatmul.f32.gmra.mxu0 %v211
    %v415 = vpop.f32.mrf.mxu0
    %v416 = vadd.f32 %v182, %v415
    %417 = vmatmul.f32.gmra.mxu0 %v214
    %v418 = vpop.f32.mrf.mxu0
    %v419 = vadd.f32 %v187, %v418
    %420 = vmatmul.f32.gmra.mxu0 %v217
    %v421 = vpop.f32.mrf.mxu0
    %v422 = vadd.f32 %v192, %v421
    %423 = vdwg.mxu0
    %424 = vmatpush.msra.mxu0 0.0
    %425 = vmatpush.msra.mxu0 0.0
    %426 = vmatpush.msra.mxu0 0.0
    %427 = vmatpush.msra.mxu0 0.0
    %428 = vmatpush.msra.mxu0 0.0
    %429 = vmatpush.msra.mxu0 0.0
    %430 = vmatpush.msra.mxu0 0.0
    %431 = vmatpush.msra.mxu0 0.0
    %432 = vmatpush.msra.mxu0 0.0
    %433 = vmatpush.msra.mxu0 0.0
    %434 = vmatpush.msra.mxu0 0.0
    %435 = vmatpush.msra.mxu0 0.0
    %436 = vmatpush.msra.mxu0 0.0
    %437 = vmatpush.msra.mxu0 0.0
    %438 = vmatpush.msra.mxu0 0.0
    %439 = vmatpush.msra.mxu0 %v109
    %440 = vmatmul.f32.gmra.mxu0 %v196
    %v441 = vpop.f32.mrf.mxu0
    %v442 = vadd.f32 %v157, %v441
    %443 = vmatmul.f32.gmra.mxu0 %v199
    %v444 = vpop.f32.mrf.mxu0
    %v445 = vadd.f32 %v162, %v444
    %446 = vmatmul.f32.gmra.mxu0 %v202
    %v447 = vpop.f32.mrf.mxu0
    %v448 = vadd.f32 %v167, %v447
    %449 = vmatmul.f32.gmra.mxu0 %v205
    %v450 = vpop.f32.mrf.mxu0
    %v451 = vadd.f32 %v172, %v450
    %452 = vmatmul.f32.gmra.mxu0 %v208
    %v453 = vpop.f32.mrf.mxu0
    %v454 = vadd.f32 %v177, %v453
    %455 = vmatmul.f32.gmra.mxu0 %v211
    %v456 = vpop.f32.mrf.mxu0
    %v457 = vadd.f32 %v182, %v456
    %458 = vmatmul.f32.gmra.mxu0 %v214
    %v459 = vpop.f32.mrf.mxu0
    %v460 = vadd.f32 %v187, %v459
    %461 = vmatmul.f32.gmra.mxu0 %v217
    %v462 = vpop.f32.mrf.mxu0
    %v463 = vadd.f32 %v192, %v462
    %464 = vdwg.mxu0
    %465 = vmatpush.msra.mxu0 0.0
    %466 = vmatpush.msra.mxu0 0.0
    %467 = vmatpush.msra.mxu0 0.0
    %468 = vmatpush.msra.mxu0 0.0
    %469 = vmatpush.msra.mxu0 0.0
    %470 = vmatpush.msra.mxu0 0.0
    %471 = vmatpush.msra.mxu0 0.0
    %472 = vmatpush.msra.mxu0 0.0
    %473 = vmatpush.msra.mxu0 0.0
    %474 = vmatpush.msra.mxu0 0.0
    %475 = vmatpush.msra.mxu0 0.0
    %476 = vmatpush.msra.mxu0 0.0
    %477 = vmatpush.msra.mxu0 0.0
    %478 = vmatpush.msra.mxu0 0.0
    %479 = vmatpush.msra.mxu0 0.0
    %480 = vmatpush.msra.mxu0 %v110
    %481 = vmatmul.f32.gmra.mxu0 %v196
    %v482 = vpop.f32.mrf.mxu0
    %v483 = vadd.f32 %v157, %v482
    %484 = vmatmul.f32.gmra.mxu0 %v199
    %v485 = vpop.f32.mrf.mxu0
    %v486 = vadd.f32 %v162, %v485
    %487 = vmatmul.f32.gmra.mxu0 %v202
    %v488 = vpop.f32.mrf.mxu0
    %v489 = vadd.f32 %v167, %v488
    %490 = vmatmul.f32.gmra.mxu0 %v205
    %v491 = vpop.f32.mrf.mxu0
    %v492 = vadd.f32 %v172, %v491
    %493 = vmatmul.f32.gmra.mxu0 %v208
    %v494 = vpop.f32.mrf.mxu0
    %v495 = vadd.f32 %v177, %v494
    %496 = vmatmul.f32.gmra.mxu0 %v211
    %v497 = vpop.f32.mrf.mxu0
    %v498 = vadd.f32 %v182, %v497
    %499 = vmatmul.f32.gmra.mxu0 %v214
    %v500 = vpop.f32.mrf.mxu0
    %v501 = vadd.f32 %v187, %v500
    %502 = vmatmul.f32.gmra.mxu0 %v217
    %v503 = vpop.f32.mrf.mxu0
    %v504 = vadd.f32 %v192, %v503
    %505 = vdwg.mxu0
    %506 = vmatpush.msra.mxu0 0.0
    %507 = vmatpush.msra.mxu0 0.0
    %508 = vmatpush.msra.mxu0 0.0
    %509 = vmatpush.msra.mxu0 0.0
    %510 = vmatpush.msra.mxu0 0.0
    %511 = vmatpush.msra.mxu0 0.0
    %512 = vmatpush.msra.mxu0 0.0
    %513 = vmatpush.msra.mxu0 0.0
    %514 = vmatpush.msra.mxu0 0.0
    %515 = vmatpush.msra.mxu0 0.0
    %516 = vmatpush.msra.mxu0 0.0
    %517 = vmatpush.msra.mxu0 0.0
    %518 = vmatpush.msra.mxu0 0.0
    %519 = vmatpush.msra.mxu0 0.0
    %520 = vmatpush.msra.mxu0 0.0
    %521 = vmatpush.msra.mxu0 %v111
    %522 = vmatmul.f32.gmra.mxu0 %v196
    %v523 = vpop.f32.mrf.mxu0
    %v524 = vadd.f32 %v157, %v523
    %525 = vmatmul.f32.gmra.mxu0 %v199
    %v526 = vpop.f32.mrf.mxu0
    %v527 = vadd.f32 %v162, %v526
    %528 = vmatmul.f32.gmra.mxu0 %v202
    %v529 = vpop.f32.mrf.mxu0
    %v530 = vadd.f32 %v167, %v529
    %531 = vmatmul.f32.gmra.mxu0 %v205
    %v532 = vpop.f32.mrf.mxu0
    %v533 = vadd.f32 %v172, %v532
    %534 = vmatmul.f32.gmra.mxu0 %v208
    %v535 = vpop.f32.mrf.mxu0
    %v536 = vadd.f32 %v177, %v535
    %537 = vmatmul.f32.gmra.mxu0 %v211
    %v538 = vpop.f32.mrf.mxu0
    %v539 = vadd.f32 %v182, %v538
    %540 = vmatmul.f32.gmra.mxu0 %v214
    %v541 = vpop.f32.mrf.mxu0
    %v542 = vadd.f32 %v187, %v541
    %543 = vmatmul.f32.gmra.mxu0 %v217
    %v544 = vpop.f32.mrf.mxu0
    %v545 = vadd.f32 %v192, %v544
    %546 = vdwg.mxu0
    %vm547 = vcmp.gt.f32.partialorder %v237, 0.0
    %vm548 = vcmp.gt.f32.partialorder %v278, 0.0
    %vm549 = vcmp.gt.f32.partialorder %v319, 0.0
    %vm550 = vcmp.gt.f32.partialorder %v360, 0.0
    %vm551 = vcmp.gt.f32.partialorder %v401, 0.0
    %vm552 = vcmp.gt.f32.partialorder %v442, 0.0
    %vm553 = vcmp.gt.f32.partialorder %v483, 0.0
    %vm554 = vcmp.gt.f32.partialorder %v524, 0.0
    %vm555 = vcmp.gt.f32.partialorder %v240, 0.0
    %vm556 = vcmp.gt.f32.partialorder %v281, 0.0
    %vm557 = vcmp.gt.f32.partialorder %v322, 0.0
    %vm558 = vcmp.gt.f32.partialorder %v363, 0.0
    %vm559 = vcmp.gt.f32.partialorder %v404, 0.0
    %vm560 = vcmp.gt.f32.partialorder %v445, 0.0
    %vm561 = vcmp.gt.f32.partialorder %v486, 0.0
    %vm562 = vcmp.gt.f32.partialorder %v527, 0.0
    %vm563 = vcmp.gt.f32.partialorder %v243, 0.0
    %vm564 = vcmp.gt.f32.partialorder %v284, 0.0
    %vm565 = vcmp.gt.f32.partialorder %v325, 0.0
    %vm566 = vcmp.gt.f32.partialorder %v366, 0.0
    %vm567 = vcmp.gt.f32.partialorder %v407, 0.0
    %vm568 = vcmp.gt.f32.partialorder %v448, 0.0
    %vm569 = vcmp.gt.f32.partialorder %v489, 0.0
    %vm570 = vcmp.gt.f32.partialorder %v530, 0.0
    %vm571 = vcmp.gt.f32.partialorder %v246, 0.0
    %vm572 = vcmp.gt.f32.partialorder %v287, 0.0
    %vm573 = vcmp.gt.f32.partialorder %v328, 0.0
    %vm574 = vcmp.gt.f32.partialorder %v369, 0.0
    %vm575 = vcmp.gt.f32.partialorder %v410, 0.0
    %vm576 = vcmp.gt.f32.partialorder %v451, 0.0
    %vm577 = vcmp.gt.f32.partialorder %v492, 0.0
    %vm578 = vcmp.gt.f32.partialorder %v533, 0.0
    %vm579 = vcmp.gt.f32.partialorder %v249, 0.0
    %vm580 = vcmp.gt.f32.partialorder %v290, 0.0
    %vm581 = vcmp.gt.f32.partialorder %v331, 0.0
    %vm582 = vcmp.gt.f32.partialorder %v372, 0.0
    %vm583 = vcmp.gt.f32.partialorder %v413, 0.0
    %vm584 = vcmp.gt.f32.partialorder %v454, 0.0
    %vm585 = vcmp.gt.f32.partialorder %v495, 0.0
    %vm586 = vcmp.gt.f32.partialorder %v536, 0.0
    %vm587 = vcmp.gt.f32.partialorder %v252, 0.0
    %vm588 = vcmp.gt.f32.partialorder %v293, 0.0
    %vm589 = vcmp.gt.f32.partialorder %v334, 0.0
    %vm590 = vcmp.gt.f32.partialorder %v375, 0.0
    %vm591 = vcmp.gt.f32.partialorder %v416, 0.0
    %vm592 = vcmp.gt.f32.partialorder %v457, 0.0
    %vm593 = vcmp.gt.f32.partialorder %v498, 0.0
    %vm594 = vcmp.gt.f32.partialorder %v539, 0.0
    %vm595 = vcmp.gt.f32.partialorder %v255, 0.0
    %vm596 = vcmp.gt.f32.partialorder %v296, 0.0
    %vm597 = vcmp.gt.f32.partialorder %v337, 0.0
    %vm598 = vcmp.gt.f32.partialorder %v378, 0.0
    %vm599 = vcmp.gt.f32.partialorder %v419, 0.0
    %vm600 = vcmp.gt.f32.partialorder %v460, 0.0
    %vm601 = vcmp.gt.f32.partialorder %v501, 0.0
    %vm602 = vcmp.gt.f32.partialorder %v542, 0.0
    %vm603 = vcmp.gt.f32.partialorder %v258, 0.0
    %vm604 = vcmp.gt.f32.partialorder %v299, 0.0
    %vm605 = vcmp.gt.f32.partialorder %v340, 0.0
    %vm606 = vcmp.gt.f32.partialorder %v381, 0.0
    %vm607 = vcmp.gt.f32.partialorder %v422, 0.0
    %vm608 = vcmp.gt.f32.partialorder %v463, 0.0
    %vm609 = vcmp.gt.f32.partialorder %v504, 0.0
    %vm610 = vcmp.gt.f32.partialorder %v545, 0.0
    %v611 = vmul.f32 %v237, 0.01
    %v612 = vmul.f32 %v278, 0.01
    %v613 = vmul.f32 %v319, 0.01
    %v614 = vmul.f32 %v360, 0.01
    %v615 = vmul.f32 %v401, 0.01
    %v616 = vmul.f32 %v442, 0.01
    %v617 = vmul.f32 %v483, 0.01
    %v618 = vmul.f32 %v524, 0.01
    %v619 = vmul.f32 %v240, 0.01
    %v620 = vmul.f32 %v281, 0.01
    %v621 = vmul.f32 %v322, 0.01
    %v622 = vmul.f32 %v363, 0.01
    %v623 = vmul.f32 %v404, 0.01
    %v624 = vmul.f32 %v445, 0.01
    %v625 = vmul.f32 %v486, 0.01
    %v626 = vmul.f32 %v527, 0.01
    %v627 = vmul.f32 %v243, 0.01
    %v628 = vmul.f32 %v284, 0.01
    %v629 = vmul.f32 %v325, 0.01
    %v630 = vmul.f32 %v366, 0.01
    %v631 = vmul.f32 %v407, 0.01
    %v632 = vmul.f32 %v448, 0.01
    %v633 = vmul.f32 %v489, 0.01
    %v634 = vmul.f32 %v530, 0.01
    %v635 = vmul.f32 %v246, 0.01
    %v636 = vmul.f32 %v287, 0.01
    %v637 = vmul.f32 %v328, 0.01
    %v638 = vmul.f32 %v369, 0.01
    %v639 = vmul.f32 %v410, 0.01
    %v640 = vmul.f32 %v451, 0.01
    %v641 = vmul.f32 %v492, 0.01
    %v642 = vmul.f32 %v533, 0.01
    %v643 = vmul.f32 %v249, 0.01
    %v644 = vmul.f32 %v290, 0.01
    %v645 = vmul.f32 %v331, 0.01
    %v646 = vmul.f32 %v372, 0.01
    %v647 = vmul.f32 %v413, 0.01
    %v648 = vmul.f32 %v454, 0.01
    %v649 = vmul.f32 %v495, 0.01
    %v650 = vmul.f32 %v536, 0.01
    %v651 = vmul.f32 %v252, 0.01
    %v652 = vmul.f32 %v293, 0.01
    %v653 = vmul.f32 %v334, 0.01
    %v654 = vmul.f32 %v375, 0.01
    %v655 = vmul.f32 %v416, 0.01
    %v656 = vmul.f32 %v457, 0.01
    %v657 = vmul.f32 %v498, 0.01
    %v658 = vmul.f32 %v539, 0.01
    %v659 = vmul.f32 %v255, 0.01
    %v660 = vmul.f32 %v296, 0.01
    %v661 = vmul.f32 %v337, 0.01
    %v662 = vmul.f32 %v378, 0.01
    %v663 = vmul.f32 %v419, 0.01
    %v664 = vmul.f32 %v460, 0.01
    %v665 = vmul.f32 %v501, 0.01
    %v666 = vmul.f32 %v542, 0.01
    %v667 = vmul.f32 %v258, 0.01
    %v668 = vmul.f32 %v299, 0.01
    %v669 = vmul.f32 %v340, 0.01
    %v670 = vmul.f32 %v381, 0.01
    %v671 = vmul.f32 %v422, 0.01
    %v672 = vmul.f32 %v463, 0.01
    %v673 = vmul.f32 %v504, 0.01
    %v674 = vmul.f32 %v545, 0.01
    %v675 = vsel %vm547, %v237, %v611
    %v676 = vsel %vm548, %v278, %v612
    %v677 = vsel %vm549, %v319, %v613
    %v678 = vsel %vm550, %v360, %v614
    %v679 = vsel %vm551, %v401, %v615
    %v680 = vsel %vm552, %v442, %v616
    %v681 = vsel %vm553, %v483, %v617
    %v682 = vsel %vm554, %v524, %v618
    %v683 = vsel %vm555, %v240, %v619
    %v684 = vsel %vm556, %v281, %v620
    %v685 = vsel %vm557, %v322, %v621
    %v686 = vsel %vm558, %v363, %v622
    %v687 = vsel %vm559, %v404, %v623
    %v688 = vsel %vm560, %v445, %v624
    %v689 = vsel %vm561, %v486, %v625
    %v690 = vsel %vm562, %v527, %v626
    %v691 = vsel %vm563, %v243, %v627
    %v692 = vsel %vm564, %v284, %v628
    %v693 = vsel %vm565, %v325, %v629
    %v694 = vsel %vm566, %v366, %v630
    %v695 = vsel %vm567, %v407, %v631
    %v696 = vsel %vm568, %v448, %v632
    %v697 = vsel %vm569, %v489, %v633
    %v698 = vsel %vm570, %v530, %v634
    %v699 = vsel %vm571, %v246, %v635
    %v700 = vsel %vm572, %v287, %v636
    %v701 = vsel %vm573, %v328, %v637
    %v702 = vsel %vm574, %v369, %v638
    %v703 = vsel %vm575, %v410, %v639
    %v704 = vsel %vm576, %v451, %v640
    %v705 = vsel %vm577, %v492, %v641
    %v706 = vsel %vm578, %v533, %v642
    %v707 = vsel %vm579, %v249, %v643
    %v708 = vsel %vm580, %v290, %v644
    %v709 = vsel %vm581, %v331, %v645
    %v710 = vsel %vm582, %v372, %v646
    %v711 = vsel %vm583, %v413, %v647
    %v712 = vsel %vm584, %v454, %v648
    %v713 = vsel %vm585, %v495, %v649
    %v714 = vsel %vm586, %v536, %v650
    %v715 = vsel %vm587, %v252, %v651
    %v716 = vsel %vm588, %v293, %v652
    %v717 = vsel %vm589, %v334, %v653
    %v718 = vsel %vm590, %v375, %v654
    %v719 = vsel %vm591, %v416, %v655
    %v720 = vsel %vm592, %v457, %v656
    %v721 = vsel %vm593, %v498, %v657
    %v722 = vsel %vm594, %v539, %v658
    %v723 = vsel %vm595, %v255, %v659
    %v724 = vsel %vm596, %v296, %v660
    %v725 = vsel %vm597, %v337, %v661
    %v726 = vsel %vm598, %v378, %v662
    %v727 = vsel %vm599, %v419, %v663
    %v728 = vsel %vm600, %v460, %v664
    %v729 = vsel %vm601, %v501, %v665
    %v730 = vsel %vm602, %v542, %v666
    %v731 = vsel %vm603, %v258, %v667
    %v732 = vsel %vm604, %v299, %v668
    %v733 = vsel %vm605, %v340, %v669
    %v734 = vsel %vm606, %v381, %v670
    %v735 = vsel %vm607, %v422, %v671
    %v736 = vsel %vm608, %v463, %v672
    %v737 = vsel %vm609, %v504, %v673
    %v738 = vsel %vm610, %v545, %v674
    %s739 = scalar_lea.vmem %s5, 64
    %v740 = vld [vmem:[%s739] sm:$0xff]
    %v741 = vld [vmem:[%s739 + $0x8] sm:$0xff]
    %v742 = vld [vmem:[%s739 + $0x10] sm:$0xff]
    %v743 = vld [vmem:[%s739 + $0x18] sm:$0xff]
    %v744 = vld [vmem:[%s739 + $0x20] sm:$0xff]
    %v745 = vld [vmem:[%s739 + $0x28] sm:$0xff]
    %v746 = vld [vmem:[%s739 + $0x30] sm:$0xff]
    %v747 = vld [vmem:[%s739 + $0x38] sm:$0xff]
    %s748 = scalar_lea.vmem %s6, 64
    %v749 = vld [vmem:[%s748] sm:$0xff]
    %v750 = vld [vmem:[%s748 + $0x8] sm:$0xff]
    %v751 = vld [vmem:[%s748 + $0x10] sm:$0xff]
    %v752 = vld [vmem:[%s748 + $0x18] sm:$0xff]
    %v753 = vld [vmem:[%s748 + $0x20] sm:$0xff]
    %v754 = vld [vmem:[%s748 + $0x28] sm:$0xff]
    %v755 = vld [vmem:[%s748 + $0x30] sm:$0xff]
    %v756 = vld [vmem:[%s748 + $0x38] sm:$0xff]
    %758 = vset.pattern.permute.xlu0 0
    %759 = vperm.xlu0 %758, %v749
    %v760 = vpop.permute.xlu0 %759
    %763 = vset.pattern.permute.xlu0 0
    %764 = vperm.xlu0 %763, %v750
    %v765 = vpop.permute.xlu0 %764
    %768 = vset.pattern.permute.xlu0 0
    %769 = vperm.xlu0 %768, %v751
    %v770 = vpop.permute.xlu0 %769
    %773 = vset.pattern.permute.xlu0 0
    %774 = vperm.xlu0 %773, %v752
    %v775 = vpop.permute.xlu0 %774
    %778 = vset.pattern.permute.xlu0 0
    %779 = vperm.xlu0 %778, %v753
    %v780 = vpop.permute.xlu0 %779
    %783 = vset.pattern.permute.xlu0 0
    %784 = vperm.xlu0 %783, %v754
    %v785 = vpop.permute.xlu0 %784
    %788 = vset.pattern.permute.xlu0 0
    %789 = vperm.xlu0 %788, %v755
    %v790 = vpop.permute.xlu0 %789
    %793 = vset.pattern.permute.xlu0 0
    %794 = vperm.xlu0 %793, %v756
    %v795 = vpop.permute.xlu0 %794
    %vm797 = vcmask 523264
    %v799 = vsel %vm797, %v740, 0
    %v802 = vsel %vm797, %v741, 0
    %v805 = vsel %vm797, %v742, 0
    %v808 = vsel %vm797, %v743, 0
    %v811 = vsel %vm797, %v744, 0
    %v814 = vsel %vm797, %v745, 0
    %v817 = vsel %vm797, %v746, 0
    %v820 = vsel %vm797, %v747, 0
    %822 = vmatpush.msra.mxu0 0.0
    %823 = vmatpush.msra.mxu0 0.0
    %824 = vmatpush.msra.mxu0 0.0
    %825 = vmatpush.msra.mxu0 0.0
    %826 = vmatpush.msra.mxu0 0.0
    %827 = vmatpush.msra.mxu0 0.0
    %828 = vmatpush.msra.mxu0 0.0
    %829 = vmatpush.msra.mxu0 0.0
    %830 = vmatpush.msra.mxu0 %v731
    %831 = vmatpush.msra.mxu0 %v723
    %832 = vmatpush.msra.mxu0 %v715
    %833 = vmatpush.msra.mxu0 %v707
    %834 = vmatpush.msra.mxu0 %v699
    %835 = vmatpush.msra.mxu0 %v691
    %836 = vmatpush.msra.mxu0 %v683
    %837 = vmatpush.msra.mxu0 %v675
    %838 = vmatmul.f32.gmra.mxu0 %v799
    %v839 = vpop.f32.mrf.mxu0
    %v840 = vadd.f32 %v760, %v839
    %841 = vmatmul.f32.gmra.mxu0 %v802
    %v842 = vpop.f32.mrf.mxu0
    %v843 = vadd.f32 %v765, %v842
    %844 = vmatmul.f32.gmra.mxu0 %v805
    %v845 = vpop.f32.mrf.mxu0
    %v846 = vadd.f32 %v770, %v845
    %847 = vmatmul.f32.gmra.mxu0 %v808
    %v848 = vpop.f32.mrf.mxu0
    %v849 = vadd.f32 %v775, %v848
    %850 = vmatmul.f32.gmra.mxu0 %v811
    %v851 = vpop.f32.mrf.mxu0
    %v852 = vadd.f32 %v780, %v851
    %853 = vmatmul.f32.gmra.mxu0 %v814
    %v854 = vpop.f32.mrf.mxu0
    %v855 = vadd.f32 %v785, %v854
    %856 = vmatmul.f32.gmra.mxu0 %v817
    %v857 = vpop.f32.mrf.mxu0
    %v858 = vadd.f32 %v790, %v857
    %859 = vmatmul.f32.gmra.mxu0 %v820
    %v860 = vpop.f32.mrf.mxu0
    %v861 = vadd.f32 %v795, %v860
    %862 = vdwg.mxu0
    %863 = vmatpush.msra.mxu0 0.0
    %864 = vmatpush.msra.mxu0 0.0
    %865 = vmatpush.msra.mxu0 0.0
    %866 = vmatpush.msra.mxu0 0.0
    %867 = vmatpush.msra.mxu0 0.0
    %868 = vmatpush.msra.mxu0 0.0
    %869 = vmatpush.msra.mxu0 0.0
    %870 = vmatpush.msra.mxu0 0.0
    %871 = vmatpush.msra.mxu0 %v732
    %872 = vmatpush.msra.mxu0 %v724
    %873 = vmatpush.msra.mxu0 %v716
    %874 = vmatpush.msra.mxu0 %v708
    %875 = vmatpush.msra.mxu0 %v700
    %876 = vmatpush.msra.mxu0 %v692
    %877 = vmatpush.msra.mxu0 %v684
    %878 = vmatpush.msra.mxu0 %v676
    %879 = vmatmul.f32.gmra.mxu0 %v799
    %v880 = vpop.f32.mrf.mxu0
    %v881 = vadd.f32 %v760, %v880
    %882 = vmatmul.f32.gmra.mxu0 %v802
    %v883 = vpop.f32.mrf.mxu0
    %v884 = vadd.f32 %v765, %v883
    %885 = vmatmul.f32.gmra.mxu0 %v805
    %v886 = vpop.f32.mrf.mxu0
    %v887 = vadd.f32 %v770, %v886
    %888 = vmatmul.f32.gmra.mxu0 %v808
    %v889 = vpop.f32.mrf.mxu0
    %v890 = vadd.f32 %v775, %v889
    %891 = vmatmul.f32.gmra.mxu0 %v811
    %v892 = vpop.f32.mrf.mxu0
    %v893 = vadd.f32 %v780, %v892
    %894 = vmatmul.f32.gmra.mxu0 %v814
    %v895 = vpop.f32.mrf.mxu0
    %v896 = vadd.f32 %v785, %v895
    %897 = vmatmul.f32.gmra.mxu0 %v817
    %v898 = vpop.f32.mrf.mxu0
    %v899 = vadd.f32 %v790, %v898
    %900 = vmatmul.f32.gmra.mxu0 %v820
    %v901 = vpop.f32.mrf.mxu0
    %v902 = vadd.f32 %v795, %v901
    %903 = vdwg.mxu0
    %904 = vmatpush.msra.mxu0 0.0
    %905 = vmatpush.msra.mxu0 0.0
    %906 = vmatpush.msra.mxu0 0.0
    %907 = vmatpush.msra.mxu0 0.0
    %908 = vmatpush.msra.mxu0 0.0
    %909 = vmatpush.msra.mxu0 0.0
    %910 = vmatpush.msra.mxu0 0.0
    %911 = vmatpush.msra.mxu0 0.0
    %912 = vmatpush.msra.mxu0 %v733
    %913 = vmatpush.msra.mxu0 %v725
    %914 = vmatpush.msra.mxu0 %v717
    %915 = vmatpush.msra.mxu0 %v709
    %916 = vmatpush.msra.mxu0 %v701
    %917 = vmatpush.msra.mxu0 %v693
    %918 = vmatpush.msra.mxu0 %v685
    %919 = vmatpush.msra.mxu0 %v677
    %920 = vmatmul.f32.gmra.mxu0 %v799
    %v921 = vpop.f32.mrf.mxu0
    %v922 = vadd.f32 %v760, %v921
    %923 = vmatmul.f32.gmra.mxu0 %v802
    %v924 = vpop.f32.mrf.mxu0
    %v925 = vadd.f32 %v765, %v924
    %926 = vmatmul.f32.gmra.mxu0 %v805
    %v927 = vpop.f32.mrf.mxu0
    %v928 = vadd.f32 %v770, %v927
    %929 = vmatmul.f32.gmra.mxu0 %v808
    %v930 = vpop.f32.mrf.mxu0
    %v931 = vadd.f32 %v775, %v930
    %932 = vmatmul.f32.gmra.mxu0 %v811
    %v933 = vpop.f32.mrf.mxu0
    %v934 = vadd.f32 %v780, %v933
    %935 = vmatmul.f32.gmra.mxu0 %v814
    %v936 = vpop.f32.mrf.mxu0
    %v937 = vadd.f32 %v785, %v936
    %938 = vmatmul.f32.gmra.mxu0 %v817
    %v939 = vpop.f32.mrf.mxu0
    %v940 = vadd.f32 %v790, %v939
    %941 = vmatmul.f32.gmra.mxu0 %v820
    %v942 = vpop.f32.mrf.mxu0
    %v943 = vadd.f32 %v795, %v942
    %944 = vdwg.mxu0
    %945 = vmatpush.msra.mxu0 0.0
    %946 = vmatpush.msra.mxu0 0.0
    %947 = vmatpush.msra.mxu0 0.0
    %948 = vmatpush.msra.mxu0 0.0
    %949 = vmatpush.msra.mxu0 0.0
    %950 = vmatpush.msra.mxu0 0.0
    %951 = vmatpush.msra.mxu0 0.0
    %952 = vmatpush.msra.mxu0 0.0
    %953 = vmatpush.msra.mxu0 %v734
    %954 = vmatpush.msra.mxu0 %v726
    %955 = vmatpush.msra.mxu0 %v718
    %956 = vmatpush.msra.mxu0 %v710
    %957 = vmatpush.msra.mxu0 %v702
    %958 = vmatpush.msra.mxu0 %v694
    %959 = vmatpush.msra.mxu0 %v686
    %960 = vmatpush.msra.mxu0 %v678
    %961 = vmatmul.f32.gmra.mxu0 %v799
    %v962 = vpop.f32.mrf.mxu0
    %v963 = vadd.f32 %v760, %v962
    %964 = vmatmul.f32.gmra.mxu0 %v802
    %v965 = vpop.f32.mrf.mxu0
    %v966 = vadd.f32 %v765, %v965
    %967 = vmatmul.f32.gmra.mxu0 %v805
    %v968 = vpop.f32.mrf.mxu0
    %v969 = vadd.f32 %v770, %v968
    %970 = vmatmul.f32.gmra.mxu0 %v808
    %v971 = vpop.f32.mrf.mxu0
    %v972 = vadd.f32 %v775, %v971
    %973 = vmatmul.f32.gmra.mxu0 %v811
    %v974 = vpop.f32.mrf.mxu0
    %v975 = vadd.f32 %v780, %v974
    %976 = vmatmul.f32.gmra.mxu0 %v814
    %v977 = vpop.f32.mrf.mxu0
    %v978 = vadd.f32 %v785, %v977
    %979 = vmatmul.f32.gmra.mxu0 %v817
    %v980 = vpop.f32.mrf.mxu0
    %v981 = vadd.f32 %v790, %v980
    %982 = vmatmul.f32.gmra.mxu0 %v820
    %v983 = vpop.f32.mrf.mxu0
    %v984 = vadd.f32 %v795, %v983
    %985 = vdwg.mxu0
    %986 = vmatpush.msra.mxu0 0.0
    %987 = vmatpush.msra.mxu0 0.0
    %988 = vmatpush.msra.mxu0 0.0
    %989 = vmatpush.msra.mxu0 0.0
    %990 = vmatpush.msra.mxu0 0.0
    %991 = vmatpush.msra.mxu0 0.0
    %992 = vmatpush.msra.mxu0 0.0
    %993 = vmatpush.msra.mxu0 0.0
    %994 = vmatpush.msra.mxu0 %v735
    %995 = vmatpush.msra.mxu0 %v727
    %996 = vmatpush.msra.mxu0 %v719
    %997 = vmatpush.msra.mxu0 %v711
    %998 = vmatpush.msra.mxu0 %v703
    %999 = vmatpush.msra.mxu0 %v695
    %1000 = vmatpush.msra.mxu0 %v687
    %1001 = vmatpush.msra.mxu0 %v679
    %1002 = vmatmul.f32.gmra.mxu0 %v799
    %v1003 = vpop.f32.mrf.mxu0
    %v1004 = vadd.f32 %v760, %v1003
    %1005 = vmatmul.f32.gmra.mxu0 %v802
    %v1006 = vpop.f32.mrf.mxu0
    %v1007 = vadd.f32 %v765, %v1006
    %1008 = vmatmul.f32.gmra.mxu0 %v805
    %v1009 = vpop.f32.mrf.mxu0
    %v1010 = vadd.f32 %v770, %v1009
    %1011 = vmatmul.f32.gmra.mxu0 %v808
    %v1012 = vpop.f32.mrf.mxu0
    %v1013 = vadd.f32 %v775, %v1012
    %1014 = vmatmul.f32.gmra.mxu0 %v811
    %v1015 = vpop.f32.mrf.mxu0
    %v1016 = vadd.f32 %v780, %v1015
    %1017 = vmatmul.f32.gmra.mxu0 %v814
    %v1018 = vpop.f32.mrf.mxu0
    %v1019 = vadd.f32 %v785, %v1018
    %1020 = vmatmul.f32.gmra.mxu0 %v817
    %v1021 = vpop.f32.mrf.mxu0
    %v1022 = vadd.f32 %v790, %v1021
    %1023 = vmatmul.f32.gmra.mxu0 %v820
    %v1024 = vpop.f32.mrf.mxu0
    %v1025 = vadd.f32 %v795, %v1024
    %1026 = vdwg.mxu0
    %1027 = vmatpush.msra.mxu0 0.0
    %1028 = vmatpush.msra.mxu0 0.0
    %1029 = vmatpush.msra.mxu0 0.0
    %1030 = vmatpush.msra.mxu0 0.0
    %1031 = vmatpush.msra.mxu0 0.0
    %1032 = vmatpush.msra.mxu0 0.0
    %1033 = vmatpush.msra.mxu0 0.0
    %1034 = vmatpush.msra.mxu0 0.0
    %1035 = vmatpush.msra.mxu0 %v736
    %1036 = vmatpush.msra.mxu0 %v728
    %1037 = vmatpush.msra.mxu0 %v720
    %1038 = vmatpush.msra.mxu0 %v712
    %1039 = vmatpush.msra.mxu0 %v704
    %1040 = vmatpush.msra.mxu0 %v696
    %1041 = vmatpush.msra.mxu0 %v688
    %1042 = vmatpush.msra.mxu0 %v680
    %1043 = vmatmul.f32.gmra.mxu0 %v799
    %v1044 = vpop.f32.mrf.mxu0
    %v1045 = vadd.f32 %v760, %v1044
    %1046 = vmatmul.f32.gmra.mxu0 %v802
    %v1047 = vpop.f32.mrf.mxu0
    %v1048 = vadd.f32 %v765, %v1047
    %1049 = vmatmul.f32.gmra.mxu0 %v805
    %v1050 = vpop.f32.mrf.mxu0
    %v1051 = vadd.f32 %v770, %v1050
    %1052 = vmatmul.f32.gmra.mxu0 %v808
    %v1053 = vpop.f32.mrf.mxu0
    %v1054 = vadd.f32 %v775, %v1053
    %1055 = vmatmul.f32.gmra.mxu0 %v811
    %v1056 = vpop.f32.mrf.mxu0
    %v1057 = vadd.f32 %v780, %v1056
    %1058 = vmatmul.f32.gmra.mxu0 %v814
    %v1059 = vpop.f32.mrf.mxu0
    %v1060 = vadd.f32 %v785, %v1059
    %1061 = vmatmul.f32.gmra.mxu0 %v817
    %v1062 = vpop.f32.mrf.mxu0
    %v1063 = vadd.f32 %v790, %v1062
    %1064 = vmatmul.f32.gmra.mxu0 %v820
    %v1065 = vpop.f32.mrf.mxu0
    %v1066 = vadd.f32 %v795, %v1065
    %1067 = vdwg.mxu0
    %1068 = vmatpush.msra.mxu0 0.0
    %1069 = vmatpush.msra.mxu0 0.0
    %1070 = vmatpush.msra.mxu0 0.0
    %1071 = vmatpush.msra.mxu0 0.0
    %1072 = vmatpush.msra.mxu0 0.0
    %1073 = vmatpush.msra.mxu0 0.0
    %1074 = vmatpush.msra.mxu0 0.0
    %1075 = vmatpush.msra.mxu0 0.0
    %1076 = vmatpush.msra.mxu0 %v737
    %1077 = vmatpush.msra.mxu0 %v729
    %1078 = vmatpush.msra.mxu0 %v721
    %1079 = vmatpush.msra.mxu0 %v713
    %1080 = vmatpush.msra.mxu0 %v705
    %1081 = vmatpush.msra.mxu0 %v697
    %1082 = vmatpush.msra.mxu0 %v689
    %1083 = vmatpush.msra.mxu0 %v681
    %1084 = vmatmul.f32.gmra.mxu0 %v799
    %v1085 = vpop.f32.mrf.mxu0
    %v1086 = vadd.f32 %v760, %v1085
    %1087 = vmatmul.f32.gmra.mxu0 %v802
    %v1088 = vpop.f32.mrf.mxu0
    %v1089 = vadd.f32 %v765, %v1088
    %1090 = vmatmul.f32.gmra.mxu0 %v805
    %v1091 = vpop.f32.mrf.mxu0
    %v1092 = vadd.f32 %v770, %v1091
    %1093 = vmatmul.f32.gmra.mxu0 %v808
    %v1094 = vpop.f32.mrf.mxu0
    %v1095 = vadd.f32 %v775, %v1094
    %1096 = vmatmul.f32.gmra.mxu0 %v811
    %v1097 = vpop.f32.mrf.mxu0
    %v1098 = vadd.f32 %v780, %v1097
    %1099 = vmatmul.f32.gmra.mxu0 %v814
    %v1100 = vpop.f32.mrf.mxu0
    %v1101 = vadd.f32 %v785, %v1100
    %1102 = vmatmul.f32.gmra.mxu0 %v817
    %v1103 = vpop.f32.mrf.mxu0
    %v1104 = vadd.f32 %v790, %v1103
    %1105 = vmatmul.f32.gmra.mxu0 %v820
    %v1106 = vpop.f32.mrf.mxu0
    %v1107 = vadd.f32 %v795, %v1106
    %1108 = vdwg.mxu0
    %1109 = vmatpush.msra.mxu0 0.0
    %1110 = vmatpush.msra.mxu0 0.0
    %1111 = vmatpush.msra.mxu0 0.0
    %1112 = vmatpush.msra.mxu0 0.0
    %1113 = vmatpush.msra.mxu0 0.0
    %1114 = vmatpush.msra.mxu0 0.0
    %1115 = vmatpush.msra.mxu0 0.0
    %1116 = vmatpush.msra.mxu0 0.0
    %1117 = vmatpush.msra.mxu0 %v738
    %1118 = vmatpush.msra.mxu0 %v730
    %1119 = vmatpush.msra.mxu0 %v722
    %1120 = vmatpush.msra.mxu0 %v714
    %1121 = vmatpush.msra.mxu0 %v706
    %1122 = vmatpush.msra.mxu0 %v698
    %1123 = vmatpush.msra.mxu0 %v690
    %1124 = vmatpush.msra.mxu0 %v682
    %1125 = vmatmul.f32.gmra.mxu0 %v799
    %v1126 = vpop.f32.mrf.mxu0
    %v1127 = vadd.f32 %v760, %v1126
    %1128 = vmatmul.f32.gmra.mxu0 %v802
    %v1129 = vpop.f32.mrf.mxu0
    %v1130 = vadd.f32 %v765, %v1129
    %1131 = vmatmul.f32.gmra.mxu0 %v805
    %v1132 = vpop.f32.mrf.mxu0
    %v1133 = vadd.f32 %v770, %v1132
    %1134 = vmatmul.f32.gmra.mxu0 %v808
    %v1135 = vpop.f32.mrf.mxu0
    %v1136 = vadd.f32 %v775, %v1135
    %1137 = vmatmul.f32.gmra.mxu0 %v811
    %v1138 = vpop.f32.mrf.mxu0
    %v1139 = vadd.f32 %v780, %v1138
    %1140 = vmatmul.f32.gmra.mxu0 %v814
    %v1141 = vpop.f32.mrf.mxu0
    %v1142 = vadd.f32 %v785, %v1141
    %1143 = vmatmul.f32.gmra.mxu0 %v817
    %v1144 = vpop.f32.mrf.mxu0
    %v1145 = vadd.f32 %v790, %v1144
    %1146 = vmatmul.f32.gmra.mxu0 %v820
    %v1147 = vpop.f32.mrf.mxu0
    %v1148 = vadd.f32 %v795, %v1147
    %1149 = vdwg.mxu0
    %vm1150 = vcmp.gt.f32.partialorder %v840, 0.0
    %vm1151 = vcmp.gt.f32.partialorder %v881, 0.0
    %vm1152 = vcmp.gt.f32.partialorder %v922, 0.0
    %vm1153 = vcmp.gt.f32.partialorder %v963, 0.0
    %vm1154 = vcmp.gt.f32.partialorder %v1004, 0.0
    %vm1155 = vcmp.gt.f32.partialorder %v1045, 0.0
    %vm1156 = vcmp.gt.f32.partialorder %v1086, 0.0
    %vm1157 = vcmp.gt.f32.partialorder %v1127, 0.0
    %vm1158 = vcmp.gt.f32.partialorder %v843, 0.0
    %vm1159 = vcmp.gt.f32.partialorder %v884, 0.0
    %vm1160 = vcmp.gt.f32.partialorder %v925, 0.0
    %vm1161 = vcmp.gt.f32.partialorder %v966, 0.0
    %vm1162 = vcmp.gt.f32.partialorder %v1007, 0.0
    %vm1163 = vcmp.gt.f32.partialorder %v1048, 0.0
    %vm1164 = vcmp.gt.f32.partialorder %v1089, 0.0
    %vm1165 = vcmp.gt.f32.partialorder %v1130, 0.0
    %vm1166 = vcmp.gt.f32.partialorder %v846, 0.0
    %vm1167 = vcmp.gt.f32.partialorder %v887, 0.0
    %vm1168 = vcmp.gt.f32.partialorder %v928, 0.0
    %vm1169 = vcmp.gt.f32.partialorder %v969, 0.0
    %vm1170 = vcmp.gt.f32.partialorder %v1010, 0.0
    %vm1171 = vcmp.gt.f32.partialorder %v1051, 0.0
    %vm1172 = vcmp.gt.f32.partialorder %v1092, 0.0
    %vm1173 = vcmp.gt.f32.partialorder %v1133, 0.0
    %vm1174 = vcmp.gt.f32.partialorder %v849, 0.0
    %vm1175 = vcmp.gt.f32.partialorder %v890, 0.0
    %vm1176 = vcmp.gt.f32.partialorder %v931, 0.0
    %vm1177 = vcmp.gt.f32.partialorder %v972, 0.0
    %vm1178 = vcmp.gt.f32.partialorder %v1013, 0.0
    %vm1179 = vcmp.gt.f32.partialorder %v1054, 0.0
    %vm1180 = vcmp.gt.f32.partialorder %v1095, 0.0
    %vm1181 = vcmp.gt.f32.partialorder %v1136, 0.0
    %vm1182 = vcmp.gt.f32.partialorder %v852, 0.0
    %vm1183 = vcmp.gt.f32.partialorder %v893, 0.0
    %vm1184 = vcmp.gt.f32.partialorder %v934, 0.0
    %vm1185 = vcmp.gt.f32.partialorder %v975, 0.0
    %vm1186 = vcmp.gt.f32.partialorder %v1016, 0.0
    %vm1187 = vcmp.gt.f32.partialorder %v1057, 0.0
    %vm1188 = vcmp.gt.f32.partialorder %v1098, 0.0
    %vm1189 = vcmp.gt.f32.partialorder %v1139, 0.0
    %vm1190 = vcmp.gt.f32.partialorder %v855, 0.0
    %vm1191 = vcmp.gt.f32.partialorder %v896, 0.0
    %vm1192 = vcmp.gt.f32.partialorder %v937, 0.0
    %vm1193 = vcmp.gt.f32.partialorder %v978, 0.0
    %vm1194 = vcmp.gt.f32.partialorder %v1019, 0.0
    %vm1195 = vcmp.gt.f32.partialorder %v1060, 0.0
    %vm1196 = vcmp.gt.f32.partialorder %v1101, 0.0
    %vm1197 = vcmp.gt.f32.partialorder %v1142, 0.0
    %vm1198 = vcmp.gt.f32.partialorder %v858, 0.0
    %vm1199 = vcmp.gt.f32.partialorder %v899, 0.0
    %vm1200 = vcmp.gt.f32.partialorder %v940, 0.0
    %vm1201 = vcmp.gt.f32.partialorder %v981, 0.0
    %vm1202 = vcmp.gt.f32.partialorder %v1022, 0.0
    %vm1203 = vcmp.gt.f32.partialorder %v1063, 0.0
    %vm1204 = vcmp.gt.f32.partialorder %v1104, 0.0
    %vm1205 = vcmp.gt.f32.partialorder %v1145, 0.0
    %vm1206 = vcmp.gt.f32.partialorder %v861, 0.0
    %vm1207 = vcmp.gt.f32.partialorder %v902, 0.0
    %vm1208 = vcmp.gt.f32.partialorder %v943, 0.0
    %vm1209 = vcmp.gt.f32.partialorder %v984, 0.0
    %vm1210 = vcmp.gt.f32.partialorder %v1025, 0.0
    %vm1211 = vcmp.gt.f32.partialorder %v1066, 0.0
    %vm1212 = vcmp.gt.f32.partialorder %v1107, 0.0
    %vm1213 = vcmp.gt.f32.partialorder %v1148, 0.0
    %v1214 = vmul.f32 %v840, 0.01
    %v1215 = vmul.f32 %v881, 0.01
    %v1216 = vmul.f32 %v922, 0.01
    %v1217 = vmul.f32 %v963, 0.01
    %v1218 = vmul.f32 %v1004, 0.01
    %v1219 = vmul.f32 %v1045, 0.01
    %v1220 = vmul.f32 %v1086, 0.01
    %v1221 = vmul.f32 %v1127, 0.01
    %v1222 = vmul.f32 %v843, 0.01
    %v1223 = vmul.f32 %v884, 0.01
    %v1224 = vmul.f32 %v925, 0.01
    %v1225 = vmul.f32 %v966, 0.01
    %v1226 = vmul.f32 %v1007, 0.01
    %v1227 = vmul.f32 %v1048, 0.01
    %v1228 = vmul.f32 %v1089, 0.01
    %v1229 = vmul.f32 %v1130, 0.01
    %v1230 = vmul.f32 %v846, 0.01
    %v1231 = vmul.f32 %v887, 0.01
    %v1232 = vmul.f32 %v928, 0.01
    %v1233 = vmul.f32 %v969, 0.01
    %v1234 = vmul.f32 %v1010, 0.01
    %v1235 = vmul.f32 %v1051, 0.01
    %v1236 = vmul.f32 %v1092, 0.01
    %v1237 = vmul.f32 %v1133, 0.01
    %v1238 = vmul.f32 %v849, 0.01
    %v1239 = vmul.f32 %v890, 0.01
    %v1240 = vmul.f32 %v931, 0.01
    %v1241 = vmul.f32 %v972, 0.01
    %v1242 = vmul.f32 %v1013, 0.01
    %v1243 = vmul.f32 %v1054, 0.01
    %v1244 = vmul.f32 %v1095, 0.01
    %v1245 = vmul.f32 %v1136, 0.01
    %v1246 = vmul.f32 %v852, 0.01
    %v1247 = vmul.f32 %v893, 0.01
    %v1248 = vmul.f32 %v934, 0.01
    %v1249 = vmul.f32 %v975, 0.01
    %v1250 = vmul.f32 %v1016, 0.01
    %v1251 = vmul.f32 %v1057, 0.01
    %v1252 = vmul.f32 %v1098, 0.01
    %v1253 = vmul.f32 %v1139, 0.01
    %v1254 = vmul.f32 %v855, 0.01
    %v1255 = vmul.f32 %v896, 0.01
    %v1256 = vmul.f32 %v937, 0.01
    %v1257 = vmul.f32 %v978, 0.01
    %v1258 = vmul.f32 %v1019, 0.01
    %v1259 = vmul.f32 %v1060, 0.01
    %v1260 = vmul.f32 %v1101, 0.01
    %v1261 = vmul.f32 %v1142, 0.01
    %v1262 = vmul.f32 %v858, 0.01
    %v1263 = vmul.f32 %v899, 0.01
    %v1264 = vmul.f32 %v940, 0.01
    %v1265 = vmul.f32 %v981, 0.01
    %v1266 = vmul.f32 %v1022, 0.01
    %v1267 = vmul.f32 %v1063, 0.01
    %v1268 = vmul.f32 %v1104, 0.01
    %v1269 = vmul.f32 %v1145, 0.01
    %v1270 = vmul.f32 %v861, 0.01
    %v1271 = vmul.f32 %v902, 0.01
    %v1272 = vmul.f32 %v943, 0.01
    %v1273 = vmul.f32 %v984, 0.01
    %v1274 = vmul.f32 %v1025, 0.01
    %v1275 = vmul.f32 %v1066, 0.01
    %v1276 = vmul.f32 %v1107, 0.01
    %v1277 = vmul.f32 %v1148, 0.01
    %v1278 = vsel %vm1150, %v840, %v1214
    %v1279 = vsel %vm1151, %v881, %v1215
    %v1280 = vsel %vm1152, %v922, %v1216
    %v1281 = vsel %vm1153, %v963, %v1217
    %v1282 = vsel %vm1154, %v1004, %v1218
    %v1283 = vsel %vm1155, %v1045, %v1219
    %v1284 = vsel %vm1156, %v1086, %v1220
    %v1285 = vsel %vm1157, %v1127, %v1221
    %v1286 = vsel %vm1158, %v843, %v1222
    %v1287 = vsel %vm1159, %v884, %v1223
    %v1288 = vsel %vm1160, %v925, %v1224
    %v1289 = vsel %vm1161, %v966, %v1225
    %v1290 = vsel %vm1162, %v1007, %v1226
    %v1291 = vsel %vm1163, %v1048, %v1227
    %v1292 = vsel %vm1164, %v1089, %v1228
    %v1293 = vsel %vm1165, %v1130, %v1229
    %v1294 = vsel %vm1166, %v846, %v1230
    %v1295 = vsel %vm1167, %v887, %v1231
    %v1296 = vsel %vm1168, %v928, %v1232
    %v1297 = vsel %vm1169, %v969, %v1233
    %v1298 = vsel %vm1170, %v1010, %v1234
    %v1299 = vsel %vm1171, %v1051, %v1235
    %v1300 = vsel %vm1172, %v1092, %v1236
    %v1301 = vsel %vm1173, %v1133, %v1237
    %v1302 = vsel %vm1174, %v849, %v1238
    %v1303 = vsel %vm1175, %v890, %v1239
    %v1304 = vsel %vm1176, %v931, %v1240
    %v1305 = vsel %vm1177, %v972, %v1241
    %v1306 = vsel %vm1178, %v1013, %v1242
    %v1307 = vsel %vm1179, %v1054, %v1243
    %v1308 = vsel %vm1180, %v1095, %v1244
    %v1309 = vsel %vm1181, %v1136, %v1245
    %v1310 = vsel %vm1182, %v852, %v1246
    %v1311 = vsel %vm1183, %v893, %v1247
    %v1312 = vsel %vm1184, %v934, %v1248
    %v1313 = vsel %vm1185, %v975, %v1249
    %v1314 = vsel %vm1186, %v1016, %v1250
    %v1315 = vsel %vm1187, %v1057, %v1251
    %v1316 = vsel %vm1188, %v1098, %v1252
    %v1317 = vsel %vm1189, %v1139, %v1253
    %v1318 = vsel %vm1190, %v855, %v1254
    %v1319 = vsel %vm1191, %v896, %v1255
    %v1320 = vsel %vm1192, %v937, %v1256
    %v1321 = vsel %vm1193, %v978, %v1257
    %v1322 = vsel %vm1194, %v1019, %v1258
    %v1323 = vsel %vm1195, %v1060, %v1259
    %v1324 = vsel %vm1196, %v1101, %v1260
    %v1325 = vsel %vm1197, %v1142, %v1261
    %v1326 = vsel %vm1198, %v858, %v1262
    %v1327 = vsel %vm1199, %v899, %v1263
    %v1328 = vsel %vm1200, %v940, %v1264
    %v1329 = vsel %vm1201, %v981, %v1265
    %v1330 = vsel %vm1202, %v1022, %v1266
    %v1331 = vsel %vm1203, %v1063, %v1267
    %v1332 = vsel %vm1204, %v1104, %v1268
    %v1333 = vsel %vm1205, %v1145, %v1269
    %v1334 = vsel %vm1206, %v861, %v1270
    %v1335 = vsel %vm1207, %v902, %v1271
    %v1336 = vsel %vm1208, %v943, %v1272
    %v1337 = vsel %vm1209, %v984, %v1273
    %v1338 = vsel %vm1210, %v1025, %v1274
    %v1339 = vsel %vm1211, %v1066, %v1275
    %v1340 = vsel %vm1212, %v1107, %v1276
    %v1341 = vsel %vm1213, %v1148, %v1277
    %s1342 = scalar_lea.vmem %s7, 16
    %v1343 = vld [vmem:[%s1342] sm:$0xff]
    %v1344 = vld [vmem:[%s1342 + $0x8] sm:$0xff]
    %s1345 = scalar_lea.vmem %s8, 16
    %v1346 = vld [vmem:[%s1345] sm:$0xff]
    %v1347 = vld [vmem:[%s1345 + $0x8] sm:$0xff]
    %1349 = vset.pattern.permute.xlu0 0
    %1350 = vperm.xlu0 %1349, %v1346
    %v1351 = vpop.permute.xlu0 %1350
    %1354 = vset.pattern.permute.xlu0 0
    %1355 = vperm.xlu0 %1354, %v1347
    %v1356 = vpop.permute.xlu0 %1355
    %v1359 = vsel %vm797, %v1343, 0
    %v1362 = vsel %vm797, %v1344, 0
    %1364 = vmatpush.msra.mxu0 0.0
    %1365 = vmatpush.msra.mxu0 0.0
    %1366 = vmatpush.msra.mxu0 0.0
    %1367 = vmatpush.msra.mxu0 0.0
    %1368 = vmatpush.msra.mxu0 0.0
    %1369 = vmatpush.msra.mxu0 0.0
    %1370 = vmatpush.msra.mxu0 0.0
    %1371 = vmatpush.msra.mxu0 0.0
    %1372 = vmatpush.msra.mxu0 %v1334
    %1373 = vmatpush.msra.mxu0 %v1326
    %1374 = vmatpush.msra.mxu0 %v1318
    %1375 = vmatpush.msra.mxu0 %v1310
    %1376 = vmatpush.msra.mxu0 %v1302
    %1377 = vmatpush.msra.mxu0 %v1294
    %1378 = vmatpush.msra.mxu0 %v1286
    %1379 = vmatpush.msra.mxu0 %v1278
    %1380 = vmatmul.f32.gmra.mxu0 %v1359
    %v1381 = vpop.f32.mrf.mxu0
    %v1382 = vadd.f32 %v1351, %v1381
    %1383 = vmatmul.f32.gmra.mxu0 %v1362
    %v1384 = vpop.f32.mrf.mxu0
    %v1385 = vadd.f32 %v1356, %v1384
    %1386 = vdwg.mxu0
    %1387 = vmatpush.msra.mxu0 0.0
    %1388 = vmatpush.msra.mxu0 0.0
    %1389 = vmatpush.msra.mxu0 0.0
    %1390 = vmatpush.msra.mxu0 0.0
    %1391 = vmatpush.msra.mxu0 0.0
    %1392 = vmatpush.msra.mxu0 0.0
    %1393 = vmatpush.msra.mxu0 0.0
    %1394 = vmatpush.msra.mxu0 0.0
    %1395 = vmatpush.msra.mxu0 %v1335
    %1396 = vmatpush.msra.mxu0 %v1327
    %1397 = vmatpush.msra.mxu0 %v1319
    %1398 = vmatpush.msra.mxu0 %v1311
    %1399 = vmatpush.msra.mxu0 %v1303
    %1400 = vmatpush.msra.mxu0 %v1295
    %1401 = vmatpush.msra.mxu0 %v1287
    %1402 = vmatpush.msra.mxu0 %v1279
    %1403 = vmatmul.f32.gmra.mxu0 %v1359
    %v1404 = vpop.f32.mrf.mxu0
    %v1405 = vadd.f32 %v1351, %v1404
    %1406 = vmatmul.f32.gmra.mxu0 %v1362
    %v1407 = vpop.f32.mrf.mxu0
    %v1408 = vadd.f32 %v1356, %v1407
    %1409 = vdwg.mxu0
    %1410 = vmatpush.msra.mxu0 0.0
    %1411 = vmatpush.msra.mxu0 0.0
    %1412 = vmatpush.msra.mxu0 0.0
    %1413 = vmatpush.msra.mxu0 0.0
    %1414 = vmatpush.msra.mxu0 0.0
    %1415 = vmatpush.msra.mxu0 0.0
    %1416 = vmatpush.msra.mxu0 0.0
    %1417 = vmatpush.msra.mxu0 0.0
    %1418 = vmatpush.msra.mxu0 %v1336
    %1419 = vmatpush.msra.mxu0 %v1328
    %1420 = vmatpush.msra.mxu0 %v1320
    %1421 = vmatpush.msra.mxu0 %v1312
    %1422 = vmatpush.msra.mxu0 %v1304
    %1423 = vmatpush.msra.mxu0 %v1296
    %1424 = vmatpush.msra.mxu0 %v1288
    %1425 = vmatpush.msra.mxu0 %v1280
    %1426 = vmatmul.f32.gmra.mxu0 %v1359
    %v1427 = vpop.f32.mrf.mxu0
    %v1428 = vadd.f32 %v1351, %v1427
    %1429 = vmatmul.f32.gmra.mxu0 %v1362
    %v1430 = vpop.f32.mrf.mxu0
    %v1431 = vadd.f32 %v1356, %v1430
    %1432 = vdwg.mxu0
    %1433 = vmatpush.msra.mxu0 0.0
    %1434 = vmatpush.msra.mxu0 0.0
    %1435 = vmatpush.msra.mxu0 0.0
    %1436 = vmatpush.msra.mxu0 0.0
    %1437 = vmatpush.msra.mxu0 0.0
    %1438 = vmatpush.msra.mxu0 0.0
    %1439 = vmatpush.msra.mxu0 0.0
    %1440 = vmatpush.msra.mxu0 0.0
    %1441 = vmatpush.msra.mxu0 %v1337
    %1442 = vmatpush.msra.mxu0 %v1329
    %1443 = vmatpush.msra.mxu0 %v1321
    %1444 = vmatpush.msra.mxu0 %v1313
    %1445 = vmatpush.msra.mxu0 %v1305
    %1446 = vmatpush.msra.mxu0 %v1297
    %1447 = vmatpush.msra.mxu0 %v1289
    %1448 = vmatpush.msra.mxu0 %v1281
    %1449 = vmatmul.f32.gmra.mxu0 %v1359
    %v1450 = vpop.f32.mrf.mxu0
    %v1451 = vadd.f32 %v1351, %v1450
    %1452 = vmatmul.f32.gmra.mxu0 %v1362
    %v1453 = vpop.f32.mrf.mxu0
    %v1454 = vadd.f32 %v1356, %v1453
    %1455 = vdwg.mxu0
    %1456 = vmatpush.msra.mxu0 0.0
    %1457 = vmatpush.msra.mxu0 0.0
    %1458 = vmatpush.msra.mxu0 0.0
    %1459 = vmatpush.msra.mxu0 0.0
    %1460 = vmatpush.msra.mxu0 0.0
    %1461 = vmatpush.msra.mxu0 0.0
    %1462 = vmatpush.msra.mxu0 0.0
    %1463 = vmatpush.msra.mxu0 0.0
    %1464 = vmatpush.msra.mxu0 %v1338
    %1465 = vmatpush.msra.mxu0 %v1330
    %1466 = vmatpush.msra.mxu0 %v1322
    %1467 = vmatpush.msra.mxu0 %v1314
    %1468 = vmatpush.msra.mxu0 %v1306
    %1469 = vmatpush.msra.mxu0 %v1298
    %1470 = vmatpush.msra.mxu0 %v1290
    %1471 = vmatpush.msra.mxu0 %v1282
    %1472 = vmatmul.f32.gmra.mxu0 %v1359
    %v1473 = vpop.f32.mrf.mxu0
    %v1474 = vadd.f32 %v1351, %v1473
    %1475 = vmatmul.f32.gmra.mxu0 %v1362
    %v1476 = vpop.f32.mrf.mxu0
    %v1477 = vadd.f32 %v1356, %v1476
    %1478 = vdwg.mxu0
    %1479 = vmatpush.msra.mxu0 0.0
    %1480 = vmatpush.msra.mxu0 0.0
    %1481 = vmatpush.msra.mxu0 0.0
    %1482 = vmatpush.msra.mxu0 0.0
    %1483 = vmatpush.msra.mxu0 0.0
    %1484 = vmatpush.msra.mxu0 0.0
    %1485 = vmatpush.msra.mxu0 0.0
    %1486 = vmatpush.msra.mxu0 0.0
    %1487 = vmatpush.msra.mxu0 %v1339
    %1488 = vmatpush.msra.mxu0 %v1331
    %1489 = vmatpush.msra.mxu0 %v1323
    %1490 = vmatpush.msra.mxu0 %v1315
    %1491 = vmatpush.msra.mxu0 %v1307
    %1492 = vmatpush.msra.mxu0 %v1299
    %1493 = vmatpush.msra.mxu0 %v1291
    %1494 = vmatpush.msra.mxu0 %v1283
    %1495 = vmatmul.f32.gmra.mxu0 %v1359
    %v1496 = vpop.f32.mrf.mxu0
    %v1497 = vadd.f32 %v1351, %v1496
    %1498 = vmatmul.f32.gmra.mxu0 %v1362
    %v1499 = vpop.f32.mrf.mxu0
    %v1500 = vadd.f32 %v1356, %v1499
    %1501 = vdwg.mxu0
    %1502 = vmatpush.msra.mxu0 0.0
    %1503 = vmatpush.msra.mxu0 0.0
    %1504 = vmatpush.msra.mxu0 0.0
    %1505 = vmatpush.msra.mxu0 0.0
    %1506 = vmatpush.msra.mxu0 0.0
    %1507 = vmatpush.msra.mxu0 0.0
    %1508 = vmatpush.msra.mxu0 0.0
    %1509 = vmatpush.msra.mxu0 0.0
    %1510 = vmatpush.msra.mxu0 %v1340
    %1511 = vmatpush.msra.mxu0 %v1332
    %1512 = vmatpush.msra.mxu0 %v1324
    %1513 = vmatpush.msra.mxu0 %v1316
    %1514 = vmatpush.msra.mxu0 %v1308
    %1515 = vmatpush.msra.mxu0 %v1300
    %1516 = vmatpush.msra.mxu0 %v1292
    %1517 = vmatpush.msra.mxu0 %v1284
    %1518 = vmatmul.f32.gmra.mxu0 %v1359
    %v1519 = vpop.f32.mrf.mxu0
    %v1520 = vadd.f32 %v1351, %v1519
    %1521 = vmatmul.f32.gmra.mxu0 %v1362
    %v1522 = vpop.f32.mrf.mxu0
    %v1523 = vadd.f32 %v1356, %v1522
    %1524 = vdwg.mxu0
    %1525 = vmatpush.msra.mxu0 0.0
    %1526 = vmatpush.msra.mxu0 0.0
    %1527 = vmatpush.msra.mxu0 0.0
    %1528 = vmatpush.msra.mxu0 0.0
    %1529 = vmatpush.msra.mxu0 0.0
    %1530 = vmatpush.msra.mxu0 0.0
    %1531 = vmatpush.msra.mxu0 0.0
    %1532 = vmatpush.msra.mxu0 0.0
    %1533 = vmatpush.msra.mxu0 %v1341
    %1534 = vmatpush.msra.mxu0 %v1333
    %1535 = vmatpush.msra.mxu0 %v1325
    %1536 = vmatpush.msra.mxu0 %v1317
    %1537 = vmatpush.msra.mxu0 %v1309
    %1538 = vmatpush.msra.mxu0 %v1301
    %1539 = vmatpush.msra.mxu0 %v1293
    %1540 = vmatpush.msra.mxu0 %v1285
    %1541 = vmatmul.f32.gmra.mxu0 %v1359
    %v1542 = vpop.f32.mrf.mxu0
    %v1543 = vadd.f32 %v1351, %v1542
    %1544 = vmatmul.f32.gmra.mxu0 %v1362
    %v1545 = vpop.f32.mrf.mxu0
    %v1546 = vadd.f32 %v1356, %v1545
    %1547 = vdwg.mxu0
    %v1548 = vtanh.pop %v1382
    %v1549 = vtanh.pop %v1405
    %v1550 = vtanh.pop %v1428
    %v1551 = vtanh.pop %v1451
    %v1552 = vtanh.pop %v1474
    %v1553 = vtanh.pop %v1497
    %v1554 = vtanh.pop %v1520
    %v1555 = vtanh.pop %v1543
    %v1556 = vmul.f32 %v1385, %v1385
    %v1557 = vmul.f32 %v1408, %v1408
    %v1558 = vmul.f32 %v1431, %v1431
    %v1559 = vmul.f32 %v1454, %v1454
    %v1560 = vmul.f32 %v1477, %v1477
    %v1561 = vmul.f32 %v1500, %v1500
    %v1562 = vmul.f32 %v1523, %v1523
    %v1563 = vmul.f32 %v1546, %v1546
    %v1564 = vrot.slane %v1556, 4
    %v1565 = vadd.f32 %v1556, %v1564
    %v1566 = vrot.slane %v1565, 2
    %v1567 = vadd.f32 %v1565, %v1566
    %v1568 = vrot.slane %v1567, 1
    %v1569 = vadd.f32 %v1567, %v1568
    %v1570 = vrot.slane %v1557, 4
    %v1571 = vadd.f32 %v1557, %v1570
    %v1572 = vrot.slane %v1571, 2
    %v1573 = vadd.f32 %v1571, %v1572
    %v1574 = vrot.slane %v1573, 1
    %v1575 = vadd.f32 %v1573, %v1574
    %v1576 = vrot.slane %v1558, 4
    %v1577 = vadd.f32 %v1558, %v1576
    %v1578 = vrot.slane %v1577, 2
    %v1579 = vadd.f32 %v1577, %v1578
    %v1580 = vrot.slane %v1579, 1
    %v1581 = vadd.f32 %v1579, %v1580
    %v1582 = vrot.slane %v1559, 4
    %v1583 = vadd.f32 %v1559, %v1582
    %v1584 = vrot.slane %v1583, 2
    %v1585 = vadd.f32 %v1583, %v1584
    %v1586 = vrot.slane %v1585, 1
    %v1587 = vadd.f32 %v1585, %v1586
    %v1588 = vrot.slane %v1560, 4
    %v1589 = vadd.f32 %v1560, %v1588
    %v1590 = vrot.slane %v1589, 2
    %v1591 = vadd.f32 %v1589, %v1590
    %v1592 = vrot.slane %v1591, 1
    %v1593 = vadd.f32 %v1591, %v1592
    %v1594 = vrot.slane %v1561, 4
    %v1595 = vadd.f32 %v1561, %v1594
    %v1596 = vrot.slane %v1595, 2
    %v1597 = vadd.f32 %v1595, %v1596
    %v1598 = vrot.slane %v1597, 1
    %v1599 = vadd.f32 %v1597, %v1598
    %v1600 = vrot.slane %v1562, 4
    %v1601 = vadd.f32 %v1562, %v1600
    %v1602 = vrot.slane %v1601, 2
    %v1603 = vadd.f32 %v1601, %v1602
    %v1604 = vrot.slane %v1603, 1
    %v1605 = vadd.f32 %v1603, %v1604
    %v1606 = vrot.slane %v1563, 4
    %v1607 = vadd.f32 %v1563, %v1606
    %v1608 = vrot.slane %v1607, 2
    %v1609 = vadd.f32 %v1607, %v1608
    %v1610 = vrot.slane %v1609, 1
    %v1611 = vadd.f32 %v1609, %v1610
    %v1612 = vadd.f32 %v1569, 1.0
    %v1613 = vadd.f32 %v1575, 1.0
    %v1614 = vadd.f32 %v1581, 1.0
    %v1615 = vadd.f32 %v1587, 1.0
    %v1616 = vadd.f32 %v1593, 1.0
    %v1617 = vadd.f32 %v1599, 1.0
    %v1618 = vadd.f32 %v1605, 1.0
    %v1619 = vadd.f32 %v1611, 1.0
    %v1620 = vrsqrt.pop %v1612
    %v1621 = vmul.f32 %v1620, %v1612
    %v1622 = vmul.f32 %v1621, %v1620
    %v1623 = vmul.f32 0.5, %v1622
    %v1624 = vsub.f32 1.5, %v1623
    %v1625 = vmul.f32 %v1620, %v1624
    %v1626 = vmul.f32 %v1612, %v1625
    %vm1627 = vcmp.eq.f32.partialorder %v1612, inf
    %v1628 = vsel %vm1627, %v1612, %v1626
    %vm1629 = vcmp.eq.f32.partialorder %v1612, 0.0
    %v1630 = vand.u32 %v1612, 2147483648
    %v1631 = vsel %vm1629, %v1630, %v1628
    %v1632 = vrsqrt.pop %v1613
    %v1633 = vmul.f32 %v1632, %v1613
    %v1634 = vmul.f32 %v1633, %v1632
    %v1635 = vmul.f32 0.5, %v1634
    %v1636 = vsub.f32 1.5, %v1635
    %v1637 = vmul.f32 %v1632, %v1636
    %v1638 = vmul.f32 %v1613, %v1637
    %vm1639 = vcmp.eq.f32.partialorder %v1613, inf
    %v1640 = vsel %vm1639, %v1613, %v1638
    %vm1641 = vcmp.eq.f32.partialorder %v1613, 0.0
    %v1642 = vand.u32 %v1613, 2147483648
    %v1643 = vsel %vm1641, %v1642, %v1640
    %v1644 = vrsqrt.pop %v1614
    %v1645 = vmul.f32 %v1644, %v1614
    %v1646 = vmul.f32 %v1645, %v1644
    %v1647 = vmul.f32 0.5, %v1646
    %v1648 = vsub.f32 1.5, %v1647
    %v1649 = vmul.f32 %v1644, %v1648
    %v1650 = vmul.f32 %v1614, %v1649
    %vm1651 = vcmp.eq.f32.partialorder %v1614, inf
    %v1652 = vsel %vm1651, %v1614, %v1650
    %vm1653 = vcmp.eq.f32.partialorder %v1614, 0.0
    %v1654 = vand.u32 %v1614, 2147483648
    %v1655 = vsel %vm1653, %v1654, %v1652
    %v1656 = vrsqrt.pop %v1615
    %v1657 = vmul.f32 %v1656, %v1615
    %v1658 = vmul.f32 %v1657, %v1656
    %v1659 = vmul.f32 0.5, %v1658
    %v1660 = vsub.f32 1.5, %v1659
    %v1661 = vmul.f32 %v1656, %v1660
    %v1662 = vmul.f32 %v1615, %v1661
    %vm1663 = vcmp.eq.f32.partialorder %v1615, inf
    %v1664 = vsel %vm1663, %v1615, %v1662
    %vm1665 = vcmp.eq.f32.partialorder %v1615, 0.0
    %v1666 = vand.u32 %v1615, 2147483648
    %v1667 = vsel %vm1665, %v1666, %v1664
    %v1668 = vrsqrt.pop %v1616
    %v1669 = vmul.f32 %v1668, %v1616
    %v1670 = vmul.f32 %v1669, %v1668
    %v1671 = vmul.f32 0.5, %v1670
    %v1672 = vsub.f32 1.5, %v1671
    %v1673 = vmul.f32 %v1668, %v1672
    %v1674 = vmul.f32 %v1616, %v1673
    %vm1675 = vcmp.eq.f32.partialorder %v1616, inf
    %v1676 = vsel %vm1675, %v1616, %v1674
    %vm1677 = vcmp.eq.f32.partialorder %v1616, 0.0
    %v1678 = vand.u32 %v1616, 2147483648
    %v1679 = vsel %vm1677, %v1678, %v1676
    %v1680 = vrsqrt.pop %v1617
    %v1681 = vmul.f32 %v1680, %v1617
    %v1682 = vmul.f32 %v1681, %v1680
    %v1683 = vmul.f32 0.5, %v1682
    %v1684 = vsub.f32 1.5, %v1683
    %v1685 = vmul.f32 %v1680, %v1684
    %v1686 = vmul.f32 %v1617, %v1685
    %vm1687 = vcmp.eq.f32.partialorder %v1617, inf
    %v1688 = vsel %vm1687, %v1617, %v1686
    %vm1689 = vcmp.eq.f32.partialorder %v1617, 0.0
    %v1690 = vand.u32 %v1617, 2147483648
    %v1691 = vsel %vm1689, %v1690, %v1688
    %v1692 = vrsqrt.pop %v1618
    %v1693 = vmul.f32 %v1692, %v1618
    %v1694 = vmul.f32 %v1693, %v1692
    %v1695 = vmul.f32 0.5, %v1694
    %v1696 = vsub.f32 1.5, %v1695
    %v1697 = vmul.f32 %v1692, %v1696
    %v1698 = vmul.f32 %v1618, %v1697
    %vm1699 = vcmp.eq.f32.partialorder %v1618, inf
    %v1700 = vsel %vm1699, %v1618, %v1698
    %vm1701 = vcmp.eq.f32.partialorder %v1618, 0.0
    %v1702 = vand.u32 %v1618, 2147483648
    %v1703 = vsel %vm1701, %v1702, %v1700
    %v1704 = vrsqrt.pop %v1619
    %v1705 = vmul.f32 %v1704, %v1619
    %v1706 = vmul.f32 %v1705, %v1704
    %v1707 = vmul.f32 0.5, %v1706
    %v1708 = vsub.f32 1.5, %v1707
    %v1709 = vmul.f32 %v1704, %v1708
    %v1710 = vmul.f32 %v1619, %v1709
    %vm1711 = vcmp.eq.f32.partialorder %v1619, inf
    %v1712 = vsel %vm1711, %v1619, %v1710
    %vm1713 = vcmp.eq.f32.partialorder %v1619, 0.0
    %v1714 = vand.u32 %v1619, 2147483648
    %v1715 = vsel %vm1713, %v1714, %v1712
    %1717 = vset.pattern.permute.xlu0 0
    %1718 = vperm.xlu0 %1717, %v135
    %v1719 = vpop.permute.xlu0 %1718
    %v1721 = vmul.f32 %v1719, %v104
    %v1722 = vmul.f32 %v1719, %v105
    %v1723 = vmul.f32 %v1719, %v106
    %v1724 = vmul.f32 %v1719, %v107
    %v1725 = vmul.f32 %v1719, %v108
    %v1726 = vmul.f32 %v1719, %v109
    %v1727 = vmul.f32 %v1719, %v110
    %v1728 = vmul.f32 %v1719, %v111
    %v1729 = vmax.f32 %v1721, -40.0
    %v1730 = vmax.f32 %v1722, -40.0
    %v1731 = vmax.f32 %v1723, -40.0
    %v1732 = vmax.f32 %v1724, -40.0
    %v1733 = vmax.f32 %v1725, -40.0
    %v1734 = vmax.f32 %v1726, -40.0
    %v1735 = vmax.f32 %v1727, -40.0
    %v1736 = vmax.f32 %v1728, -40.0
    %v1737 = vmin.f32 %v1729, 40.0
    %v1738 = vmin.f32 %v1730, 40.0
    %v1739 = vmin.f32 %v1731, 40.0
    %v1740 = vmin.f32 %v1732, 40.0
    %v1741 = vmin.f32 %v1733, 40.0
    %v1742 = vmin.f32 %v1734, 40.0
    %v1743 = vmin.f32 %v1735, 40.0
    %v1744 = vmin.f32 %v1736, 40.0
    %v1745 = vmul.f32 %v1737, %v1737
    %v1746 = vmul.f32 %v1738, %v1738
    %v1747 = vmul.f32 %v1739, %v1739
    %v1748 = vmul.f32 %v1740, %v1740
    %v1749 = vmul.f32 %v1741, %v1741
    %v1750 = vmul.f32 %v1742, %v1742
    %v1751 = vmul.f32 %v1743, %v1743
    %v1752 = vmul.f32 %v1744, %v1744
    %v1753 = vrot.slane %v1745, 4
    %v1754 = vadd.f32 %v1745, %v1753
    %v1755 = vrot.slane %v1754, 2
    %v1756 = vadd.f32 %v1754, %v1755
    %v1757 = vrot.slane %v1756, 1
    %v1758 = vadd.f32 %v1756, %v1757
    %v1759 = vrot.slane %v1746, 4
    %v1760 = vadd.f32 %v1746, %v1759
    %v1761 = vrot.slane %v1760, 2
    %v1762 = vadd.f32 %v1760, %v1761
    %v1763 = vrot.slane %v1762, 1
    %v1764 = vadd.f32 %v1762, %v1763
    %v1765 = vrot.slane %v1747, 4
    %v1766 = vadd.f32 %v1747, %v1765
    %v1767 = vrot.slane %v1766, 2
    %v1768 = vadd.f32 %v1766, %v1767
    %v1769 = vrot.slane %v1768, 1
    %v1770 = vadd.f32 %v1768, %v1769
    %v1771 = vrot.slane %v1748, 4
    %v1772 = vadd.f32 %v1748, %v1771
    %v1773 = vrot.slane %v1772, 2
    %v1774 = vadd.f32 %v1772, %v1773
    %v1775 = vrot.slane %v1774, 1
    %v1776 = vadd.f32 %v1774, %v1775
    %v1777 = vrot.slane %v1749, 4
    %v1778 = vadd.f32 %v1749, %v1777
    %v1779 = vrot.slane %v1778, 2
    %v1780 = vadd.f32 %v1778, %v1779
    %v1781 = vrot.slane %v1780, 1
    %v1782 = vadd.f32 %v1780, %v1781
    %v1783 = vrot.slane %v1750, 4
    %v1784 = vadd.f32 %v1750, %v1783
    %v1785 = vrot.slane %v1784, 2
    %v1786 = vadd.f32 %v1784, %v1785
    %v1787 = vrot.slane %v1786, 1
    %v1788 = vadd.f32 %v1786, %v1787
    %v1789 = vrot.slane %v1751, 4
    %v1790 = vadd.f32 %v1751, %v1789
    %v1791 = vrot.slane %v1790, 2
    %v1792 = vadd.f32 %v1790, %v1791
    %v1793 = vrot.slane %v1792, 1
    %v1794 = vadd.f32 %v1792, %v1793
    %v1795 = vrot.slane %v1752, 4
    %v1796 = vadd.f32 %v1752, %v1795
    %v1797 = vrot.slane %v1796, 2
    %v1798 = vadd.f32 %v1796, %v1797
    %v1799 = vrot.slane %v1798, 1
    %v1800 = vadd.f32 %v1798, %v1799
    %v1801 = vmax.f32 %v1758, 1e-06
    %v1802 = vmax.f32 %v1764, 1e-06
    %v1803 = vmax.f32 %v1770, 1e-06
    %v1804 = vmax.f32 %v1776, 1e-06
    %v1805 = vmax.f32 %v1782, 1e-06
    %v1806 = vmax.f32 %v1788, 1e-06
    %v1807 = vmax.f32 %v1794, 1e-06
    %v1808 = vmax.f32 %v1800, 1e-06
    %v1809 = vrsqrt.pop %v1801
    %v1810 = vmul.f32 %v1809, %v1801
    %v1811 = vmul.f32 %v1810, %v1809
    %v1812 = vmul.f32 0.5, %v1811
    %v1813 = vsub.f32 1.5, %v1812
    %v1814 = vmul.f32 %v1809, %v1813
    %v1815 = vmul.f32 %v1801, %v1814
    %vm1816 = vcmp.eq.f32.partialorder %v1801, inf
    %v1817 = vsel %vm1816, %v1801, %v1815
    %vm1818 = vcmp.eq.f32.partialorder %v1801, 0.0
    %v1819 = vand.u32 %v1801, 2147483648
    %v1820 = vsel %vm1818, %v1819, %v1817
    %v1821 = vrsqrt.pop %v1802
    %v1822 = vmul.f32 %v1821, %v1802
    %v1823 = vmul.f32 %v1822, %v1821
    %v1824 = vmul.f32 0.5, %v1823
    %v1825 = vsub.f32 1.5, %v1824
    %v1826 = vmul.f32 %v1821, %v1825
    %v1827 = vmul.f32 %v1802, %v1826
    %vm1828 = vcmp.eq.f32.partialorder %v1802, inf
    %v1829 = vsel %vm1828, %v1802, %v1827
    %vm1830 = vcmp.eq.f32.partialorder %v1802, 0.0
    %v1831 = vand.u32 %v1802, 2147483648
    %v1832 = vsel %vm1830, %v1831, %v1829
    %v1833 = vrsqrt.pop %v1803
    %v1834 = vmul.f32 %v1833, %v1803
    %v1835 = vmul.f32 %v1834, %v1833
    %v1836 = vmul.f32 0.5, %v1835
    %v1837 = vsub.f32 1.5, %v1836
    %v1838 = vmul.f32 %v1833, %v1837
    %v1839 = vmul.f32 %v1803, %v1838
    %vm1840 = vcmp.eq.f32.partialorder %v1803, inf
    %v1841 = vsel %vm1840, %v1803, %v1839
    %vm1842 = vcmp.eq.f32.partialorder %v1803, 0.0
    %v1843 = vand.u32 %v1803, 2147483648
    %v1844 = vsel %vm1842, %v1843, %v1841
    %v1845 = vrsqrt.pop %v1804
    %v1846 = vmul.f32 %v1845, %v1804
    %v1847 = vmul.f32 %v1846, %v1845
    %v1848 = vmul.f32 0.5, %v1847
    %v1849 = vsub.f32 1.5, %v1848
    %v1850 = vmul.f32 %v1845, %v1849
    %v1851 = vmul.f32 %v1804, %v1850
    %vm1852 = vcmp.eq.f32.partialorder %v1804, inf
    %v1853 = vsel %vm1852, %v1804, %v1851
    %vm1854 = vcmp.eq.f32.partialorder %v1804, 0.0
    %v1855 = vand.u32 %v1804, 2147483648
    %v1856 = vsel %vm1854, %v1855, %v1853
    %v1857 = vrsqrt.pop %v1805
    %v1858 = vmul.f32 %v1857, %v1805
    %v1859 = vmul.f32 %v1858, %v1857
    %v1860 = vmul.f32 0.5, %v1859
    %v1861 = vsub.f32 1.5, %v1860
    %v1862 = vmul.f32 %v1857, %v1861
    %v1863 = vmul.f32 %v1805, %v1862
    %vm1864 = vcmp.eq.f32.partialorder %v1805, inf
    %v1865 = vsel %vm1864, %v1805, %v1863
    %vm1866 = vcmp.eq.f32.partialorder %v1805, 0.0
    %v1867 = vand.u32 %v1805, 2147483648
    %v1868 = vsel %vm1866, %v1867, %v1865
    %v1869 = vrsqrt.pop %v1806
    %v1870 = vmul.f32 %v1869, %v1806
    %v1871 = vmul.f32 %v1870, %v1869
    %v1872 = vmul.f32 0.5, %v1871
    %v1873 = vsub.f32 1.5, %v1872
    %v1874 = vmul.f32 %v1869, %v1873
    %v1875 = vmul.f32 %v1806, %v1874
    %vm1876 = vcmp.eq.f32.partialorder %v1806, inf
    %v1877 = vsel %vm1876, %v1806, %v1875
    %vm1878 = vcmp.eq.f32.partialorder %v1806, 0.0
    %v1879 = vand.u32 %v1806, 2147483648
    %v1880 = vsel %vm1878, %v1879, %v1877
    %v1881 = vrsqrt.pop %v1807
    %v1882 = vmul.f32 %v1881, %v1807
    %v1883 = vmul.f32 %v1882, %v1881
    %v1884 = vmul.f32 0.5, %v1883
    %v1885 = vsub.f32 1.5, %v1884
    %v1886 = vmul.f32 %v1881, %v1885
    %v1887 = vmul.f32 %v1807, %v1886
    %vm1888 = vcmp.eq.f32.partialorder %v1807, inf
    %v1889 = vsel %vm1888, %v1807, %v1887
    %vm1890 = vcmp.eq.f32.partialorder %v1807, 0.0
    %v1891 = vand.u32 %v1807, 2147483648
    %v1892 = vsel %vm1890, %v1891, %v1889
    %v1893 = vrsqrt.pop %v1808
    %v1894 = vmul.f32 %v1893, %v1808
    %v1895 = vmul.f32 %v1894, %v1893
    %v1896 = vmul.f32 0.5, %v1895
    %v1897 = vsub.f32 1.5, %v1896
    %v1898 = vmul.f32 %v1893, %v1897
    %v1899 = vmul.f32 %v1808, %v1898
    %vm1900 = vcmp.eq.f32.partialorder %v1808, inf
    %v1901 = vsel %vm1900, %v1808, %v1899
    %vm1902 = vcmp.eq.f32.partialorder %v1808, 0.0
    %v1903 = vand.u32 %v1808, 2147483648
    %v1904 = vsel %vm1902, %v1903, %v1901
    %v1905 = vmax.f32 %v1820, 1e-06
    %v1906 = vmax.f32 %v1832, 1e-06
    %v1907 = vmax.f32 %v1844, 1e-06
    %v1908 = vmax.f32 %v1856, 1e-06
    %v1909 = vmax.f32 %v1868, 1e-06
    %v1910 = vmax.f32 %v1880, 1e-06
    %v1911 = vmax.f32 %v1892, 1e-06
    %v1912 = vmax.f32 %v1904, 1e-06
    %v1913 = vmul.f32 %v1905, 1.442695
    %v1914 = vpow.pop %v1913
    %v1915 = vmul.f32 %v1906, 1.442695
    %v1916 = vpow.pop %v1915
    %v1917 = vmul.f32 %v1907, 1.442695
    %v1918 = vpow.pop %v1917
    %v1919 = vmul.f32 %v1908, 1.442695
    %v1920 = vpow.pop %v1919
    %v1921 = vmul.f32 %v1909, 1.442695
    %v1922 = vpow.pop %v1921
    %v1923 = vmul.f32 %v1910, 1.442695
    %v1924 = vpow.pop %v1923
    %v1925 = vmul.f32 %v1911, 1.442695
    %v1926 = vpow.pop %v1925
    %v1927 = vmul.f32 %v1912, 1.442695
    %v1928 = vpow.pop %v1927
    %v1929 = vsub.f32 0.0, %v1905
    %v1930 = vsub.f32 0.0, %v1906
    %v1931 = vsub.f32 0.0, %v1907
    %v1932 = vsub.f32 0.0, %v1908
    %v1933 = vsub.f32 0.0, %v1909
    %v1934 = vsub.f32 0.0, %v1910
    %v1935 = vsub.f32 0.0, %v1911
    %v1936 = vsub.f32 0.0, %v1912
    %v1937 = vmul.f32 %v1929, 1.442695
    %v1938 = vpow.pop %v1937
    %v1939 = vmul.f32 %v1930, 1.442695
    %v1940 = vpow.pop %v1939
    %v1941 = vmul.f32 %v1931, 1.442695
    %v1942 = vpow.pop %v1941
    %v1943 = vmul.f32 %v1932, 1.442695
    %v1944 = vpow.pop %v1943
    %v1945 = vmul.f32 %v1933, 1.442695
    %v1946 = vpow.pop %v1945
    %v1947 = vmul.f32 %v1934, 1.442695
    %v1948 = vpow.pop %v1947
    %v1949 = vmul.f32 %v1935, 1.442695
    %v1950 = vpow.pop %v1949
    %v1951 = vmul.f32 %v1936, 1.442695
    %v1952 = vpow.pop %v1951
    %v1953 = vadd.f32 %v1914, %v1938
    %v1954 = vadd.f32 %v1916, %v1940
    %v1955 = vadd.f32 %v1918, %v1942
    %v1956 = vadd.f32 %v1920, %v1944
    %v1957 = vadd.f32 %v1922, %v1946
    %v1958 = vadd.f32 %v1924, %v1948
    %v1959 = vadd.f32 %v1926, %v1950
    %v1960 = vadd.f32 %v1928, %v1952
    %v1961 = vmul.f32 %v1953, 0.5
    %v1962 = vmul.f32 %v1954, 0.5
    %v1963 = vmul.f32 %v1955, 0.5
    %v1964 = vmul.f32 %v1956, 0.5
    %v1965 = vmul.f32 %v1957, 0.5
    %v1966 = vmul.f32 %v1958, 0.5
    %v1967 = vmul.f32 %v1959, 0.5
    %v1968 = vmul.f32 %v1960, 0.5
    %v1969 = vsub.f32 %v1914, %v1938
    %v1970 = vsub.f32 %v1916, %v1940
    %v1971 = vsub.f32 %v1918, %v1942
    %v1972 = vsub.f32 %v1920, %v1944
    %v1973 = vsub.f32 %v1922, %v1946
    %v1974 = vsub.f32 %v1924, %v1948
    %v1975 = vsub.f32 %v1926, %v1950
    %v1976 = vsub.f32 %v1928, %v1952
    %v1977 = vmul.f32 %v1969, 0.5
    %v1978 = vmul.f32 %v1970, 0.5
    %v1979 = vmul.f32 %v1971, 0.5
    %v1980 = vmul.f32 %v1972, 0.5
    %v1981 = vmul.f32 %v1973, 0.5
    %v1982 = vmul.f32 %v1974, 0.5
    %v1983 = vmul.f32 %v1975, 0.5
    %v1984 = vmul.f32 %v1976, 0.5
    %v1985 = vrcp.pop %v1905
    %v1986 = vmul.f32 %v1905, %v1985
    %v1987 = vsub.f32 1.0, %v1986
    %v1988 = vmul.f32 %v1985, %v1987
    %v1989 = vadd.f32 %v1985, %v1988
    %vm1990 = vweird.f32 %v1905
    %vm1991 = vweird.f32 %v1985
    %vm1992 = vmor %vm1990, %vm1991
    %v1993 = vsel %vm1992, %v1985, %v1989
    %v1994 = vand.u32 2147483647, %v1905
    %vm1995 = vcmp.eq.f32.partialorder %v1994, 8.507059e+37
    %v1996 = vand.u32 %v1905, 2147483648
    %v1997 = vor.u32 1.1754944e-38, %v1996
    %v1998 = vsel %vm1995, %v1997, %v1993
    %v1999 = vmul.f32 %v1977, %v1998
    %v2000 = vrcp.pop %v1906
    %v2001 = vmul.f32 %v1906, %v2000
    %v2002 = vsub.f32 1.0, %v2001
    %v2003 = vmul.f32 %v2000, %v2002
    %v2004 = vadd.f32 %v2000, %v2003
    %vm2005 = vweird.f32 %v1906
    %vm2006 = vweird.f32 %v2000
    %vm2007 = vmor %vm2005, %vm2006
    %v2008 = vsel %vm2007, %v2000, %v2004
    %v2009 = vand.u32 2147483647, %v1906
    %vm2010 = vcmp.eq.f32.partialorder %v2009, 8.507059e+37
    %v2011 = vand.u32 %v1906, 2147483648
    %v2012 = vor.u32 1.1754944e-38, %v2011
    %v2013 = vsel %vm2010, %v2012, %v2008
    %v2014 = vmul.f32 %v1978, %v2013
    %v2015 = vrcp.pop %v1907
    %v2016 = vmul.f32 %v1907, %v2015
    %v2017 = vsub.f32 1.0, %v2016
    %v2018 = vmul.f32 %v2015, %v2017
    %v2019 = vadd.f32 %v2015, %v2018
    %vm2020 = vweird.f32 %v1907
    %vm2021 = vweird.f32 %v2015
    %vm2022 = vmor %vm2020, %vm2021
    %v2023 = vsel %vm2022, %v2015, %v2019
    %v2024 = vand.u32 2147483647, %v1907
    %vm2025 = vcmp.eq.f32.partialorder %v2024, 8.507059e+37
    %v2026 = vand.u32 %v1907, 2147483648
    %v2027 = vor.u32 1.1754944e-38, %v2026
    %v2028 = vsel %vm2025, %v2027, %v2023
    %v2029 = vmul.f32 %v1979, %v2028
    %v2030 = vrcp.pop %v1908
    %v2031 = vmul.f32 %v1908, %v2030
    %v2032 = vsub.f32 1.0, %v2031
    %v2033 = vmul.f32 %v2030, %v2032
    %v2034 = vadd.f32 %v2030, %v2033
    %vm2035 = vweird.f32 %v1908
    %vm2036 = vweird.f32 %v2030
    %vm2037 = vmor %vm2035, %vm2036
    %v2038 = vsel %vm2037, %v2030, %v2034
    %v2039 = vand.u32 2147483647, %v1908
    %vm2040 = vcmp.eq.f32.partialorder %v2039, 8.507059e+37
    %v2041 = vand.u32 %v1908, 2147483648
    %v2042 = vor.u32 1.1754944e-38, %v2041
    %v2043 = vsel %vm2040, %v2042, %v2038
    %v2044 = vmul.f32 %v1980, %v2043
    %v2045 = vrcp.pop %v1909
    %v2046 = vmul.f32 %v1909, %v2045
    %v2047 = vsub.f32 1.0, %v2046
    %v2048 = vmul.f32 %v2045, %v2047
    %v2049 = vadd.f32 %v2045, %v2048
    %vm2050 = vweird.f32 %v1909
    %vm2051 = vweird.f32 %v2045
    %vm2052 = vmor %vm2050, %vm2051
    %v2053 = vsel %vm2052, %v2045, %v2049
    %v2054 = vand.u32 2147483647, %v1909
    %vm2055 = vcmp.eq.f32.partialorder %v2054, 8.507059e+37
    %v2056 = vand.u32 %v1909, 2147483648
    %v2057 = vor.u32 1.1754944e-38, %v2056
    %v2058 = vsel %vm2055, %v2057, %v2053
    %v2059 = vmul.f32 %v1981, %v2058
    %v2060 = vrcp.pop %v1910
    %v2061 = vmul.f32 %v1910, %v2060
    %v2062 = vsub.f32 1.0, %v2061
    %v2063 = vmul.f32 %v2060, %v2062
    %v2064 = vadd.f32 %v2060, %v2063
    %vm2065 = vweird.f32 %v1910
    %vm2066 = vweird.f32 %v2060
    %vm2067 = vmor %vm2065, %vm2066
    %v2068 = vsel %vm2067, %v2060, %v2064
    %v2069 = vand.u32 2147483647, %v1910
    %vm2070 = vcmp.eq.f32.partialorder %v2069, 8.507059e+37
    %v2071 = vand.u32 %v1910, 2147483648
    %v2072 = vor.u32 1.1754944e-38, %v2071
    %v2073 = vsel %vm2070, %v2072, %v2068
    %v2074 = vmul.f32 %v1982, %v2073
    %v2075 = vrcp.pop %v1911
    %v2076 = vmul.f32 %v1911, %v2075
    %v2077 = vsub.f32 1.0, %v2076
    %v2078 = vmul.f32 %v2075, %v2077
    %v2079 = vadd.f32 %v2075, %v2078
    %vm2080 = vweird.f32 %v1911
    %vm2081 = vweird.f32 %v2075
    %vm2082 = vmor %vm2080, %vm2081
    %v2083 = vsel %vm2082, %v2075, %v2079
    %v2084 = vand.u32 2147483647, %v1911
    %vm2085 = vcmp.eq.f32.partialorder %v2084, 8.507059e+37
    %v2086 = vand.u32 %v1911, 2147483648
    %v2087 = vor.u32 1.1754944e-38, %v2086
    %v2088 = vsel %vm2085, %v2087, %v2083
    %v2089 = vmul.f32 %v1983, %v2088
    %v2090 = vrcp.pop %v1912
    %v2091 = vmul.f32 %v1912, %v2090
    %v2092 = vsub.f32 1.0, %v2091
    %v2093 = vmul.f32 %v2090, %v2092
    %v2094 = vadd.f32 %v2090, %v2093
    %vm2095 = vweird.f32 %v1912
    %vm2096 = vweird.f32 %v2090
    %vm2097 = vmor %vm2095, %vm2096
    %v2098 = vsel %vm2097, %v2090, %v2094
    %v2099 = vand.u32 2147483647, %v1912
    %vm2100 = vcmp.eq.f32.partialorder %v2099, 8.507059e+37
    %v2101 = vand.u32 %v1912, 2147483648
    %v2102 = vor.u32 1.1754944e-38, %v2101
    %v2103 = vsel %vm2100, %v2102, %v2098
    %v2104 = vmul.f32 %v1984, %v2103
    %v2105 = vsub.f32 0.0, %v1938
    %v2106 = vsub.f32 0.0, %v1940
    %v2107 = vsub.f32 0.0, %v1942
    %v2108 = vsub.f32 0.0, %v1944
    %v2109 = vsub.f32 0.0, %v1946
    %v2110 = vsub.f32 0.0, %v1948
    %v2111 = vsub.f32 0.0, %v1950
    %v2112 = vsub.f32 0.0, %v1952
    %v2113 = vmul.f32 %v2105, %v1938
    %v2114 = vmul.f32 %v2106, %v1940
    %v2115 = vmul.f32 %v2107, %v1942
    %v2116 = vmul.f32 %v2108, %v1944
    %v2117 = vmul.f32 %v2109, %v1946
    %v2118 = vmul.f32 %v2110, %v1948
    %v2119 = vmul.f32 %v2111, %v1950
    %v2120 = vmul.f32 %v2112, %v1952
    %v2121 = vadd.f32 %v2113, 1.0
    %v2122 = vlog2.pop %v2121
    %v2123 = vmul.f32 %v2122, 0.6931472
    %v2124 = vmul.f32 -0.5, %v2113
    %v2125 = vadd.f32 %v2124, 1.0
    %v2126 = vmul.f32 %v2125, %v2113
    %v2127 = vand.u32 2147483647, %v2113
    %vm2128 = vcmp.lt.f32.partialorder %v2127, 0.0004427343
    %v2129 = vsel %vm2128, %v2126, %v2123
    %v2130 = vadd.f32 %v2114, 1.0
    %v2131 = vlog2.pop %v2130
    %v2132 = vmul.f32 %v2131, 0.6931472
    %v2133 = vmul.f32 -0.5, %v2114
    %v2134 = vadd.f32 %v2133, 1.0
    %v2135 = vmul.f32 %v2134, %v2114
    %v2136 = vand.u32 2147483647, %v2114
    %vm2137 = vcmp.lt.f32.partialorder %v2136, 0.0004427343
    %v2138 = vsel %vm2137, %v2135, %v2132
    %v2139 = vadd.f32 %v2115, 1.0
    %v2140 = vlog2.pop %v2139
    %v2141 = vmul.f32 %v2140, 0.6931472
    %v2142 = vmul.f32 -0.5, %v2115
    %v2143 = vadd.f32 %v2142, 1.0
    %v2144 = vmul.f32 %v2143, %v2115
    %v2145 = vand.u32 2147483647, %v2115
    %vm2146 = vcmp.lt.f32.partialorder %v2145, 0.0004427343
    %v2147 = vsel %vm2146, %v2144, %v2141
    %v2148 = vadd.f32 %v2116, 1.0
    %v2149 = vlog2.pop %v2148
    %v2150 = vmul.f32 %v2149, 0.6931472
    %v2151 = vmul.f32 -0.5, %v2116
    %v2152 = vadd.f32 %v2151, 1.0
    %v2153 = vmul.f32 %v2152, %v2116
    %v2154 = vand.u32 2147483647, %v2116
    %vm2155 = vcmp.lt.f32.partialorder %v2154, 0.0004427343
    %v2156 = vsel %vm2155, %v2153, %v2150
    %v2157 = vadd.f32 %v2117, 1.0
    %v2158 = vlog2.pop %v2157
    %v2159 = vmul.f32 %v2158, 0.6931472
    %v2160 = vmul.f32 -0.5, %v2117
    %v2161 = vadd.f32 %v2160, 1.0
    %v2162 = vmul.f32 %v2161, %v2117
    %v2163 = vand.u32 2147483647, %v2117
    %vm2164 = vcmp.lt.f32.partialorder %v2163, 0.0004427343
    %v2165 = vsel %vm2164, %v2162, %v2159
    %v2166 = vadd.f32 %v2118, 1.0
    %v2167 = vlog2.pop %v2166
    %v2168 = vmul.f32 %v2167, 0.6931472
    %v2169 = vmul.f32 -0.5, %v2118
    %v2170 = vadd.f32 %v2169, 1.0
    %v2171 = vmul.f32 %v2170, %v2118
    %v2172 = vand.u32 2147483647, %v2118
    %vm2173 = vcmp.lt.f32.partialorder %v2172, 0.0004427343
    %v2174 = vsel %vm2173, %v2171, %v2168
    %v2175 = vadd.f32 %v2119, 1.0
    %v2176 = vlog2.pop %v2175
    %v2177 = vmul.f32 %v2176, 0.6931472
    %v2178 = vmul.f32 -0.5, %v2119
    %v2179 = vadd.f32 %v2178, 1.0
    %v2180 = vmul.f32 %v2179, %v2119
    %v2181 = vand.u32 2147483647, %v2119
    %vm2182 = vcmp.lt.f32.partialorder %v2181, 0.0004427343
    %v2183 = vsel %vm2182, %v2180, %v2177
    %v2184 = vadd.f32 %v2120, 1.0
    %v2185 = vlog2.pop %v2184
    %v2186 = vmul.f32 %v2185, 0.6931472
    %v2187 = vmul.f32 -0.5, %v2120
    %v2188 = vadd.f32 %v2187, 1.0
    %v2189 = vmul.f32 %v2188, %v2120
    %v2190 = vand.u32 2147483647, %v2120
    %vm2191 = vcmp.lt.f32.partialorder %v2190, 0.0004427343
    %v2192 = vsel %vm2191, %v2189, %v2186
    %v2193 = vadd.f32 %v1905, %v2129
    %v2194 = vadd.f32 %v1906, %v2138
    %v2195 = vadd.f32 %v1907, %v2147
    %v2196 = vadd.f32 %v1908, %v2156
    %v2197 = vadd.f32 %v1909, %v2165
    %v2198 = vadd.f32 %v1910, %v2174
    %v2199 = vadd.f32 %v1911, %v2183
    %v2200 = vadd.f32 %v1912, %v2192
    %v2201 = vmul.f32 %v1905, 2.0
    %v2202 = vmul.f32 %v1906, 2.0
    %v2203 = vmul.f32 %v1907, 2.0
    %v2204 = vmul.f32 %v1908, 2.0
    %v2205 = vmul.f32 %v1909, 2.0
    %v2206 = vmul.f32 %v1910, 2.0
    %v2207 = vmul.f32 %v1911, 2.0
    %v2208 = vmul.f32 %v1912, 2.0
    %v2209 = vlog2.pop %v2201
    %v2210 = vmul.f32 %v2209, 0.6931472
    %v2211 = vlog2.pop %v2202
    %v2212 = vmul.f32 %v2211, 0.6931472
    %v2213 = vlog2.pop %v2203
    %v2214 = vmul.f32 %v2213, 0.6931472
    %v2215 = vlog2.pop %v2204
    %v2216 = vmul.f32 %v2215, 0.6931472
    %v2217 = vlog2.pop %v2205
    %v2218 = vmul.f32 %v2217, 0.6931472
    %v2219 = vlog2.pop %v2206
    %v2220 = vmul.f32 %v2219, 0.6931472
    %v2221 = vlog2.pop %v2207
    %v2222 = vmul.f32 %v2221, 0.6931472
    %v2223 = vlog2.pop %v2208
    %v2224 = vmul.f32 %v2223, 0.6931472
    %v2225 = vsub.f32 %v2193, %v2210
    %v2226 = vsub.f32 %v2194, %v2212
    %v2227 = vsub.f32 %v2195, %v2214
    %v2228 = vsub.f32 %v2196, %v2216
    %v2229 = vsub.f32 %v2197, %v2218
    %v2230 = vsub.f32 %v2198, %v2220
    %v2231 = vsub.f32 %v2199, %v2222
    %v2232 = vsub.f32 %v2200, %v2224
    %v2233 = vmax.f32 %v2225, 0.0
    %v2234 = vmax.f32 %v2226, 0.0
    %v2235 = vmax.f32 %v2227, 0.0
    %v2236 = vmax.f32 %v2228, 0.0
    %v2237 = vmax.f32 %v2229, 0.0
    %v2238 = vmax.f32 %v2230, 0.0
    %v2239 = vmax.f32 %v2231, 0.0
    %v2240 = vmax.f32 %v2232, 0.0
    %v2241 = vmax.f32 %v1961, -40.0
    %v2242 = vmax.f32 %v1962, -40.0
    %v2243 = vmax.f32 %v1963, -40.0
    %v2244 = vmax.f32 %v1964, -40.0
    %v2245 = vmax.f32 %v1965, -40.0
    %v2246 = vmax.f32 %v1966, -40.0
    %v2247 = vmax.f32 %v1967, -40.0
    %v2248 = vmax.f32 %v1968, -40.0
    %v2249 = vmin.f32 %v2241, 40.0
    %v2250 = vmin.f32 %v2242, 40.0
    %v2251 = vmin.f32 %v2243, 40.0
    %v2252 = vmin.f32 %v2244, 40.0
    %v2253 = vmin.f32 %v2245, 40.0
    %v2254 = vmin.f32 %v2246, 40.0
    %v2255 = vmin.f32 %v2247, 40.0
    %v2256 = vmin.f32 %v2248, 40.0
    %v2257 = vmul.f32 %v1999, %v1737
    %v2258 = vmul.f32 %v2014, %v1738
    %v2259 = vmul.f32 %v2029, %v1739
    %v2260 = vmul.f32 %v2044, %v1740
    %v2261 = vmul.f32 %v2059, %v1741
    %v2262 = vmul.f32 %v2074, %v1742
    %v2263 = vmul.f32 %v2089, %v1743
    %v2264 = vmul.f32 %v2104, %v1744
    %v2265 = vmax.f32 %v2257, -40.0
    %v2266 = vmax.f32 %v2258, -40.0
    %v2267 = vmax.f32 %v2259, -40.0
    %v2268 = vmax.f32 %v2260, -40.0
    %v2269 = vmax.f32 %v2261, -40.0
    %v2270 = vmax.f32 %v2262, -40.0
    %v2271 = vmax.f32 %v2263, -40.0
    %v2272 = vmax.f32 %v2264, -40.0
    %v2273 = vmin.f32 %v2265, 40.0
    %v2274 = vmin.f32 %v2266, 40.0
    %v2275 = vmin.f32 %v2267, 40.0
    %v2276 = vmin.f32 %v2268, 40.0
    %v2277 = vmin.f32 %v2269, 40.0
    %v2278 = vmin.f32 %v2270, 40.0
    %v2279 = vmin.f32 %v2271, 40.0
    %v2280 = vmin.f32 %v2272, 40.0
    %v2281 = vmul.f32 %v2233, 3.0
    %v2282 = vmul.f32 %v2234, 3.0
    %v2283 = vmul.f32 %v2235, 3.0
    %v2284 = vmul.f32 %v2236, 3.0
    %v2285 = vmul.f32 %v2237, 3.0
    %v2286 = vmul.f32 %v2238, 3.0
    %v2287 = vmul.f32 %v2239, 3.0
    %v2288 = vmul.f32 %v2240, 3.0
    %v2297 = vrot.slane %v2282, 7
    %v2298 = vrot.slane %v2283, 6
    %v2299 = vrot.slane %v2284, 5
    %v2300 = vrot.slane %v2285, 4
    %v2301 = vrot.slane %v2286, 3
    %v2302 = vrot.slane %v2287, 2
    %v2303 = vrot.slane %v2288, 1
    %vm2304 = vcmask 1040384
    %v2305 = vsel %vm2304, %v2281, %v2297
    %vm2306 = vcmask 1042434
    %v2307 = vsel %vm2306, %v2298, %v2299
    %vm2308 = vcmask 1041408
    %v2309 = vsel %vm2308, %v2305, %v2307
    %vm2310 = vcmask 1044484
    %v2311 = vsel %vm2310, %v2300, %v2301
    %vm2312 = vcmask 1046534
    %v2313 = vsel %vm2312, %v2302, %v2303
    %vm2314 = vcmask 1045508
    %v2315 = vsel %vm2314, %v2311, %v2313
    %vm2316 = vcmask 1043456
    %v2317 = vsel %vm2316, %v2309, %v2315
    %v2319 = vsub.f32 %v132, %v2317
    %v2320 = vmul.f32 %v1385, %v2273
    %v2321 = vmul.f32 %v1408, %v2274
    %v2322 = vmul.f32 %v1431, %v2275
    %v2323 = vmul.f32 %v1454, %v2276
    %v2324 = vmul.f32 %v1477, %v2277
    %v2325 = vmul.f32 %v1500, %v2278
    %v2326 = vmul.f32 %v1523, %v2279
    %v2327 = vmul.f32 %v1546, %v2280
    %v2328 = vrot.slane %v2320, 4
    %v2329 = vadd.f32 %v2320, %v2328
    %v2330 = vrot.slane %v2329, 2
    %v2331 = vadd.f32 %v2329, %v2330
    %v2332 = vrot.slane %v2331, 1
    %v2333 = vadd.f32 %v2331, %v2332
    %v2334 = vrot.slane %v2321, 4
    %v2335 = vadd.f32 %v2321, %v2334
    %v2336 = vrot.slane %v2335, 2
    %v2337 = vadd.f32 %v2335, %v2336
    %v2338 = vrot.slane %v2337, 1
    %v2339 = vadd.f32 %v2337, %v2338
    %v2340 = vrot.slane %v2322, 4
    %v2341 = vadd.f32 %v2322, %v2340
    %v2342 = vrot.slane %v2341, 2
    %v2343 = vadd.f32 %v2341, %v2342
    %v2344 = vrot.slane %v2343, 1
    %v2345 = vadd.f32 %v2343, %v2344
    %v2346 = vrot.slane %v2323, 4
    %v2347 = vadd.f32 %v2323, %v2346
    %v2348 = vrot.slane %v2347, 2
    %v2349 = vadd.f32 %v2347, %v2348
    %v2350 = vrot.slane %v2349, 1
    %v2351 = vadd.f32 %v2349, %v2350
    %v2352 = vrot.slane %v2324, 4
    %v2353 = vadd.f32 %v2324, %v2352
    %v2354 = vrot.slane %v2353, 2
    %v2355 = vadd.f32 %v2353, %v2354
    %v2356 = vrot.slane %v2355, 1
    %v2357 = vadd.f32 %v2355, %v2356
    %v2358 = vrot.slane %v2325, 4
    %v2359 = vadd.f32 %v2325, %v2358
    %v2360 = vrot.slane %v2359, 2
    %v2361 = vadd.f32 %v2359, %v2360
    %v2362 = vrot.slane %v2361, 1
    %v2363 = vadd.f32 %v2361, %v2362
    %v2364 = vrot.slane %v2326, 4
    %v2365 = vadd.f32 %v2326, %v2364
    %v2366 = vrot.slane %v2365, 2
    %v2367 = vadd.f32 %v2365, %v2366
    %v2368 = vrot.slane %v2367, 1
    %v2369 = vadd.f32 %v2367, %v2368
    %v2370 = vrot.slane %v2327, 4
    %v2371 = vadd.f32 %v2327, %v2370
    %v2372 = vrot.slane %v2371, 2
    %v2373 = vadd.f32 %v2371, %v2372
    %v2374 = vrot.slane %v2373, 1
    %v2375 = vadd.f32 %v2373, %v2374
    %v2376 = vmul.f32 %v1631, %v2249
    %v2377 = vmul.f32 %v1643, %v2250
    %v2378 = vmul.f32 %v1655, %v2251
    %v2379 = vmul.f32 %v1667, %v2252
    %v2380 = vmul.f32 %v1679, %v2253
    %v2381 = vmul.f32 %v1691, %v2254
    %v2382 = vmul.f32 %v1703, %v2255
    %v2383 = vmul.f32 %v1715, %v2256
    %v2384 = vsub.f32 %v2333, %v2376
    %v2385 = vsub.f32 %v2339, %v2377
    %v2386 = vsub.f32 %v2345, %v2378
    %v2387 = vsub.f32 %v2351, %v2379
    %v2388 = vsub.f32 %v2357, %v2380
    %v2389 = vsub.f32 %v2363, %v2381
    %v2390 = vsub.f32 %v2369, %v2382
    %v2391 = vsub.f32 %v2375, %v2383
    %v2392 = vsub.f32 0.0, %v2384
    %v2393 = vsub.f32 0.0, %v2385
    %v2394 = vsub.f32 0.0, %v2386
    %v2395 = vsub.f32 0.0, %v2387
    %v2396 = vsub.f32 0.0, %v2388
    %v2397 = vsub.f32 0.0, %v2389
    %v2398 = vsub.f32 0.0, %v2390
    %v2399 = vsub.f32 0.0, %v2391
    %v2400 = vmax.f32 %v2392, 1.000001
    %v2401 = vmax.f32 %v2393, 1.000001
    %v2402 = vmax.f32 %v2394, 1.000001
    %v2403 = vmax.f32 %v2395, 1.000001
    %v2404 = vmax.f32 %v2396, 1.000001
    %v2405 = vmax.f32 %v2397, 1.000001
    %v2406 = vmax.f32 %v2398, 1.000001
    %v2407 = vmax.f32 %v2399, 1.000001
    %v2408 = vsub.f32 %v2400, 1.0
    %v2409 = vsub.f32 %v2401, 1.0
    %v2410 = vsub.f32 %v2402, 1.0
    %v2411 = vsub.f32 %v2403, 1.0
    %v2412 = vsub.f32 %v2404, 1.0
    %v2413 = vsub.f32 %v2405, 1.0
    %v2414 = vsub.f32 %v2406, 1.0
    %v2415 = vsub.f32 %v2407, 1.0
    %v2416 = vadd.f32 %v2400, 1.0
    %v2417 = vadd.f32 %v2401, 1.0
    %v2418 = vadd.f32 %v2402, 1.0
    %v2419 = vadd.f32 %v2403, 1.0
    %v2420 = vadd.f32 %v2404, 1.0
    %v2421 = vadd.f32 %v2405, 1.0
    %v2422 = vadd.f32 %v2406, 1.0
    %v2423 = vadd.f32 %v2407, 1.0
    %v2424 = vmul.f32 %v2408, %v2416
    %v2425 = vmul.f32 %v2409, %v2417
    %v2426 = vmul.f32 %v2410, %v2418
    %v2427 = vmul.f32 %v2411, %v2419
    %v2428 = vmul.f32 %v2412, %v2420
    %v2429 = vmul.f32 %v2413, %v2421
    %v2430 = vmul.f32 %v2414, %v2422
    %v2431 = vmul.f32 %v2415, %v2423
    %v2432 = vrsqrt.pop %v2424
    %v2433 = vmul.f32 %v2432, %v2424
    %v2434 = vmul.f32 %v2433, %v2432
    %v2435 = vmul.f32 0.5, %v2434
    %v2436 = vsub.f32 1.5, %v2435
    %v2437 = vmul.f32 %v2432, %v2436
    %v2438 = vmul.f32 %v2424, %v2437
    %vm2439 = vcmp.eq.f32.partialorder %v2424, inf
    %v2440 = vsel %vm2439, %v2424, %v2438
    %vm2441 = vcmp.eq.f32.partialorder %v2424, 0.0
    %v2442 = vand.u32 %v2424, 2147483648
    %v2443 = vsel %vm2441, %v2442, %v2440
    %v2444 = vrsqrt.pop %v2425
    %v2445 = vmul.f32 %v2444, %v2425
    %v2446 = vmul.f32 %v2445, %v2444
    %v2447 = vmul.f32 0.5, %v2446
    %v2448 = vsub.f32 1.5, %v2447
    %v2449 = vmul.f32 %v2444, %v2448
    %v2450 = vmul.f32 %v2425, %v2449
    %vm2451 = vcmp.eq.f32.partialorder %v2425, inf
    %v2452 = vsel %vm2451, %v2425, %v2450
    %vm2453 = vcmp.eq.f32.partialorder %v2425, 0.0
    %v2454 = vand.u32 %v2425, 2147483648
    %v2455 = vsel %vm2453, %v2454, %v2452
    %v2456 = vrsqrt.pop %v2426
    %v2457 = vmul.f32 %v2456, %v2426
    %v2458 = vmul.f32 %v2457, %v2456
    %v2459 = vmul.f32 0.5, %v2458
    %v2460 = vsub.f32 1.5, %v2459
    %v2461 = vmul.f32 %v2456, %v2460
    %v2462 = vmul.f32 %v2426, %v2461
    %vm2463 = vcmp.eq.f32.partialorder %v2426, inf
    %v2464 = vsel %vm2463, %v2426, %v2462
    %vm2465 = vcmp.eq.f32.partialorder %v2426, 0.0
    %v2466 = vand.u32 %v2426, 2147483648
    %v2467 = vsel %vm2465, %v2466, %v2464
    %v2468 = vrsqrt.pop %v2427
    %v2469 = vmul.f32 %v2468, %v2427
    %v2470 = vmul.f32 %v2469, %v2468
    %v2471 = vmul.f32 0.5, %v2470
    %v2472 = vsub.f32 1.5, %v2471
    %v2473 = vmul.f32 %v2468, %v2472
    %v2474 = vmul.f32 %v2427, %v2473
    %vm2475 = vcmp.eq.f32.partialorder %v2427, inf
    %v2476 = vsel %vm2475, %v2427, %v2474
    %vm2477 = vcmp.eq.f32.partialorder %v2427, 0.0
    %v2478 = vand.u32 %v2427, 2147483648
    %v2479 = vsel %vm2477, %v2478, %v2476
    %v2480 = vrsqrt.pop %v2428
    %v2481 = vmul.f32 %v2480, %v2428
    %v2482 = vmul.f32 %v2481, %v2480
    %v2483 = vmul.f32 0.5, %v2482
    %v2484 = vsub.f32 1.5, %v2483
    %v2485 = vmul.f32 %v2480, %v2484
    %v2486 = vmul.f32 %v2428, %v2485
    %vm2487 = vcmp.eq.f32.partialorder %v2428, inf
    %v2488 = vsel %vm2487, %v2428, %v2486
    %vm2489 = vcmp.eq.f32.partialorder %v2428, 0.0
    %v2490 = vand.u32 %v2428, 2147483648
    %v2491 = vsel %vm2489, %v2490, %v2488
    %v2492 = vrsqrt.pop %v2429
    %v2493 = vmul.f32 %v2492, %v2429
    %v2494 = vmul.f32 %v2493, %v2492
    %v2495 = vmul.f32 0.5, %v2494
    %v2496 = vsub.f32 1.5, %v2495
    %v2497 = vmul.f32 %v2492, %v2496
    %v2498 = vmul.f32 %v2429, %v2497
    %vm2499 = vcmp.eq.f32.partialorder %v2429, inf
    %v2500 = vsel %vm2499, %v2429, %v2498
    %vm2501 = vcmp.eq.f32.partialorder %v2429, 0.0
    %v2502 = vand.u32 %v2429, 2147483648
    %v2503 = vsel %vm2501, %v2502, %v2500
    %v2504 = vrsqrt.pop %v2430
    %v2505 = vmul.f32 %v2504, %v2430
    %v2506 = vmul.f32 %v2505, %v2504
    %v2507 = vmul.f32 0.5, %v2506
    %v2508 = vsub.f32 1.5, %v2507
    %v2509 = vmul.f32 %v2504, %v2508
    %v2510 = vmul.f32 %v2430, %v2509
    %vm2511 = vcmp.eq.f32.partialorder %v2430, inf
    %v2512 = vsel %vm2511, %v2430, %v2510
    %vm2513 = vcmp.eq.f32.partialorder %v2430, 0.0
    %v2514 = vand.u32 %v2430, 2147483648
    %v2515 = vsel %vm2513, %v2514, %v2512
    %v2516 = vrsqrt.pop %v2431
    %v2517 = vmul.f32 %v2516, %v2431
    %v2518 = vmul.f32 %v2517, %v2516
    %v2519 = vmul.f32 0.5, %v2518
    %v2520 = vsub.f32 1.5, %v2519
    %v2521 = vmul.f32 %v2516, %v2520
    %v2522 = vmul.f32 %v2431, %v2521
    %vm2523 = vcmp.eq.f32.partialorder %v2431, inf
    %v2524 = vsel %vm2523, %v2431, %v2522
    %vm2525 = vcmp.eq.f32.partialorder %v2431, 0.0
    %v2526 = vand.u32 %v2431, 2147483648
    %v2527 = vsel %vm2525, %v2526, %v2524
    %v2528 = vadd.f32 %v2408, %v2443
    %v2529 = vadd.f32 %v2409, %v2455
    %v2530 = vadd.f32 %v2410, %v2467
    %v2531 = vadd.f32 %v2411, %v2479
    %v2532 = vadd.f32 %v2412, %v2491
    %v2533 = vadd.f32 %v2413, %v2503
    %v2534 = vadd.f32 %v2414, %v2515
    %v2535 = vadd.f32 %v2415, %v2527
    %v2536 = vadd.f32 %v2528, 1.0
    %v2537 = vlog2.pop %v2536
    %v2538 = vmul.f32 %v2537, 0.6931472
    %v2539 = vmul.f32 -0.5, %v2528
    %v2540 = vadd.f32 %v2539, 1.0
    %v2541 = vmul.f32 %v2540, %v2528
    %v2542 = vand.u32 2147483647, %v2528
    %vm2543 = vcmp.lt.f32.partialorder %v2542, 0.0004427343
    %v2544 = vsel %vm2543, %v2541, %v2538
    %v2545 = vadd.f32 %v2529, 1.0
    %v2546 = vlog2.pop %v2545
    %v2547 = vmul.f32 %v2546, 0.6931472
    %v2548 = vmul.f32 -0.5, %v2529
    %v2549 = vadd.f32 %v2548, 1.0
    %v2550 = vmul.f32 %v2549, %v2529
    %v2551 = vand.u32 2147483647, %v2529
    %vm2552 = vcmp.lt.f32.partialorder %v2551, 0.0004427343
    %v2553 = vsel %vm2552, %v2550, %v2547
    %v2554 = vadd.f32 %v2530, 1.0
    %v2555 = vlog2.pop %v2554
    %v2556 = vmul.f32 %v2555, 0.6931472
    %v2557 = vmul.f32 -0.5, %v2530
    %v2558 = vadd.f32 %v2557, 1.0
    %v2559 = vmul.f32 %v2558, %v2530
    %v2560 = vand.u32 2147483647, %v2530
    %vm2561 = vcmp.lt.f32.partialorder %v2560, 0.0004427343
    %v2562 = vsel %vm2561, %v2559, %v2556
    %v2563 = vadd.f32 %v2531, 1.0
    %v2564 = vlog2.pop %v2563
    %v2565 = vmul.f32 %v2564, 0.6931472
    %v2566 = vmul.f32 -0.5, %v2531
    %v2567 = vadd.f32 %v2566, 1.0
    %v2568 = vmul.f32 %v2567, %v2531
    %v2569 = vand.u32 2147483647, %v2531
    %vm2570 = vcmp.lt.f32.partialorder %v2569, 0.0004427343
    %v2571 = vsel %vm2570, %v2568, %v2565
    %v2572 = vadd.f32 %v2532, 1.0
    %v2573 = vlog2.pop %v2572
    %v2574 = vmul.f32 %v2573, 0.6931472
    %v2575 = vmul.f32 -0.5, %v2532
    %v2576 = vadd.f32 %v2575, 1.0
    %v2577 = vmul.f32 %v2576, %v2532
    %v2578 = vand.u32 2147483647, %v2532
    %vm2579 = vcmp.lt.f32.partialorder %v2578, 0.0004427343
    %v2580 = vsel %vm2579, %v2577, %v2574
    %v2581 = vadd.f32 %v2533, 1.0
    %v2582 = vlog2.pop %v2581
    %v2583 = vmul.f32 %v2582, 0.6931472
    %v2584 = vmul.f32 -0.5, %v2533
    %v2585 = vadd.f32 %v2584, 1.0
    %v2586 = vmul.f32 %v2585, %v2533
    %v2587 = vand.u32 2147483647, %v2533
    %vm2588 = vcmp.lt.f32.partialorder %v2587, 0.0004427343
    %v2589 = vsel %vm2588, %v2586, %v2583
    %v2590 = vadd.f32 %v2534, 1.0
    %v2591 = vlog2.pop %v2590
    %v2592 = vmul.f32 %v2591, 0.6931472
    %v2593 = vmul.f32 -0.5, %v2534
    %v2594 = vadd.f32 %v2593, 1.0
    %v2595 = vmul.f32 %v2594, %v2534
    %v2596 = vand.u32 2147483647, %v2534
    %vm2597 = vcmp.lt.f32.partialorder %v2596, 0.0004427343
    %v2598 = vsel %vm2597, %v2595, %v2592
    %v2599 = vadd.f32 %v2535, 1.0
    %v2600 = vlog2.pop %v2599
    %v2601 = vmul.f32 %v2600, 0.6931472
    %v2602 = vmul.f32 -0.5, %v2535
    %v2603 = vadd.f32 %v2602, 1.0
    %v2604 = vmul.f32 %v2603, %v2535
    %v2605 = vand.u32 2147483647, %v2535
    %vm2606 = vcmp.lt.f32.partialorder %v2605, 0.0004427343
    %v2607 = vsel %vm2606, %v2604, %v2601
    %v2608 = vrcp.pop %v2443
    %v2609 = vmul.f32 %v2443, %v2608
    %v2610 = vsub.f32 1.0, %v2609
    %v2611 = vmul.f32 %v2608, %v2610
    %v2612 = vadd.f32 %v2608, %v2611
    %vm2613 = vweird.f32 %v2443
    %vm2614 = vweird.f32 %v2608
    %vm2615 = vmor %vm2613, %vm2614
    %v2616 = vsel %vm2615, %v2608, %v2612
    %v2617 = vand.u32 2147483647, %v2443
    %vm2618 = vcmp.eq.f32.partialorder %v2617, 8.507059e+37
    %v2619 = vand.u32 %v2443, 2147483648
    %v2620 = vor.u32 1.1754944e-38, %v2619
    %v2621 = vsel %vm2618, %v2620, %v2616
    %v2622 = vmul.f32 %v2544, %v2621
    %v2623 = vrcp.pop %v2455
    %v2624 = vmul.f32 %v2455, %v2623
    %v2625 = vsub.f32 1.0, %v2624
    %v2626 = vmul.f32 %v2623, %v2625
    %v2627 = vadd.f32 %v2623, %v2626
    %vm2628 = vweird.f32 %v2455
    %vm2629 = vweird.f32 %v2623
    %vm2630 = vmor %vm2628, %vm2629
    %v2631 = vsel %vm2630, %v2623, %v2627
    %v2632 = vand.u32 2147483647, %v2455
    %vm2633 = vcmp.eq.f32.partialorder %v2632, 8.507059e+37
    %v2634 = vand.u32 %v2455, 2147483648
    %v2635 = vor.u32 1.1754944e-38, %v2634
    %v2636 = vsel %vm2633, %v2635, %v2631
    %v2637 = vmul.f32 %v2553, %v2636
    %v2638 = vrcp.pop %v2467
    %v2639 = vmul.f32 %v2467, %v2638
    %v2640 = vsub.f32 1.0, %v2639
    %v2641 = vmul.f32 %v2638, %v2640
    %v2642 = vadd.f32 %v2638, %v2641
    %vm2643 = vweird.f32 %v2467
    %vm2644 = vweird.f32 %v2638
    %vm2645 = vmor %vm2643, %vm2644
    %v2646 = vsel %vm2645, %v2638, %v2642
    %v2647 = vand.u32 2147483647, %v2467
    %vm2648 = vcmp.eq.f32.partialorder %v2647, 8.507059e+37
    %v2649 = vand.u32 %v2467, 2147483648
    %v2650 = vor.u32 1.1754944e-38, %v2649
    %v2651 = vsel %vm2648, %v2650, %v2646
    %v2652 = vmul.f32 %v2562, %v2651
    %v2653 = vrcp.pop %v2479
    %v2654 = vmul.f32 %v2479, %v2653
    %v2655 = vsub.f32 1.0, %v2654
    %v2656 = vmul.f32 %v2653, %v2655
    %v2657 = vadd.f32 %v2653, %v2656
    %vm2658 = vweird.f32 %v2479
    %vm2659 = vweird.f32 %v2653
    %vm2660 = vmor %vm2658, %vm2659
    %v2661 = vsel %vm2660, %v2653, %v2657
    %v2662 = vand.u32 2147483647, %v2479
    %vm2663 = vcmp.eq.f32.partialorder %v2662, 8.507059e+37
    %v2664 = vand.u32 %v2479, 2147483648
    %v2665 = vor.u32 1.1754944e-38, %v2664
    %v2666 = vsel %vm2663, %v2665, %v2661
    %v2667 = vmul.f32 %v2571, %v2666
    %v2668 = vrcp.pop %v2491
    %v2669 = vmul.f32 %v2491, %v2668
    %v2670 = vsub.f32 1.0, %v2669
    %v2671 = vmul.f32 %v2668, %v2670
    %v2672 = vadd.f32 %v2668, %v2671
    %vm2673 = vweird.f32 %v2491
    %vm2674 = vweird.f32 %v2668
    %vm2675 = vmor %vm2673, %vm2674
    %v2676 = vsel %vm2675, %v2668, %v2672
    %v2677 = vand.u32 2147483647, %v2491
    %vm2678 = vcmp.eq.f32.partialorder %v2677, 8.507059e+37
    %v2679 = vand.u32 %v2491, 2147483648
    %v2680 = vor.u32 1.1754944e-38, %v2679
    %v2681 = vsel %vm2678, %v2680, %v2676
    %v2682 = vmul.f32 %v2580, %v2681
    %v2683 = vrcp.pop %v2503
    %v2684 = vmul.f32 %v2503, %v2683
    %v2685 = vsub.f32 1.0, %v2684
    %v2686 = vmul.f32 %v2683, %v2685
    %v2687 = vadd.f32 %v2683, %v2686
    %vm2688 = vweird.f32 %v2503
    %vm2689 = vweird.f32 %v2683
    %vm2690 = vmor %vm2688, %vm2689
    %v2691 = vsel %vm2690, %v2683, %v2687
    %v2692 = vand.u32 2147483647, %v2503
    %vm2693 = vcmp.eq.f32.partialorder %v2692, 8.507059e+37
    %v2694 = vand.u32 %v2503, 2147483648
    %v2695 = vor.u32 1.1754944e-38, %v2694
    %v2696 = vsel %vm2693, %v2695, %v2691
    %v2697 = vmul.f32 %v2589, %v2696
    %v2698 = vrcp.pop %v2515
    %v2699 = vmul.f32 %v2515, %v2698
    %v2700 = vsub.f32 1.0, %v2699
    %v2701 = vmul.f32 %v2698, %v2700
    %v2702 = vadd.f32 %v2698, %v2701
    %vm2703 = vweird.f32 %v2515
    %vm2704 = vweird.f32 %v2698
    %vm2705 = vmor %vm2703, %vm2704
    %v2706 = vsel %vm2705, %v2698, %v2702
    %v2707 = vand.u32 2147483647, %v2515
    %vm2708 = vcmp.eq.f32.partialorder %v2707, 8.507059e+37
    %v2709 = vand.u32 %v2515, 2147483648
    %v2710 = vor.u32 1.1754944e-38, %v2709
    %v2711 = vsel %vm2708, %v2710, %v2706
    %v2712 = vmul.f32 %v2598, %v2711
    %v2713 = vrcp.pop %v2527
    %v2714 = vmul.f32 %v2527, %v2713
    %v2715 = vsub.f32 1.0, %v2714
    %v2716 = vmul.f32 %v2713, %v2715
    %v2717 = vadd.f32 %v2713, %v2716
    %vm2718 = vweird.f32 %v2527
    %vm2719 = vweird.f32 %v2713
    %vm2720 = vmor %vm2718, %vm2719
    %v2721 = vsel %vm2720, %v2713, %v2717
    %v2722 = vand.u32 2147483647, %v2527
    %vm2723 = vcmp.eq.f32.partialorder %v2722, 8.507059e+37
    %v2724 = vand.u32 %v2527, 2147483648
    %v2725 = vor.u32 1.1754944e-38, %v2724
    %v2726 = vsel %vm2723, %v2725, %v2721
    %v2727 = vmul.f32 %v2607, %v2726
    %v2728 = vmul.f32 %v2400, %v1631
    %v2729 = vmul.f32 %v2401, %v1643
    %v2730 = vmul.f32 %v2402, %v1655
    %v2731 = vmul.f32 %v2403, %v1667
    %v2732 = vmul.f32 %v2404, %v1679
    %v2733 = vmul.f32 %v2405, %v1691
    %v2734 = vmul.f32 %v2406, %v1703
    %v2735 = vmul.f32 %v2407, %v1715
    %v2736 = vsub.f32 %v2249, %v2728
    %v2737 = vsub.f32 %v2250, %v2729
    %v2738 = vsub.f32 %v2251, %v2730
    %v2739 = vsub.f32 %v2252, %v2731
    %v2740 = vsub.f32 %v2253, %v2732
    %v2741 = vsub.f32 %v2254, %v2733
    %v2742 = vsub.f32 %v2255, %v2734
    %v2743 = vsub.f32 %v2256, %v2735
    %v2744 = vmul.f32 %v2622, %v2736
    %v2745 = vmul.f32 %v2637, %v2737
    %v2746 = vmul.f32 %v2652, %v2738
    %v2747 = vmul.f32 %v2667, %v2739
    %v2748 = vmul.f32 %v2682, %v2740
    %v2749 = vmul.f32 %v2697, %v2741
    %v2750 = vmul.f32 %v2712, %v2742
    %v2751 = vmul.f32 %v2727, %v2743
    %v2752 = vmul.f32 %v2400, %v1385
    %v2753 = vmul.f32 %v2401, %v1408
    %v2754 = vmul.f32 %v2402, %v1431
    %v2755 = vmul.f32 %v2403, %v1454
    %v2756 = vmul.f32 %v2404, %v1477
    %v2757 = vmul.f32 %v2405, %v1500
    %v2758 = vmul.f32 %v2406, %v1523
    %v2759 = vmul.f32 %v2407, %v1546
    %v2760 = vsub.f32 %v2273, %v2752
    %v2761 = vsub.f32 %v2274, %v2753
    %v2762 = vsub.f32 %v2275, %v2754
    %v2763 = vsub.f32 %v2276, %v2755
    %v2764 = vsub.f32 %v2277, %v2756
    %v2765 = vsub.f32 %v2278, %v2757
    %v2766 = vsub.f32 %v2279, %v2758
    %v2767 = vsub.f32 %v2280, %v2759
    %v2768 = vmul.f32 %v2622, %v2760
    %v2769 = vmul.f32 %v2637, %v2761
    %v2770 = vmul.f32 %v2652, %v2762
    %v2771 = vmul.f32 %v2667, %v2763
    %v2772 = vmul.f32 %v2682, %v2764
    %v2773 = vmul.f32 %v2697, %v2765
    %v2774 = vmul.f32 %v2712, %v2766
    %v2775 = vmul.f32 %v2727, %v2767
    %v2776 = vmul.f32 %v2768, %v2768
    %v2777 = vmul.f32 %v2769, %v2769
    %v2778 = vmul.f32 %v2770, %v2770
    %v2779 = vmul.f32 %v2771, %v2771
    %v2780 = vmul.f32 %v2772, %v2772
    %v2781 = vmul.f32 %v2773, %v2773
    %v2782 = vmul.f32 %v2774, %v2774
    %v2783 = vmul.f32 %v2775, %v2775
    %v2784 = vrot.slane %v2776, 4
    %v2785 = vadd.f32 %v2776, %v2784
    %v2786 = vrot.slane %v2785, 2
    %v2787 = vadd.f32 %v2785, %v2786
    %v2788 = vrot.slane %v2787, 1
    %v2789 = vadd.f32 %v2787, %v2788
    %v2790 = vrot.slane %v2777, 4
    %v2791 = vadd.f32 %v2777, %v2790
    %v2792 = vrot.slane %v2791, 2
    %v2793 = vadd.f32 %v2791, %v2792
    %v2794 = vrot.slane %v2793, 1
    %v2795 = vadd.f32 %v2793, %v2794
    %v2796 = vrot.slane %v2778, 4
    %v2797 = vadd.f32 %v2778, %v2796
    %v2798 = vrot.slane %v2797, 2
    %v2799 = vadd.f32 %v2797, %v2798
    %v2800 = vrot.slane %v2799, 1
    %v2801 = vadd.f32 %v2799, %v2800
    %v2802 = vrot.slane %v2779, 4
    %v2803 = vadd.f32 %v2779, %v2802
    %v2804 = vrot.slane %v2803, 2
    %v2805 = vadd.f32 %v2803, %v2804
    %v2806 = vrot.slane %v2805, 1
    %v2807 = vadd.f32 %v2805, %v2806
    %v2808 = vrot.slane %v2780, 4
    %v2809 = vadd.f32 %v2780, %v2808
    %v2810 = vrot.slane %v2809, 2
    %v2811 = vadd.f32 %v2809, %v2810
    %v2812 = vrot.slane %v2811, 1
    %v2813 = vadd.f32 %v2811, %v2812
    %v2814 = vrot.slane %v2781, 4
    %v2815 = vadd.f32 %v2781, %v2814
    %v2816 = vrot.slane %v2815, 2
    %v2817 = vadd.f32 %v2815, %v2816
    %v2818 = vrot.slane %v2817, 1
    %v2819 = vadd.f32 %v2817, %v2818
    %v2820 = vrot.slane %v2782, 4
    %v2821 = vadd.f32 %v2782, %v2820
    %v2822 = vrot.slane %v2821, 2
    %v2823 = vadd.f32 %v2821, %v2822
    %v2824 = vrot.slane %v2823, 1
    %v2825 = vadd.f32 %v2823, %v2824
    %v2826 = vrot.slane %v2783, 4
    %v2827 = vadd.f32 %v2783, %v2826
    %v2828 = vrot.slane %v2827, 2
    %v2829 = vadd.f32 %v2827, %v2828
    %v2830 = vrot.slane %v2829, 1
    %v2831 = vadd.f32 %v2829, %v2830
    %v2832 = vmul.f32 %v2744, %v2744
    %v2833 = vmul.f32 %v2745, %v2745
    %v2834 = vmul.f32 %v2746, %v2746
    %v2835 = vmul.f32 %v2747, %v2747
    %v2836 = vmul.f32 %v2748, %v2748
    %v2837 = vmul.f32 %v2749, %v2749
    %v2838 = vmul.f32 %v2750, %v2750
    %v2839 = vmul.f32 %v2751, %v2751
    %v2840 = vsub.f32 %v2789, %v2832
    %v2841 = vsub.f32 %v2795, %v2833
    %v2842 = vsub.f32 %v2801, %v2834
    %v2843 = vsub.f32 %v2807, %v2835
    %v2844 = vsub.f32 %v2813, %v2836
    %v2845 = vsub.f32 %v2819, %v2837
    %v2846 = vsub.f32 %v2825, %v2838
    %v2847 = vsub.f32 %v2831, %v2839
    %v2848 = vmax.f32 %v2840, 1e-06
    %v2849 = vmax.f32 %v2841, 1e-06
    %v2850 = vmax.f32 %v2842, 1e-06
    %v2851 = vmax.f32 %v2843, 1e-06
    %v2852 = vmax.f32 %v2844, 1e-06
    %v2853 = vmax.f32 %v2845, 1e-06
    %v2854 = vmax.f32 %v2846, 1e-06
    %v2855 = vmax.f32 %v2847, 1e-06
    %v2856 = vrsqrt.pop %v2848
    %v2857 = vmul.f32 %v2856, %v2848
    %v2858 = vmul.f32 %v2857, %v2856
    %v2859 = vmul.f32 0.5, %v2858
    %v2860 = vsub.f32 1.5, %v2859
    %v2861 = vmul.f32 %v2856, %v2860
    %v2862 = vmul.f32 %v2848, %v2861
    %vm2863 = vcmp.eq.f32.partialorder %v2848, inf
    %v2864 = vsel %vm2863, %v2848, %v2862
    %vm2865 = vcmp.eq.f32.partialorder %v2848, 0.0
    %v2866 = vand.u32 %v2848, 2147483648
    %v2867 = vsel %vm2865, %v2866, %v2864
    %v2868 = vrsqrt.pop %v2849
    %v2869 = vmul.f32 %v2868, %v2849
    %v2870 = vmul.f32 %v2869, %v2868
    %v2871 = vmul.f32 0.5, %v2870
    %v2872 = vsub.f32 1.5, %v2871
    %v2873 = vmul.f32 %v2868, %v2872
    %v2874 = vmul.f32 %v2849, %v2873
    %vm2875 = vcmp.eq.f32.partialorder %v2849, inf
    %v2876 = vsel %vm2875, %v2849, %v2874
    %vm2877 = vcmp.eq.f32.partialorder %v2849, 0.0
    %v2878 = vand.u32 %v2849, 2147483648
    %v2879 = vsel %vm2877, %v2878, %v2876
    %v2880 = vrsqrt.pop %v2850
    %v2881 = vmul.f32 %v2880, %v2850
    %v2882 = vmul.f32 %v2881, %v2880
    %v2883 = vmul.f32 0.5, %v2882
    %v2884 = vsub.f32 1.5, %v2883
    %v2885 = vmul.f32 %v2880, %v2884
    %v2886 = vmul.f32 %v2850, %v2885
    %vm2887 = vcmp.eq.f32.partialorder %v2850, inf
    %v2888 = vsel %vm2887, %v2850, %v2886
    %vm2889 = vcmp.eq.f32.partialorder %v2850, 0.0
    %v2890 = vand.u32 %v2850, 2147483648
    %v2891 = vsel %vm2889, %v2890, %v2888
    %v2892 = vrsqrt.pop %v2851
    %v2893 = vmul.f32 %v2892, %v2851
    %v2894 = vmul.f32 %v2893, %v2892
    %v2895 = vmul.f32 0.5, %v2894
    %v2896 = vsub.f32 1.5, %v2895
    %v2897 = vmul.f32 %v2892, %v2896
    %v2898 = vmul.f32 %v2851, %v2897
    %vm2899 = vcmp.eq.f32.partialorder %v2851, inf
    %v2900 = vsel %vm2899, %v2851, %v2898
    %vm2901 = vcmp.eq.f32.partialorder %v2851, 0.0
    %v2902 = vand.u32 %v2851, 2147483648
    %v2903 = vsel %vm2901, %v2902, %v2900
    %v2904 = vrsqrt.pop %v2852
    %v2905 = vmul.f32 %v2904, %v2852
    %v2906 = vmul.f32 %v2905, %v2904
    %v2907 = vmul.f32 0.5, %v2906
    %v2908 = vsub.f32 1.5, %v2907
    %v2909 = vmul.f32 %v2904, %v2908
    %v2910 = vmul.f32 %v2852, %v2909
    %vm2911 = vcmp.eq.f32.partialorder %v2852, inf
    %v2912 = vsel %vm2911, %v2852, %v2910
    %vm2913 = vcmp.eq.f32.partialorder %v2852, 0.0
    %v2914 = vand.u32 %v2852, 2147483648
    %v2915 = vsel %vm2913, %v2914, %v2912
    %v2916 = vrsqrt.pop %v2853
    %v2917 = vmul.f32 %v2916, %v2853
    %v2918 = vmul.f32 %v2917, %v2916
    %v2919 = vmul.f32 0.5, %v2918
    %v2920 = vsub.f32 1.5, %v2919
    %v2921 = vmul.f32 %v2916, %v2920
    %v2922 = vmul.f32 %v2853, %v2921
    %vm2923 = vcmp.eq.f32.partialorder %v2853, inf
    %v2924 = vsel %vm2923, %v2853, %v2922
    %vm2925 = vcmp.eq.f32.partialorder %v2853, 0.0
    %v2926 = vand.u32 %v2853, 2147483648
    %v2927 = vsel %vm2925, %v2926, %v2924
    %v2928 = vrsqrt.pop %v2854
    %v2929 = vmul.f32 %v2928, %v2854
    %v2930 = vmul.f32 %v2929, %v2928
    %v2931 = vmul.f32 0.5, %v2930
    %v2932 = vsub.f32 1.5, %v2931
    %v2933 = vmul.f32 %v2928, %v2932
    %v2934 = vmul.f32 %v2854, %v2933
    %vm2935 = vcmp.eq.f32.partialorder %v2854, inf
    %v2936 = vsel %vm2935, %v2854, %v2934
    %vm2937 = vcmp.eq.f32.partialorder %v2854, 0.0
    %v2938 = vand.u32 %v2854, 2147483648
    %v2939 = vsel %vm2937, %v2938, %v2936
    %v2940 = vrsqrt.pop %v2855
    %v2941 = vmul.f32 %v2940, %v2855
    %v2942 = vmul.f32 %v2941, %v2940
    %v2943 = vmul.f32 0.5, %v2942
    %v2944 = vsub.f32 1.5, %v2943
    %v2945 = vmul.f32 %v2940, %v2944
    %v2946 = vmul.f32 %v2855, %v2945
    %vm2947 = vcmp.eq.f32.partialorder %v2855, inf
    %v2948 = vsel %vm2947, %v2855, %v2946
    %vm2949 = vcmp.eq.f32.partialorder %v2855, 0.0
    %v2950 = vand.u32 %v2855, 2147483648
    %v2951 = vsel %vm2949, %v2950, %v2948
    %v2952 = vmax.f32 %v2867, 1e-06
    %v2953 = vmax.f32 %v2879, 1e-06
    %v2954 = vmax.f32 %v2891, 1e-06
    %v2955 = vmax.f32 %v2903, 1e-06
    %v2956 = vmax.f32 %v2915, 1e-06
    %v2957 = vmax.f32 %v2927, 1e-06
    %v2958 = vmax.f32 %v2939, 1e-06
    %v2959 = vmax.f32 %v2951, 1e-06
    %v2960 = vmul.f32 %v2952, -2.0
    %v2961 = vmul.f32 %v2953, -2.0
    %v2962 = vmul.f32 %v2954, -2.0
    %v2963 = vmul.f32 %v2955, -2.0
    %v2964 = vmul.f32 %v2956, -2.0
    %v2965 = vmul.f32 %v2957, -2.0
    %v2966 = vmul.f32 %v2958, -2.0
    %v2967 = vmul.f32 %v2959, -2.0
    %v2968 = vmul.f32 %v2960, 1.442695
    %v2969 = vpow.pop %v2968
    %v2970 = vmul.f32 %v2961, 1.442695
    %v2971 = vpow.pop %v2970
    %v2972 = vmul.f32 %v2962, 1.442695
    %v2973 = vpow.pop %v2972
    %v2974 = vmul.f32 %v2963, 1.442695
    %v2975 = vpow.pop %v2974
    %v2976 = vmul.f32 %v2964, 1.442695
    %v2977 = vpow.pop %v2976
    %v2978 = vmul.f32 %v2965, 1.442695
    %v2979 = vpow.pop %v2978
    %v2980 = vmul.f32 %v2966, 1.442695
    %v2981 = vpow.pop %v2980
    %v2982 = vmul.f32 %v2967, 1.442695
    %v2983 = vpow.pop %v2982
    %v2984 = vsub.f32 0.0, %v2969
    %v2985 = vsub.f32 0.0, %v2971
    %v2986 = vsub.f32 0.0, %v2973
    %v2987 = vsub.f32 0.0, %v2975
    %v2988 = vsub.f32 0.0, %v2977
    %v2989 = vsub.f32 0.0, %v2979
    %v2990 = vsub.f32 0.0, %v2981
    %v2991 = vsub.f32 0.0, %v2983
    %v2992 = vadd.f32 %v2984, 1.0
    %v2993 = vlog2.pop %v2992
    %v2994 = vmul.f32 %v2993, 0.6931472
    %v2995 = vmul.f32 -0.5, %v2984
    %v2996 = vadd.f32 %v2995, 1.0
    %v2997 = vmul.f32 %v2996, %v2984
    %v2998 = vand.u32 2147483647, %v2984
    %vm2999 = vcmp.lt.f32.partialorder %v2998, 0.0004427343
    %v3000 = vsel %vm2999, %v2997, %v2994
    %v3001 = vadd.f32 %v2985, 1.0
    %v3002 = vlog2.pop %v3001
    %v3003 = vmul.f32 %v3002, 0.6931472
    %v3004 = vmul.f32 -0.5, %v2985
    %v3005 = vadd.f32 %v3004, 1.0
    %v3006 = vmul.f32 %v3005, %v2985
    %v3007 = vand.u32 2147483647, %v2985
    %vm3008 = vcmp.lt.f32.partialorder %v3007, 0.0004427343
    %v3009 = vsel %vm3008, %v3006, %v3003
    %v3010 = vadd.f32 %v2986, 1.0
    %v3011 = vlog2.pop %v3010
    %v3012 = vmul.f32 %v3011, 0.6931472
    %v3013 = vmul.f32 -0.5, %v2986
    %v3014 = vadd.f32 %v3013, 1.0
    %v3015 = vmul.f32 %v3014, %v2986
    %v3016 = vand.u32 2147483647, %v2986
    %vm3017 = vcmp.lt.f32.partialorder %v3016, 0.0004427343
    %v3018 = vsel %vm3017, %v3015, %v3012
    %v3019 = vadd.f32 %v2987, 1.0
    %v3020 = vlog2.pop %v3019
    %v3021 = vmul.f32 %v3020, 0.6931472
    %v3022 = vmul.f32 -0.5, %v2987
    %v3023 = vadd.f32 %v3022, 1.0
    %v3024 = vmul.f32 %v3023, %v2987
    %v3025 = vand.u32 2147483647, %v2987
    %vm3026 = vcmp.lt.f32.partialorder %v3025, 0.0004427343
    %v3027 = vsel %vm3026, %v3024, %v3021
    %v3028 = vadd.f32 %v2988, 1.0
    %v3029 = vlog2.pop %v3028
    %v3030 = vmul.f32 %v3029, 0.6931472
    %v3031 = vmul.f32 -0.5, %v2988
    %v3032 = vadd.f32 %v3031, 1.0
    %v3033 = vmul.f32 %v3032, %v2988
    %v3034 = vand.u32 2147483647, %v2988
    %vm3035 = vcmp.lt.f32.partialorder %v3034, 0.0004427343
    %v3036 = vsel %vm3035, %v3033, %v3030
    %v3037 = vadd.f32 %v2989, 1.0
    %v3038 = vlog2.pop %v3037
    %v3039 = vmul.f32 %v3038, 0.6931472
    %v3040 = vmul.f32 -0.5, %v2989
    %v3041 = vadd.f32 %v3040, 1.0
    %v3042 = vmul.f32 %v3041, %v2989
    %v3043 = vand.u32 2147483647, %v2989
    %vm3044 = vcmp.lt.f32.partialorder %v3043, 0.0004427343
    %v3045 = vsel %vm3044, %v3042, %v3039
    %v3046 = vadd.f32 %v2990, 1.0
    %v3047 = vlog2.pop %v3046
    %v3048 = vmul.f32 %v3047, 0.6931472
    %v3049 = vmul.f32 -0.5, %v2990
    %v3050 = vadd.f32 %v3049, 1.0
    %v3051 = vmul.f32 %v3050, %v2990
    %v3052 = vand.u32 2147483647, %v2990
    %vm3053 = vcmp.lt.f32.partialorder %v3052, 0.0004427343
    %v3054 = vsel %vm3053, %v3051, %v3048
    %v3055 = vadd.f32 %v2991, 1.0
    %v3056 = vlog2.pop %v3055
    %v3057 = vmul.f32 %v3056, 0.6931472
    %v3058 = vmul.f32 -0.5, %v2991
    %v3059 = vadd.f32 %v3058, 1.0
    %v3060 = vmul.f32 %v3059, %v2991
    %v3061 = vand.u32 2147483647, %v2991
    %vm3062 = vcmp.lt.f32.partialorder %v3061, 0.0004427343
    %v3063 = vsel %vm3062, %v3060, %v3057
    %v3064 = vadd.f32 %v2952, %v3000
    %v3065 = vadd.f32 %v2953, %v3009
    %v3066 = vadd.f32 %v2954, %v3018
    %v3067 = vadd.f32 %v2955, %v3027
    %v3068 = vadd.f32 %v2956, %v3036
    %v3069 = vadd.f32 %v2957, %v3045
    %v3070 = vadd.f32 %v2958, %v3054
    %v3071 = vadd.f32 %v2959, %v3063
    %v3072 = vmul.f32 %v2952, 2.0
    %v3073 = vmul.f32 %v2953, 2.0
    %v3074 = vmul.f32 %v2954, 2.0
    %v3075 = vmul.f32 %v2955, 2.0
    %v3076 = vmul.f32 %v2956, 2.0
    %v3077 = vmul.f32 %v2957, 2.0
    %v3078 = vmul.f32 %v2958, 2.0
    %v3079 = vmul.f32 %v2959, 2.0
    %v3080 = vlog2.pop %v3072
    %v3081 = vmul.f32 %v3080, 0.6931472
    %v3082 = vlog2.pop %v3073
    %v3083 = vmul.f32 %v3082, 0.6931472
    %v3084 = vlog2.pop %v3074
    %v3085 = vmul.f32 %v3084, 0.6931472
    %v3086 = vlog2.pop %v3075
    %v3087 = vmul.f32 %v3086, 0.6931472
    %v3088 = vlog2.pop %v3076
    %v3089 = vmul.f32 %v3088, 0.6931472
    %v3090 = vlog2.pop %v3077
    %v3091 = vmul.f32 %v3090, 0.6931472
    %v3092 = vlog2.pop %v3078
    %v3093 = vmul.f32 %v3092, 0.6931472
    %v3094 = vlog2.pop %v3079
    %v3095 = vmul.f32 %v3094, 0.6931472
    %v3096 = vsub.f32 %v3064, %v3081
    %v3097 = vsub.f32 %v3065, %v3083
    %v3098 = vsub.f32 %v3066, %v3085
    %v3099 = vsub.f32 %v3067, %v3087
    %v3100 = vsub.f32 %v3068, %v3089
    %v3101 = vsub.f32 %v3069, %v3091
    %v3102 = vsub.f32 %v3070, %v3093
    %v3103 = vsub.f32 %v3071, %v3095
    %v3104 = vmax.f32 %v3096, 0.0
    %v3105 = vmax.f32 %v3097, 0.0
    %v3106 = vmax.f32 %v3098, 0.0
    %v3107 = vmax.f32 %v3099, 0.0
    %v3108 = vmax.f32 %v3100, 0.0
    %v3109 = vmax.f32 %v3101, 0.0
    %v3110 = vmax.f32 %v3102, 0.0
    %v3111 = vmax.f32 %v3103, 0.0
    %v3112 = vmul.f32 %v3104, 3.0
    %v3113 = vmul.f32 %v3105, 3.0
    %v3114 = vmul.f32 %v3106, 3.0
    %v3115 = vmul.f32 %v3107, 3.0
    %v3116 = vmul.f32 %v3108, 3.0
    %v3117 = vmul.f32 %v3109, 3.0
    %v3118 = vmul.f32 %v3110, 3.0
    %v3119 = vmul.f32 %v3111, 3.0
    %v3128 = vrot.slane %v3113, 7
    %v3129 = vrot.slane %v3114, 6
    %v3130 = vrot.slane %v3115, 5
    %v3131 = vrot.slane %v3116, 4
    %v3132 = vrot.slane %v3117, 3
    %v3133 = vrot.slane %v3118, 2
    %v3134 = vrot.slane %v3119, 1
    %v3135 = vsel %vm2304, %v3112, %v3128
    %v3136 = vsel %vm2306, %v3129, %v3130
    %v3137 = vsel %vm2308, %v3135, %v3136
    %v3138 = vsel %vm2310, %v3131, %v3132
    %v3139 = vsel %vm2312, %v3133, %v3134
    %v3140 = vsel %vm2314, %v3138, %v3139
    %v3141 = vsel %vm2316, %v3137, %v3140
    %v3143 = vadd.f32 %v2319, %v3141
    %v3144 = vmax.f32 %v2744, -40.0
    %v3145 = vmax.f32 %v2745, -40.0
    %v3146 = vmax.f32 %v2746, -40.0
    %v3147 = vmax.f32 %v2747, -40.0
    %v3148 = vmax.f32 %v2748, -40.0
    %v3149 = vmax.f32 %v2749, -40.0
    %v3150 = vmax.f32 %v2750, -40.0
    %v3151 = vmax.f32 %v2751, -40.0
    %v3152 = vmin.f32 %v3144, 40.0
    %v3153 = vmin.f32 %v3145, 40.0
    %v3154 = vmin.f32 %v3146, 40.0
    %v3155 = vmin.f32 %v3147, 40.0
    %v3156 = vmin.f32 %v3148, 40.0
    %v3157 = vmin.f32 %v3149, 40.0
    %v3158 = vmin.f32 %v3150, 40.0
    %v3159 = vmin.f32 %v3151, 40.0
    %v3160 = vmax.f32 %v2768, -40.0
    %v3161 = vmax.f32 %v2769, -40.0
    %v3162 = vmax.f32 %v2770, -40.0
    %v3163 = vmax.f32 %v2771, -40.0
    %v3164 = vmax.f32 %v2772, -40.0
    %v3165 = vmax.f32 %v2773, -40.0
    %v3166 = vmax.f32 %v2774, -40.0
    %v3167 = vmax.f32 %v2775, -40.0
    %v3168 = vmin.f32 %v3160, 40.0
    %v3169 = vmin.f32 %v3161, 40.0
    %v3170 = vmin.f32 %v3162, 40.0
    %v3171 = vmin.f32 %v3163, 40.0
    %v3172 = vmin.f32 %v3164, 40.0
    %v3173 = vmin.f32 %v3165, 40.0
    %v3174 = vmin.f32 %v3166, 40.0
    %v3175 = vmin.f32 %v3167, 40.0
    %v3176 = vadd.f32 %v1631, 1.0
    %v3177 = vadd.f32 %v1643, 1.0
    %v3178 = vadd.f32 %v1655, 1.0
    %v3179 = vadd.f32 %v1667, 1.0
    %v3180 = vadd.f32 %v1679, 1.0
    %v3181 = vadd.f32 %v1691, 1.0
    %v3182 = vadd.f32 %v1703, 1.0
    %v3183 = vadd.f32 %v1715, 1.0
    %v3184 = vrcp.pop %v3176
    %v3185 = vmul.f32 %v3176, %v3184
    %v3186 = vsub.f32 1.0, %v3185
    %v3187 = vmul.f32 %v3184, %v3186
    %v3188 = vadd.f32 %v3184, %v3187
    %vm3189 = vweird.f32 %v3176
    %vm3190 = vweird.f32 %v3184
    %vm3191 = vmor %vm3189, %vm3190
    %v3192 = vsel %vm3191, %v3184, %v3188
    %v3193 = vand.u32 2147483647, %v3176
    %vm3194 = vcmp.eq.f32.partialorder %v3193, 8.507059e+37
    %v3195 = vand.u32 %v3176, 2147483648
    %v3196 = vor.u32 1.1754944e-38, %v3195
    %v3197 = vsel %vm3194, %v3196, %v3192
    %v3198 = vmul.f32 %v3152, %v3197
    %v3199 = vrcp.pop %v3177
    %v3200 = vmul.f32 %v3177, %v3199
    %v3201 = vsub.f32 1.0, %v3200
    %v3202 = vmul.f32 %v3199, %v3201
    %v3203 = vadd.f32 %v3199, %v3202
    %vm3204 = vweird.f32 %v3177
    %vm3205 = vweird.f32 %v3199
    %vm3206 = vmor %vm3204, %vm3205
    %v3207 = vsel %vm3206, %v3199, %v3203
    %v3208 = vand.u32 2147483647, %v3177
    %vm3209 = vcmp.eq.f32.partialorder %v3208, 8.507059e+37
    %v3210 = vand.u32 %v3177, 2147483648
    %v3211 = vor.u32 1.1754944e-38, %v3210
    %v3212 = vsel %vm3209, %v3211, %v3207
    %v3213 = vmul.f32 %v3153, %v3212
    %v3214 = vrcp.pop %v3178
    %v3215 = vmul.f32 %v3178, %v3214
    %v3216 = vsub.f32 1.0, %v3215
    %v3217 = vmul.f32 %v3214, %v3216
    %v3218 = vadd.f32 %v3214, %v3217
    %vm3219 = vweird.f32 %v3178
    %vm3220 = vweird.f32 %v3214
    %vm3221 = vmor %vm3219, %vm3220
    %v3222 = vsel %vm3221, %v3214, %v3218
    %v3223 = vand.u32 2147483647, %v3178
    %vm3224 = vcmp.eq.f32.partialorder %v3223, 8.507059e+37
    %v3225 = vand.u32 %v3178, 2147483648
    %v3226 = vor.u32 1.1754944e-38, %v3225
    %v3227 = vsel %vm3224, %v3226, %v3222
    %v3228 = vmul.f32 %v3154, %v3227
    %v3229 = vrcp.pop %v3179
    %v3230 = vmul.f32 %v3179, %v3229
    %v3231 = vsub.f32 1.0, %v3230
    %v3232 = vmul.f32 %v3229, %v3231
    %v3233 = vadd.f32 %v3229, %v3232
    %vm3234 = vweird.f32 %v3179
    %vm3235 = vweird.f32 %v3229
    %vm3236 = vmor %vm3234, %vm3235
    %v3237 = vsel %vm3236, %v3229, %v3233
    %v3238 = vand.u32 2147483647, %v3179
    %vm3239 = vcmp.eq.f32.partialorder %v3238, 8.507059e+37
    %v3240 = vand.u32 %v3179, 2147483648
    %v3241 = vor.u32 1.1754944e-38, %v3240
    %v3242 = vsel %vm3239, %v3241, %v3237
    %v3243 = vmul.f32 %v3155, %v3242
    %v3244 = vrcp.pop %v3180
    %v3245 = vmul.f32 %v3180, %v3244
    %v3246 = vsub.f32 1.0, %v3245
    %v3247 = vmul.f32 %v3244, %v3246
    %v3248 = vadd.f32 %v3244, %v3247
    %vm3249 = vweird.f32 %v3180
    %vm3250 = vweird.f32 %v3244
    %vm3251 = vmor %vm3249, %vm3250
    %v3252 = vsel %vm3251, %v3244, %v3248
    %v3253 = vand.u32 2147483647, %v3180
    %vm3254 = vcmp.eq.f32.partialorder %v3253, 8.507059e+37
    %v3255 = vand.u32 %v3180, 2147483648
    %v3256 = vor.u32 1.1754944e-38, %v3255
    %v3257 = vsel %vm3254, %v3256, %v3252
    %v3258 = vmul.f32 %v3156, %v3257
    %v3259 = vrcp.pop %v3181
    %v3260 = vmul.f32 %v3181, %v3259
    %v3261 = vsub.f32 1.0, %v3260
    %v3262 = vmul.f32 %v3259, %v3261
    %v3263 = vadd.f32 %v3259, %v3262
    %vm3264 = vweird.f32 %v3181
    %vm3265 = vweird.f32 %v3259
    %vm3266 = vmor %vm3264, %vm3265
    %v3267 = vsel %vm3266, %v3259, %v3263
    %v3268 = vand.u32 2147483647, %v3181
    %vm3269 = vcmp.eq.f32.partialorder %v3268, 8.507059e+37
    %v3270 = vand.u32 %v3181, 2147483648
    %v3271 = vor.u32 1.1754944e-38, %v3270
    %v3272 = vsel %vm3269, %v3271, %v3267
    %v3273 = vmul.f32 %v3157, %v3272
    %v3274 = vrcp.pop %v3182
    %v3275 = vmul.f32 %v3182, %v3274
    %v3276 = vsub.f32 1.0, %v3275
    %v3277 = vmul.f32 %v3274, %v3276
    %v3278 = vadd.f32 %v3274, %v3277
    %vm3279 = vweird.f32 %v3182
    %vm3280 = vweird.f32 %v3274
    %vm3281 = vmor %vm3279, %vm3280
    %v3282 = vsel %vm3281, %v3274, %v3278
    %v3283 = vand.u32 2147483647, %v3182
    %vm3284 = vcmp.eq.f32.partialorder %v3283, 8.507059e+37
    %v3285 = vand.u32 %v3182, 2147483648
    %v3286 = vor.u32 1.1754944e-38, %v3285
    %v3287 = vsel %vm3284, %v3286, %v3282
    %v3288 = vmul.f32 %v3158, %v3287
    %v3289 = vrcp.pop %v3183
    %v3290 = vmul.f32 %v3183, %v3289
    %v3291 = vsub.f32 1.0, %v3290
    %v3292 = vmul.f32 %v3289, %v3291
    %v3293 = vadd.f32 %v3289, %v3292
    %vm3294 = vweird.f32 %v3183
    %vm3295 = vweird.f32 %v3289
    %vm3296 = vmor %vm3294, %vm3295
    %v3297 = vsel %vm3296, %v3289, %v3293
    %v3298 = vand.u32 2147483647, %v3183
    %vm3299 = vcmp.eq.f32.partialorder %v3298, 8.507059e+37
    %v3300 = vand.u32 %v3183, 2147483648
    %v3301 = vor.u32 1.1754944e-38, %v3300
    %v3302 = vsel %vm3299, %v3301, %v3297
    %v3303 = vmul.f32 %v3159, %v3302
    %v3304 = vmul.f32 %v3198, %v1385
    %v3305 = vmul.f32 %v3213, %v1408
    %v3306 = vmul.f32 %v3228, %v1431
    %v3307 = vmul.f32 %v3243, %v1454
    %v3308 = vmul.f32 %v3258, %v1477
    %v3309 = vmul.f32 %v3273, %v1500
    %v3310 = vmul.f32 %v3288, %v1523
    %v3311 = vmul.f32 %v3303, %v1546
    %v3312 = vsub.f32 %v3168, %v3304
    %v3313 = vsub.f32 %v3169, %v3305
    %v3314 = vsub.f32 %v3170, %v3306
    %v3315 = vsub.f32 %v3171, %v3307
    %v3316 = vsub.f32 %v3172, %v3308
    %v3317 = vsub.f32 %v3173, %v3309
    %v3318 = vsub.f32 %v3174, %v3310
    %v3319 = vsub.f32 %v3175, %v3311
    %vm3320 = vcmp.gt.f32.partialorder %v134, 0.0
    %v3321 = vsub.f32 0.0, %v1548
    %v3322 = vsub.f32 0.0, %v1549
    %v3323 = vsub.f32 0.0, %v1550
    %v3324 = vsub.f32 0.0, %v1551
    %v3325 = vsub.f32 0.0, %v1552
    %v3326 = vsub.f32 0.0, %v1553
    %v3327 = vsub.f32 0.0, %v1554
    %v3328 = vsub.f32 0.0, %v1555
    %v3329 = vmul.f32 %v3321, 1.442695
    %v3330 = vpow.pop %v3329
    %v3331 = vmul.f32 %v3322, 1.442695
    %v3332 = vpow.pop %v3331
    %v3333 = vmul.f32 %v3323, 1.442695
    %v3334 = vpow.pop %v3333
    %v3335 = vmul.f32 %v3324, 1.442695
    %v3336 = vpow.pop %v3335
    %v3337 = vmul.f32 %v3325, 1.442695
    %v3338 = vpow.pop %v3337
    %v3339 = vmul.f32 %v3326, 1.442695
    %v3340 = vpow.pop %v3339
    %v3341 = vmul.f32 %v3327, 1.442695
    %v3342 = vpow.pop %v3341
    %v3343 = vmul.f32 %v3328, 1.442695
    %v3344 = vpow.pop %v3343
    %v3345 = vmul.f32 %v3312, %v3330
    %v3346 = vmul.f32 %v3313, %v3332
    %v3347 = vmul.f32 %v3314, %v3334
    %v3348 = vmul.f32 %v3315, %v3336
    %v3349 = vmul.f32 %v3316, %v3338
    %v3350 = vmul.f32 %v3317, %v3340
    %v3351 = vmul.f32 %v3318, %v3342
    %v3352 = vmul.f32 %v3319, %v3344
    %v3353 = vsel %vm3320, 1, 0
    %3354 = vset.pattern.permute.xlu0 0
    %3355 = vperm.xlu0 %3354, %v3353
    %v3356 = vpop.permute.xlu0 %3355
    %vm3357 = vcmp.eq.s32.totalorder %v3356, 1
    %v3358 = vsel %vm3357, %v104, %v3345
    %v3359 = vsel %vm3357, %v105, %v3346
    %v3360 = vsel %vm3357, %v106, %v3347
    %v3361 = vsel %vm3357, %v107, %v3348
    %v3362 = vsel %vm3357, %v108, %v3349
    %v3363 = vsel %vm3357, %v109, %v3350
    %v3364 = vsel %vm3357, %v110, %v3351
    %v3365 = vsel %vm3357, %v111, %v3352
    %v3366 = vmul.f32 %v1719, %v1548
    %v3367 = vmul.f32 %v1719, %v1549
    %v3368 = vmul.f32 %v1719, %v1550
    %v3369 = vmul.f32 %v1719, %v1551
    %v3370 = vmul.f32 %v1719, %v1552
    %v3371 = vmul.f32 %v1719, %v1553
    %v3372 = vmul.f32 %v1719, %v1554
    %v3373 = vmul.f32 %v1719, %v1555
    %v3374 = vrot.slane %v3366, 4
    %v3375 = vadd.f32 %v3366, %v3374
    %v3376 = vrot.slane %v3375, 2
    %v3377 = vadd.f32 %v3375, %v3376
    %v3378 = vrot.slane %v3377, 1
    %v3379 = vadd.f32 %v3377, %v3378
    %v3380 = vrot.slane %v3367, 4
    %v3381 = vadd.f32 %v3367, %v3380
    %v3382 = vrot.slane %v3381, 2
    %v3383 = vadd.f32 %v3381, %v3382
    %v3384 = vrot.slane %v3383, 1
    %v3385 = vadd.f32 %v3383, %v3384
    %v3386 = vrot.slane %v3368, 4
    %v3387 = vadd.f32 %v3368, %v3386
    %v3388 = vrot.slane %v3387, 2
    %v3389 = vadd.f32 %v3387, %v3388
    %v3390 = vrot.slane %v3389, 1
    %v3391 = vadd.f32 %v3389, %v3390
    %v3392 = vrot.slane %v3369, 4
    %v3393 = vadd.f32 %v3369, %v3392
    %v3394 = vrot.slane %v3393, 2
    %v3395 = vadd.f32 %v3393, %v3394
    %v3396 = vrot.slane %v3395, 1
    %v3397 = vadd.f32 %v3395, %v3396
    %v3398 = vrot.slane %v3370, 4
    %v3399 = vadd.f32 %v3370, %v3398
    %v3400 = vrot.slane %v3399, 2
    %v3401 = vadd.f32 %v3399, %v3400
    %v3402 = vrot.slane %v3401, 1
    %v3403 = vadd.f32 %v3401, %v3402
    %v3404 = vrot.slane %v3371, 4
    %v3405 = vadd.f32 %v3371, %v3404
    %v3406 = vrot.slane %v3405, 2
    %v3407 = vadd.f32 %v3405, %v3406
    %v3408 = vrot.slane %v3407, 1
    %v3409 = vadd.f32 %v3407, %v3408
    %v3410 = vrot.slane %v3372, 4
    %v3411 = vadd.f32 %v3372, %v3410
    %v3412 = vrot.slane %v3411, 2
    %v3413 = vadd.f32 %v3411, %v3412
    %v3414 = vrot.slane %v3413, 1
    %v3415 = vadd.f32 %v3413, %v3414
    %v3416 = vrot.slane %v3373, 4
    %v3417 = vadd.f32 %v3373, %v3416
    %v3418 = vrot.slane %v3417, 2
    %v3419 = vadd.f32 %v3417, %v3418
    %v3420 = vrot.slane %v3419, 1
    %v3421 = vadd.f32 %v3419, %v3420
    %v3430 = vrot.slane %v3385, 7
    %v3431 = vrot.slane %v3391, 6
    %v3432 = vrot.slane %v3397, 5
    %v3433 = vrot.slane %v3403, 4
    %v3434 = vrot.slane %v3409, 3
    %v3435 = vrot.slane %v3415, 2
    %v3436 = vrot.slane %v3421, 1
    %v3437 = vsel %vm2304, %v3379, %v3430
    %v3438 = vsel %vm2306, %v3431, %v3432
    %v3439 = vsel %vm2308, %v3437, %v3438
    %v3440 = vsel %vm2310, %v3433, %v3434
    %v3441 = vsel %vm2312, %v3435, %v3436
    %v3442 = vsel %vm2314, %v3440, %v3441
    %v3443 = vsel %vm2316, %v3439, %v3442
    %v3445 = vsub.f32 %v3143, %v3443
    %v3446 = vld [vmem:[%s2] sm:$0xff]
    %v3447 = vsub.f32 1.0, %v3446
    %v3448 = vld [vmem:[%s3] sm:$0xff]
    %v3449 = vld [vmem:[%s3 + $0x8] sm:$0xff]
    %v3450 = vld [vmem:[%s3 + $0x10] sm:$0xff]
    %v3451 = vld [vmem:[%s3 + $0x18] sm:$0xff]
    %v3452 = vld [vmem:[%s3 + $0x20] sm:$0xff]
    %v3453 = vld [vmem:[%s3 + $0x28] sm:$0xff]
    %v3454 = vld [vmem:[%s3 + $0x30] sm:$0xff]
    %v3455 = vld [vmem:[%s3 + $0x38] sm:$0xff]
    %v3456 = vld [vmem:[%s4] sm:$0xff]
    %v3457 = vld [vmem:[%s4 + $0x8] sm:$0xff]
    %v3458 = vld [vmem:[%s4 + $0x10] sm:$0xff]
    %v3459 = vld [vmem:[%s4 + $0x18] sm:$0xff]
    %v3460 = vld [vmem:[%s4 + $0x20] sm:$0xff]
    %v3461 = vld [vmem:[%s4 + $0x28] sm:$0xff]
    %v3462 = vld [vmem:[%s4 + $0x30] sm:$0xff]
    %v3463 = vld [vmem:[%s4 + $0x38] sm:$0xff]
    %3465 = vset.pattern.permute.xlu0 0
    %3466 = vperm.xlu0 %3465, %v3456
    %v3467 = vpop.permute.xlu0 %3466
    %3470 = vset.pattern.permute.xlu0 0
    %3471 = vperm.xlu0 %3470, %v3457
    %v3472 = vpop.permute.xlu0 %3471
    %3475 = vset.pattern.permute.xlu0 0
    %3476 = vperm.xlu0 %3475, %v3458
    %v3477 = vpop.permute.xlu0 %3476
    %3480 = vset.pattern.permute.xlu0 0
    %3481 = vperm.xlu0 %3480, %v3459
    %v3482 = vpop.permute.xlu0 %3481
    %3485 = vset.pattern.permute.xlu0 0
    %3486 = vperm.xlu0 %3485, %v3460
    %v3487 = vpop.permute.xlu0 %3486
    %3490 = vset.pattern.permute.xlu0 0
    %3491 = vperm.xlu0 %3490, %v3461
    %v3492 = vpop.permute.xlu0 %3491
    %3495 = vset.pattern.permute.xlu0 0
    %3496 = vperm.xlu0 %3495, %v3462
    %v3497 = vpop.permute.xlu0 %3496
    %3500 = vset.pattern.permute.xlu0 0
    %3501 = vperm.xlu0 %3500, %v3463
    %v3502 = vpop.permute.xlu0 %3501
    %v3505 = vsel %vm194, %v3448, 0
    %v3508 = vsel %vm194, %v3449, 0
    %v3511 = vsel %vm194, %v3450, 0
    %v3514 = vsel %vm194, %v3451, 0
    %v3517 = vsel %vm194, %v3452, 0
    %v3520 = vsel %vm194, %v3453, 0
    %v3523 = vsel %vm194, %v3454, 0
    %v3526 = vsel %vm194, %v3455, 0
    %3528 = vmatpush.msra.mxu0 0.0
    %3529 = vmatpush.msra.mxu0 0.0
    %3530 = vmatpush.msra.mxu0 0.0
    %3531 = vmatpush.msra.mxu0 0.0
    %3532 = vmatpush.msra.mxu0 0.0
    %3533 = vmatpush.msra.mxu0 0.0
    %3534 = vmatpush.msra.mxu0 0.0
    %3535 = vmatpush.msra.mxu0 0.0
    %3536 = vmatpush.msra.mxu0 0.0
    %3537 = vmatpush.msra.mxu0 0.0
    %3538 = vmatpush.msra.mxu0 0.0
    %3539 = vmatpush.msra.mxu0 0.0
    %3540 = vmatpush.msra.mxu0 0.0
    %3541 = vmatpush.msra.mxu0 0.0
    %3542 = vmatpush.msra.mxu0 0.0
    %3543 = vmatpush.msra.mxu0 %v3358
    %3544 = vmatmul.f32.gmra.mxu0 %v3505
    %v3545 = vpop.f32.mrf.mxu0
    %v3546 = vadd.f32 %v3467, %v3545
    %3547 = vmatmul.f32.gmra.mxu0 %v3508
    %v3548 = vpop.f32.mrf.mxu0
    %v3549 = vadd.f32 %v3472, %v3548
    %3550 = vmatmul.f32.gmra.mxu0 %v3511
    %v3551 = vpop.f32.mrf.mxu0
    %v3552 = vadd.f32 %v3477, %v3551
    %3553 = vmatmul.f32.gmra.mxu0 %v3514
    %v3554 = vpop.f32.mrf.mxu0
    %v3555 = vadd.f32 %v3482, %v3554
    %3556 = vmatmul.f32.gmra.mxu0 %v3517
    %v3557 = vpop.f32.mrf.mxu0
    %v3558 = vadd.f32 %v3487, %v3557
    %3559 = vmatmul.f32.gmra.mxu0 %v3520
    %v3560 = vpop.f32.mrf.mxu0
    %v3561 = vadd.f32 %v3492, %v3560
    %3562 = vmatmul.f32.gmra.mxu0 %v3523
    %v3563 = vpop.f32.mrf.mxu0
    %v3564 = vadd.f32 %v3497, %v3563
    %3565 = vmatmul.f32.gmra.mxu0 %v3526
    %v3566 = vpop.f32.mrf.mxu0
    %v3567 = vadd.f32 %v3502, %v3566
    %3568 = vdwg.mxu0
    %3569 = vmatpush.msra.mxu0 0.0
    %3570 = vmatpush.msra.mxu0 0.0
    %3571 = vmatpush.msra.mxu0 0.0
    %3572 = vmatpush.msra.mxu0 0.0
    %3573 = vmatpush.msra.mxu0 0.0
    %3574 = vmatpush.msra.mxu0 0.0
    %3575 = vmatpush.msra.mxu0 0.0
    %3576 = vmatpush.msra.mxu0 0.0
    %3577 = vmatpush.msra.mxu0 0.0
    %3578 = vmatpush.msra.mxu0 0.0
    %3579 = vmatpush.msra.mxu0 0.0
    %3580 = vmatpush.msra.mxu0 0.0
    %3581 = vmatpush.msra.mxu0 0.0
    %3582 = vmatpush.msra.mxu0 0.0
    %3583 = vmatpush.msra.mxu0 0.0
    %3584 = vmatpush.msra.mxu0 %v3359
    %3585 = vmatmul.f32.gmra.mxu0 %v3505
    %v3586 = vpop.f32.mrf.mxu0
    %v3587 = vadd.f32 %v3467, %v3586
    %3588 = vmatmul.f32.gmra.mxu0 %v3508
    %v3589 = vpop.f32.mrf.mxu0
    %v3590 = vadd.f32 %v3472, %v3589
    %3591 = vmatmul.f32.gmra.mxu0 %v3511
    %v3592 = vpop.f32.mrf.mxu0
    %v3593 = vadd.f32 %v3477, %v3592
    %3594 = vmatmul.f32.gmra.mxu0 %v3514
    %v3595 = vpop.f32.mrf.mxu0
    %v3596 = vadd.f32 %v3482, %v3595
    %3597 = vmatmul.f32.gmra.mxu0 %v3517
    %v3598 = vpop.f32.mrf.mxu0
    %v3599 = vadd.f32 %v3487, %v3598
    %3600 = vmatmul.f32.gmra.mxu0 %v3520
    %v3601 = vpop.f32.mrf.mxu0
    %v3602 = vadd.f32 %v3492, %v3601
    %3603 = vmatmul.f32.gmra.mxu0 %v3523
    %v3604 = vpop.f32.mrf.mxu0
    %v3605 = vadd.f32 %v3497, %v3604
    %3606 = vmatmul.f32.gmra.mxu0 %v3526
    %v3607 = vpop.f32.mrf.mxu0
    %v3608 = vadd.f32 %v3502, %v3607
    %3609 = vdwg.mxu0
    %3610 = vmatpush.msra.mxu0 0.0
    %3611 = vmatpush.msra.mxu0 0.0
    %3612 = vmatpush.msra.mxu0 0.0
    %3613 = vmatpush.msra.mxu0 0.0
    %3614 = vmatpush.msra.mxu0 0.0
    %3615 = vmatpush.msra.mxu0 0.0
    %3616 = vmatpush.msra.mxu0 0.0
    %3617 = vmatpush.msra.mxu0 0.0
    %3618 = vmatpush.msra.mxu0 0.0
    %3619 = vmatpush.msra.mxu0 0.0
    %3620 = vmatpush.msra.mxu0 0.0
    %3621 = vmatpush.msra.mxu0 0.0
    %3622 = vmatpush.msra.mxu0 0.0
    %3623 = vmatpush.msra.mxu0 0.0
    %3624 = vmatpush.msra.mxu0 0.0
    %3625 = vmatpush.msra.mxu0 %v3360
    %3626 = vmatmul.f32.gmra.mxu0 %v3505
    %v3627 = vpop.f32.mrf.mxu0
    %v3628 = vadd.f32 %v3467, %v3627
    %3629 = vmatmul.f32.gmra.mxu0 %v3508
    %v3630 = vpop.f32.mrf.mxu0
    %v3631 = vadd.f32 %v3472, %v3630
    %3632 = vmatmul.f32.gmra.mxu0 %v3511
    %v3633 = vpop.f32.mrf.mxu0
    %v3634 = vadd.f32 %v3477, %v3633
    %3635 = vmatmul.f32.gmra.mxu0 %v3514
    %v3636 = vpop.f32.mrf.mxu0
    %v3637 = vadd.f32 %v3482, %v3636
    %3638 = vmatmul.f32.gmra.mxu0 %v3517
    %v3639 = vpop.f32.mrf.mxu0
    %v3640 = vadd.f32 %v3487, %v3639
    %3641 = vmatmul.f32.gmra.mxu0 %v3520
    %v3642 = vpop.f32.mrf.mxu0
    %v3643 = vadd.f32 %v3492, %v3642
    %3644 = vmatmul.f32.gmra.mxu0 %v3523
    %v3645 = vpop.f32.mrf.mxu0
    %v3646 = vadd.f32 %v3497, %v3645
    %3647 = vmatmul.f32.gmra.mxu0 %v3526
    %v3648 = vpop.f32.mrf.mxu0
    %v3649 = vadd.f32 %v3502, %v3648
    %3650 = vdwg.mxu0
    %3651 = vmatpush.msra.mxu0 0.0
    %3652 = vmatpush.msra.mxu0 0.0
    %3653 = vmatpush.msra.mxu0 0.0
    %3654 = vmatpush.msra.mxu0 0.0
    %3655 = vmatpush.msra.mxu0 0.0
    %3656 = vmatpush.msra.mxu0 0.0
    %3657 = vmatpush.msra.mxu0 0.0
    %3658 = vmatpush.msra.mxu0 0.0
    %3659 = vmatpush.msra.mxu0 0.0
    %3660 = vmatpush.msra.mxu0 0.0
    %3661 = vmatpush.msra.mxu0 0.0
    %3662 = vmatpush.msra.mxu0 0.0
    %3663 = vmatpush.msra.mxu0 0.0
    %3664 = vmatpush.msra.mxu0 0.0
    %3665 = vmatpush.msra.mxu0 0.0
    %3666 = vmatpush.msra.mxu0 %v3361
    %3667 = vmatmul.f32.gmra.mxu0 %v3505
    %v3668 = vpop.f32.mrf.mxu0
    %v3669 = vadd.f32 %v3467, %v3668
    %3670 = vmatmul.f32.gmra.mxu0 %v3508
    %v3671 = vpop.f32.mrf.mxu0
    %v3672 = vadd.f32 %v3472, %v3671
    %3673 = vmatmul.f32.gmra.mxu0 %v3511
    %v3674 = vpop.f32.mrf.mxu0
    %v3675 = vadd.f32 %v3477, %v3674
    %3676 = vmatmul.f32.gmra.mxu0 %v3514
    %v3677 = vpop.f32.mrf.mxu0
    %v3678 = vadd.f32 %v3482, %v3677
    %3679 = vmatmul.f32.gmra.mxu0 %v3517
    %v3680 = vpop.f32.mrf.mxu0
    %v3681 = vadd.f32 %v3487, %v3680
    %3682 = vmatmul.f32.gmra.mxu0 %v3520
    %v3683 = vpop.f32.mrf.mxu0
    %v3684 = vadd.f32 %v3492, %v3683
    %3685 = vmatmul.f32.gmra.mxu0 %v3523
    %v3686 = vpop.f32.mrf.mxu0
    %v3687 = vadd.f32 %v3497, %v3686
    %3688 = vmatmul.f32.gmra.mxu0 %v3526
    %v3689 = vpop.f32.mrf.mxu0
    %v3690 = vadd.f32 %v3502, %v3689
    %3691 = vdwg.mxu0
    %3692 = vmatpush.msra.mxu0 0.0
    %3693 = vmatpush.msra.mxu0 0.0
    %3694 = vmatpush.msra.mxu0 0.0
    %3695 = vmatpush.msra.mxu0 0.0
    %3696 = vmatpush.msra.mxu0 0.0
    %3697 = vmatpush.msra.mxu0 0.0
    %3698 = vmatpush.msra.mxu0 0.0
    %3699 = vmatpush.msra.mxu0 0.0
    %3700 = vmatpush.msra.mxu0 0.0
    %3701 = vmatpush.msra.mxu0 0.0
    %3702 = vmatpush.msra.mxu0 0.0
    %3703 = vmatpush.msra.mxu0 0.0
    %3704 = vmatpush.msra.mxu0 0.0
    %3705 = vmatpush.msra.mxu0 0.0
    %3706 = vmatpush.msra.mxu0 0.0
    %3707 = vmatpush.msra.mxu0 %v3362
    %3708 = vmatmul.f32.gmra.mxu0 %v3505
    %v3709 = vpop.f32.mrf.mxu0
    %v3710 = vadd.f32 %v3467, %v3709
    %3711 = vmatmul.f32.gmra.mxu0 %v3508
    %v3712 = vpop.f32.mrf.mxu0
    %v3713 = vadd.f32 %v3472, %v3712
    %3714 = vmatmul.f32.gmra.mxu0 %v3511
    %v3715 = vpop.f32.mrf.mxu0
    %v3716 = vadd.f32 %v3477, %v3715
    %3717 = vmatmul.f32.gmra.mxu0 %v3514
    %v3718 = vpop.f32.mrf.mxu0
    %v3719 = vadd.f32 %v3482, %v3718
    %3720 = vmatmul.f32.gmra.mxu0 %v3517
    %v3721 = vpop.f32.mrf.mxu0
    %v3722 = vadd.f32 %v3487, %v3721
    %3723 = vmatmul.f32.gmra.mxu0 %v3520
    %v3724 = vpop.f32.mrf.mxu0
    %v3725 = vadd.f32 %v3492, %v3724
    %3726 = vmatmul.f32.gmra.mxu0 %v3523
    %v3727 = vpop.f32.mrf.mxu0
    %v3728 = vadd.f32 %v3497, %v3727
    %3729 = vmatmul.f32.gmra.mxu0 %v3526
    %v3730 = vpop.f32.mrf.mxu0
    %v3731 = vadd.f32 %v3502, %v3730
    %3732 = vdwg.mxu0
    %3733 = vmatpush.msra.mxu0 0.0
    %3734 = vmatpush.msra.mxu0 0.0
    %3735 = vmatpush.msra.mxu0 0.0
    %3736 = vmatpush.msra.mxu0 0.0
    %3737 = vmatpush.msra.mxu0 0.0
    %3738 = vmatpush.msra.mxu0 0.0
    %3739 = vmatpush.msra.mxu0 0.0
    %3740 = vmatpush.msra.mxu0 0.0
    %3741 = vmatpush.msra.mxu0 0.0
    %3742 = vmatpush.msra.mxu0 0.0
    %3743 = vmatpush.msra.mxu0 0.0
    %3744 = vmatpush.msra.mxu0 0.0
    %3745 = vmatpush.msra.mxu0 0.0
    %3746 = vmatpush.msra.mxu0 0.0
    %3747 = vmatpush.msra.mxu0 0.0
    %3748 = vmatpush.msra.mxu0 %v3363
    %3749 = vmatmul.f32.gmra.mxu0 %v3505
    %v3750 = vpop.f32.mrf.mxu0
    %v3751 = vadd.f32 %v3467, %v3750
    %3752 = vmatmul.f32.gmra.mxu0 %v3508
    %v3753 = vpop.f32.mrf.mxu0
    %v3754 = vadd.f32 %v3472, %v3753
    %3755 = vmatmul.f32.gmra.mxu0 %v3511
    %v3756 = vpop.f32.mrf.mxu0
    %v3757 = vadd.f32 %v3477, %v3756
    %3758 = vmatmul.f32.gmra.mxu0 %v3514
    %v3759 = vpop.f32.mrf.mxu0
    %v3760 = vadd.f32 %v3482, %v3759
    %3761 = vmatmul.f32.gmra.mxu0 %v3517
    %v3762 = vpop.f32.mrf.mxu0
    %v3763 = vadd.f32 %v3487, %v3762
    %3764 = vmatmul.f32.gmra.mxu0 %v3520
    %v3765 = vpop.f32.mrf.mxu0
    %v3766 = vadd.f32 %v3492, %v3765
    %3767 = vmatmul.f32.gmra.mxu0 %v3523
    %v3768 = vpop.f32.mrf.mxu0
    %v3769 = vadd.f32 %v3497, %v3768
    %3770 = vmatmul.f32.gmra.mxu0 %v3526
    %v3771 = vpop.f32.mrf.mxu0
    %v3772 = vadd.f32 %v3502, %v3771
    %3773 = vdwg.mxu0
    %3774 = vmatpush.msra.mxu0 0.0
    %3775 = vmatpush.msra.mxu0 0.0
    %3776 = vmatpush.msra.mxu0 0.0
    %3777 = vmatpush.msra.mxu0 0.0
    %3778 = vmatpush.msra.mxu0 0.0
    %3779 = vmatpush.msra.mxu0 0.0
    %3780 = vmatpush.msra.mxu0 0.0
    %3781 = vmatpush.msra.mxu0 0.0
    %3782 = vmatpush.msra.mxu0 0.0
    %3783 = vmatpush.msra.mxu0 0.0
    %3784 = vmatpush.msra.mxu0 0.0
    %3785 = vmatpush.msra.mxu0 0.0
    %3786 = vmatpush.msra.mxu0 0.0
    %3787 = vmatpush.msra.mxu0 0.0
    %3788 = vmatpush.msra.mxu0 0.0
    %3789 = vmatpush.msra.mxu0 %v3364
    %3790 = vmatmul.f32.gmra.mxu0 %v3505
    %v3791 = vpop.f32.mrf.mxu0
    %v3792 = vadd.f32 %v3467, %v3791
    %3793 = vmatmul.f32.gmra.mxu0 %v3508
    %v3794 = vpop.f32.mrf.mxu0
    %v3795 = vadd.f32 %v3472, %v3794
    %3796 = vmatmul.f32.gmra.mxu0 %v3511
    %v3797 = vpop.f32.mrf.mxu0
    %v3798 = vadd.f32 %v3477, %v3797
    %3799 = vmatmul.f32.gmra.mxu0 %v3514
    %v3800 = vpop.f32.mrf.mxu0
    %v3801 = vadd.f32 %v3482, %v3800
    %3802 = vmatmul.f32.gmra.mxu0 %v3517
    %v3803 = vpop.f32.mrf.mxu0
    %v3804 = vadd.f32 %v3487, %v3803
    %3805 = vmatmul.f32.gmra.mxu0 %v3520
    %v3806 = vpop.f32.mrf.mxu0
    %v3807 = vadd.f32 %v3492, %v3806
    %3808 = vmatmul.f32.gmra.mxu0 %v3523
    %v3809 = vpop.f32.mrf.mxu0
    %v3810 = vadd.f32 %v3497, %v3809
    %3811 = vmatmul.f32.gmra.mxu0 %v3526
    %v3812 = vpop.f32.mrf.mxu0
    %v3813 = vadd.f32 %v3502, %v3812
    %3814 = vdwg.mxu0
    %3815 = vmatpush.msra.mxu0 0.0
    %3816 = vmatpush.msra.mxu0 0.0
    %3817 = vmatpush.msra.mxu0 0.0
    %3818 = vmatpush.msra.mxu0 0.0
    %3819 = vmatpush.msra.mxu0 0.0
    %3820 = vmatpush.msra.mxu0 0.0
    %3821 = vmatpush.msra.mxu0 0.0
    %3822 = vmatpush.msra.mxu0 0.0
    %3823 = vmatpush.msra.mxu0 0.0
    %3824 = vmatpush.msra.mxu0 0.0
    %3825 = vmatpush.msra.mxu0 0.0
    %3826 = vmatpush.msra.mxu0 0.0
    %3827 = vmatpush.msra.mxu0 0.0
    %3828 = vmatpush.msra.mxu0 0.0
    %3829 = vmatpush.msra.mxu0 0.0
    %3830 = vmatpush.msra.mxu0 %v3365
    %3831 = vmatmul.f32.gmra.mxu0 %v3505
    %v3832 = vpop.f32.mrf.mxu0
    %v3833 = vadd.f32 %v3467, %v3832
    %3834 = vmatmul.f32.gmra.mxu0 %v3508
    %v3835 = vpop.f32.mrf.mxu0
    %v3836 = vadd.f32 %v3472, %v3835
    %3837 = vmatmul.f32.gmra.mxu0 %v3511
    %v3838 = vpop.f32.mrf.mxu0
    %v3839 = vadd.f32 %v3477, %v3838
    %3840 = vmatmul.f32.gmra.mxu0 %v3514
    %v3841 = vpop.f32.mrf.mxu0
    %v3842 = vadd.f32 %v3482, %v3841
    %3843 = vmatmul.f32.gmra.mxu0 %v3517
    %v3844 = vpop.f32.mrf.mxu0
    %v3845 = vadd.f32 %v3487, %v3844
    %3846 = vmatmul.f32.gmra.mxu0 %v3520
    %v3847 = vpop.f32.mrf.mxu0
    %v3848 = vadd.f32 %v3492, %v3847
    %3849 = vmatmul.f32.gmra.mxu0 %v3523
    %v3850 = vpop.f32.mrf.mxu0
    %v3851 = vadd.f32 %v3497, %v3850
    %3852 = vmatmul.f32.gmra.mxu0 %v3526
    %v3853 = vpop.f32.mrf.mxu0
    %v3854 = vadd.f32 %v3502, %v3853
    %3855 = vdwg.mxu0
    %vm3856 = vcmp.gt.f32.partialorder %v3546, 0.0
    %vm3857 = vcmp.gt.f32.partialorder %v3587, 0.0
    %vm3858 = vcmp.gt.f32.partialorder %v3628, 0.0
    %vm3859 = vcmp.gt.f32.partialorder %v3669, 0.0
    %vm3860 = vcmp.gt.f32.partialorder %v3710, 0.0
    %vm3861 = vcmp.gt.f32.partialorder %v3751, 0.0
    %vm3862 = vcmp.gt.f32.partialorder %v3792, 0.0
    %vm3863 = vcmp.gt.f32.partialorder %v3833, 0.0
    %vm3864 = vcmp.gt.f32.partialorder %v3549, 0.0
    %vm3865 = vcmp.gt.f32.partialorder %v3590, 0.0
    %vm3866 = vcmp.gt.f32.partialorder %v3631, 0.0
    %vm3867 = vcmp.gt.f32.partialorder %v3672, 0.0
    %vm3868 = vcmp.gt.f32.partialorder %v3713, 0.0
    %vm3869 = vcmp.gt.f32.partialorder %v3754, 0.0
    %vm3870 = vcmp.gt.f32.partialorder %v3795, 0.0
    %vm3871 = vcmp.gt.f32.partialorder %v3836, 0.0
    %vm3872 = vcmp.gt.f32.partialorder %v3552, 0.0
    %vm3873 = vcmp.gt.f32.partialorder %v3593, 0.0
    %vm3874 = vcmp.gt.f32.partialorder %v3634, 0.0
    %vm3875 = vcmp.gt.f32.partialorder %v3675, 0.0
    %vm3876 = vcmp.gt.f32.partialorder %v3716, 0.0
    %vm3877 = vcmp.gt.f32.partialorder %v3757, 0.0
    %vm3878 = vcmp.gt.f32.partialorder %v3798, 0.0
    %vm3879 = vcmp.gt.f32.partialorder %v3839, 0.0
    %vm3880 = vcmp.gt.f32.partialorder %v3555, 0.0
    %vm3881 = vcmp.gt.f32.partialorder %v3596, 0.0
    %vm3882 = vcmp.gt.f32.partialorder %v3637, 0.0
    %vm3883 = vcmp.gt.f32.partialorder %v3678, 0.0
    %vm3884 = vcmp.gt.f32.partialorder %v3719, 0.0
    %vm3885 = vcmp.gt.f32.partialorder %v3760, 0.0
    %vm3886 = vcmp.gt.f32.partialorder %v3801, 0.0
    %vm3887 = vcmp.gt.f32.partialorder %v3842, 0.0
    %vm3888 = vcmp.gt.f32.partialorder %v3558, 0.0
    %vm3889 = vcmp.gt.f32.partialorder %v3599, 0.0
    %vm3890 = vcmp.gt.f32.partialorder %v3640, 0.0
    %vm3891 = vcmp.gt.f32.partialorder %v3681, 0.0
    %vm3892 = vcmp.gt.f32.partialorder %v3722, 0.0
    %vm3893 = vcmp.gt.f32.partialorder %v3763, 0.0
    %vm3894 = vcmp.gt.f32.partialorder %v3804, 0.0
    %vm3895 = vcmp.gt.f32.partialorder %v3845, 0.0
    %vm3896 = vcmp.gt.f32.partialorder %v3561, 0.0
    %vm3897 = vcmp.gt.f32.partialorder %v3602, 0.0
    %vm3898 = vcmp.gt.f32.partialorder %v3643, 0.0
    %vm3899 = vcmp.gt.f32.partialorder %v3684, 0.0
    %vm3900 = vcmp.gt.f32.partialorder %v3725, 0.0
    %vm3901 = vcmp.gt.f32.partialorder %v3766, 0.0
    %vm3902 = vcmp.gt.f32.partialorder %v3807, 0.0
    %vm3903 = vcmp.gt.f32.partialorder %v3848, 0.0
    %vm3904 = vcmp.gt.f32.partialorder %v3564, 0.0
    %vm3905 = vcmp.gt.f32.partialorder %v3605, 0.0
    %vm3906 = vcmp.gt.f32.partialorder %v3646, 0.0
    %vm3907 = vcmp.gt.f32.partialorder %v3687, 0.0
    %vm3908 = vcmp.gt.f32.partialorder %v3728, 0.0
    %vm3909 = vcmp.gt.f32.partialorder %v3769, 0.0
    %vm3910 = vcmp.gt.f32.partialorder %v3810, 0.0
    %vm3911 = vcmp.gt.f32.partialorder %v3851, 0.0
    %vm3912 = vcmp.gt.f32.partialorder %v3567, 0.0
    %vm3913 = vcmp.gt.f32.partialorder %v3608, 0.0
    %vm3914 = vcmp.gt.f32.partialorder %v3649, 0.0
    %vm3915 = vcmp.gt.f32.partialorder %v3690, 0.0
    %vm3916 = vcmp.gt.f32.partialorder %v3731, 0.0
    %vm3917 = vcmp.gt.f32.partialorder %v3772, 0.0
    %vm3918 = vcmp.gt.f32.partialorder %v3813, 0.0
    %vm3919 = vcmp.gt.f32.partialorder %v3854, 0.0
    %v3920 = vmul.f32 %v3546, 0.01
    %v3921 = vmul.f32 %v3587, 0.01
    %v3922 = vmul.f32 %v3628, 0.01
    %v3923 = vmul.f32 %v3669, 0.01
    %v3924 = vmul.f32 %v3710, 0.01
    %v3925 = vmul.f32 %v3751, 0.01
    %v3926 = vmul.f32 %v3792, 0.01
    %v3927 = vmul.f32 %v3833, 0.01
    %v3928 = vmul.f32 %v3549, 0.01
    %v3929 = vmul.f32 %v3590, 0.01
    %v3930 = vmul.f32 %v3631, 0.01
    %v3931 = vmul.f32 %v3672, 0.01
    %v3932 = vmul.f32 %v3713, 0.01
    %v3933 = vmul.f32 %v3754, 0.01
    %v3934 = vmul.f32 %v3795, 0.01
    %v3935 = vmul.f32 %v3836, 0.01
    %v3936 = vmul.f32 %v3552, 0.01
    %v3937 = vmul.f32 %v3593, 0.01
    %v3938 = vmul.f32 %v3634, 0.01
    %v3939 = vmul.f32 %v3675, 0.01
    %v3940 = vmul.f32 %v3716, 0.01
    %v3941 = vmul.f32 %v3757, 0.01
    %v3942 = vmul.f32 %v3798, 0.01
    %v3943 = vmul.f32 %v3839, 0.01
    %v3944 = vmul.f32 %v3555, 0.01
    %v3945 = vmul.f32 %v3596, 0.01
    %v3946 = vmul.f32 %v3637, 0.01
    %v3947 = vmul.f32 %v3678, 0.01
    %v3948 = vmul.f32 %v3719, 0.01
    %v3949 = vmul.f32 %v3760, 0.01
    %v3950 = vmul.f32 %v3801, 0.01
    %v3951 = vmul.f32 %v3842, 0.01
    %v3952 = vmul.f32 %v3558, 0.01
    %v3953 = vmul.f32 %v3599, 0.01
    %v3954 = vmul.f32 %v3640, 0.01
    %v3955 = vmul.f32 %v3681, 0.01
    %v3956 = vmul.f32 %v3722, 0.01
    %v3957 = vmul.f32 %v3763, 0.01
    %v3958 = vmul.f32 %v3804, 0.01
    %v3959 = vmul.f32 %v3845, 0.01
    %v3960 = vmul.f32 %v3561, 0.01
    %v3961 = vmul.f32 %v3602, 0.01
    %v3962 = vmul.f32 %v3643, 0.01
    %v3963 = vmul.f32 %v3684, 0.01
    %v3964 = vmul.f32 %v3725, 0.01
    %v3965 = vmul.f32 %v3766, 0.01
    %v3966 = vmul.f32 %v3807, 0.01
    %v3967 = vmul.f32 %v3848, 0.01
    %v3968 = vmul.f32 %v3564, 0.01
    %v3969 = vmul.f32 %v3605, 0.01
    %v3970 = vmul.f32 %v3646, 0.01
    %v3971 = vmul.f32 %v3687, 0.01
    %v3972 = vmul.f32 %v3728, 0.01
    %v3973 = vmul.f32 %v3769, 0.01
    %v3974 = vmul.f32 %v3810, 0.01
    %v3975 = vmul.f32 %v3851, 0.01
    %v3976 = vmul.f32 %v3567, 0.01
    %v3977 = vmul.f32 %v3608, 0.01
    %v3978 = vmul.f32 %v3649, 0.01
    %v3979 = vmul.f32 %v3690, 0.01
    %v3980 = vmul.f32 %v3731, 0.01
    %v3981 = vmul.f32 %v3772, 0.01
    %v3982 = vmul.f32 %v3813, 0.01
    %v3983 = vmul.f32 %v3854, 0.01
    %v3984 = vsel %vm3856, %v3546, %v3920
    %v3985 = vsel %vm3857, %v3587, %v3921
    %v3986 = vsel %vm3858, %v3628, %v3922
    %v3987 = vsel %vm3859, %v3669, %v3923
    %v3988 = vsel %vm3860, %v3710, %v3924
    %v3989 = vsel %vm3861, %v3751, %v3925
    %v3990 = vsel %vm3862, %v3792, %v3926
    %v3991 = vsel %vm3863, %v3833, %v3927
    %v3992 = vsel %vm3864, %v3549, %v3928
    %v3993 = vsel %vm3865, %v3590, %v3929
    %v3994 = vsel %vm3866, %v3631, %v3930
    %v3995 = vsel %vm3867, %v3672, %v3931
    %v3996 = vsel %vm3868, %v3713, %v3932
    %v3997 = vsel %vm3869, %v3754, %v3933
    %v3998 = vsel %vm3870, %v3795, %v3934
    %v3999 = vsel %vm3871, %v3836, %v3935
    %v4000 = vsel %vm3872, %v3552, %v3936
    %v4001 = vsel %vm3873, %v3593, %v3937
    %v4002 = vsel %vm3874, %v3634, %v3938
    %v4003 = vsel %vm3875, %v3675, %v3939
    %v4004 = vsel %vm3876, %v3716, %v3940
    %v4005 = vsel %vm3877, %v3757, %v3941
    %v4006 = vsel %vm3878, %v3798, %v3942
    %v4007 = vsel %vm3879, %v3839, %v3943
    %v4008 = vsel %vm3880, %v3555, %v3944
    %v4009 = vsel %vm3881, %v3596, %v3945
    %v4010 = vsel %vm3882, %v3637, %v3946
    %v4011 = vsel %vm3883, %v3678, %v3947
    %v4012 = vsel %vm3884, %v3719, %v3948
    %v4013 = vsel %vm3885, %v3760, %v3949
    %v4014 = vsel %vm3886, %v3801, %v3950
    %v4015 = vsel %vm3887, %v3842, %v3951
    %v4016 = vsel %vm3888, %v3558, %v3952
    %v4017 = vsel %vm3889, %v3599, %v3953
    %v4018 = vsel %vm3890, %v3640, %v3954
    %v4019 = vsel %vm3891, %v3681, %v3955
    %v4020 = vsel %vm3892, %v3722, %v3956
    %v4021 = vsel %vm3893, %v3763, %v3957
    %v4022 = vsel %vm3894, %v3804, %v3958
    %v4023 = vsel %vm3895, %v3845, %v3959
    %v4024 = vsel %vm3896, %v3561, %v3960
    %v4025 = vsel %vm3897, %v3602, %v3961
    %v4026 = vsel %vm3898, %v3643, %v3962
    %v4027 = vsel %vm3899, %v3684, %v3963
    %v4028 = vsel %vm3900, %v3725, %v3964
    %v4029 = vsel %vm3901, %v3766, %v3965
    %v4030 = vsel %vm3902, %v3807, %v3966
    %v4031 = vsel %vm3903, %v3848, %v3967
    %v4032 = vsel %vm3904, %v3564, %v3968
    %v4033 = vsel %vm3905, %v3605, %v3969
    %v4034 = vsel %vm3906, %v3646, %v3970
    %v4035 = vsel %vm3907, %v3687, %v3971
    %v4036 = vsel %vm3908, %v3728, %v3972
    %v4037 = vsel %vm3909, %v3769, %v3973
    %v4038 = vsel %vm3910, %v3810, %v3974
    %v4039 = vsel %vm3911, %v3851, %v3975
    %v4040 = vsel %vm3912, %v3567, %v3976
    %v4041 = vsel %vm3913, %v3608, %v3977
    %v4042 = vsel %vm3914, %v3649, %v3978
    %v4043 = vsel %vm3915, %v3690, %v3979
    %v4044 = vsel %vm3916, %v3731, %v3980
    %v4045 = vsel %vm3917, %v3772, %v3981
    %v4046 = vsel %vm3918, %v3813, %v3982
    %v4047 = vsel %vm3919, %v3854, %v3983
    %v4048 = vld [vmem:[%s5] sm:$0xff]
    %v4049 = vld [vmem:[%s5 + $0x8] sm:$0xff]
    %v4050 = vld [vmem:[%s5 + $0x10] sm:$0xff]
    %v4051 = vld [vmem:[%s5 + $0x18] sm:$0xff]
    %v4052 = vld [vmem:[%s5 + $0x20] sm:$0xff]
    %v4053 = vld [vmem:[%s5 + $0x28] sm:$0xff]
    %v4054 = vld [vmem:[%s5 + $0x30] sm:$0xff]
    %v4055 = vld [vmem:[%s5 + $0x38] sm:$0xff]
    %v4056 = vld [vmem:[%s6] sm:$0xff]
    %v4057 = vld [vmem:[%s6 + $0x8] sm:$0xff]
    %v4058 = vld [vmem:[%s6 + $0x10] sm:$0xff]
    %v4059 = vld [vmem:[%s6 + $0x18] sm:$0xff]
    %v4060 = vld [vmem:[%s6 + $0x20] sm:$0xff]
    %v4061 = vld [vmem:[%s6 + $0x28] sm:$0xff]
    %v4062 = vld [vmem:[%s6 + $0x30] sm:$0xff]
    %v4063 = vld [vmem:[%s6 + $0x38] sm:$0xff]
    %4065 = vset.pattern.permute.xlu0 0
    %4066 = vperm.xlu0 %4065, %v4056
    %v4067 = vpop.permute.xlu0 %4066
    %4070 = vset.pattern.permute.xlu0 0
    %4071 = vperm.xlu0 %4070, %v4057
    %v4072 = vpop.permute.xlu0 %4071
    %4075 = vset.pattern.permute.xlu0 0
    %4076 = vperm.xlu0 %4075, %v4058
    %v4077 = vpop.permute.xlu0 %4076
    %4080 = vset.pattern.permute.xlu0 0
    %4081 = vperm.xlu0 %4080, %v4059
    %v4082 = vpop.permute.xlu0 %4081
    %4085 = vset.pattern.permute.xlu0 0
    %4086 = vperm.xlu0 %4085, %v4060
    %v4087 = vpop.permute.xlu0 %4086
    %4090 = vset.pattern.permute.xlu0 0
    %4091 = vperm.xlu0 %4090, %v4061
    %v4092 = vpop.permute.xlu0 %4091
    %4095 = vset.pattern.permute.xlu0 0
    %4096 = vperm.xlu0 %4095, %v4062
    %v4097 = vpop.permute.xlu0 %4096
    %4100 = vset.pattern.permute.xlu0 0
    %4101 = vperm.xlu0 %4100, %v4063
    %v4102 = vpop.permute.xlu0 %4101
    %v4105 = vsel %vm797, %v4048, 0
    %v4108 = vsel %vm797, %v4049, 0
    %v4111 = vsel %vm797, %v4050, 0
    %v4114 = vsel %vm797, %v4051, 0
    %v4117 = vsel %vm797, %v4052, 0
    %v4120 = vsel %vm797, %v4053, 0
    %v4123 = vsel %vm797, %v4054, 0
    %v4126 = vsel %vm797, %v4055, 0
    %4128 = vmatpush.msra.mxu0 0.0
    %4129 = vmatpush.msra.mxu0 0.0
    %4130 = vmatpush.msra.mxu0 0.0
    %4131 = vmatpush.msra.mxu0 0.0
    %4132 = vmatpush.msra.mxu0 0.0
    %4133 = vmatpush.msra.mxu0 0.0
    %4134 = vmatpush.msra.mxu0 0.0
    %4135 = vmatpush.msra.mxu0 0.0
    %4136 = vmatpush.msra.mxu0 %v4040
    %4137 = vmatpush.msra.mxu0 %v4032
    %4138 = vmatpush.msra.mxu0 %v4024
    %4139 = vmatpush.msra.mxu0 %v4016
    %4140 = vmatpush.msra.mxu0 %v4008
    %4141 = vmatpush.msra.mxu0 %v4000
    %4142 = vmatpush.msra.mxu0 %v3992
    %4143 = vmatpush.msra.mxu0 %v3984
    %4144 = vmatmul.f32.gmra.mxu0 %v4105
    %v4145 = vpop.f32.mrf.mxu0
    %v4146 = vadd.f32 %v4067, %v4145
    %4147 = vmatmul.f32.gmra.mxu0 %v4108
    %v4148 = vpop.f32.mrf.mxu0
    %v4149 = vadd.f32 %v4072, %v4148
    %4150 = vmatmul.f32.gmra.mxu0 %v4111
    %v4151 = vpop.f32.mrf.mxu0
    %v4152 = vadd.f32 %v4077, %v4151
    %4153 = vmatmul.f32.gmra.mxu0 %v4114
    %v4154 = vpop.f32.mrf.mxu0
    %v4155 = vadd.f32 %v4082, %v4154
    %4156 = vmatmul.f32.gmra.mxu0 %v4117
    %v4157 = vpop.f32.mrf.mxu0
    %v4158 = vadd.f32 %v4087, %v4157
    %4159 = vmatmul.f32.gmra.mxu0 %v4120
    %v4160 = vpop.f32.mrf.mxu0
    %v4161 = vadd.f32 %v4092, %v4160
    %4162 = vmatmul.f32.gmra.mxu0 %v4123
    %v4163 = vpop.f32.mrf.mxu0
    %v4164 = vadd.f32 %v4097, %v4163
    %4165 = vmatmul.f32.gmra.mxu0 %v4126
    %v4166 = vpop.f32.mrf.mxu0
    %v4167 = vadd.f32 %v4102, %v4166
    %4168 = vdwg.mxu0
    %4169 = vmatpush.msra.mxu0 0.0
    %4170 = vmatpush.msra.mxu0 0.0
    %4171 = vmatpush.msra.mxu0 0.0
    %4172 = vmatpush.msra.mxu0 0.0
    %4173 = vmatpush.msra.mxu0 0.0
    %4174 = vmatpush.msra.mxu0 0.0
    %4175 = vmatpush.msra.mxu0 0.0
    %4176 = vmatpush.msra.mxu0 0.0
    %4177 = vmatpush.msra.mxu0 %v4041
    %4178 = vmatpush.msra.mxu0 %v4033
    %4179 = vmatpush.msra.mxu0 %v4025
    %4180 = vmatpush.msra.mxu0 %v4017
    %4181 = vmatpush.msra.mxu0 %v4009
    %4182 = vmatpush.msra.mxu0 %v4001
    %4183 = vmatpush.msra.mxu0 %v3993
    %4184 = vmatpush.msra.mxu0 %v3985
    %4185 = vmatmul.f32.gmra.mxu0 %v4105
    %v4186 = vpop.f32.mrf.mxu0
    %v4187 = vadd.f32 %v4067, %v4186
    %4188 = vmatmul.f32.gmra.mxu0 %v4108
    %v4189 = vpop.f32.mrf.mxu0
    %v4190 = vadd.f32 %v4072, %v4189
    %4191 = vmatmul.f32.gmra.mxu0 %v4111
    %v4192 = vpop.f32.mrf.mxu0
    %v4193 = vadd.f32 %v4077, %v4192
    %4194 = vmatmul.f32.gmra.mxu0 %v4114
    %v4195 = vpop.f32.mrf.mxu0
    %v4196 = vadd.f32 %v4082, %v4195
    %4197 = vmatmul.f32.gmra.mxu0 %v4117
    %v4198 = vpop.f32.mrf.mxu0
    %v4199 = vadd.f32 %v4087, %v4198
    %4200 = vmatmul.f32.gmra.mxu0 %v4120
    %v4201 = vpop.f32.mrf.mxu0
    %v4202 = vadd.f32 %v4092, %v4201
    %4203 = vmatmul.f32.gmra.mxu0 %v4123
    %v4204 = vpop.f32.mrf.mxu0
    %v4205 = vadd.f32 %v4097, %v4204
    %4206 = vmatmul.f32.gmra.mxu0 %v4126
    %v4207 = vpop.f32.mrf.mxu0
    %v4208 = vadd.f32 %v4102, %v4207
    %4209 = vdwg.mxu0
    %4210 = vmatpush.msra.mxu0 0.0
    %4211 = vmatpush.msra.mxu0 0.0
    %4212 = vmatpush.msra.mxu0 0.0
    %4213 = vmatpush.msra.mxu0 0.0
    %4214 = vmatpush.msra.mxu0 0.0
    %4215 = vmatpush.msra.mxu0 0.0
    %4216 = vmatpush.msra.mxu0 0.0
    %4217 = vmatpush.msra.mxu0 0.0
    %4218 = vmatpush.msra.mxu0 %v4042
    %4219 = vmatpush.msra.mxu0 %v4034
    %4220 = vmatpush.msra.mxu0 %v4026
    %4221 = vmatpush.msra.mxu0 %v4018
    %4222 = vmatpush.msra.mxu0 %v4010
    %4223 = vmatpush.msra.mxu0 %v4002
    %4224 = vmatpush.msra.mxu0 %v3994
    %4225 = vmatpush.msra.mxu0 %v3986
    %4226 = vmatmul.f32.gmra.mxu0 %v4105
    %v4227 = vpop.f32.mrf.mxu0
    %v4228 = vadd.f32 %v4067, %v4227
    %4229 = vmatmul.f32.gmra.mxu0 %v4108
    %v4230 = vpop.f32.mrf.mxu0
    %v4231 = vadd.f32 %v4072, %v4230
    %4232 = vmatmul.f32.gmra.mxu0 %v4111
    %v4233 = vpop.f32.mrf.mxu0
    %v4234 = vadd.f32 %v4077, %v4233
    %4235 = vmatmul.f32.gmra.mxu0 %v4114
    %v4236 = vpop.f32.mrf.mxu0
    %v4237 = vadd.f32 %v4082, %v4236
    %4238 = vmatmul.f32.gmra.mxu0 %v4117
    %v4239 = vpop.f32.mrf.mxu0
    %v4240 = vadd.f32 %v4087, %v4239
    %4241 = vmatmul.f32.gmra.mxu0 %v4120
    %v4242 = vpop.f32.mrf.mxu0
    %v4243 = vadd.f32 %v4092, %v4242
    %4244 = vmatmul.f32.gmra.mxu0 %v4123
    %v4245 = vpop.f32.mrf.mxu0
    %v4246 = vadd.f32 %v4097, %v4245
    %4247 = vmatmul.f32.gmra.mxu0 %v4126
    %v4248 = vpop.f32.mrf.mxu0
    %v4249 = vadd.f32 %v4102, %v4248
    %4250 = vdwg.mxu0
    %4251 = vmatpush.msra.mxu0 0.0
    %4252 = vmatpush.msra.mxu0 0.0
    %4253 = vmatpush.msra.mxu0 0.0
    %4254 = vmatpush.msra.mxu0 0.0
    %4255 = vmatpush.msra.mxu0 0.0
    %4256 = vmatpush.msra.mxu0 0.0
    %4257 = vmatpush.msra.mxu0 0.0
    %4258 = vmatpush.msra.mxu0 0.0
    %4259 = vmatpush.msra.mxu0 %v4043
    %4260 = vmatpush.msra.mxu0 %v4035
    %4261 = vmatpush.msra.mxu0 %v4027
    %4262 = vmatpush.msra.mxu0 %v4019
    %4263 = vmatpush.msra.mxu0 %v4011
    %4264 = vmatpush.msra.mxu0 %v4003
    %4265 = vmatpush.msra.mxu0 %v3995
    %4266 = vmatpush.msra.mxu0 %v3987
    %4267 = vmatmul.f32.gmra.mxu0 %v4105
    %v4268 = vpop.f32.mrf.mxu0
    %v4269 = vadd.f32 %v4067, %v4268
    %4270 = vmatmul.f32.gmra.mxu0 %v4108
    %v4271 = vpop.f32.mrf.mxu0
    %v4272 = vadd.f32 %v4072, %v4271
    %4273 = vmatmul.f32.gmra.mxu0 %v4111
    %v4274 = vpop.f32.mrf.mxu0
    %v4275 = vadd.f32 %v4077, %v4274
    %4276 = vmatmul.f32.gmra.mxu0 %v4114
    %v4277 = vpop.f32.mrf.mxu0
    %v4278 = vadd.f32 %v4082, %v4277
    %4279 = vmatmul.f32.gmra.mxu0 %v4117
    %v4280 = vpop.f32.mrf.mxu0
    %v4281 = vadd.f32 %v4087, %v4280
    %4282 = vmatmul.f32.gmra.mxu0 %v4120
    %v4283 = vpop.f32.mrf.mxu0
    %v4284 = vadd.f32 %v4092, %v4283
    %4285 = vmatmul.f32.gmra.mxu0 %v4123
    %v4286 = vpop.f32.mrf.mxu0
    %v4287 = vadd.f32 %v4097, %v4286
    %4288 = vmatmul.f32.gmra.mxu0 %v4126
    %v4289 = vpop.f32.mrf.mxu0
    %v4290 = vadd.f32 %v4102, %v4289
    %4291 = vdwg.mxu0
    %4292 = vmatpush.msra.mxu0 0.0
    %4293 = vmatpush.msra.mxu0 0.0
    %4294 = vmatpush.msra.mxu0 0.0
    %4295 = vmatpush.msra.mxu0 0.0
    %4296 = vmatpush.msra.mxu0 0.0
    %4297 = vmatpush.msra.mxu0 0.0
    %4298 = vmatpush.msra.mxu0 0.0
    %4299 = vmatpush.msra.mxu0 0.0
    %4300 = vmatpush.msra.mxu0 %v4044
    %4301 = vmatpush.msra.mxu0 %v4036
    %4302 = vmatpush.msra.mxu0 %v4028
    %4303 = vmatpush.msra.mxu0 %v4020
    %4304 = vmatpush.msra.mxu0 %v4012
    %4305 = vmatpush.msra.mxu0 %v4004
    %4306 = vmatpush.msra.mxu0 %v3996
    %4307 = vmatpush.msra.mxu0 %v3988
    %4308 = vmatmul.f32.gmra.mxu0 %v4105
    %v4309 = vpop.f32.mrf.mxu0
    %v4310 = vadd.f32 %v4067, %v4309
    %4311 = vmatmul.f32.gmra.mxu0 %v4108
    %v4312 = vpop.f32.mrf.mxu0
    %v4313 = vadd.f32 %v4072, %v4312
    %4314 = vmatmul.f32.gmra.mxu0 %v4111
    %v4315 = vpop.f32.mrf.mxu0
    %v4316 = vadd.f32 %v4077, %v4315
    %4317 = vmatmul.f32.gmra.mxu0 %v4114
    %v4318 = vpop.f32.mrf.mxu0
    %v4319 = vadd.f32 %v4082, %v4318
    %4320 = vmatmul.f32.gmra.mxu0 %v4117
    %v4321 = vpop.f32.mrf.mxu0
    %v4322 = vadd.f32 %v4087, %v4321
    %4323 = vmatmul.f32.gmra.mxu0 %v4120
    %v4324 = vpop.f32.mrf.mxu0
    %v4325 = vadd.f32 %v4092, %v4324
    %4326 = vmatmul.f32.gmra.mxu0 %v4123
    %v4327 = vpop.f32.mrf.mxu0
    %v4328 = vadd.f32 %v4097, %v4327
    %4329 = vmatmul.f32.gmra.mxu0 %v4126
    %v4330 = vpop.f32.mrf.mxu0
    %v4331 = vadd.f32 %v4102, %v4330
    %4332 = vdwg.mxu0
    %4333 = vmatpush.msra.mxu0 0.0
    %4334 = vmatpush.msra.mxu0 0.0
    %4335 = vmatpush.msra.mxu0 0.0
    %4336 = vmatpush.msra.mxu0 0.0
    %4337 = vmatpush.msra.mxu0 0.0
    %4338 = vmatpush.msra.mxu0 0.0
    %4339 = vmatpush.msra.mxu0 0.0
    %4340 = vmatpush.msra.mxu0 0.0
    %4341 = vmatpush.msra.mxu0 %v4045
    %4342 = vmatpush.msra.mxu0 %v4037
    %4343 = vmatpush.msra.mxu0 %v4029
    %4344 = vmatpush.msra.mxu0 %v4021
    %4345 = vmatpush.msra.mxu0 %v4013
    %4346 = vmatpush.msra.mxu0 %v4005
    %4347 = vmatpush.msra.mxu0 %v3997
    %4348 = vmatpush.msra.mxu0 %v3989
    %4349 = vmatmul.f32.gmra.mxu0 %v4105
    %v4350 = vpop.f32.mrf.mxu0
    %v4351 = vadd.f32 %v4067, %v4350
    %4352 = vmatmul.f32.gmra.mxu0 %v4108
    %v4353 = vpop.f32.mrf.mxu0
    %v4354 = vadd.f32 %v4072, %v4353
    %4355 = vmatmul.f32.gmra.mxu0 %v4111
    %v4356 = vpop.f32.mrf.mxu0
    %v4357 = vadd.f32 %v4077, %v4356
    %4358 = vmatmul.f32.gmra.mxu0 %v4114
    %v4359 = vpop.f32.mrf.mxu0
    %v4360 = vadd.f32 %v4082, %v4359
    %4361 = vmatmul.f32.gmra.mxu0 %v4117
    %v4362 = vpop.f32.mrf.mxu0
    %v4363 = vadd.f32 %v4087, %v4362
    %4364 = vmatmul.f32.gmra.mxu0 %v4120
    %v4365 = vpop.f32.mrf.mxu0
    %v4366 = vadd.f32 %v4092, %v4365
    %4367 = vmatmul.f32.gmra.mxu0 %v4123
    %v4368 = vpop.f32.mrf.mxu0
    %v4369 = vadd.f32 %v4097, %v4368
    %4370 = vmatmul.f32.gmra.mxu0 %v4126
    %v4371 = vpop.f32.mrf.mxu0
    %v4372 = vadd.f32 %v4102, %v4371
    %4373 = vdwg.mxu0
    %4374 = vmatpush.msra.mxu0 0.0
    %4375 = vmatpush.msra.mxu0 0.0
    %4376 = vmatpush.msra.mxu0 0.0
    %4377 = vmatpush.msra.mxu0 0.0
    %4378 = vmatpush.msra.mxu0 0.0
    %4379 = vmatpush.msra.mxu0 0.0
    %4380 = vmatpush.msra.mxu0 0.0
    %4381 = vmatpush.msra.mxu0 0.0
    %4382 = vmatpush.msra.mxu0 %v4046
    %4383 = vmatpush.msra.mxu0 %v4038
    %4384 = vmatpush.msra.mxu0 %v4030
    %4385 = vmatpush.msra.mxu0 %v4022
    %4386 = vmatpush.msra.mxu0 %v4014
    %4387 = vmatpush.msra.mxu0 %v4006
    %4388 = vmatpush.msra.mxu0 %v3998
    %4389 = vmatpush.msra.mxu0 %v3990
    %4390 = vmatmul.f32.gmra.mxu0 %v4105
    %v4391 = vpop.f32.mrf.mxu0
    %v4392 = vadd.f32 %v4067, %v4391
    %4393 = vmatmul.f32.gmra.mxu0 %v4108
    %v4394 = vpop.f32.mrf.mxu0
    %v4395 = vadd.f32 %v4072, %v4394
    %4396 = vmatmul.f32.gmra.mxu0 %v4111
    %v4397 = vpop.f32.mrf.mxu0
    %v4398 = vadd.f32 %v4077, %v4397
    %4399 = vmatmul.f32.gmra.mxu0 %v4114
    %v4400 = vpop.f32.mrf.mxu0
    %v4401 = vadd.f32 %v4082, %v4400
    %4402 = vmatmul.f32.gmra.mxu0 %v4117
    %v4403 = vpop.f32.mrf.mxu0
    %v4404 = vadd.f32 %v4087, %v4403
    %4405 = vmatmul.f32.gmra.mxu0 %v4120
    %v4406 = vpop.f32.mrf.mxu0
    %v4407 = vadd.f32 %v4092, %v4406
    %4408 = vmatmul.f32.gmra.mxu0 %v4123
    %v4409 = vpop.f32.mrf.mxu0
    %v4410 = vadd.f32 %v4097, %v4409
    %4411 = vmatmul.f32.gmra.mxu0 %v4126
    %v4412 = vpop.f32.mrf.mxu0
    %v4413 = vadd.f32 %v4102, %v4412
    %4414 = vdwg.mxu0
    %4415 = vmatpush.msra.mxu0 0.0
    %4416 = vmatpush.msra.mxu0 0.0
    %4417 = vmatpush.msra.mxu0 0.0
    %4418 = vmatpush.msra.mxu0 0.0
    %4419 = vmatpush.msra.mxu0 0.0
    %4420 = vmatpush.msra.mxu0 0.0
    %4421 = vmatpush.msra.mxu0 0.0
    %4422 = vmatpush.msra.mxu0 0.0
    %4423 = vmatpush.msra.mxu0 %v4047
    %4424 = vmatpush.msra.mxu0 %v4039
    %4425 = vmatpush.msra.mxu0 %v4031
    %4426 = vmatpush.msra.mxu0 %v4023
    %4427 = vmatpush.msra.mxu0 %v4015
    %4428 = vmatpush.msra.mxu0 %v4007
    %4429 = vmatpush.msra.mxu0 %v3999
    %4430 = vmatpush.msra.mxu0 %v3991
    %4431 = vmatmul.f32.gmra.mxu0 %v4105
    %v4432 = vpop.f32.mrf.mxu0
    %v4433 = vadd.f32 %v4067, %v4432
    %4434 = vmatmul.f32.gmra.mxu0 %v4108
    %v4435 = vpop.f32.mrf.mxu0
    %v4436 = vadd.f32 %v4072, %v4435
    %4437 = vmatmul.f32.gmra.mxu0 %v4111
    %v4438 = vpop.f32.mrf.mxu0
    %v4439 = vadd.f32 %v4077, %v4438
    %4440 = vmatmul.f32.gmra.mxu0 %v4114
    %v4441 = vpop.f32.mrf.mxu0
    %v4442 = vadd.f32 %v4082, %v4441
    %4443 = vmatmul.f32.gmra.mxu0 %v4117
    %v4444 = vpop.f32.mrf.mxu0
    %v4445 = vadd.f32 %v4087, %v4444
    %4446 = vmatmul.f32.gmra.mxu0 %v4120
    %v4447 = vpop.f32.mrf.mxu0
    %v4448 = vadd.f32 %v4092, %v4447
    %4449 = vmatmul.f32.gmra.mxu0 %v4123
    %v4450 = vpop.f32.mrf.mxu0
    %v4451 = vadd.f32 %v4097, %v4450
    %4452 = vmatmul.f32.gmra.mxu0 %v4126
    %v4453 = vpop.f32.mrf.mxu0
    %v4454 = vadd.f32 %v4102, %v4453
    %4455 = vdwg.mxu0
    %vm4456 = vcmp.gt.f32.partialorder %v4146, 0.0
    %vm4457 = vcmp.gt.f32.partialorder %v4187, 0.0
    %vm4458 = vcmp.gt.f32.partialorder %v4228, 0.0
    %vm4459 = vcmp.gt.f32.partialorder %v4269, 0.0
    %vm4460 = vcmp.gt.f32.partialorder %v4310, 0.0
    %vm4461 = vcmp.gt.f32.partialorder %v4351, 0.0
    %vm4462 = vcmp.gt.f32.partialorder %v4392, 0.0
    %vm4463 = vcmp.gt.f32.partialorder %v4433, 0.0
    %vm4464 = vcmp.gt.f32.partialorder %v4149, 0.0
    %vm4465 = vcmp.gt.f32.partialorder %v4190, 0.0
    %vm4466 = vcmp.gt.f32.partialorder %v4231, 0.0
    %vm4467 = vcmp.gt.f32.partialorder %v4272, 0.0
    %vm4468 = vcmp.gt.f32.partialorder %v4313, 0.0
    %vm4469 = vcmp.gt.f32.partialorder %v4354, 0.0
    %vm4470 = vcmp.gt.f32.partialorder %v4395, 0.0
    %vm4471 = vcmp.gt.f32.partialorder %v4436, 0.0
    %vm4472 = vcmp.gt.f32.partialorder %v4152, 0.0
    %vm4473 = vcmp.gt.f32.partialorder %v4193, 0.0
    %vm4474 = vcmp.gt.f32.partialorder %v4234, 0.0
    %vm4475 = vcmp.gt.f32.partialorder %v4275, 0.0
    %vm4476 = vcmp.gt.f32.partialorder %v4316, 0.0
    %vm4477 = vcmp.gt.f32.partialorder %v4357, 0.0
    %vm4478 = vcmp.gt.f32.partialorder %v4398, 0.0
    %vm4479 = vcmp.gt.f32.partialorder %v4439, 0.0
    %vm4480 = vcmp.gt.f32.partialorder %v4155, 0.0
    %vm4481 = vcmp.gt.f32.partialorder %v4196, 0.0
    %vm4482 = vcmp.gt.f32.partialorder %v4237, 0.0
    %vm4483 = vcmp.gt.f32.partialorder %v4278, 0.0
    %vm4484 = vcmp.gt.f32.partialorder %v4319, 0.0
    %vm4485 = vcmp.gt.f32.partialorder %v4360, 0.0
    %vm4486 = vcmp.gt.f32.partialorder %v4401, 0.0
    %vm4487 = vcmp.gt.f32.partialorder %v4442, 0.0
    %vm4488 = vcmp.gt.f32.partialorder %v4158, 0.0
    %vm4489 = vcmp.gt.f32.partialorder %v4199, 0.0
    %vm4490 = vcmp.gt.f32.partialorder %v4240, 0.0
    %vm4491 = vcmp.gt.f32.partialorder %v4281, 0.0
    %vm4492 = vcmp.gt.f32.partialorder %v4322, 0.0
    %vm4493 = vcmp.gt.f32.partialorder %v4363, 0.0
    %vm4494 = vcmp.gt.f32.partialorder %v4404, 0.0
    %vm4495 = vcmp.gt.f32.partialorder %v4445, 0.0
    %vm4496 = vcmp.gt.f32.partialorder %v4161, 0.0
    %vm4497 = vcmp.gt.f32.partialorder %v4202, 0.0
    %vm4498 = vcmp.gt.f32.partialorder %v4243, 0.0
    %vm4499 = vcmp.gt.f32.partialorder %v4284, 0.0
    %vm4500 = vcmp.gt.f32.partialorder %v4325, 0.0
    %vm4501 = vcmp.gt.f32.partialorder %v4366, 0.0
    %vm4502 = vcmp.gt.f32.partialorder %v4407, 0.0
    %vm4503 = vcmp.gt.f32.partialorder %v4448, 0.0
    %vm4504 = vcmp.gt.f32.partialorder %v4164, 0.0
    %vm4505 = vcmp.gt.f32.partialorder %v4205, 0.0
    %vm4506 = vcmp.gt.f32.partialorder %v4246, 0.0
    %vm4507 = vcmp.gt.f32.partialorder %v4287, 0.0
    %vm4508 = vcmp.gt.f32.partialorder %v4328, 0.0
    %vm4509 = vcmp.gt.f32.partialorder %v4369, 0.0
    %vm4510 = vcmp.gt.f32.partialorder %v4410, 0.0
    %vm4511 = vcmp.gt.f32.partialorder %v4451, 0.0
    %vm4512 = vcmp.gt.f32.partialorder %v4167, 0.0
    %vm4513 = vcmp.gt.f32.partialorder %v4208, 0.0
    %vm4514 = vcmp.gt.f32.partialorder %v4249, 0.0
    %vm4515 = vcmp.gt.f32.partialorder %v4290, 0.0
    %vm4516 = vcmp.gt.f32.partialorder %v4331, 0.0
    %vm4517 = vcmp.gt.f32.partialorder %v4372, 0.0
    %vm4518 = vcmp.gt.f32.partialorder %v4413, 0.0
    %vm4519 = vcmp.gt.f32.partialorder %v4454, 0.0
    %v4520 = vmul.f32 %v4146, 0.01
    %v4521 = vmul.f32 %v4187, 0.01
    %v4522 = vmul.f32 %v4228, 0.01
    %v4523 = vmul.f32 %v4269, 0.01
    %v4524 = vmul.f32 %v4310, 0.01
    %v4525 = vmul.f32 %v4351, 0.01
    %v4526 = vmul.f32 %v4392, 0.01
    %v4527 = vmul.f32 %v4433, 0.01
    %v4528 = vmul.f32 %v4149, 0.01
    %v4529 = vmul.f32 %v4190, 0.01
    %v4530 = vmul.f32 %v4231, 0.01
    %v4531 = vmul.f32 %v4272, 0.01
    %v4532 = vmul.f32 %v4313, 0.01
    %v4533 = vmul.f32 %v4354, 0.01
    %v4534 = vmul.f32 %v4395, 0.01
    %v4535 = vmul.f32 %v4436, 0.01
    %v4536 = vmul.f32 %v4152, 0.01
    %v4537 = vmul.f32 %v4193, 0.01
    %v4538 = vmul.f32 %v4234, 0.01
    %v4539 = vmul.f32 %v4275, 0.01
    %v4540 = vmul.f32 %v4316, 0.01
    %v4541 = vmul.f32 %v4357, 0.01
    %v4542 = vmul.f32 %v4398, 0.01
    %v4543 = vmul.f32 %v4439, 0.01
    %v4544 = vmul.f32 %v4155, 0.01
    %v4545 = vmul.f32 %v4196, 0.01
    %v4546 = vmul.f32 %v4237, 0.01
    %v4547 = vmul.f32 %v4278, 0.01
    %v4548 = vmul.f32 %v4319, 0.01
    %v4549 = vmul.f32 %v4360, 0.01
    %v4550 = vmul.f32 %v4401, 0.01
    %v4551 = vmul.f32 %v4442, 0.01
    %v4552 = vmul.f32 %v4158, 0.01
    %v4553 = vmul.f32 %v4199, 0.01
    %v4554 = vmul.f32 %v4240, 0.01
    %v4555 = vmul.f32 %v4281, 0.01
    %v4556 = vmul.f32 %v4322, 0.01
    %v4557 = vmul.f32 %v4363, 0.01
    %v4558 = vmul.f32 %v4404, 0.01
    %v4559 = vmul.f32 %v4445, 0.01
    %v4560 = vmul.f32 %v4161, 0.01
    %v4561 = vmul.f32 %v4202, 0.01
    %v4562 = vmul.f32 %v4243, 0.01
    %v4563 = vmul.f32 %v4284, 0.01
    %v4564 = vmul.f32 %v4325, 0.01
    %v4565 = vmul.f32 %v4366, 0.01
    %v4566 = vmul.f32 %v4407, 0.01
    %v4567 = vmul.f32 %v4448, 0.01
    %v4568 = vmul.f32 %v4164, 0.01
    %v4569 = vmul.f32 %v4205, 0.01
    %v4570 = vmul.f32 %v4246, 0.01
    %v4571 = vmul.f32 %v4287, 0.01
    %v4572 = vmul.f32 %v4328, 0.01
    %v4573 = vmul.f32 %v4369, 0.01
    %v4574 = vmul.f32 %v4410, 0.01
    %v4575 = vmul.f32 %v4451, 0.01
    %v4576 = vmul.f32 %v4167, 0.01
    %v4577 = vmul.f32 %v4208, 0.01
    %v4578 = vmul.f32 %v4249, 0.01
    %v4579 = vmul.f32 %v4290, 0.01
    %v4580 = vmul.f32 %v4331, 0.01
    %v4581 = vmul.f32 %v4372, 0.01
    %v4582 = vmul.f32 %v4413, 0.01
    %v4583 = vmul.f32 %v4454, 0.01
    %v4584 = vsel %vm4456, %v4146, %v4520
    %v4585 = vsel %vm4457, %v4187, %v4521
    %v4586 = vsel %vm4458, %v4228, %v4522
    %v4587 = vsel %vm4459, %v4269, %v4523
    %v4588 = vsel %vm4460, %v4310, %v4524
    %v4589 = vsel %vm4461, %v4351, %v4525
    %v4590 = vsel %vm4462, %v4392, %v4526
    %v4591 = vsel %vm4463, %v4433, %v4527
    %v4592 = vsel %vm4464, %v4149, %v4528
    %v4593 = vsel %vm4465, %v4190, %v4529
    %v4594 = vsel %vm4466, %v4231, %v4530
    %v4595 = vsel %vm4467, %v4272, %v4531
    %v4596 = vsel %vm4468, %v4313, %v4532
    %v4597 = vsel %vm4469, %v4354, %v4533
    %v4598 = vsel %vm4470, %v4395, %v4534
    %v4599 = vsel %vm4471, %v4436, %v4535
    %v4600 = vsel %vm4472, %v4152, %v4536
    %v4601 = vsel %vm4473, %v4193, %v4537
    %v4602 = vsel %vm4474, %v4234, %v4538
    %v4603 = vsel %vm4475, %v4275, %v4539
    %v4604 = vsel %vm4476, %v4316, %v4540
    %v4605 = vsel %vm4477, %v4357, %v4541
    %v4606 = vsel %vm4478, %v4398, %v4542
    %v4607 = vsel %vm4479, %v4439, %v4543
    %v4608 = vsel %vm4480, %v4155, %v4544
    %v4609 = vsel %vm4481, %v4196, %v4545
    %v4610 = vsel %vm4482, %v4237, %v4546
    %v4611 = vsel %vm4483, %v4278, %v4547
    %v4612 = vsel %vm4484, %v4319, %v4548
    %v4613 = vsel %vm4485, %v4360, %v4549
    %v4614 = vsel %vm4486, %v4401, %v4550
    %v4615 = vsel %vm4487, %v4442, %v4551
    %v4616 = vsel %vm4488, %v4158, %v4552
    %v4617 = vsel %vm4489, %v4199, %v4553
    %v4618 = vsel %vm4490, %v4240, %v4554
    %v4619 = vsel %vm4491, %v4281, %v4555
    %v4620 = vsel %vm4492, %v4322, %v4556
    %v4621 = vsel %vm4493, %v4363, %v4557
    %v4622 = vsel %vm4494, %v4404, %v4558
    %v4623 = vsel %vm4495, %v4445, %v4559
    %v4624 = vsel %vm4496, %v4161, %v4560
    %v4625 = vsel %vm4497, %v4202, %v4561
    %v4626 = vsel %vm4498, %v4243, %v4562
    %v4627 = vsel %vm4499, %v4284, %v4563
    %v4628 = vsel %vm4500, %v4325, %v4564
    %v4629 = vsel %vm4501, %v4366, %v4565
    %v4630 = vsel %vm4502, %v4407, %v4566
    %v4631 = vsel %vm4503, %v4448, %v4567
    %v4632 = vsel %vm4504, %v4164, %v4568
    %v4633 = vsel %vm4505, %v4205, %v4569
    %v4634 = vsel %vm4506, %v4246, %v4570
    %v4635 = vsel %vm4507, %v4287, %v4571
    %v4636 = vsel %vm4508, %v4328, %v4572
    %v4637 = vsel %vm4509, %v4369, %v4573
    %v4638 = vsel %vm4510, %v4410, %v4574
    %v4639 = vsel %vm4511, %v4451, %v4575
    %v4640 = vsel %vm4512, %v4167, %v4576
    %v4641 = vsel %vm4513, %v4208, %v4577
    %v4642 = vsel %vm4514, %v4249, %v4578
    %v4643 = vsel %vm4515, %v4290, %v4579
    %v4644 = vsel %vm4516, %v4331, %v4580
    %v4645 = vsel %vm4517, %v4372, %v4581
    %v4646 = vsel %vm4518, %v4413, %v4582
    %v4647 = vsel %vm4519, %v4454, %v4583
    %v4648 = vld [vmem:[%s7] sm:$0xff]
    %v4649 = vld [vmem:[%s7 + $0x8] sm:$0xff]
    %v4650 = vld [vmem:[%s8] sm:$0xff]
    %v4651 = vld [vmem:[%s8 + $0x8] sm:$0xff]
    %4653 = vset.pattern.permute.xlu0 0
    %4654 = vperm.xlu0 %4653, %v4650
    %v4655 = vpop.permute.xlu0 %4654
    %4658 = vset.pattern.permute.xlu0 0
    %4659 = vperm.xlu0 %4658, %v4651
    %v4660 = vpop.permute.xlu0 %4659
    %v4663 = vsel %vm797, %v4648, 0
    %v4666 = vsel %vm797, %v4649, 0
    %4668 = vmatpush.msra.mxu0 0.0
    %4669 = vmatpush.msra.mxu0 0.0
    %4670 = vmatpush.msra.mxu0 0.0
    %4671 = vmatpush.msra.mxu0 0.0
    %4672 = vmatpush.msra.mxu0 0.0
    %4673 = vmatpush.msra.mxu0 0.0
    %4674 = vmatpush.msra.mxu0 0.0
    %4675 = vmatpush.msra.mxu0 0.0
    %4676 = vmatpush.msra.mxu0 %v4640
    %4677 = vmatpush.msra.mxu0 %v4632
    %4678 = vmatpush.msra.mxu0 %v4624
    %4679 = vmatpush.msra.mxu0 %v4616
    %4680 = vmatpush.msra.mxu0 %v4608
    %4681 = vmatpush.msra.mxu0 %v4600
    %4682 = vmatpush.msra.mxu0 %v4592
    %4683 = vmatpush.msra.mxu0 %v4584
    %4684 = vmatmul.f32.gmra.mxu0 %v4663
    %v4685 = vpop.f32.mrf.mxu0
    %v4686 = vadd.f32 %v4655, %v4685
    %4687 = vmatmul.f32.gmra.mxu0 %v4666
    %v4688 = vpop.f32.mrf.mxu0
    %v4689 = vadd.f32 %v4660, %v4688
    %4690 = vdwg.mxu0
    %4691 = vmatpush.msra.mxu0 0.0
    %4692 = vmatpush.msra.mxu0 0.0
    %4693 = vmatpush.msra.mxu0 0.0
    %4694 = vmatpush.msra.mxu0 0.0
    %4695 = vmatpush.msra.mxu0 0.0
    %4696 = vmatpush.msra.mxu0 0.0
    %4697 = vmatpush.msra.mxu0 0.0
    %4698 = vmatpush.msra.mxu0 0.0
    %4699 = vmatpush.msra.mxu0 %v4641
    %4700 = vmatpush.msra.mxu0 %v4633
    %4701 = vmatpush.msra.mxu0 %v4625
    %4702 = vmatpush.msra.mxu0 %v4617
    %4703 = vmatpush.msra.mxu0 %v4609
    %4704 = vmatpush.msra.mxu0 %v4601
    %4705 = vmatpush.msra.mxu0 %v4593
    %4706 = vmatpush.msra.mxu0 %v4585
    %4707 = vmatmul.f32.gmra.mxu0 %v4663
    %v4708 = vpop.f32.mrf.mxu0
    %v4709 = vadd.f32 %v4655, %v4708
    %4710 = vmatmul.f32.gmra.mxu0 %v4666
    %v4711 = vpop.f32.mrf.mxu0
    %v4712 = vadd.f32 %v4660, %v4711
    %4713 = vdwg.mxu0
    %4714 = vmatpush.msra.mxu0 0.0
    %4715 = vmatpush.msra.mxu0 0.0
    %4716 = vmatpush.msra.mxu0 0.0
    %4717 = vmatpush.msra.mxu0 0.0
    %4718 = vmatpush.msra.mxu0 0.0
    %4719 = vmatpush.msra.mxu0 0.0
    %4720 = vmatpush.msra.mxu0 0.0
    %4721 = vmatpush.msra.mxu0 0.0
    %4722 = vmatpush.msra.mxu0 %v4642
    %4723 = vmatpush.msra.mxu0 %v4634
    %4724 = vmatpush.msra.mxu0 %v4626
    %4725 = vmatpush.msra.mxu0 %v4618
    %4726 = vmatpush.msra.mxu0 %v4610
    %4727 = vmatpush.msra.mxu0 %v4602
    %4728 = vmatpush.msra.mxu0 %v4594
    %4729 = vmatpush.msra.mxu0 %v4586
    %4730 = vmatmul.f32.gmra.mxu0 %v4663
    %v4731 = vpop.f32.mrf.mxu0
    %v4732 = vadd.f32 %v4655, %v4731
    %4733 = vmatmul.f32.gmra.mxu0 %v4666
    %v4734 = vpop.f32.mrf.mxu0
    %v4735 = vadd.f32 %v4660, %v4734
    %4736 = vdwg.mxu0
    %4737 = vmatpush.msra.mxu0 0.0
    %4738 = vmatpush.msra.mxu0 0.0
    %4739 = vmatpush.msra.mxu0 0.0
    %4740 = vmatpush.msra.mxu0 0.0
    %4741 = vmatpush.msra.mxu0 0.0
    %4742 = vmatpush.msra.mxu0 0.0
    %4743 = vmatpush.msra.mxu0 0.0
    %4744 = vmatpush.msra.mxu0 0.0
    %4745 = vmatpush.msra.mxu0 %v4643
    %4746 = vmatpush.msra.mxu0 %v4635
    %4747 = vmatpush.msra.mxu0 %v4627
    %4748 = vmatpush.msra.mxu0 %v4619
    %4749 = vmatpush.msra.mxu0 %v4611
    %4750 = vmatpush.msra.mxu0 %v4603
    %4751 = vmatpush.msra.mxu0 %v4595
    %4752 = vmatpush.msra.mxu0 %v4587
    %4753 = vmatmul.f32.gmra.mxu0 %v4663
    %v4754 = vpop.f32.mrf.mxu0
    %v4755 = vadd.f32 %v4655, %v4754
    %4756 = vmatmul.f32.gmra.mxu0 %v4666
    %v4757 = vpop.f32.mrf.mxu0
    %v4758 = vadd.f32 %v4660, %v4757
    %4759 = vdwg.mxu0
    %4760 = vmatpush.msra.mxu0 0.0
    %4761 = vmatpush.msra.mxu0 0.0
    %4762 = vmatpush.msra.mxu0 0.0
    %4763 = vmatpush.msra.mxu0 0.0
    %4764 = vmatpush.msra.mxu0 0.0
    %4765 = vmatpush.msra.mxu0 0.0
    %4766 = vmatpush.msra.mxu0 0.0
    %4767 = vmatpush.msra.mxu0 0.0
    %4768 = vmatpush.msra.mxu0 %v4644
    %4769 = vmatpush.msra.mxu0 %v4636
    %4770 = vmatpush.msra.mxu0 %v4628
    %4771 = vmatpush.msra.mxu0 %v4620
    %4772 = vmatpush.msra.mxu0 %v4612
    %4773 = vmatpush.msra.mxu0 %v4604
    %4774 = vmatpush.msra.mxu0 %v4596
    %4775 = vmatpush.msra.mxu0 %v4588
    %4776 = vmatmul.f32.gmra.mxu0 %v4663
    %v4777 = vpop.f32.mrf.mxu0
    %v4778 = vadd.f32 %v4655, %v4777
    %4779 = vmatmul.f32.gmra.mxu0 %v4666
    %v4780 = vpop.f32.mrf.mxu0
    %v4781 = vadd.f32 %v4660, %v4780
    %4782 = vdwg.mxu0
    %4783 = vmatpush.msra.mxu0 0.0
    %4784 = vmatpush.msra.mxu0 0.0
    %4785 = vmatpush.msra.mxu0 0.0
    %4786 = vmatpush.msra.mxu0 0.0
    %4787 = vmatpush.msra.mxu0 0.0
    %4788 = vmatpush.msra.mxu0 0.0
    %4789 = vmatpush.msra.mxu0 0.0
    %4790 = vmatpush.msra.mxu0 0.0
    %4791 = vmatpush.msra.mxu0 %v4645
    %4792 = vmatpush.msra.mxu0 %v4637
    %4793 = vmatpush.msra.mxu0 %v4629
    %4794 = vmatpush.msra.mxu0 %v4621
    %4795 = vmatpush.msra.mxu0 %v4613
    %4796 = vmatpush.msra.mxu0 %v4605
    %4797 = vmatpush.msra.mxu0 %v4597
    %4798 = vmatpush.msra.mxu0 %v4589
    %4799 = vmatmul.f32.gmra.mxu0 %v4663
    %v4800 = vpop.f32.mrf.mxu0
    %v4801 = vadd.f32 %v4655, %v4800
    %4802 = vmatmul.f32.gmra.mxu0 %v4666
    %v4803 = vpop.f32.mrf.mxu0
    %v4804 = vadd.f32 %v4660, %v4803
    %4805 = vdwg.mxu0
    %4806 = vmatpush.msra.mxu0 0.0
    %4807 = vmatpush.msra.mxu0 0.0
    %4808 = vmatpush.msra.mxu0 0.0
    %4809 = vmatpush.msra.mxu0 0.0
    %4810 = vmatpush.msra.mxu0 0.0
    %4811 = vmatpush.msra.mxu0 0.0
    %4812 = vmatpush.msra.mxu0 0.0
    %4813 = vmatpush.msra.mxu0 0.0
    %4814 = vmatpush.msra.mxu0 %v4646
    %4815 = vmatpush.msra.mxu0 %v4638
    %4816 = vmatpush.msra.mxu0 %v4630
    %4817 = vmatpush.msra.mxu0 %v4622
    %4818 = vmatpush.msra.mxu0 %v4614
    %4819 = vmatpush.msra.mxu0 %v4606
    %4820 = vmatpush.msra.mxu0 %v4598
    %4821 = vmatpush.msra.mxu0 %v4590
    %4822 = vmatmul.f32.gmra.mxu0 %v4663
    %v4823 = vpop.f32.mrf.mxu0
    %v4824 = vadd.f32 %v4655, %v4823
    %4825 = vmatmul.f32.gmra.mxu0 %v4666
    %v4826 = vpop.f32.mrf.mxu0
    %v4827 = vadd.f32 %v4660, %v4826
    %4828 = vdwg.mxu0
    %4829 = vmatpush.msra.mxu0 0.0
    %4830 = vmatpush.msra.mxu0 0.0
    %4831 = vmatpush.msra.mxu0 0.0
    %4832 = vmatpush.msra.mxu0 0.0
    %4833 = vmatpush.msra.mxu0 0.0
    %4834 = vmatpush.msra.mxu0 0.0
    %4835 = vmatpush.msra.mxu0 0.0
    %4836 = vmatpush.msra.mxu0 0.0
    %4837 = vmatpush.msra.mxu0 %v4647
    %4838 = vmatpush.msra.mxu0 %v4639
    %4839 = vmatpush.msra.mxu0 %v4631
    %4840 = vmatpush.msra.mxu0 %v4623
    %4841 = vmatpush.msra.mxu0 %v4615
    %4842 = vmatpush.msra.mxu0 %v4607
    %4843 = vmatpush.msra.mxu0 %v4599
    %4844 = vmatpush.msra.mxu0 %v4591
    %4845 = vmatmul.f32.gmra.mxu0 %v4663
    %v4846 = vpop.f32.mrf.mxu0
    %v4847 = vadd.f32 %v4655, %v4846
    %4848 = vmatmul.f32.gmra.mxu0 %v4666
    %v4849 = vpop.f32.mrf.mxu0
    %v4850 = vadd.f32 %v4660, %v4849
    %4851 = vdwg.mxu0
    %v4852 = vtanh.pop %v4686
    %v4853 = vtanh.pop %v4709
    %v4854 = vtanh.pop %v4732
    %v4855 = vtanh.pop %v4755
    %v4856 = vtanh.pop %v4778
    %v4857 = vtanh.pop %v4801
    %v4858 = vtanh.pop %v4824
    %v4859 = vtanh.pop %v4847
    %v4860 = vmul.f32 %v4689, %v4689
    %v4861 = vmul.f32 %v4712, %v4712
    %v4862 = vmul.f32 %v4735, %v4735
    %v4863 = vmul.f32 %v4758, %v4758
    %v4864 = vmul.f32 %v4781, %v4781
    %v4865 = vmul.f32 %v4804, %v4804
    %v4866 = vmul.f32 %v4827, %v4827
    %v4867 = vmul.f32 %v4850, %v4850
    %v4868 = vrot.slane %v4860, 4
    %v4869 = vadd.f32 %v4860, %v4868
    %v4870 = vrot.slane %v4869, 2
    %v4871 = vadd.f32 %v4869, %v4870
    %v4872 = vrot.slane %v4871, 1
    %v4873 = vadd.f32 %v4871, %v4872
    %v4874 = vrot.slane %v4861, 4
    %v4875 = vadd.f32 %v4861, %v4874
    %v4876 = vrot.slane %v4875, 2
    %v4877 = vadd.f32 %v4875, %v4876
    %v4878 = vrot.slane %v4877, 1
    %v4879 = vadd.f32 %v4877, %v4878
    %v4880 = vrot.slane %v4862, 4
    %v4881 = vadd.f32 %v4862, %v4880
    %v4882 = vrot.slane %v4881, 2
    %v4883 = vadd.f32 %v4881, %v4882
    %v4884 = vrot.slane %v4883, 1
    %v4885 = vadd.f32 %v4883, %v4884
    %v4886 = vrot.slane %v4863, 4
    %v4887 = vadd.f32 %v4863, %v4886
    %v4888 = vrot.slane %v4887, 2
    %v4889 = vadd.f32 %v4887, %v4888
    %v4890 = vrot.slane %v4889, 1
    %v4891 = vadd.f32 %v4889, %v4890
    %v4892 = vrot.slane %v4864, 4
    %v4893 = vadd.f32 %v4864, %v4892
    %v4894 = vrot.slane %v4893, 2
    %v4895 = vadd.f32 %v4893, %v4894
    %v4896 = vrot.slane %v4895, 1
    %v4897 = vadd.f32 %v4895, %v4896
    %v4898 = vrot.slane %v4865, 4
    %v4899 = vadd.f32 %v4865, %v4898
    %v4900 = vrot.slane %v4899, 2
    %v4901 = vadd.f32 %v4899, %v4900
    %v4902 = vrot.slane %v4901, 1
    %v4903 = vadd.f32 %v4901, %v4902
    %v4904 = vrot.slane %v4866, 4
    %v4905 = vadd.f32 %v4866, %v4904
    %v4906 = vrot.slane %v4905, 2
    %v4907 = vadd.f32 %v4905, %v4906
    %v4908 = vrot.slane %v4907, 1
    %v4909 = vadd.f32 %v4907, %v4908
    %v4910 = vrot.slane %v4867, 4
    %v4911 = vadd.f32 %v4867, %v4910
    %v4912 = vrot.slane %v4911, 2
    %v4913 = vadd.f32 %v4911, %v4912
    %v4914 = vrot.slane %v4913, 1
    %v4915 = vadd.f32 %v4913, %v4914
    %v4916 = vadd.f32 %v4873, 1.0
    %v4917 = vadd.f32 %v4879, 1.0
    %v4918 = vadd.f32 %v4885, 1.0
    %v4919 = vadd.f32 %v4891, 1.0
    %v4920 = vadd.f32 %v4897, 1.0
    %v4921 = vadd.f32 %v4903, 1.0
    %v4922 = vadd.f32 %v4909, 1.0
    %v4923 = vadd.f32 %v4915, 1.0
    %v4924 = vrsqrt.pop %v4916
    %v4925 = vmul.f32 %v4924, %v4916
    %v4926 = vmul.f32 %v4925, %v4924
    %v4927 = vmul.f32 0.5, %v4926
    %v4928 = vsub.f32 1.5, %v4927
    %v4929 = vmul.f32 %v4924, %v4928
    %v4930 = vmul.f32 %v4916, %v4929
    %vm4931 = vcmp.eq.f32.partialorder %v4916, inf
    %v4932 = vsel %vm4931, %v4916, %v4930
    %vm4933 = vcmp.eq.f32.partialorder %v4916, 0.0
    %v4934 = vand.u32 %v4916, 2147483648
    %v4935 = vsel %vm4933, %v4934, %v4932
    %v4936 = vrsqrt.pop %v4917
    %v4937 = vmul.f32 %v4936, %v4917
    %v4938 = vmul.f32 %v4937, %v4936
    %v4939 = vmul.f32 0.5, %v4938
    %v4940 = vsub.f32 1.5, %v4939
    %v4941 = vmul.f32 %v4936, %v4940
    %v4942 = vmul.f32 %v4917, %v4941
    %vm4943 = vcmp.eq.f32.partialorder %v4917, inf
    %v4944 = vsel %vm4943, %v4917, %v4942
    %vm4945 = vcmp.eq.f32.partialorder %v4917, 0.0
    %v4946 = vand.u32 %v4917, 2147483648
    %v4947 = vsel %vm4945, %v4946, %v4944
    %v4948 = vrsqrt.pop %v4918
    %v4949 = vmul.f32 %v4948, %v4918
    %v4950 = vmul.f32 %v4949, %v4948
    %v4951 = vmul.f32 0.5, %v4950
    %v4952 = vsub.f32 1.5, %v4951
    %v4953 = vmul.f32 %v4948, %v4952
    %v4954 = vmul.f32 %v4918, %v4953
    %vm4955 = vcmp.eq.f32.partialorder %v4918, inf
    %v4956 = vsel %vm4955, %v4918, %v4954
    %vm4957 = vcmp.eq.f32.partialorder %v4918, 0.0
    %v4958 = vand.u32 %v4918, 2147483648
    %v4959 = vsel %vm4957, %v4958, %v4956
    %v4960 = vrsqrt.pop %v4919
    %v4961 = vmul.f32 %v4960, %v4919
    %v4962 = vmul.f32 %v4961, %v4960
    %v4963 = vmul.f32 0.5, %v4962
    %v4964 = vsub.f32 1.5, %v4963
    %v4965 = vmul.f32 %v4960, %v4964
    %v4966 = vmul.f32 %v4919, %v4965
    %vm4967 = vcmp.eq.f32.partialorder %v4919, inf
    %v4968 = vsel %vm4967, %v4919, %v4966
    %vm4969 = vcmp.eq.f32.partialorder %v4919, 0.0
    %v4970 = vand.u32 %v4919, 2147483648
    %v4971 = vsel %vm4969, %v4970, %v4968
    %v4972 = vrsqrt.pop %v4920
    %v4973 = vmul.f32 %v4972, %v4920
    %v4974 = vmul.f32 %v4973, %v4972
    %v4975 = vmul.f32 0.5, %v4974
    %v4976 = vsub.f32 1.5, %v4975
    %v4977 = vmul.f32 %v4972, %v4976
    %v4978 = vmul.f32 %v4920, %v4977
    %vm4979 = vcmp.eq.f32.partialorder %v4920, inf
    %v4980 = vsel %vm4979, %v4920, %v4978
    %vm4981 = vcmp.eq.f32.partialorder %v4920, 0.0
    %v4982 = vand.u32 %v4920, 2147483648
    %v4983 = vsel %vm4981, %v4982, %v4980
    %v4984 = vrsqrt.pop %v4921
    %v4985 = vmul.f32 %v4984, %v4921
    %v4986 = vmul.f32 %v4985, %v4984
    %v4987 = vmul.f32 0.5, %v4986
    %v4988 = vsub.f32 1.5, %v4987
    %v4989 = vmul.f32 %v4984, %v4988
    %v4990 = vmul.f32 %v4921, %v4989
    %vm4991 = vcmp.eq.f32.partialorder %v4921, inf
    %v4992 = vsel %vm4991, %v4921, %v4990
    %vm4993 = vcmp.eq.f32.partialorder %v4921, 0.0
    %v4994 = vand.u32 %v4921, 2147483648
    %v4995 = vsel %vm4993, %v4994, %v4992
    %v4996 = vrsqrt.pop %v4922
    %v4997 = vmul.f32 %v4996, %v4922
    %v4998 = vmul.f32 %v4997, %v4996
    %v4999 = vmul.f32 0.5, %v4998
    %v5000 = vsub.f32 1.5, %v4999
    %v5001 = vmul.f32 %v4996, %v5000
    %v5002 = vmul.f32 %v4922, %v5001
    %vm5003 = vcmp.eq.f32.partialorder %v4922, inf
    %v5004 = vsel %vm5003, %v4922, %v5002
    %vm5005 = vcmp.eq.f32.partialorder %v4922, 0.0
    %v5006 = vand.u32 %v4922, 2147483648
    %v5007 = vsel %vm5005, %v5006, %v5004
    %v5008 = vrsqrt.pop %v4923
    %v5009 = vmul.f32 %v5008, %v4923
    %v5010 = vmul.f32 %v5009, %v5008
    %v5011 = vmul.f32 0.5, %v5010
    %v5012 = vsub.f32 1.5, %v5011
    %v5013 = vmul.f32 %v5008, %v5012
    %v5014 = vmul.f32 %v4923, %v5013
    %vm5015 = vcmp.eq.f32.partialorder %v4923, inf
    %v5016 = vsel %vm5015, %v4923, %v5014
    %vm5017 = vcmp.eq.f32.partialorder %v4923, 0.0
    %v5018 = vand.u32 %v4923, 2147483648
    %v5019 = vsel %vm5017, %v5018, %v5016
    %5021 = vset.pattern.permute.xlu0 0
    %5022 = vperm.xlu0 %5021, %v3447
    %v5023 = vpop.permute.xlu0 %5022
    %v5025 = vmul.f32 %v5023, %v3358
    %v5026 = vmul.f32 %v5023, %v3359
    %v5027 = vmul.f32 %v5023, %v3360
    %v5028 = vmul.f32 %v5023, %v3361
    %v5029 = vmul.f32 %v5023, %v3362
    %v5030 = vmul.f32 %v5023, %v3363
    %v5031 = vmul.f32 %v5023, %v3364
    %v5032 = vmul.f32 %v5023, %v3365
    %v5033 = vmax.f32 %v5025, -40.0
    %v5034 = vmax.f32 %v5026, -40.0
    %v5035 = vmax.f32 %v5027, -40.0
    %v5036 = vmax.f32 %v5028, -40.0
    %v5037 = vmax.f32 %v5029, -40.0
    %v5038 = vmax.f32 %v5030, -40.0
    %v5039 = vmax.f32 %v5031, -40.0
    %v5040 = vmax.f32 %v5032, -40.0
    %v5041 = vmin.f32 %v5033, 40.0
    %v5042 = vmin.f32 %v5034, 40.0
    %v5043 = vmin.f32 %v5035, 40.0
    %v5044 = vmin.f32 %v5036, 40.0
    %v5045 = vmin.f32 %v5037, 40.0
    %v5046 = vmin.f32 %v5038, 40.0
    %v5047 = vmin.f32 %v5039, 40.0
    %v5048 = vmin.f32 %v5040, 40.0
    %v5049 = vmul.f32 %v5041, %v5041
    %v5050 = vmul.f32 %v5042, %v5042
    %v5051 = vmul.f32 %v5043, %v5043
    %v5052 = vmul.f32 %v5044, %v5044
    %v5053 = vmul.f32 %v5045, %v5045
    %v5054 = vmul.f32 %v5046, %v5046
    %v5055 = vmul.f32 %v5047, %v5047
    %v5056 = vmul.f32 %v5048, %v5048
    %v5057 = vrot.slane %v5049, 4
    %v5058 = vadd.f32 %v5049, %v5057
    %v5059 = vrot.slane %v5058, 2
    %v5060 = vadd.f32 %v5058, %v5059
    %v5061 = vrot.slane %v5060, 1
    %v5062 = vadd.f32 %v5060, %v5061
    %v5063 = vrot.slane %v5050, 4
    %v5064 = vadd.f32 %v5050, %v5063
    %v5065 = vrot.slane %v5064, 2
    %v5066 = vadd.f32 %v5064, %v5065
    %v5067 = vrot.slane %v5066, 1
    %v5068 = vadd.f32 %v5066, %v5067
    %v5069 = vrot.slane %v5051, 4
    %v5070 = vadd.f32 %v5051, %v5069
    %v5071 = vrot.slane %v5070, 2
    %v5072 = vadd.f32 %v5070, %v5071
    %v5073 = vrot.slane %v5072, 1
    %v5074 = vadd.f32 %v5072, %v5073
    %v5075 = vrot.slane %v5052, 4
    %v5076 = vadd.f32 %v5052, %v5075
    %v5077 = vrot.slane %v5076, 2
    %v5078 = vadd.f32 %v5076, %v5077
    %v5079 = vrot.slane %v5078, 1
    %v5080 = vadd.f32 %v5078, %v5079
    %v5081 = vrot.slane %v5053, 4
    %v5082 = vadd.f32 %v5053, %v5081
    %v5083 = vrot.slane %v5082, 2
    %v5084 = vadd.f32 %v5082, %v5083
    %v5085 = vrot.slane %v5084, 1
    %v5086 = vadd.f32 %v5084, %v5085
    %v5087 = vrot.slane %v5054, 4
    %v5088 = vadd.f32 %v5054, %v5087
    %v5089 = vrot.slane %v5088, 2
    %v5090 = vadd.f32 %v5088, %v5089
    %v5091 = vrot.slane %v5090, 1
    %v5092 = vadd.f32 %v5090, %v5091
    %v5093 = vrot.slane %v5055, 4
    %v5094 = vadd.f32 %v5055, %v5093
    %v5095 = vrot.slane %v5094, 2
    %v5096 = vadd.f32 %v5094, %v5095
    %v5097 = vrot.slane %v5096, 1
    %v5098 = vadd.f32 %v5096, %v5097
    %v5099 = vrot.slane %v5056, 4
    %v5100 = vadd.f32 %v5056, %v5099
    %v5101 = vrot.slane %v5100, 2
    %v5102 = vadd.f32 %v5100, %v5101
    %v5103 = vrot.slane %v5102, 1
    %v5104 = vadd.f32 %v5102, %v5103
    %v5105 = vmax.f32 %v5062, 1e-06
    %v5106 = vmax.f32 %v5068, 1e-06
    %v5107 = vmax.f32 %v5074, 1e-06
    %v5108 = vmax.f32 %v5080, 1e-06
    %v5109 = vmax.f32 %v5086, 1e-06
    %v5110 = vmax.f32 %v5092, 1e-06
    %v5111 = vmax.f32 %v5098, 1e-06
    %v5112 = vmax.f32 %v5104, 1e-06
    %v5113 = vrsqrt.pop %v5105
    %v5114 = vmul.f32 %v5113, %v5105
    %v5115 = vmul.f32 %v5114, %v5113
    %v5116 = vmul.f32 0.5, %v5115
    %v5117 = vsub.f32 1.5, %v5116
    %v5118 = vmul.f32 %v5113, %v5117
    %v5119 = vmul.f32 %v5105, %v5118
    %vm5120 = vcmp.eq.f32.partialorder %v5105, inf
    %v5121 = vsel %vm5120, %v5105, %v5119
    %vm5122 = vcmp.eq.f32.partialorder %v5105, 0.0
    %v5123 = vand.u32 %v5105, 2147483648
    %v5124 = vsel %vm5122, %v5123, %v5121
    %v5125 = vrsqrt.pop %v5106
    %v5126 = vmul.f32 %v5125, %v5106
    %v5127 = vmul.f32 %v5126, %v5125
    %v5128 = vmul.f32 0.5, %v5127
    %v5129 = vsub.f32 1.5, %v5128
    %v5130 = vmul.f32 %v5125, %v5129
    %v5131 = vmul.f32 %v5106, %v5130
    %vm5132 = vcmp.eq.f32.partialorder %v5106, inf
    %v5133 = vsel %vm5132, %v5106, %v5131
    %vm5134 = vcmp.eq.f32.partialorder %v5106, 0.0
    %v5135 = vand.u32 %v5106, 2147483648
    %v5136 = vsel %vm5134, %v5135, %v5133
    %v5137 = vrsqrt.pop %v5107
    %v5138 = vmul.f32 %v5137, %v5107
    %v5139 = vmul.f32 %v5138, %v5137
    %v5140 = vmul.f32 0.5, %v5139
    %v5141 = vsub.f32 1.5, %v5140
    %v5142 = vmul.f32 %v5137, %v5141
    %v5143 = vmul.f32 %v5107, %v5142
    %vm5144 = vcmp.eq.f32.partialorder %v5107, inf
    %v5145 = vsel %vm5144, %v5107, %v5143
    %vm5146 = vcmp.eq.f32.partialorder %v5107, 0.0
    %v5147 = vand.u32 %v5107, 2147483648
    %v5148 = vsel %vm5146, %v5147, %v5145
    %v5149 = vrsqrt.pop %v5108
    %v5150 = vmul.f32 %v5149, %v5108
    %v5151 = vmul.f32 %v5150, %v5149
    %v5152 = vmul.f32 0.5, %v5151
    %v5153 = vsub.f32 1.5, %v5152
    %v5154 = vmul.f32 %v5149, %v5153
    %v5155 = vmul.f32 %v5108, %v5154
    %vm5156 = vcmp.eq.f32.partialorder %v5108, inf
    %v5157 = vsel %vm5156, %v5108, %v5155
    %vm5158 = vcmp.eq.f32.partialorder %v5108, 0.0
    %v5159 = vand.u32 %v5108, 2147483648
    %v5160 = vsel %vm5158, %v5159, %v5157
    %v5161 = vrsqrt.pop %v5109
    %v5162 = vmul.f32 %v5161, %v5109
    %v5163 = vmul.f32 %v5162, %v5161
    %v5164 = vmul.f32 0.5, %v5163
    %v5165 = vsub.f32 1.5, %v5164
    %v5166 = vmul.f32 %v5161, %v5165
    %v5167 = vmul.f32 %v5109, %v5166
    %vm5168 = vcmp.eq.f32.partialorder %v5109, inf
    %v5169 = vsel %vm5168, %v5109, %v5167
    %vm5170 = vcmp.eq.f32.partialorder %v5109, 0.0
    %v5171 = vand.u32 %v5109, 2147483648
    %v5172 = vsel %vm5170, %v5171, %v5169
    %v5173 = vrsqrt.pop %v5110
    %v5174 = vmul.f32 %v5173, %v5110
    %v5175 = vmul.f32 %v5174, %v5173
    %v5176 = vmul.f32 0.5, %v5175
    %v5177 = vsub.f32 1.5, %v5176
    %v5178 = vmul.f32 %v5173, %v5177
    %v5179 = vmul.f32 %v5110, %v5178
    %vm5180 = vcmp.eq.f32.partialorder %v5110, inf
    %v5181 = vsel %vm5180, %v5110, %v5179
    %vm5182 = vcmp.eq.f32.partialorder %v5110, 0.0
    %v5183 = vand.u32 %v5110, 2147483648
    %v5184 = vsel %vm5182, %v5183, %v5181
    %v5185 = vrsqrt.pop %v5111
    %v5186 = vmul.f32 %v5185, %v5111
    %v5187 = vmul.f32 %v5186, %v5185
    %v5188 = vmul.f32 0.5, %v5187
    %v5189 = vsub.f32 1.5, %v5188
    %v5190 = vmul.f32 %v5185, %v5189
    %v5191 = vmul.f32 %v5111, %v5190
    %vm5192 = vcmp.eq.f32.partialorder %v5111, inf
    %v5193 = vsel %vm5192, %v5111, %v5191
    %vm5194 = vcmp.eq.f32.partialorder %v5111, 0.0
    %v5195 = vand.u32 %v5111, 2147483648
    %v5196 = vsel %vm5194, %v5195, %v5193
    %v5197 = vrsqrt.pop %v5112
    %v5198 = vmul.f32 %v5197, %v5112
    %v5199 = vmul.f32 %v5198, %v5197
    %v5200 = vmul.f32 0.5, %v5199
    %v5201 = vsub.f32 1.5, %v5200
    %v5202 = vmul.f32 %v5197, %v5201
    %v5203 = vmul.f32 %v5112, %v5202
    %vm5204 = vcmp.eq.f32.partialorder %v5112, inf
    %v5205 = vsel %vm5204, %v5112, %v5203
    %vm5206 = vcmp.eq.f32.partialorder %v5112, 0.0
    %v5207 = vand.u32 %v5112, 2147483648
    %v5208 = vsel %vm5206, %v5207, %v5205
    %v5209 = vmax.f32 %v5124, 1e-06
    %v5210 = vmax.f32 %v5136, 1e-06
    %v5211 = vmax.f32 %v5148, 1e-06
    %v5212 = vmax.f32 %v5160, 1e-06
    %v5213 = vmax.f32 %v5172, 1e-06
    %v5214 = vmax.f32 %v5184, 1e-06
    %v5215 = vmax.f32 %v5196, 1e-06
    %v5216 = vmax.f32 %v5208, 1e-06
    %v5217 = vmul.f32 %v5209, 1.442695
    %v5218 = vpow.pop %v5217
    %v5219 = vmul.f32 %v5210, 1.442695
    %v5220 = vpow.pop %v5219
    %v5221 = vmul.f32 %v5211, 1.442695
    %v5222 = vpow.pop %v5221
    %v5223 = vmul.f32 %v5212, 1.442695
    %v5224 = vpow.pop %v5223
    %v5225 = vmul.f32 %v5213, 1.442695
    %v5226 = vpow.pop %v5225
    %v5227 = vmul.f32 %v5214, 1.442695
    %v5228 = vpow.pop %v5227
    %v5229 = vmul.f32 %v5215, 1.442695
    %v5230 = vpow.pop %v5229
    %v5231 = vmul.f32 %v5216, 1.442695
    %v5232 = vpow.pop %v5231
    %v5233 = vsub.f32 0.0, %v5209
    %v5234 = vsub.f32 0.0, %v5210
    %v5235 = vsub.f32 0.0, %v5211
    %v5236 = vsub.f32 0.0, %v5212
    %v5237 = vsub.f32 0.0, %v5213
    %v5238 = vsub.f32 0.0, %v5214
    %v5239 = vsub.f32 0.0, %v5215
    %v5240 = vsub.f32 0.0, %v5216
    %v5241 = vmul.f32 %v5233, 1.442695
    %v5242 = vpow.pop %v5241
    %v5243 = vmul.f32 %v5234, 1.442695
    %v5244 = vpow.pop %v5243
    %v5245 = vmul.f32 %v5235, 1.442695
    %v5246 = vpow.pop %v5245
    %v5247 = vmul.f32 %v5236, 1.442695
    %v5248 = vpow.pop %v5247
    %v5249 = vmul.f32 %v5237, 1.442695
    %v5250 = vpow.pop %v5249
    %v5251 = vmul.f32 %v5238, 1.442695
    %v5252 = vpow.pop %v5251
    %v5253 = vmul.f32 %v5239, 1.442695
    %v5254 = vpow.pop %v5253
    %v5255 = vmul.f32 %v5240, 1.442695
    %v5256 = vpow.pop %v5255
    %v5257 = vadd.f32 %v5218, %v5242
    %v5258 = vadd.f32 %v5220, %v5244
    %v5259 = vadd.f32 %v5222, %v5246
    %v5260 = vadd.f32 %v5224, %v5248
    %v5261 = vadd.f32 %v5226, %v5250
    %v5262 = vadd.f32 %v5228, %v5252
    %v5263 = vadd.f32 %v5230, %v5254
    %v5264 = vadd.f32 %v5232, %v5256
    %v5265 = vmul.f32 %v5257, 0.5
    %v5266 = vmul.f32 %v5258, 0.5
    %v5267 = vmul.f32 %v5259, 0.5
    %v5268 = vmul.f32 %v5260, 0.5
    %v5269 = vmul.f32 %v5261, 0.5
    %v5270 = vmul.f32 %v5262, 0.5
    %v5271 = vmul.f32 %v5263, 0.5
    %v5272 = vmul.f32 %v5264, 0.5
    %v5273 = vsub.f32 %v5218, %v5242
    %v5274 = vsub.f32 %v5220, %v5244
    %v5275 = vsub.f32 %v5222, %v5246
    %v5276 = vsub.f32 %v5224, %v5248
    %v5277 = vsub.f32 %v5226, %v5250
    %v5278 = vsub.f32 %v5228, %v5252
    %v5279 = vsub.f32 %v5230, %v5254
    %v5280 = vsub.f32 %v5232, %v5256
    %v5281 = vmul.f32 %v5273, 0.5
    %v5282 = vmul.f32 %v5274, 0.5
    %v5283 = vmul.f32 %v5275, 0.5
    %v5284 = vmul.f32 %v5276, 0.5
    %v5285 = vmul.f32 %v5277, 0.5
    %v5286 = vmul.f32 %v5278, 0.5
    %v5287 = vmul.f32 %v5279, 0.5
    %v5288 = vmul.f32 %v5280, 0.5
    %v5289 = vrcp.pop %v5209
    %v5290 = vmul.f32 %v5209, %v5289
    %v5291 = vsub.f32 1.0, %v5290
    %v5292 = vmul.f32 %v5289, %v5291
    %v5293 = vadd.f32 %v5289, %v5292
    %vm5294 = vweird.f32 %v5209
    %vm5295 = vweird.f32 %v5289
    %vm5296 = vmor %vm5294, %vm5295
    %v5297 = vsel %vm5296, %v5289, %v5293
    %v5298 = vand.u32 2147483647, %v5209
    %vm5299 = vcmp.eq.f32.partialorder %v5298, 8.507059e+37
    %v5300 = vand.u32 %v5209, 2147483648
    %v5301 = vor.u32 1.1754944e-38, %v5300
    %v5302 = vsel %vm5299, %v5301, %v5297
    %v5303 = vmul.f32 %v5281, %v5302
    %v5304 = vrcp.pop %v5210
    %v5305 = vmul.f32 %v5210, %v5304
    %v5306 = vsub.f32 1.0, %v5305
    %v5307 = vmul.f32 %v5304, %v5306
    %v5308 = vadd.f32 %v5304, %v5307
    %vm5309 = vweird.f32 %v5210
    %vm5310 = vweird.f32 %v5304
    %vm5311 = vmor %vm5309, %vm5310
    %v5312 = vsel %vm5311, %v5304, %v5308
    %v5313 = vand.u32 2147483647, %v5210
    %vm5314 = vcmp.eq.f32.partialorder %v5313, 8.507059e+37
    %v5315 = vand.u32 %v5210, 2147483648
    %v5316 = vor.u32 1.1754944e-38, %v5315
    %v5317 = vsel %vm5314, %v5316, %v5312
    %v5318 = vmul.f32 %v5282, %v5317
    %v5319 = vrcp.pop %v5211
    %v5320 = vmul.f32 %v5211, %v5319
    %v5321 = vsub.f32 1.0, %v5320
    %v5322 = vmul.f32 %v5319, %v5321
    %v5323 = vadd.f32 %v5319, %v5322
    %vm5324 = vweird.f32 %v5211
    %vm5325 = vweird.f32 %v5319
    %vm5326 = vmor %vm5324, %vm5325
    %v5327 = vsel %vm5326, %v5319, %v5323
    %v5328 = vand.u32 2147483647, %v5211
    %vm5329 = vcmp.eq.f32.partialorder %v5328, 8.507059e+37
    %v5330 = vand.u32 %v5211, 2147483648
    %v5331 = vor.u32 1.1754944e-38, %v5330
    %v5332 = vsel %vm5329, %v5331, %v5327
    %v5333 = vmul.f32 %v5283, %v5332
    %v5334 = vrcp.pop %v5212
    %v5335 = vmul.f32 %v5212, %v5334
    %v5336 = vsub.f32 1.0, %v5335
    %v5337 = vmul.f32 %v5334, %v5336
    %v5338 = vadd.f32 %v5334, %v5337
    %vm5339 = vweird.f32 %v5212
    %vm5340 = vweird.f32 %v5334
    %vm5341 = vmor %vm5339, %vm5340
    %v5342 = vsel %vm5341, %v5334, %v5338
    %v5343 = vand.u32 2147483647, %v5212
    %vm5344 = vcmp.eq.f32.partialorder %v5343, 8.507059e+37
    %v5345 = vand.u32 %v5212, 2147483648
    %v5346 = vor.u32 1.1754944e-38, %v5345
    %v5347 = vsel %vm5344, %v5346, %v5342
    %v5348 = vmul.f32 %v5284, %v5347
    %v5349 = vrcp.pop %v5213
    %v5350 = vmul.f32 %v5213, %v5349
    %v5351 = vsub.f32 1.0, %v5350
    %v5352 = vmul.f32 %v5349, %v5351
    %v5353 = vadd.f32 %v5349, %v5352
    %vm5354 = vweird.f32 %v5213
    %vm5355 = vweird.f32 %v5349
    %vm5356 = vmor %vm5354, %vm5355
    %v5357 = vsel %vm5356, %v5349, %v5353
    %v5358 = vand.u32 2147483647, %v5213
    %vm5359 = vcmp.eq.f32.partialorder %v5358, 8.507059e+37
    %v5360 = vand.u32 %v5213, 2147483648
    %v5361 = vor.u32 1.1754944e-38, %v5360
    %v5362 = vsel %vm5359, %v5361, %v5357
    %v5363 = vmul.f32 %v5285, %v5362
    %v5364 = vrcp.pop %v5214
    %v5365 = vmul.f32 %v5214, %v5364
    %v5366 = vsub.f32 1.0, %v5365
    %v5367 = vmul.f32 %v5364, %v5366
    %v5368 = vadd.f32 %v5364, %v5367
    %vm5369 = vweird.f32 %v5214
    %vm5370 = vweird.f32 %v5364
    %vm5371 = vmor %vm5369, %vm5370
    %v5372 = vsel %vm5371, %v5364, %v5368
    %v5373 = vand.u32 2147483647, %v5214
    %vm5374 = vcmp.eq.f32.partialorder %v5373, 8.507059e+37
    %v5375 = vand.u32 %v5214, 2147483648
    %v5376 = vor.u32 1.1754944e-38, %v5375
    %v5377 = vsel %vm5374, %v5376, %v5372
    %v5378 = vmul.f32 %v5286, %v5377
    %v5379 = vrcp.pop %v5215
    %v5380 = vmul.f32 %v5215, %v5379
    %v5381 = vsub.f32 1.0, %v5380
    %v5382 = vmul.f32 %v5379, %v5381
    %v5383 = vadd.f32 %v5379, %v5382
    %vm5384 = vweird.f32 %v5215
    %vm5385 = vweird.f32 %v5379
    %vm5386 = vmor %vm5384, %vm5385
    %v5387 = vsel %vm5386, %v5379, %v5383
    %v5388 = vand.u32 2147483647, %v5215
    %vm5389 = vcmp.eq.f32.partialorder %v5388, 8.507059e+37
    %v5390 = vand.u32 %v5215, 2147483648
    %v5391 = vor.u32 1.1754944e-38, %v5390
    %v5392 = vsel %vm5389, %v5391, %v5387
    %v5393 = vmul.f32 %v5287, %v5392
    %v5394 = vrcp.pop %v5216
    %v5395 = vmul.f32 %v5216, %v5394
    %v5396 = vsub.f32 1.0, %v5395
    %v5397 = vmul.f32 %v5394, %v5396
    %v5398 = vadd.f32 %v5394, %v5397
    %vm5399 = vweird.f32 %v5216
    %vm5400 = vweird.f32 %v5394
    %vm5401 = vmor %vm5399, %vm5400
    %v5402 = vsel %vm5401, %v5394, %v5398
    %v5403 = vand.u32 2147483647, %v5216
    %vm5404 = vcmp.eq.f32.partialorder %v5403, 8.507059e+37
    %v5405 = vand.u32 %v5216, 2147483648
    %v5406 = vor.u32 1.1754944e-38, %v5405
    %v5407 = vsel %vm5404, %v5406, %v5402
    %v5408 = vmul.f32 %v5288, %v5407
    %v5409 = vsub.f32 0.0, %v5242
    %v5410 = vsub.f32 0.0, %v5244
    %v5411 = vsub.f32 0.0, %v5246
    %v5412 = vsub.f32 0.0, %v5248
    %v5413 = vsub.f32 0.0, %v5250
    %v5414 = vsub.f32 0.0, %v5252
    %v5415 = vsub.f32 0.0, %v5254
    %v5416 = vsub.f32 0.0, %v5256
    %v5417 = vmul.f32 %v5409, %v5242
    %v5418 = vmul.f32 %v5410, %v5244
    %v5419 = vmul.f32 %v5411, %v5246
    %v5420 = vmul.f32 %v5412, %v5248
    %v5421 = vmul.f32 %v5413, %v5250
    %v5422 = vmul.f32 %v5414, %v5252
    %v5423 = vmul.f32 %v5415, %v5254
    %v5424 = vmul.f32 %v5416, %v5256
    %v5425 = vadd.f32 %v5417, 1.0
    %v5426 = vlog2.pop %v5425
    %v5427 = vmul.f32 %v5426, 0.6931472
    %v5428 = vmul.f32 -0.5, %v5417
    %v5429 = vadd.f32 %v5428, 1.0
    %v5430 = vmul.f32 %v5429, %v5417
    %v5431 = vand.u32 2147483647, %v5417
    %vm5432 = vcmp.lt.f32.partialorder %v5431, 0.0004427343
    %v5433 = vsel %vm5432, %v5430, %v5427
    %v5434 = vadd.f32 %v5418, 1.0
    %v5435 = vlog2.pop %v5434
    %v5436 = vmul.f32 %v5435, 0.6931472
    %v5437 = vmul.f32 -0.5, %v5418
    %v5438 = vadd.f32 %v5437, 1.0
    %v5439 = vmul.f32 %v5438, %v5418
    %v5440 = vand.u32 2147483647, %v5418
    %vm5441 = vcmp.lt.f32.partialorder %v5440, 0.0004427343
    %v5442 = vsel %vm5441, %v5439, %v5436
    %v5443 = vadd.f32 %v5419, 1.0
    %v5444 = vlog2.pop %v5443
    %v5445 = vmul.f32 %v5444, 0.6931472
    %v5446 = vmul.f32 -0.5, %v5419
    %v5447 = vadd.f32 %v5446, 1.0
    %v5448 = vmul.f32 %v5447, %v5419
    %v5449 = vand.u32 2147483647, %v5419
    %vm5450 = vcmp.lt.f32.partialorder %v5449, 0.0004427343
    %v5451 = vsel %vm5450, %v5448, %v5445
    %v5452 = vadd.f32 %v5420, 1.0
    %v5453 = vlog2.pop %v5452
    %v5454 = vmul.f32 %v5453, 0.6931472
    %v5455 = vmul.f32 -0.5, %v5420
    %v5456 = vadd.f32 %v5455, 1.0
    %v5457 = vmul.f32 %v5456, %v5420
    %v5458 = vand.u32 2147483647, %v5420
    %vm5459 = vcmp.lt.f32.partialorder %v5458, 0.0004427343
    %v5460 = vsel %vm5459, %v5457, %v5454
    %v5461 = vadd.f32 %v5421, 1.0
    %v5462 = vlog2.pop %v5461
    %v5463 = vmul.f32 %v5462, 0.6931472
    %v5464 = vmul.f32 -0.5, %v5421
    %v5465 = vadd.f32 %v5464, 1.0
    %v5466 = vmul.f32 %v5465, %v5421
    %v5467 = vand.u32 2147483647, %v5421
    %vm5468 = vcmp.lt.f32.partialorder %v5467, 0.0004427343
    %v5469 = vsel %vm5468, %v5466, %v5463
    %v5470 = vadd.f32 %v5422, 1.0
    %v5471 = vlog2.pop %v5470
    %v5472 = vmul.f32 %v5471, 0.6931472
    %v5473 = vmul.f32 -0.5, %v5422
    %v5474 = vadd.f32 %v5473, 1.0
    %v5475 = vmul.f32 %v5474, %v5422
    %v5476 = vand.u32 2147483647, %v5422
    %vm5477 = vcmp.lt.f32.partialorder %v5476, 0.0004427343
    %v5478 = vsel %vm5477, %v5475, %v5472
    %v5479 = vadd.f32 %v5423, 1.0
    %v5480 = vlog2.pop %v5479
    %v5481 = vmul.f32 %v5480, 0.6931472
    %v5482 = vmul.f32 -0.5, %v5423
    %v5483 = vadd.f32 %v5482, 1.0
    %v5484 = vmul.f32 %v5483, %v5423
    %v5485 = vand.u32 2147483647, %v5423
    %vm5486 = vcmp.lt.f32.partialorder %v5485, 0.0004427343
    %v5487 = vsel %vm5486, %v5484, %v5481
    %v5488 = vadd.f32 %v5424, 1.0
    %v5489 = vlog2.pop %v5488
    %v5490 = vmul.f32 %v5489, 0.6931472
    %v5491 = vmul.f32 -0.5, %v5424
    %v5492 = vadd.f32 %v5491, 1.0
    %v5493 = vmul.f32 %v5492, %v5424
    %v5494 = vand.u32 2147483647, %v5424
    %vm5495 = vcmp.lt.f32.partialorder %v5494, 0.0004427343
    %v5496 = vsel %vm5495, %v5493, %v5490
    %v5497 = vadd.f32 %v5209, %v5433
    %v5498 = vadd.f32 %v5210, %v5442
    %v5499 = vadd.f32 %v5211, %v5451
    %v5500 = vadd.f32 %v5212, %v5460
    %v5501 = vadd.f32 %v5213, %v5469
    %v5502 = vadd.f32 %v5214, %v5478
    %v5503 = vadd.f32 %v5215, %v5487
    %v5504 = vadd.f32 %v5216, %v5496
    %v5505 = vmul.f32 %v5209, 2.0
    %v5506 = vmul.f32 %v5210, 2.0
    %v5507 = vmul.f32 %v5211, 2.0
    %v5508 = vmul.f32 %v5212, 2.0
    %v5509 = vmul.f32 %v5213, 2.0
    %v5510 = vmul.f32 %v5214, 2.0
    %v5511 = vmul.f32 %v5215, 2.0
    %v5512 = vmul.f32 %v5216, 2.0
    %v5513 = vlog2.pop %v5505
    %v5514 = vmul.f32 %v5513, 0.6931472
    %v5515 = vlog2.pop %v5506
    %v5516 = vmul.f32 %v5515, 0.6931472
    %v5517 = vlog2.pop %v5507
    %v5518 = vmul.f32 %v5517, 0.6931472
    %v5519 = vlog2.pop %v5508
    %v5520 = vmul.f32 %v5519, 0.6931472
    %v5521 = vlog2.pop %v5509
    %v5522 = vmul.f32 %v5521, 0.6931472
    %v5523 = vlog2.pop %v5510
    %v5524 = vmul.f32 %v5523, 0.6931472
    %v5525 = vlog2.pop %v5511
    %v5526 = vmul.f32 %v5525, 0.6931472
    %v5527 = vlog2.pop %v5512
    %v5528 = vmul.f32 %v5527, 0.6931472
    %v5529 = vsub.f32 %v5497, %v5514
    %v5530 = vsub.f32 %v5498, %v5516
    %v5531 = vsub.f32 %v5499, %v5518
    %v5532 = vsub.f32 %v5500, %v5520
    %v5533 = vsub.f32 %v5501, %v5522
    %v5534 = vsub.f32 %v5502, %v5524
    %v5535 = vsub.f32 %v5503, %v5526
    %v5536 = vsub.f32 %v5504, %v5528
    %v5537 = vmax.f32 %v5529, 0.0
    %v5538 = vmax.f32 %v5530, 0.0
    %v5539 = vmax.f32 %v5531, 0.0
    %v5540 = vmax.f32 %v5532, 0.0
    %v5541 = vmax.f32 %v5533, 0.0
    %v5542 = vmax.f32 %v5534, 0.0
    %v5543 = vmax.f32 %v5535, 0.0
    %v5544 = vmax.f32 %v5536, 0.0
    %v5545 = vmax.f32 %v5265, -40.0
    %v5546 = vmax.f32 %v5266, -40.0
    %v5547 = vmax.f32 %v5267, -40.0
    %v5548 = vmax.f32 %v5268, -40.0
    %v5549 = vmax.f32 %v5269, -40.0
    %v5550 = vmax.f32 %v5270, -40.0
    %v5551 = vmax.f32 %v5271, -40.0
    %v5552 = vmax.f32 %v5272, -40.0
    %v5553 = vmin.f32 %v5545, 40.0
    %v5554 = vmin.f32 %v5546, 40.0
    %v5555 = vmin.f32 %v5547, 40.0
    %v5556 = vmin.f32 %v5548, 40.0
    %v5557 = vmin.f32 %v5549, 40.0
    %v5558 = vmin.f32 %v5550, 40.0
    %v5559 = vmin.f32 %v5551, 40.0
    %v5560 = vmin.f32 %v5552, 40.0
    %v5561 = vmul.f32 %v5303, %v5041
    %v5562 = vmul.f32 %v5318, %v5042
    %v5563 = vmul.f32 %v5333, %v5043
    %v5564 = vmul.f32 %v5348, %v5044
    %v5565 = vmul.f32 %v5363, %v5045
    %v5566 = vmul.f32 %v5378, %v5046
    %v5567 = vmul.f32 %v5393, %v5047
    %v5568 = vmul.f32 %v5408, %v5048
    %v5569 = vmax.f32 %v5561, -40.0
    %v5570 = vmax.f32 %v5562, -40.0
    %v5571 = vmax.f32 %v5563, -40.0
    %v5572 = vmax.f32 %v5564, -40.0
    %v5573 = vmax.f32 %v5565, -40.0
    %v5574 = vmax.f32 %v5566, -40.0
    %v5575 = vmax.f32 %v5567, -40.0
    %v5576 = vmax.f32 %v5568, -40.0
    %v5577 = vmin.f32 %v5569, 40.0
    %v5578 = vmin.f32 %v5570, 40.0
    %v5579 = vmin.f32 %v5571, 40.0
    %v5580 = vmin.f32 %v5572, 40.0
    %v5581 = vmin.f32 %v5573, 40.0
    %v5582 = vmin.f32 %v5574, 40.0
    %v5583 = vmin.f32 %v5575, 40.0
    %v5584 = vmin.f32 %v5576, 40.0
    %v5585 = vmul.f32 %v5537, 3.0
    %v5586 = vmul.f32 %v5538, 3.0
    %v5587 = vmul.f32 %v5539, 3.0
    %v5588 = vmul.f32 %v5540, 3.0
    %v5589 = vmul.f32 %v5541, 3.0
    %v5590 = vmul.f32 %v5542, 3.0
    %v5591 = vmul.f32 %v5543, 3.0
    %v5592 = vmul.f32 %v5544, 3.0
    %v5601 = vrot.slane %v5586, 7
    %v5602 = vrot.slane %v5587, 6
    %v5603 = vrot.slane %v5588, 5
    %v5604 = vrot.slane %v5589, 4
    %v5605 = vrot.slane %v5590, 3
    %v5606 = vrot.slane %v5591, 2
    %v5607 = vrot.slane %v5592, 1
    %v5608 = vsel %vm2304, %v5585, %v5601
    %v5609 = vsel %vm2306, %v5602, %v5603
    %v5610 = vsel %vm2308, %v5608, %v5609
    %v5611 = vsel %vm2310, %v5604, %v5605
    %v5612 = vsel %vm2312, %v5606, %v5607
    %v5613 = vsel %vm2314, %v5611, %v5612
    %v5614 = vsel %vm2316, %v5610, %v5613
    %v5616 = vsub.f32 %v3445, %v5614
    %v5617 = vmul.f32 %v4689, %v5577
    %v5618 = vmul.f32 %v4712, %v5578
    %v5619 = vmul.f32 %v4735, %v5579
    %v5620 = vmul.f32 %v4758, %v5580
    %v5621 = vmul.f32 %v4781, %v5581
    %v5622 = vmul.f32 %v4804, %v5582
    %v5623 = vmul.f32 %v4827, %v5583
    %v5624 = vmul.f32 %v4850, %v5584
    %v5625 = vrot.slane %v5617, 4
    %v5626 = vadd.f32 %v5617, %v5625
    %v5627 = vrot.slane %v5626, 2
    %v5628 = vadd.f32 %v5626, %v5627
    %v5629 = vrot.slane %v5628, 1
    %v5630 = vadd.f32 %v5628, %v5629
    %v5631 = vrot.slane %v5618, 4
    %v5632 = vadd.f32 %v5618, %v5631
    %v5633 = vrot.slane %v5632, 2
    %v5634 = vadd.f32 %v5632, %v5633
    %v5635 = vrot.slane %v5634, 1
    %v5636 = vadd.f32 %v5634, %v5635
    %v5637 = vrot.slane %v5619, 4
    %v5638 = vadd.f32 %v5619, %v5637
    %v5639 = vrot.slane %v5638, 2
    %v5640 = vadd.f32 %v5638, %v5639
    %v5641 = vrot.slane %v5640, 1
    %v5642 = vadd.f32 %v5640, %v5641
    %v5643 = vrot.slane %v5620, 4
    %v5644 = vadd.f32 %v5620, %v5643
    %v5645 = vrot.slane %v5644, 2
    %v5646 = vadd.f32 %v5644, %v5645
    %v5647 = vrot.slane %v5646, 1
    %v5648 = vadd.f32 %v5646, %v5647
    %v5649 = vrot.slane %v5621, 4
    %v5650 = vadd.f32 %v5621, %v5649
    %v5651 = vrot.slane %v5650, 2
    %v5652 = vadd.f32 %v5650, %v5651
    %v5653 = vrot.slane %v5652, 1
    %v5654 = vadd.f32 %v5652, %v5653
    %v5655 = vrot.slane %v5622, 4
    %v5656 = vadd.f32 %v5622, %v5655
    %v5657 = vrot.slane %v5656, 2
    %v5658 = vadd.f32 %v5656, %v5657
    %v5659 = vrot.slane %v5658, 1
    %v5660 = vadd.f32 %v5658, %v5659
    %v5661 = vrot.slane %v5623, 4
    %v5662 = vadd.f32 %v5623, %v5661
    %v5663 = vrot.slane %v5662, 2
    %v5664 = vadd.f32 %v5662, %v5663
    %v5665 = vrot.slane %v5664, 1
    %v5666 = vadd.f32 %v5664, %v5665
    %v5667 = vrot.slane %v5624, 4
    %v5668 = vadd.f32 %v5624, %v5667
    %v5669 = vrot.slane %v5668, 2
    %v5670 = vadd.f32 %v5668, %v5669
    %v5671 = vrot.slane %v5670, 1
    %v5672 = vadd.f32 %v5670, %v5671
    %v5673 = vmul.f32 %v4935, %v5553
    %v5674 = vmul.f32 %v4947, %v5554
    %v5675 = vmul.f32 %v4959, %v5555
    %v5676 = vmul.f32 %v4971, %v5556
    %v5677 = vmul.f32 %v4983, %v5557
    %v5678 = vmul.f32 %v4995, %v5558
    %v5679 = vmul.f32 %v5007, %v5559
    %v5680 = vmul.f32 %v5019, %v5560
    %v5681 = vsub.f32 %v5630, %v5673
    %v5682 = vsub.f32 %v5636, %v5674
    %v5683 = vsub.f32 %v5642, %v5675
    %v5684 = vsub.f32 %v5648, %v5676
    %v5685 = vsub.f32 %v5654, %v5677
    %v5686 = vsub.f32 %v5660, %v5678
    %v5687 = vsub.f32 %v5666, %v5679
    %v5688 = vsub.f32 %v5672, %v5680
    %v5689 = vsub.f32 0.0, %v5681
    %v5690 = vsub.f32 0.0, %v5682
    %v5691 = vsub.f32 0.0, %v5683
    %v5692 = vsub.f32 0.0, %v5684
    %v5693 = vsub.f32 0.0, %v5685
    %v5694 = vsub.f32 0.0, %v5686
    %v5695 = vsub.f32 0.0, %v5687
    %v5696 = vsub.f32 0.0, %v5688
    %v5697 = vmax.f32 %v5689, 1.000001
    %v5698 = vmax.f32 %v5690, 1.000001
    %v5699 = vmax.f32 %v5691, 1.000001
    %v5700 = vmax.f32 %v5692, 1.000001
    %v5701 = vmax.f32 %v5693, 1.000001
    %v5702 = vmax.f32 %v5694, 1.000001
    %v5703 = vmax.f32 %v5695, 1.000001
    %v5704 = vmax.f32 %v5696, 1.000001
    %v5705 = vsub.f32 %v5697, 1.0
    %v5706 = vsub.f32 %v5698, 1.0
    %v5707 = vsub.f32 %v5699, 1.0
    %v5708 = vsub.f32 %v5700, 1.0
    %v5709 = vsub.f32 %v5701, 1.0
    %v5710 = vsub.f32 %v5702, 1.0
    %v5711 = vsub.f32 %v5703, 1.0
    %v5712 = vsub.f32 %v5704, 1.0
    %v5713 = vadd.f32 %v5697, 1.0
    %v5714 = vadd.f32 %v5698, 1.0
    %v5715 = vadd.f32 %v5699, 1.0
    %v5716 = vadd.f32 %v5700, 1.0
    %v5717 = vadd.f32 %v5701, 1.0
    %v5718 = vadd.f32 %v5702, 1.0
    %v5719 = vadd.f32 %v5703, 1.0
    %v5720 = vadd.f32 %v5704, 1.0
    %v5721 = vmul.f32 %v5705, %v5713
    %v5722 = vmul.f32 %v5706, %v5714
    %v5723 = vmul.f32 %v5707, %v5715
    %v5724 = vmul.f32 %v5708, %v5716
    %v5725 = vmul.f32 %v5709, %v5717
    %v5726 = vmul.f32 %v5710, %v5718
    %v5727 = vmul.f32 %v5711, %v5719
    %v5728 = vmul.f32 %v5712, %v5720
    %v5729 = vrsqrt.pop %v5721
    %v5730 = vmul.f32 %v5729, %v5721
    %v5731 = vmul.f32 %v5730, %v5729
    %v5732 = vmul.f32 0.5, %v5731
    %v5733 = vsub.f32 1.5, %v5732
    %v5734 = vmul.f32 %v5729, %v5733
    %v5735 = vmul.f32 %v5721, %v5734
    %vm5736 = vcmp.eq.f32.partialorder %v5721, inf
    %v5737 = vsel %vm5736, %v5721, %v5735
    %vm5738 = vcmp.eq.f32.partialorder %v5721, 0.0
    %v5739 = vand.u32 %v5721, 2147483648
    %v5740 = vsel %vm5738, %v5739, %v5737
    %v5741 = vrsqrt.pop %v5722
    %v5742 = vmul.f32 %v5741, %v5722
    %v5743 = vmul.f32 %v5742, %v5741
    %v5744 = vmul.f32 0.5, %v5743
    %v5745 = vsub.f32 1.5, %v5744
    %v5746 = vmul.f32 %v5741, %v5745
    %v5747 = vmul.f32 %v5722, %v5746
    %vm5748 = vcmp.eq.f32.partialorder %v5722, inf
    %v5749 = vsel %vm5748, %v5722, %v5747
    %vm5750 = vcmp.eq.f32.partialorder %v5722, 0.0
    %v5751 = vand.u32 %v5722, 2147483648
    %v5752 = vsel %vm5750, %v5751, %v5749
    %v5753 = vrsqrt.pop %v5723
    %v5754 = vmul.f32 %v5753, %v5723
    %v5755 = vmul.f32 %v5754, %v5753
    %v5756 = vmul.f32 0.5, %v5755
    %v5757 = vsub.f32 1.5, %v5756
    %v5758 = vmul.f32 %v5753, %v5757
    %v5759 = vmul.f32 %v5723, %v5758
    %vm5760 = vcmp.eq.f32.partialorder %v5723, inf
    %v5761 = vsel %vm5760, %v5723, %v5759
    %vm5762 = vcmp.eq.f32.partialorder %v5723, 0.0
    %v5763 = vand.u32 %v5723, 2147483648
    %v5764 = vsel %vm5762, %v5763, %v5761
    %v5765 = vrsqrt.pop %v5724
    %v5766 = vmul.f32 %v5765, %v5724
    %v5767 = vmul.f32 %v5766, %v5765
    %v5768 = vmul.f32 0.5, %v5767
    %v5769 = vsub.f32 1.5, %v5768
    %v5770 = vmul.f32 %v5765, %v5769
    %v5771 = vmul.f32 %v5724, %v5770
    %vm5772 = vcmp.eq.f32.partialorder %v5724, inf
    %v5773 = vsel %vm5772, %v5724, %v5771
    %vm5774 = vcmp.eq.f32.partialorder %v5724, 0.0
    %v5775 = vand.u32 %v5724, 2147483648
    %v5776 = vsel %vm5774, %v5775, %v5773
    %v5777 = vrsqrt.pop %v5725
    %v5778 = vmul.f32 %v5777, %v5725
    %v5779 = vmul.f32 %v5778, %v5777
    %v5780 = vmul.f32 0.5, %v5779
    %v5781 = vsub.f32 1.5, %v5780
    %v5782 = vmul.f32 %v5777, %v5781
    %v5783 = vmul.f32 %v5725, %v5782
    %vm5784 = vcmp.eq.f32.partialorder %v5725, inf
    %v5785 = vsel %vm5784, %v5725, %v5783
    %vm5786 = vcmp.eq.f32.partialorder %v5725, 0.0
    %v5787 = vand.u32 %v5725, 2147483648
    %v5788 = vsel %vm5786, %v5787, %v5785
    %v5789 = vrsqrt.pop %v5726
    %v5790 = vmul.f32 %v5789, %v5726
    %v5791 = vmul.f32 %v5790, %v5789
    %v5792 = vmul.f32 0.5, %v5791
    %v5793 = vsub.f32 1.5, %v5792
    %v5794 = vmul.f32 %v5789, %v5793
    %v5795 = vmul.f32 %v5726, %v5794
    %vm5796 = vcmp.eq.f32.partialorder %v5726, inf
    %v5797 = vsel %vm5796, %v5726, %v5795
    %vm5798 = vcmp.eq.f32.partialorder %v5726, 0.0
    %v5799 = vand.u32 %v5726, 2147483648
    %v5800 = vsel %vm5798, %v5799, %v5797
    %v5801 = vrsqrt.pop %v5727
    %v5802 = vmul.f32 %v5801, %v5727
    %v5803 = vmul.f32 %v5802, %v5801
    %v5804 = vmul.f32 0.5, %v5803
    %v5805 = vsub.f32 1.5, %v5804
    %v5806 = vmul.f32 %v5801, %v5805
    %v5807 = vmul.f32 %v5727, %v5806
    %vm5808 = vcmp.eq.f32.partialorder %v5727, inf
    %v5809 = vsel %vm5808, %v5727, %v5807
    %vm5810 = vcmp.eq.f32.partialorder %v5727, 0.0
    %v5811 = vand.u32 %v5727, 2147483648
    %v5812 = vsel %vm5810, %v5811, %v5809
    %v5813 = vrsqrt.pop %v5728
    %v5814 = vmul.f32 %v5813, %v5728
    %v5815 = vmul.f32 %v5814, %v5813
    %v5816 = vmul.f32 0.5, %v5815
    %v5817 = vsub.f32 1.5, %v5816
    %v5818 = vmul.f32 %v5813, %v5817
    %v5819 = vmul.f32 %v5728, %v5818
    %vm5820 = vcmp.eq.f32.partialorder %v5728, inf
    %v5821 = vsel %vm5820, %v5728, %v5819
    %vm5822 = vcmp.eq.f32.partialorder %v5728, 0.0
    %v5823 = vand.u32 %v5728, 2147483648
    %v5824 = vsel %vm5822, %v5823, %v5821
    %v5825 = vadd.f32 %v5705, %v5740
    %v5826 = vadd.f32 %v5706, %v5752
    %v5827 = vadd.f32 %v5707, %v5764
    %v5828 = vadd.f32 %v5708, %v5776
    %v5829 = vadd.f32 %v5709, %v5788
    %v5830 = vadd.f32 %v5710, %v5800
    %v5831 = vadd.f32 %v5711, %v5812
    %v5832 = vadd.f32 %v5712, %v5824
    %v5833 = vadd.f32 %v5825, 1.0
    %v5834 = vlog2.pop %v5833
    %v5835 = vmul.f32 %v5834, 0.6931472
    %v5836 = vmul.f32 -0.5, %v5825
    %v5837 = vadd.f32 %v5836, 1.0
    %v5838 = vmul.f32 %v5837, %v5825
    %v5839 = vand.u32 2147483647, %v5825
    %vm5840 = vcmp.lt.f32.partialorder %v5839, 0.0004427343
    %v5841 = vsel %vm5840, %v5838, %v5835
    %v5842 = vadd.f32 %v5826, 1.0
    %v5843 = vlog2.pop %v5842
    %v5844 = vmul.f32 %v5843, 0.6931472
    %v5845 = vmul.f32 -0.5, %v5826
    %v5846 = vadd.f32 %v5845, 1.0
    %v5847 = vmul.f32 %v5846, %v5826
    %v5848 = vand.u32 2147483647, %v5826
    %vm5849 = vcmp.lt.f32.partialorder %v5848, 0.0004427343
    %v5850 = vsel %vm5849, %v5847, %v5844
    %v5851 = vadd.f32 %v5827, 1.0
    %v5852 = vlog2.pop %v5851
    %v5853 = vmul.f32 %v5852, 0.6931472
    %v5854 = vmul.f32 -0.5, %v5827
    %v5855 = vadd.f32 %v5854, 1.0
    %v5856 = vmul.f32 %v5855, %v5827
    %v5857 = vand.u32 2147483647, %v5827
    %vm5858 = vcmp.lt.f32.partialorder %v5857, 0.0004427343
    %v5859 = vsel %vm5858, %v5856, %v5853
    %v5860 = vadd.f32 %v5828, 1.0
    %v5861 = vlog2.pop %v5860
    %v5862 = vmul.f32 %v5861, 0.6931472
    %v5863 = vmul.f32 -0.5, %v5828
    %v5864 = vadd.f32 %v5863, 1.0
    %v5865 = vmul.f32 %v5864, %v5828
    %v5866 = vand.u32 2147483647, %v5828
    %vm5867 = vcmp.lt.f32.partialorder %v5866, 0.0004427343
    %v5868 = vsel %vm5867, %v5865, %v5862
    %v5869 = vadd.f32 %v5829, 1.0
    %v5870 = vlog2.pop %v5869
    %v5871 = vmul.f32 %v5870, 0.6931472
    %v5872 = vmul.f32 -0.5, %v5829
    %v5873 = vadd.f32 %v5872, 1.0
    %v5874 = vmul.f32 %v5873, %v5829
    %v5875 = vand.u32 2147483647, %v5829
    %vm5876 = vcmp.lt.f32.partialorder %v5875, 0.0004427343
    %v5877 = vsel %vm5876, %v5874, %v5871
    %v5878 = vadd.f32 %v5830, 1.0
    %v5879 = vlog2.pop %v5878
    %v5880 = vmul.f32 %v5879, 0.6931472
    %v5881 = vmul.f32 -0.5, %v5830
    %v5882 = vadd.f32 %v5881, 1.0
    %v5883 = vmul.f32 %v5882, %v5830
    %v5884 = vand.u32 2147483647, %v5830
    %vm5885 = vcmp.lt.f32.partialorder %v5884, 0.0004427343
    %v5886 = vsel %vm5885, %v5883, %v5880
    %v5887 = vadd.f32 %v5831, 1.0
    %v5888 = vlog2.pop %v5887
    %v5889 = vmul.f32 %v5888, 0.6931472
    %v5890 = vmul.f32 -0.5, %v5831
    %v5891 = vadd.f32 %v5890, 1.0
    %v5892 = vmul.f32 %v5891, %v5831
    %v5893 = vand.u32 2147483647, %v5831
    %vm5894 = vcmp.lt.f32.partialorder %v5893, 0.0004427343
    %v5895 = vsel %vm5894, %v5892, %v5889
    %v5896 = vadd.f32 %v5832, 1.0
    %v5897 = vlog2.pop %v5896
    %v5898 = vmul.f32 %v5897, 0.6931472
    %v5899 = vmul.f32 -0.5, %v5832
    %v5900 = vadd.f32 %v5899, 1.0
    %v5901 = vmul.f32 %v5900, %v5832
    %v5902 = vand.u32 2147483647, %v5832
    %vm5903 = vcmp.lt.f32.partialorder %v5902, 0.0004427343
    %v5904 = vsel %vm5903, %v5901, %v5898
    %v5905 = vrcp.pop %v5740
    %v5906 = vmul.f32 %v5740, %v5905
    %v5907 = vsub.f32 1.0, %v5906
    %v5908 = vmul.f32 %v5905, %v5907
    %v5909 = vadd.f32 %v5905, %v5908
    %vm5910 = vweird.f32 %v5740
    %vm5911 = vweird.f32 %v5905
    %vm5912 = vmor %vm5910, %vm5911
    %v5913 = vsel %vm5912, %v5905, %v5909
    %v5914 = vand.u32 2147483647, %v5740
    %vm5915 = vcmp.eq.f32.partialorder %v5914, 8.507059e+37
    %v5916 = vand.u32 %v5740, 2147483648
    %v5917 = vor.u32 1.1754944e-38, %v5916
    %v5918 = vsel %vm5915, %v5917, %v5913
    %v5919 = vmul.f32 %v5841, %v5918
    %v5920 = vrcp.pop %v5752
    %v5921 = vmul.f32 %v5752, %v5920
    %v5922 = vsub.f32 1.0, %v5921
    %v5923 = vmul.f32 %v5920, %v5922
    %v5924 = vadd.f32 %v5920, %v5923
    %vm5925 = vweird.f32 %v5752
    %vm5926 = vweird.f32 %v5920
    %vm5927 = vmor %vm5925, %vm5926
    %v5928 = vsel %vm5927, %v5920, %v5924
    %v5929 = vand.u32 2147483647, %v5752
    %vm5930 = vcmp.eq.f32.partialorder %v5929, 8.507059e+37
    %v5931 = vand.u32 %v5752, 2147483648
    %v5932 = vor.u32 1.1754944e-38, %v5931
    %v5933 = vsel %vm5930, %v5932, %v5928
    %v5934 = vmul.f32 %v5850, %v5933
    %v5935 = vrcp.pop %v5764
    %v5936 = vmul.f32 %v5764, %v5935
    %v5937 = vsub.f32 1.0, %v5936
    %v5938 = vmul.f32 %v5935, %v5937
    %v5939 = vadd.f32 %v5935, %v5938
    %vm5940 = vweird.f32 %v5764
    %vm5941 = vweird.f32 %v5935
    %vm5942 = vmor %vm5940, %vm5941
    %v5943 = vsel %vm5942, %v5935, %v5939
    %v5944 = vand.u32 2147483647, %v5764
    %vm5945 = vcmp.eq.f32.partialorder %v5944, 8.507059e+37
    %v5946 = vand.u32 %v5764, 2147483648
    %v5947 = vor.u32 1.1754944e-38, %v5946
    %v5948 = vsel %vm5945, %v5947, %v5943
    %v5949 = vmul.f32 %v5859, %v5948
    %v5950 = vrcp.pop %v5776
    %v5951 = vmul.f32 %v5776, %v5950
    %v5952 = vsub.f32 1.0, %v5951
    %v5953 = vmul.f32 %v5950, %v5952
    %v5954 = vadd.f32 %v5950, %v5953
    %vm5955 = vweird.f32 %v5776
    %vm5956 = vweird.f32 %v5950
    %vm5957 = vmor %vm5955, %vm5956
    %v5958 = vsel %vm5957, %v5950, %v5954
    %v5959 = vand.u32 2147483647, %v5776
    %vm5960 = vcmp.eq.f32.partialorder %v5959, 8.507059e+37
    %v5961 = vand.u32 %v5776, 2147483648
    %v5962 = vor.u32 1.1754944e-38, %v5961
    %v5963 = vsel %vm5960, %v5962, %v5958
    %v5964 = vmul.f32 %v5868, %v5963
    %v5965 = vrcp.pop %v5788
    %v5966 = vmul.f32 %v5788, %v5965
    %v5967 = vsub.f32 1.0, %v5966
    %v5968 = vmul.f32 %v5965, %v5967
    %v5969 = vadd.f32 %v5965, %v5968
    %vm5970 = vweird.f32 %v5788
    %vm5971 = vweird.f32 %v5965
    %vm5972 = vmor %vm5970, %vm5971
    %v5973 = vsel %vm5972, %v5965, %v5969
    %v5974 = vand.u32 2147483647, %v5788
    %vm5975 = vcmp.eq.f32.partialorder %v5974, 8.507059e+37
    %v5976 = vand.u32 %v5788, 2147483648
    %v5977 = vor.u32 1.1754944e-38, %v5976
    %v5978 = vsel %vm5975, %v5977, %v5973
    %v5979 = vmul.f32 %v5877, %v5978
    %v5980 = vrcp.pop %v5800
    %v5981 = vmul.f32 %v5800, %v5980
    %v5982 = vsub.f32 1.0, %v5981
    %v5983 = vmul.f32 %v5980, %v5982
    %v5984 = vadd.f32 %v5980, %v5983
    %vm5985 = vweird.f32 %v5800
    %vm5986 = vweird.f32 %v5980
    %vm5987 = vmor %vm5985, %vm5986
    %v5988 = vsel %vm5987, %v5980, %v5984
    %v5989 = vand.u32 2147483647, %v5800
    %vm5990 = vcmp.eq.f32.partialorder %v5989, 8.507059e+37
    %v5991 = vand.u32 %v5800, 2147483648
    %v5992 = vor.u32 1.1754944e-38, %v5991
    %v5993 = vsel %vm5990, %v5992, %v5988
    %v5994 = vmul.f32 %v5886, %v5993
    %v5995 = vrcp.pop %v5812
    %v5996 = vmul.f32 %v5812, %v5995
    %v5997 = vsub.f32 1.0, %v5996
    %v5998 = vmul.f32 %v5995, %v5997
    %v5999 = vadd.f32 %v5995, %v5998
    %vm6000 = vweird.f32 %v5812
    %vm6001 = vweird.f32 %v5995
    %vm6002 = vmor %vm6000, %vm6001
    %v6003 = vsel %vm6002, %v5995, %v5999
    %v6004 = vand.u32 2147483647, %v5812
    %vm6005 = vcmp.eq.f32.partialorder %v6004, 8.507059e+37
    %v6006 = vand.u32 %v5812, 2147483648
    %v6007 = vor.u32 1.1754944e-38, %v6006
    %v6008 = vsel %vm6005, %v6007, %v6003
    %v6009 = vmul.f32 %v5895, %v6008
    %v6010 = vrcp.pop %v5824
    %v6011 = vmul.f32 %v5824, %v6010
    %v6012 = vsub.f32 1.0, %v6011
    %v6013 = vmul.f32 %v6010, %v6012
    %v6014 = vadd.f32 %v6010, %v6013
    %vm6015 = vweird.f32 %v5824
    %vm6016 = vweird.f32 %v6010
    %vm6017 = vmor %vm6015, %vm6016
    %v6018 = vsel %vm6017, %v6010, %v6014
    %v6019 = vand.u32 2147483647, %v5824
    %vm6020 = vcmp.eq.f32.partialorder %v6019, 8.507059e+37
    %v6021 = vand.u32 %v5824, 2147483648
    %v6022 = vor.u32 1.1754944e-38, %v6021
    %v6023 = vsel %vm6020, %v6022, %v6018
    %v6024 = vmul.f32 %v5904, %v6023
    %v6025 = vmul.f32 %v5697, %v4935
    %v6026 = vmul.f32 %v5698, %v4947
    %v6027 = vmul.f32 %v5699, %v4959
    %v6028 = vmul.f32 %v5700, %v4971
    %v6029 = vmul.f32 %v5701, %v4983
    %v6030 = vmul.f32 %v5702, %v4995
    %v6031 = vmul.f32 %v5703, %v5007
    %v6032 = vmul.f32 %v5704, %v5019
    %v6033 = vsub.f32 %v5553, %v6025
    %v6034 = vsub.f32 %v5554, %v6026
    %v6035 = vsub.f32 %v5555, %v6027
    %v6036 = vsub.f32 %v5556, %v6028
    %v6037 = vsub.f32 %v5557, %v6029
    %v6038 = vsub.f32 %v5558, %v6030
    %v6039 = vsub.f32 %v5559, %v6031
    %v6040 = vsub.f32 %v5560, %v6032
    %v6041 = vmul.f32 %v5919, %v6033
    %v6042 = vmul.f32 %v5934, %v6034
    %v6043 = vmul.f32 %v5949, %v6035
    %v6044 = vmul.f32 %v5964, %v6036
    %v6045 = vmul.f32 %v5979, %v6037
    %v6046 = vmul.f32 %v5994, %v6038
    %v6047 = vmul.f32 %v6009, %v6039
    %v6048 = vmul.f32 %v6024, %v6040
    %v6049 = vmul.f32 %v5697, %v4689
    %v6050 = vmul.f32 %v5698, %v4712
    %v6051 = vmul.f32 %v5699, %v4735
    %v6052 = vmul.f32 %v5700, %v4758
    %v6053 = vmul.f32 %v5701, %v4781
    %v6054 = vmul.f32 %v5702, %v4804
    %v6055 = vmul.f32 %v5703, %v4827
    %v6056 = vmul.f32 %v5704, %v4850
    %v6057 = vsub.f32 %v5577, %v6049
    %v6058 = vsub.f32 %v5578, %v6050
    %v6059 = vsub.f32 %v5579, %v6051
    %v6060 = vsub.f32 %v5580, %v6052
    %v6061 = vsub.f32 %v5581, %v6053
    %v6062 = vsub.f32 %v5582, %v6054
    %v6063 = vsub.f32 %v5583, %v6055
    %v6064 = vsub.f32 %v5584, %v6056
    %v6065 = vmul.f32 %v5919, %v6057
    %v6066 = vmul.f32 %v5934, %v6058
    %v6067 = vmul.f32 %v5949, %v6059
    %v6068 = vmul.f32 %v5964, %v6060
    %v6069 = vmul.f32 %v5979, %v6061
    %v6070 = vmul.f32 %v5994, %v6062
    %v6071 = vmul.f32 %v6009, %v6063
    %v6072 = vmul.f32 %v6024, %v6064
    %v6073 = vmul.f32 %v6065, %v6065
    %v6074 = vmul.f32 %v6066, %v6066
    %v6075 = vmul.f32 %v6067, %v6067
    %v6076 = vmul.f32 %v6068, %v6068
    %v6077 = vmul.f32 %v6069, %v6069
    %v6078 = vmul.f32 %v6070, %v6070
    %v6079 = vmul.f32 %v6071, %v6071
    %v6080 = vmul.f32 %v6072, %v6072
    %v6081 = vrot.slane %v6073, 4
    %v6082 = vadd.f32 %v6073, %v6081
    %v6083 = vrot.slane %v6082, 2
    %v6084 = vadd.f32 %v6082, %v6083
    %v6085 = vrot.slane %v6084, 1
    %v6086 = vadd.f32 %v6084, %v6085
    %v6087 = vrot.slane %v6074, 4
    %v6088 = vadd.f32 %v6074, %v6087
    %v6089 = vrot.slane %v6088, 2
    %v6090 = vadd.f32 %v6088, %v6089
    %v6091 = vrot.slane %v6090, 1
    %v6092 = vadd.f32 %v6090, %v6091
    %v6093 = vrot.slane %v6075, 4
    %v6094 = vadd.f32 %v6075, %v6093
    %v6095 = vrot.slane %v6094, 2
    %v6096 = vadd.f32 %v6094, %v6095
    %v6097 = vrot.slane %v6096, 1
    %v6098 = vadd.f32 %v6096, %v6097
    %v6099 = vrot.slane %v6076, 4
    %v6100 = vadd.f32 %v6076, %v6099
    %v6101 = vrot.slane %v6100, 2
    %v6102 = vadd.f32 %v6100, %v6101
    %v6103 = vrot.slane %v6102, 1
    %v6104 = vadd.f32 %v6102, %v6103
    %v6105 = vrot.slane %v6077, 4
    %v6106 = vadd.f32 %v6077, %v6105
    %v6107 = vrot.slane %v6106, 2
    %v6108 = vadd.f32 %v6106, %v6107
    %v6109 = vrot.slane %v6108, 1
    %v6110 = vadd.f32 %v6108, %v6109
    %v6111 = vrot.slane %v6078, 4
    %v6112 = vadd.f32 %v6078, %v6111
    %v6113 = vrot.slane %v6112, 2
    %v6114 = vadd.f32 %v6112, %v6113
    %v6115 = vrot.slane %v6114, 1
    %v6116 = vadd.f32 %v6114, %v6115
    %v6117 = vrot.slane %v6079, 4
    %v6118 = vadd.f32 %v6079, %v6117
    %v6119 = vrot.slane %v6118, 2
    %v6120 = vadd.f32 %v6118, %v6119
    %v6121 = vrot.slane %v6120, 1
    %v6122 = vadd.f32 %v6120, %v6121
    %v6123 = vrot.slane %v6080, 4
    %v6124 = vadd.f32 %v6080, %v6123
    %v6125 = vrot.slane %v6124, 2
    %v6126 = vadd.f32 %v6124, %v6125
    %v6127 = vrot.slane %v6126, 1
    %v6128 = vadd.f32 %v6126, %v6127
    %v6129 = vmul.f32 %v6041, %v6041
    %v6130 = vmul.f32 %v6042, %v6042
    %v6131 = vmul.f32 %v6043, %v6043
    %v6132 = vmul.f32 %v6044, %v6044
    %v6133 = vmul.f32 %v6045, %v6045
    %v6134 = vmul.f32 %v6046, %v6046
    %v6135 = vmul.f32 %v6047, %v6047
    %v6136 = vmul.f32 %v6048, %v6048
    %v6137 = vsub.f32 %v6086, %v6129
    %v6138 = vsub.f32 %v6092, %v6130
    %v6139 = vsub.f32 %v6098, %v6131
    %v6140 = vsub.f32 %v6104, %v6132
    %v6141 = vsub.f32 %v6110, %v6133
    %v6142 = vsub.f32 %v6116, %v6134
    %v6143 = vsub.f32 %v6122, %v6135
    %v6144 = vsub.f32 %v6128, %v6136
    %v6145 = vmax.f32 %v6137, 1e-06
    %v6146 = vmax.f32 %v6138, 1e-06
    %v6147 = vmax.f32 %v6139, 1e-06
    %v6148 = vmax.f32 %v6140, 1e-06
    %v6149 = vmax.f32 %v6141, 1e-06
    %v6150 = vmax.f32 %v6142, 1e-06
    %v6151 = vmax.f32 %v6143, 1e-06
    %v6152 = vmax.f32 %v6144, 1e-06
    %v6153 = vrsqrt.pop %v6145
    %v6154 = vmul.f32 %v6153, %v6145
    %v6155 = vmul.f32 %v6154, %v6153
    %v6156 = vmul.f32 0.5, %v6155
    %v6157 = vsub.f32 1.5, %v6156
    %v6158 = vmul.f32 %v6153, %v6157
    %v6159 = vmul.f32 %v6145, %v6158
    %vm6160 = vcmp.eq.f32.partialorder %v6145, inf
    %v6161 = vsel %vm6160, %v6145, %v6159
    %vm6162 = vcmp.eq.f32.partialorder %v6145, 0.0
    %v6163 = vand.u32 %v6145, 2147483648
    %v6164 = vsel %vm6162, %v6163, %v6161
    %v6165 = vrsqrt.pop %v6146
    %v6166 = vmul.f32 %v6165, %v6146
    %v6167 = vmul.f32 %v6166, %v6165
    %v6168 = vmul.f32 0.5, %v6167
    %v6169 = vsub.f32 1.5, %v6168
    %v6170 = vmul.f32 %v6165, %v6169
    %v6171 = vmul.f32 %v6146, %v6170
    %vm6172 = vcmp.eq.f32.partialorder %v6146, inf
    %v6173 = vsel %vm6172, %v6146, %v6171
    %vm6174 = vcmp.eq.f32.partialorder %v6146, 0.0
    %v6175 = vand.u32 %v6146, 2147483648
    %v6176 = vsel %vm6174, %v6175, %v6173
    %v6177 = vrsqrt.pop %v6147
    %v6178 = vmul.f32 %v6177, %v6147
    %v6179 = vmul.f32 %v6178, %v6177
    %v6180 = vmul.f32 0.5, %v6179
    %v6181 = vsub.f32 1.5, %v6180
    %v6182 = vmul.f32 %v6177, %v6181
    %v6183 = vmul.f32 %v6147, %v6182
    %vm6184 = vcmp.eq.f32.partialorder %v6147, inf
    %v6185 = vsel %vm6184, %v6147, %v6183
    %vm6186 = vcmp.eq.f32.partialorder %v6147, 0.0
    %v6187 = vand.u32 %v6147, 2147483648
    %v6188 = vsel %vm6186, %v6187, %v6185
    %v6189 = vrsqrt.pop %v6148
    %v6190 = vmul.f32 %v6189, %v6148
    %v6191 = vmul.f32 %v6190, %v6189
    %v6192 = vmul.f32 0.5, %v6191
    %v6193 = vsub.f32 1.5, %v6192
    %v6194 = vmul.f32 %v6189, %v6193
    %v6195 = vmul.f32 %v6148, %v6194
    %vm6196 = vcmp.eq.f32.partialorder %v6148, inf
    %v6197 = vsel %vm6196, %v6148, %v6195
    %vm6198 = vcmp.eq.f32.partialorder %v6148, 0.0
    %v6199 = vand.u32 %v6148, 2147483648
    %v6200 = vsel %vm6198, %v6199, %v6197
    %v6201 = vrsqrt.pop %v6149
    %v6202 = vmul.f32 %v6201, %v6149
    %v6203 = vmul.f32 %v6202, %v6201
    %v6204 = vmul.f32 0.5, %v6203
    %v6205 = vsub.f32 1.5, %v6204
    %v6206 = vmul.f32 %v6201, %v6205
    %v6207 = vmul.f32 %v6149, %v6206
    %vm6208 = vcmp.eq.f32.partialorder %v6149, inf
    %v6209 = vsel %vm6208, %v6149, %v6207
    %vm6210 = vcmp.eq.f32.partialorder %v6149, 0.0
    %v6211 = vand.u32 %v6149, 2147483648
    %v6212 = vsel %vm6210, %v6211, %v6209
    %v6213 = vrsqrt.pop %v6150
    %v6214 = vmul.f32 %v6213, %v6150
    %v6215 = vmul.f32 %v6214, %v6213
    %v6216 = vmul.f32 0.5, %v6215
    %v6217 = vsub.f32 1.5, %v6216
    %v6218 = vmul.f32 %v6213, %v6217
    %v6219 = vmul.f32 %v6150, %v6218
    %vm6220 = vcmp.eq.f32.partialorder %v6150, inf
    %v6221 = vsel %vm6220, %v6150, %v6219
    %vm6222 = vcmp.eq.f32.partialorder %v6150, 0.0
    %v6223 = vand.u32 %v6150, 2147483648
    %v6224 = vsel %vm6222, %v6223, %v6221
    %v6225 = vrsqrt.pop %v6151
    %v6226 = vmul.f32 %v6225, %v6151
    %v6227 = vmul.f32 %v6226, %v6225
    %v6228 = vmul.f32 0.5, %v6227
    %v6229 = vsub.f32 1.5, %v6228
    %v6230 = vmul.f32 %v6225, %v6229
    %v6231 = vmul.f32 %v6151, %v6230
    %vm6232 = vcmp.eq.f32.partialorder %v6151, inf
    %v6233 = vsel %vm6232, %v6151, %v6231
    %vm6234 = vcmp.eq.f32.partialorder %v6151, 0.0
    %v6235 = vand.u32 %v6151, 2147483648
    %v6236 = vsel %vm6234, %v6235, %v6233
    %v6237 = vrsqrt.pop %v6152
    %v6238 = vmul.f32 %v6237, %v6152
    %v6239 = vmul.f32 %v6238, %v6237
    %v6240 = vmul.f32 0.5, %v6239
    %v6241 = vsub.f32 1.5, %v6240
    %v6242 = vmul.f32 %v6237, %v6241
    %v6243 = vmul.f32 %v6152, %v6242
    %vm6244 = vcmp.eq.f32.partialorder %v6152, inf
    %v6245 = vsel %vm6244, %v6152, %v6243
    %vm6246 = vcmp.eq.f32.partialorder %v6152, 0.0
    %v6247 = vand.u32 %v6152, 2147483648
    %v6248 = vsel %vm6246, %v6247, %v6245
    %v6249 = vmax.f32 %v6164, 1e-06
    %v6250 = vmax.f32 %v6176, 1e-06
    %v6251 = vmax.f32 %v6188, 1e-06
    %v6252 = vmax.f32 %v6200, 1e-06
    %v6253 = vmax.f32 %v6212, 1e-06
    %v6254 = vmax.f32 %v6224, 1e-06
    %v6255 = vmax.f32 %v6236, 1e-06
    %v6256 = vmax.f32 %v6248, 1e-06
    %v6257 = vmul.f32 %v6249, -2.0
    %v6258 = vmul.f32 %v6250, -2.0
    %v6259 = vmul.f32 %v6251, -2.0
    %v6260 = vmul.f32 %v6252, -2.0
    %v6261 = vmul.f32 %v6253, -2.0
    %v6262 = vmul.f32 %v6254, -2.0
    %v6263 = vmul.f32 %v6255, -2.0
    %v6264 = vmul.f32 %v6256, -2.0
    %v6265 = vmul.f32 %v6257, 1.442695
    %v6266 = vpow.pop %v6265
    %v6267 = vmul.f32 %v6258, 1.442695
    %v6268 = vpow.pop %v6267
    %v6269 = vmul.f32 %v6259, 1.442695
    %v6270 = vpow.pop %v6269
    %v6271 = vmul.f32 %v6260, 1.442695
    %v6272 = vpow.pop %v6271
    %v6273 = vmul.f32 %v6261, 1.442695
    %v6274 = vpow.pop %v6273
    %v6275 = vmul.f32 %v6262, 1.442695
    %v6276 = vpow.pop %v6275
    %v6277 = vmul.f32 %v6263, 1.442695
    %v6278 = vpow.pop %v6277
    %v6279 = vmul.f32 %v6264, 1.442695
    %v6280 = vpow.pop %v6279
    %v6281 = vsub.f32 0.0, %v6266
    %v6282 = vsub.f32 0.0, %v6268
    %v6283 = vsub.f32 0.0, %v6270
    %v6284 = vsub.f32 0.0, %v6272
    %v6285 = vsub.f32 0.0, %v6274
    %v6286 = vsub.f32 0.0, %v6276
    %v6287 = vsub.f32 0.0, %v6278
    %v6288 = vsub.f32 0.0, %v6280
    %v6289 = vadd.f32 %v6281, 1.0
    %v6290 = vlog2.pop %v6289
    %v6291 = vmul.f32 %v6290, 0.6931472
    %v6292 = vmul.f32 -0.5, %v6281
    %v6293 = vadd.f32 %v6292, 1.0
    %v6294 = vmul.f32 %v6293, %v6281
    %v6295 = vand.u32 2147483647, %v6281
    %vm6296 = vcmp.lt.f32.partialorder %v6295, 0.0004427343
    %v6297 = vsel %vm6296, %v6294, %v6291
    %v6298 = vadd.f32 %v6282, 1.0
    %v6299 = vlog2.pop %v6298
    %v6300 = vmul.f32 %v6299, 0.6931472
    %v6301 = vmul.f32 -0.5, %v6282
    %v6302 = vadd.f32 %v6301, 1.0
    %v6303 = vmul.f32 %v6302, %v6282
    %v6304 = vand.u32 2147483647, %v6282
    %vm6305 = vcmp.lt.f32.partialorder %v6304, 0.0004427343
    %v6306 = vsel %vm6305, %v6303, %v6300
    %v6307 = vadd.f32 %v6283, 1.0
    %v6308 = vlog2.pop %v6307
    %v6309 = vmul.f32 %v6308, 0.6931472
    %v6310 = vmul.f32 -0.5, %v6283
    %v6311 = vadd.f32 %v6310, 1.0
    %v6312 = vmul.f32 %v6311, %v6283
    %v6313 = vand.u32 2147483647, %v6283
    %vm6314 = vcmp.lt.f32.partialorder %v6313, 0.0004427343
    %v6315 = vsel %vm6314, %v6312, %v6309
    %v6316 = vadd.f32 %v6284, 1.0
    %v6317 = vlog2.pop %v6316
    %v6318 = vmul.f32 %v6317, 0.6931472
    %v6319 = vmul.f32 -0.5, %v6284
    %v6320 = vadd.f32 %v6319, 1.0
    %v6321 = vmul.f32 %v6320, %v6284
    %v6322 = vand.u32 2147483647, %v6284
    %vm6323 = vcmp.lt.f32.partialorder %v6322, 0.0004427343
    %v6324 = vsel %vm6323, %v6321, %v6318
    %v6325 = vadd.f32 %v6285, 1.0
    %v6326 = vlog2.pop %v6325
    %v6327 = vmul.f32 %v6326, 0.6931472
    %v6328 = vmul.f32 -0.5, %v6285
    %v6329 = vadd.f32 %v6328, 1.0
    %v6330 = vmul.f32 %v6329, %v6285
    %v6331 = vand.u32 2147483647, %v6285
    %vm6332 = vcmp.lt.f32.partialorder %v6331, 0.0004427343
    %v6333 = vsel %vm6332, %v6330, %v6327
    %v6334 = vadd.f32 %v6286, 1.0
    %v6335 = vlog2.pop %v6334
    %v6336 = vmul.f32 %v6335, 0.6931472
    %v6337 = vmul.f32 -0.5, %v6286
    %v6338 = vadd.f32 %v6337, 1.0
    %v6339 = vmul.f32 %v6338, %v6286
    %v6340 = vand.u32 2147483647, %v6286
    %vm6341 = vcmp.lt.f32.partialorder %v6340, 0.0004427343
    %v6342 = vsel %vm6341, %v6339, %v6336
    %v6343 = vadd.f32 %v6287, 1.0
    %v6344 = vlog2.pop %v6343
    %v6345 = vmul.f32 %v6344, 0.6931472
    %v6346 = vmul.f32 -0.5, %v6287
    %v6347 = vadd.f32 %v6346, 1.0
    %v6348 = vmul.f32 %v6347, %v6287
    %v6349 = vand.u32 2147483647, %v6287
    %vm6350 = vcmp.lt.f32.partialorder %v6349, 0.0004427343
    %v6351 = vsel %vm6350, %v6348, %v6345
    %v6352 = vadd.f32 %v6288, 1.0
    %v6353 = vlog2.pop %v6352
    %v6354 = vmul.f32 %v6353, 0.6931472
    %v6355 = vmul.f32 -0.5, %v6288
    %v6356 = vadd.f32 %v6355, 1.0
    %v6357 = vmul.f32 %v6356, %v6288
    %v6358 = vand.u32 2147483647, %v6288
    %vm6359 = vcmp.lt.f32.partialorder %v6358, 0.0004427343
    %v6360 = vsel %vm6359, %v6357, %v6354
    %v6361 = vadd.f32 %v6249, %v6297
    %v6362 = vadd.f32 %v6250, %v6306
    %v6363 = vadd.f32 %v6251, %v6315
    %v6364 = vadd.f32 %v6252, %v6324
    %v6365 = vadd.f32 %v6253, %v6333
    %v6366 = vadd.f32 %v6254, %v6342
    %v6367 = vadd.f32 %v6255, %v6351
    %v6368 = vadd.f32 %v6256, %v6360
    %v6369 = vmul.f32 %v6249, 2.0
    %v6370 = vmul.f32 %v6250, 2.0
    %v6371 = vmul.f32 %v6251, 2.0
    %v6372 = vmul.f32 %v6252, 2.0
    %v6373 = vmul.f32 %v6253, 2.0
    %v6374 = vmul.f32 %v6254, 2.0
    %v6375 = vmul.f32 %v6255, 2.0
    %v6376 = vmul.f32 %v6256, 2.0
    %v6377 = vlog2.pop %v6369
    %v6378 = vmul.f32 %v6377, 0.6931472
    %v6379 = vlog2.pop %v6370
    %v6380 = vmul.f32 %v6379, 0.6931472
    %v6381 = vlog2.pop %v6371
    %v6382 = vmul.f32 %v6381, 0.6931472
    %v6383 = vlog2.pop %v6372
    %v6384 = vmul.f32 %v6383, 0.6931472
    %v6385 = vlog2.pop %v6373
    %v6386 = vmul.f32 %v6385, 0.6931472
    %v6387 = vlog2.pop %v6374
    %v6388 = vmul.f32 %v6387, 0.6931472
    %v6389 = vlog2.pop %v6375
    %v6390 = vmul.f32 %v6389, 0.6931472
    %v6391 = vlog2.pop %v6376
    %v6392 = vmul.f32 %v6391, 0.6931472
    %v6393 = vsub.f32 %v6361, %v6378
    %v6394 = vsub.f32 %v6362, %v6380
    %v6395 = vsub.f32 %v6363, %v6382
    %v6396 = vsub.f32 %v6364, %v6384
    %v6397 = vsub.f32 %v6365, %v6386
    %v6398 = vsub.f32 %v6366, %v6388
    %v6399 = vsub.f32 %v6367, %v6390
    %v6400 = vsub.f32 %v6368, %v6392
    %v6401 = vmax.f32 %v6393, 0.0
    %v6402 = vmax.f32 %v6394, 0.0
    %v6403 = vmax.f32 %v6395, 0.0
    %v6404 = vmax.f32 %v6396, 0.0
    %v6405 = vmax.f32 %v6397, 0.0
    %v6406 = vmax.f32 %v6398, 0.0
    %v6407 = vmax.f32 %v6399, 0.0
    %v6408 = vmax.f32 %v6400, 0.0
    %v6409 = vmul.f32 %v6401, 3.0
    %v6410 = vmul.f32 %v6402, 3.0
    %v6411 = vmul.f32 %v6403, 3.0
    %v6412 = vmul.f32 %v6404, 3.0
    %v6413 = vmul.f32 %v6405, 3.0
    %v6414 = vmul.f32 %v6406, 3.0
    %v6415 = vmul.f32 %v6407, 3.0
    %v6416 = vmul.f32 %v6408, 3.0
    %v6425 = vrot.slane %v6410, 7
    %v6426 = vrot.slane %v6411, 6
    %v6427 = vrot.slane %v6412, 5
    %v6428 = vrot.slane %v6413, 4
    %v6429 = vrot.slane %v6414, 3
    %v6430 = vrot.slane %v6415, 2
    %v6431 = vrot.slane %v6416, 1
    %v6432 = vsel %vm2304, %v6409, %v6425
    %v6433 = vsel %vm2306, %v6426, %v6427
    %v6434 = vsel %vm2308, %v6432, %v6433
    %v6435 = vsel %vm2310, %v6428, %v6429
    %v6436 = vsel %vm2312, %v6430, %v6431
    %v6437 = vsel %vm2314, %v6435, %v6436
    %v6438 = vsel %vm2316, %v6434, %v6437
    %v6440 = vadd.f32 %v5616, %v6438
    %v6441 = vmax.f32 %v6041, -40.0
    %v6442 = vmax.f32 %v6042, -40.0
    %v6443 = vmax.f32 %v6043, -40.0
    %v6444 = vmax.f32 %v6044, -40.0
    %v6445 = vmax.f32 %v6045, -40.0
    %v6446 = vmax.f32 %v6046, -40.0
    %v6447 = vmax.f32 %v6047, -40.0
    %v6448 = vmax.f32 %v6048, -40.0
    %v6449 = vmin.f32 %v6441, 40.0
    %v6450 = vmin.f32 %v6442, 40.0
    %v6451 = vmin.f32 %v6443, 40.0
    %v6452 = vmin.f32 %v6444, 40.0
    %v6453 = vmin.f32 %v6445, 40.0
    %v6454 = vmin.f32 %v6446, 40.0
    %v6455 = vmin.f32 %v6447, 40.0
    %v6456 = vmin.f32 %v6448, 40.0
    %v6457 = vmax.f32 %v6065, -40.0
    %v6458 = vmax.f32 %v6066, -40.0
    %v6459 = vmax.f32 %v6067, -40.0
    %v6460 = vmax.f32 %v6068, -40.0
    %v6461 = vmax.f32 %v6069, -40.0
    %v6462 = vmax.f32 %v6070, -40.0
    %v6463 = vmax.f32 %v6071, -40.0
    %v6464 = vmax.f32 %v6072, -40.0
    %v6465 = vmin.f32 %v6457, 40.0
    %v6466 = vmin.f32 %v6458, 40.0
    %v6467 = vmin.f32 %v6459, 40.0
    %v6468 = vmin.f32 %v6460, 40.0
    %v6469 = vmin.f32 %v6461, 40.0
    %v6470 = vmin.f32 %v6462, 40.0
    %v6471 = vmin.f32 %v6463, 40.0
    %v6472 = vmin.f32 %v6464, 40.0
    %v6473 = vadd.f32 %v4935, 1.0
    %v6474 = vadd.f32 %v4947, 1.0
    %v6475 = vadd.f32 %v4959, 1.0
    %v6476 = vadd.f32 %v4971, 1.0
    %v6477 = vadd.f32 %v4983, 1.0
    %v6478 = vadd.f32 %v4995, 1.0
    %v6479 = vadd.f32 %v5007, 1.0
    %v6480 = vadd.f32 %v5019, 1.0
    %v6481 = vrcp.pop %v6473
    %v6482 = vmul.f32 %v6473, %v6481
    %v6483 = vsub.f32 1.0, %v6482
    %v6484 = vmul.f32 %v6481, %v6483
    %v6485 = vadd.f32 %v6481, %v6484
    %vm6486 = vweird.f32 %v6473
    %vm6487 = vweird.f32 %v6481
    %vm6488 = vmor %vm6486, %vm6487
    %v6489 = vsel %vm6488, %v6481, %v6485
    %v6490 = vand.u32 2147483647, %v6473
    %vm6491 = vcmp.eq.f32.partialorder %v6490, 8.507059e+37
    %v6492 = vand.u32 %v6473, 2147483648
    %v6493 = vor.u32 1.1754944e-38, %v6492
    %v6494 = vsel %vm6491, %v6493, %v6489
    %v6495 = vmul.f32 %v6449, %v6494
    %v6496 = vrcp.pop %v6474
    %v6497 = vmul.f32 %v6474, %v6496
    %v6498 = vsub.f32 1.0, %v6497
    %v6499 = vmul.f32 %v6496, %v6498
    %v6500 = vadd.f32 %v6496, %v6499
    %vm6501 = vweird.f32 %v6474
    %vm6502 = vweird.f32 %v6496
    %vm6503 = vmor %vm6501, %vm6502
    %v6504 = vsel %vm6503, %v6496, %v6500
    %v6505 = vand.u32 2147483647, %v6474
    %vm6506 = vcmp.eq.f32.partialorder %v6505, 8.507059e+37
    %v6507 = vand.u32 %v6474, 2147483648
    %v6508 = vor.u32 1.1754944e-38, %v6507
    %v6509 = vsel %vm6506, %v6508, %v6504
    %v6510 = vmul.f32 %v6450, %v6509
    %v6511 = vrcp.pop %v6475
    %v6512 = vmul.f32 %v6475, %v6511
    %v6513 = vsub.f32 1.0, %v6512
    %v6514 = vmul.f32 %v6511, %v6513
    %v6515 = vadd.f32 %v6511, %v6514
    %vm6516 = vweird.f32 %v6475
    %vm6517 = vweird.f32 %v6511
    %vm6518 = vmor %vm6516, %vm6517
    %v6519 = vsel %vm6518, %v6511, %v6515
    %v6520 = vand.u32 2147483647, %v6475
    %vm6521 = vcmp.eq.f32.partialorder %v6520, 8.507059e+37
    %v6522 = vand.u32 %v6475, 2147483648
    %v6523 = vor.u32 1.1754944e-38, %v6522
    %v6524 = vsel %vm6521, %v6523, %v6519
    %v6525 = vmul.f32 %v6451, %v6524
    %v6526 = vrcp.pop %v6476
    %v6527 = vmul.f32 %v6476, %v6526
    %v6528 = vsub.f32 1.0, %v6527
    %v6529 = vmul.f32 %v6526, %v6528
    %v6530 = vadd.f32 %v6526, %v6529
    %vm6531 = vweird.f32 %v6476
    %vm6532 = vweird.f32 %v6526
    %vm6533 = vmor %vm6531, %vm6532
    %v6534 = vsel %vm6533, %v6526, %v6530
    %v6535 = vand.u32 2147483647, %v6476
    %vm6536 = vcmp.eq.f32.partialorder %v6535, 8.507059e+37
    %v6537 = vand.u32 %v6476, 2147483648
    %v6538 = vor.u32 1.1754944e-38, %v6537
    %v6539 = vsel %vm6536, %v6538, %v6534
    %v6540 = vmul.f32 %v6452, %v6539
    %v6541 = vrcp.pop %v6477
    %v6542 = vmul.f32 %v6477, %v6541
    %v6543 = vsub.f32 1.0, %v6542
    %v6544 = vmul.f32 %v6541, %v6543
    %v6545 = vadd.f32 %v6541, %v6544
    %vm6546 = vweird.f32 %v6477
    %vm6547 = vweird.f32 %v6541
    %vm6548 = vmor %vm6546, %vm6547
    %v6549 = vsel %vm6548, %v6541, %v6545
    %v6550 = vand.u32 2147483647, %v6477
    %vm6551 = vcmp.eq.f32.partialorder %v6550, 8.507059e+37
    %v6552 = vand.u32 %v6477, 2147483648
    %v6553 = vor.u32 1.1754944e-38, %v6552
    %v6554 = vsel %vm6551, %v6553, %v6549
    %v6555 = vmul.f32 %v6453, %v6554
    %v6556 = vrcp.pop %v6478
    %v6557 = vmul.f32 %v6478, %v6556
    %v6558 = vsub.f32 1.0, %v6557
    %v6559 = vmul.f32 %v6556, %v6558
    %v6560 = vadd.f32 %v6556, %v6559
    %vm6561 = vweird.f32 %v6478
    %vm6562 = vweird.f32 %v6556
    %vm6563 = vmor %vm6561, %vm6562
    %v6564 = vsel %vm6563, %v6556, %v6560
    %v6565 = vand.u32 2147483647, %v6478
    %vm6566 = vcmp.eq.f32.partialorder %v6565, 8.507059e+37
    %v6567 = vand.u32 %v6478, 2147483648
    %v6568 = vor.u32 1.1754944e-38, %v6567
    %v6569 = vsel %vm6566, %v6568, %v6564
    %v6570 = vmul.f32 %v6454, %v6569
    %v6571 = vrcp.pop %v6479
    %v6572 = vmul.f32 %v6479, %v6571
    %v6573 = vsub.f32 1.0, %v6572
    %v6574 = vmul.f32 %v6571, %v6573
    %v6575 = vadd.f32 %v6571, %v6574
    %vm6576 = vweird.f32 %v6479
    %vm6577 = vweird.f32 %v6571
    %vm6578 = vmor %vm6576, %vm6577
    %v6579 = vsel %vm6578, %v6571, %v6575
    %v6580 = vand.u32 2147483647, %v6479
    %vm6581 = vcmp.eq.f32.partialorder %v6580, 8.507059e+37
    %v6582 = vand.u32 %v6479, 2147483648
    %v6583 = vor.u32 1.1754944e-38, %v6582
    %v6584 = vsel %vm6581, %v6583, %v6579
    %v6585 = vmul.f32 %v6455, %v6584
    %v6586 = vrcp.pop %v6480
    %v6587 = vmul.f32 %v6480, %v6586
    %v6588 = vsub.f32 1.0, %v6587
    %v6589 = vmul.f32 %v6586, %v6588
    %v6590 = vadd.f32 %v6586, %v6589
    %vm6591 = vweird.f32 %v6480
    %vm6592 = vweird.f32 %v6586
    %vm6593 = vmor %vm6591, %vm6592
    %v6594 = vsel %vm6593, %v6586, %v6590
    %v6595 = vand.u32 2147483647, %v6480
    %vm6596 = vcmp.eq.f32.partialorder %v6595, 8.507059e+37
    %v6597 = vand.u32 %v6480, 2147483648
    %v6598 = vor.u32 1.1754944e-38, %v6597
    %v6599 = vsel %vm6596, %v6598, %v6594
    %v6600 = vmul.f32 %v6456, %v6599
    %v6601 = vmul.f32 %v6495, %v4689
    %v6602 = vmul.f32 %v6510, %v4712
    %v6603 = vmul.f32 %v6525, %v4735
    %v6604 = vmul.f32 %v6540, %v4758
    %v6605 = vmul.f32 %v6555, %v4781
    %v6606 = vmul.f32 %v6570, %v4804
    %v6607 = vmul.f32 %v6585, %v4827
    %v6608 = vmul.f32 %v6600, %v4850
    %v6609 = vsub.f32 %v6465, %v6601
    %v6610 = vsub.f32 %v6466, %v6602
    %v6611 = vsub.f32 %v6467, %v6603
    %v6612 = vsub.f32 %v6468, %v6604
    %v6613 = vsub.f32 %v6469, %v6605
    %v6614 = vsub.f32 %v6470, %v6606
    %v6615 = vsub.f32 %v6471, %v6607
    %v6616 = vsub.f32 %v6472, %v6608
    %vm6617 = vcmp.gt.f32.partialorder %v3446, 0.0
    %v6618 = vsub.f32 0.0, %v4852
    %v6619 = vsub.f32 0.0, %v4853
    %v6620 = vsub.f32 0.0, %v4854
    %v6621 = vsub.f32 0.0, %v4855
    %v6622 = vsub.f32 0.0, %v4856
    %v6623 = vsub.f32 0.0, %v4857
    %v6624 = vsub.f32 0.0, %v4858
    %v6625 = vsub.f32 0.0, %v4859
    %v6626 = vmul.f32 %v6618, 1.442695
    %v6627 = vpow.pop %v6626
    %v6628 = vmul.f32 %v6619, 1.442695
    %v6629 = vpow.pop %v6628
    %v6630 = vmul.f32 %v6620, 1.442695
    %v6631 = vpow.pop %v6630
    %v6632 = vmul.f32 %v6621, 1.442695
    %v6633 = vpow.pop %v6632
    %v6634 = vmul.f32 %v6622, 1.442695
    %v6635 = vpow.pop %v6634
    %v6636 = vmul.f32 %v6623, 1.442695
    %v6637 = vpow.pop %v6636
    %v6638 = vmul.f32 %v6624, 1.442695
    %v6639 = vpow.pop %v6638
    %v6640 = vmul.f32 %v6625, 1.442695
    %v6641 = vpow.pop %v6640
    %v6642 = vmul.f32 %v6609, %v6627
    %v6643 = vmul.f32 %v6610, %v6629
    %v6644 = vmul.f32 %v6611, %v6631
    %v6645 = vmul.f32 %v6612, %v6633
    %v6646 = vmul.f32 %v6613, %v6635
    %v6647 = vmul.f32 %v6614, %v6637
    %v6648 = vmul.f32 %v6615, %v6639
    %v6649 = vmul.f32 %v6616, %v6641
    %v6650 = vsel %vm6617, 1, 0
    %6651 = vset.pattern.permute.xlu0 0
    %6652 = vperm.xlu0 %6651, %v6650
    %v6653 = vpop.permute.xlu0 %6652
    %vm6654 = vcmp.eq.s32.totalorder %v6653, 1
    %v6655 = vsel %vm6654, %v3358, %v6642
    %v6656 = vsel %vm6654, %v3359, %v6643
    %v6657 = vsel %vm6654, %v3360, %v6644
    %v6658 = vsel %vm6654, %v3361, %v6645
    %v6659 = vsel %vm6654, %v3362, %v6646
    %v6660 = vsel %vm6654, %v3363, %v6647
    %v6661 = vsel %vm6654, %v3364, %v6648
    %v6662 = vsel %vm6654, %v3365, %v6649
    %v6663 = vmul.f32 %v5023, %v4852
    %v6664 = vmul.f32 %v5023, %v4853
    %v6665 = vmul.f32 %v5023, %v4854
    %v6666 = vmul.f32 %v5023, %v4855
    %v6667 = vmul.f32 %v5023, %v4856
    %v6668 = vmul.f32 %v5023, %v4857
    %v6669 = vmul.f32 %v5023, %v4858
    %v6670 = vmul.f32 %v5023, %v4859
    %v6671 = vrot.slane %v6663, 4
    %v6672 = vadd.f32 %v6663, %v6671
    %v6673 = vrot.slane %v6672, 2
    %v6674 = vadd.f32 %v6672, %v6673
    %v6675 = vrot.slane %v6674, 1
    %v6676 = vadd.f32 %v6674, %v6675
    %v6677 = vrot.slane %v6664, 4
    %v6678 = vadd.f32 %v6664, %v6677
    %v6679 = vrot.slane %v6678, 2
    %v6680 = vadd.f32 %v6678, %v6679
    %v6681 = vrot.slane %v6680, 1
    %v6682 = vadd.f32 %v6680, %v6681
    %v6683 = vrot.slane %v6665, 4
    %v6684 = vadd.f32 %v6665, %v6683
    %v6685 = vrot.slane %v6684, 2
    %v6686 = vadd.f32 %v6684, %v6685
    %v6687 = vrot.slane %v6686, 1
    %v6688 = vadd.f32 %v6686, %v6687
    %v6689 = vrot.slane %v6666, 4
    %v6690 = vadd.f32 %v6666, %v6689
    %v6691 = vrot.slane %v6690, 2
    %v6692 = vadd.f32 %v6690, %v6691
    %v6693 = vrot.slane %v6692, 1
    %v6694 = vadd.f32 %v6692, %v6693
    %v6695 = vrot.slane %v6667, 4
    %v6696 = vadd.f32 %v6667, %v6695
    %v6697 = vrot.slane %v6696, 2
    %v6698 = vadd.f32 %v6696, %v6697
    %v6699 = vrot.slane %v6698, 1
    %v6700 = vadd.f32 %v6698, %v6699
    %v6701 = vrot.slane %v6668, 4
    %v6702 = vadd.f32 %v6668, %v6701
    %v6703 = vrot.slane %v6702, 2
    %v6704 = vadd.f32 %v6702, %v6703
    %v6705 = vrot.slane %v6704, 1
    %v6706 = vadd.f32 %v6704, %v6705
    %v6707 = vrot.slane %v6669, 4
    %v6708 = vadd.f32 %v6669, %v6707
    %v6709 = vrot.slane %v6708, 2
    %v6710 = vadd.f32 %v6708, %v6709
    %v6711 = vrot.slane %v6710, 1
    %v6712 = vadd.f32 %v6710, %v6711
    %v6713 = vrot.slane %v6670, 4
    %v6714 = vadd.f32 %v6670, %v6713
    %v6715 = vrot.slane %v6714, 2
    %v6716 = vadd.f32 %v6714, %v6715
    %v6717 = vrot.slane %v6716, 1
    %v6718 = vadd.f32 %v6716, %v6717
    %v6727 = vrot.slane %v6682, 7
    %v6728 = vrot.slane %v6688, 6
    %v6729 = vrot.slane %v6694, 5
    %v6730 = vrot.slane %v6700, 4
    %v6731 = vrot.slane %v6706, 3
    %v6732 = vrot.slane %v6712, 2
    %v6733 = vrot.slane %v6718, 1
    %v6734 = vsel %vm2304, %v6676, %v6727
    %v6735 = vsel %vm2306, %v6728, %v6729
    %v6736 = vsel %vm2308, %v6734, %v6735
    %v6737 = vsel %vm2310, %v6730, %v6731
    %v6738 = vsel %vm2312, %v6732, %v6733
    %v6739 = vsel %vm2314, %v6737, %v6738
    %v6740 = vsel %vm2316, %v6736, %v6739
    %v6742 = vsub.f32 %v6440, %v6740
    %v6743 = vmul.f32 %v6655, %v6655
    %v6744 = vmul.f32 %v6656, %v6656
    %v6745 = vmul.f32 %v6657, %v6657
    %v6746 = vmul.f32 %v6658, %v6658
    %v6747 = vmul.f32 %v6659, %v6659
    %v6748 = vmul.f32 %v6660, %v6660
    %v6749 = vmul.f32 %v6661, %v6661
    %v6750 = vmul.f32 %v6662, %v6662
    %v6751 = vrot.slane %v6743, 4
    %v6752 = vadd.f32 %v6743, %v6751
    %v6753 = vrot.slane %v6752, 2
    %v6754 = vadd.f32 %v6752, %v6753
    %v6755 = vrot.slane %v6754, 1
    %v6756 = vadd.f32 %v6754, %v6755
    %v6757 = vrot.slane %v6744, 4
    %v6758 = vadd.f32 %v6744, %v6757
    %v6759 = vrot.slane %v6758, 2
    %v6760 = vadd.f32 %v6758, %v6759
    %v6761 = vrot.slane %v6760, 1
    %v6762 = vadd.f32 %v6760, %v6761
    %v6763 = vrot.slane %v6745, 4
    %v6764 = vadd.f32 %v6745, %v6763
    %v6765 = vrot.slane %v6764, 2
    %v6766 = vadd.f32 %v6764, %v6765
    %v6767 = vrot.slane %v6766, 1
    %v6768 = vadd.f32 %v6766, %v6767
    %v6769 = vrot.slane %v6746, 4
    %v6770 = vadd.f32 %v6746, %v6769
    %v6771 = vrot.slane %v6770, 2
    %v6772 = vadd.f32 %v6770, %v6771
    %v6773 = vrot.slane %v6772, 1
    %v6774 = vadd.f32 %v6772, %v6773
    %v6775 = vrot.slane %v6747, 4
    %v6776 = vadd.f32 %v6747, %v6775
    %v6777 = vrot.slane %v6776, 2
    %v6778 = vadd.f32 %v6776, %v6777
    %v6779 = vrot.slane %v6778, 1
    %v6780 = vadd.f32 %v6778, %v6779
    %v6781 = vrot.slane %v6748, 4
    %v6782 = vadd.f32 %v6748, %v6781
    %v6783 = vrot.slane %v6782, 2
    %v6784 = vadd.f32 %v6782, %v6783
    %v6785 = vrot.slane %v6784, 1
    %v6786 = vadd.f32 %v6784, %v6785
    %v6787 = vrot.slane %v6749, 4
    %v6788 = vadd.f32 %v6749, %v6787
    %v6789 = vrot.slane %v6788, 2
    %v6790 = vadd.f32 %v6788, %v6789
    %v6791 = vrot.slane %v6790, 1
    %v6792 = vadd.f32 %v6790, %v6791
    %v6793 = vrot.slane %v6750, 4
    %v6794 = vadd.f32 %v6750, %v6793
    %v6795 = vrot.slane %v6794, 2
    %v6796 = vadd.f32 %v6794, %v6795
    %v6797 = vrot.slane %v6796, 1
    %v6798 = vadd.f32 %v6796, %v6797
    %v6799 = vmax.f32 %v6756, 1e-06
    %v6800 = vmax.f32 %v6762, 1e-06
    %v6801 = vmax.f32 %v6768, 1e-06
    %v6802 = vmax.f32 %v6774, 1e-06
    %v6803 = vmax.f32 %v6780, 1e-06
    %v6804 = vmax.f32 %v6786, 1e-06
    %v6805 = vmax.f32 %v6792, 1e-06
    %v6806 = vmax.f32 %v6798, 1e-06
    %v6807 = vrsqrt.pop %v6799
    %v6808 = vmul.f32 %v6807, %v6799
    %v6809 = vmul.f32 %v6808, %v6807
    %v6810 = vmul.f32 0.5, %v6809
    %v6811 = vsub.f32 1.5, %v6810
    %v6812 = vmul.f32 %v6807, %v6811
    %v6813 = vmul.f32 %v6799, %v6812
    %vm6814 = vcmp.eq.f32.partialorder %v6799, inf
    %v6815 = vsel %vm6814, %v6799, %v6813
    %vm6816 = vcmp.eq.f32.partialorder %v6799, 0.0
    %v6817 = vand.u32 %v6799, 2147483648
    %v6818 = vsel %vm6816, %v6817, %v6815
    %v6819 = vrsqrt.pop %v6800
    %v6820 = vmul.f32 %v6819, %v6800
    %v6821 = vmul.f32 %v6820, %v6819
    %v6822 = vmul.f32 0.5, %v6821
    %v6823 = vsub.f32 1.5, %v6822
    %v6824 = vmul.f32 %v6819, %v6823
    %v6825 = vmul.f32 %v6800, %v6824
    %vm6826 = vcmp.eq.f32.partialorder %v6800, inf
    %v6827 = vsel %vm6826, %v6800, %v6825
    %vm6828 = vcmp.eq.f32.partialorder %v6800, 0.0
    %v6829 = vand.u32 %v6800, 2147483648
    %v6830 = vsel %vm6828, %v6829, %v6827
    %v6831 = vrsqrt.pop %v6801
    %v6832 = vmul.f32 %v6831, %v6801
    %v6833 = vmul.f32 %v6832, %v6831
    %v6834 = vmul.f32 0.5, %v6833
    %v6835 = vsub.f32 1.5, %v6834
    %v6836 = vmul.f32 %v6831, %v6835
    %v6837 = vmul.f32 %v6801, %v6836
    %vm6838 = vcmp.eq.f32.partialorder %v6801, inf
    %v6839 = vsel %vm6838, %v6801, %v6837
    %vm6840 = vcmp.eq.f32.partialorder %v6801, 0.0
    %v6841 = vand.u32 %v6801, 2147483648
    %v6842 = vsel %vm6840, %v6841, %v6839
    %v6843 = vrsqrt.pop %v6802
    %v6844 = vmul.f32 %v6843, %v6802
    %v6845 = vmul.f32 %v6844, %v6843
    %v6846 = vmul.f32 0.5, %v6845
    %v6847 = vsub.f32 1.5, %v6846
    %v6848 = vmul.f32 %v6843, %v6847
    %v6849 = vmul.f32 %v6802, %v6848
    %vm6850 = vcmp.eq.f32.partialorder %v6802, inf
    %v6851 = vsel %vm6850, %v6802, %v6849
    %vm6852 = vcmp.eq.f32.partialorder %v6802, 0.0
    %v6853 = vand.u32 %v6802, 2147483648
    %v6854 = vsel %vm6852, %v6853, %v6851
    %v6855 = vrsqrt.pop %v6803
    %v6856 = vmul.f32 %v6855, %v6803
    %v6857 = vmul.f32 %v6856, %v6855
    %v6858 = vmul.f32 0.5, %v6857
    %v6859 = vsub.f32 1.5, %v6858
    %v6860 = vmul.f32 %v6855, %v6859
    %v6861 = vmul.f32 %v6803, %v6860
    %vm6862 = vcmp.eq.f32.partialorder %v6803, inf
    %v6863 = vsel %vm6862, %v6803, %v6861
    %vm6864 = vcmp.eq.f32.partialorder %v6803, 0.0
    %v6865 = vand.u32 %v6803, 2147483648
    %v6866 = vsel %vm6864, %v6865, %v6863
    %v6867 = vrsqrt.pop %v6804
    %v6868 = vmul.f32 %v6867, %v6804
    %v6869 = vmul.f32 %v6868, %v6867
    %v6870 = vmul.f32 0.5, %v6869
    %v6871 = vsub.f32 1.5, %v6870
    %v6872 = vmul.f32 %v6867, %v6871
    %v6873 = vmul.f32 %v6804, %v6872
    %vm6874 = vcmp.eq.f32.partialorder %v6804, inf
    %v6875 = vsel %vm6874, %v6804, %v6873
    %vm6876 = vcmp.eq.f32.partialorder %v6804, 0.0
    %v6877 = vand.u32 %v6804, 2147483648
    %v6878 = vsel %vm6876, %v6877, %v6875
    %v6879 = vrsqrt.pop %v6805
    %v6880 = vmul.f32 %v6879, %v6805
    %v6881 = vmul.f32 %v6880, %v6879
    %v6882 = vmul.f32 0.5, %v6881
    %v6883 = vsub.f32 1.5, %v6882
    %v6884 = vmul.f32 %v6879, %v6883
    %v6885 = vmul.f32 %v6805, %v6884
    %vm6886 = vcmp.eq.f32.partialorder %v6805, inf
    %v6887 = vsel %vm6886, %v6805, %v6885
    %vm6888 = vcmp.eq.f32.partialorder %v6805, 0.0
    %v6889 = vand.u32 %v6805, 2147483648
    %v6890 = vsel %vm6888, %v6889, %v6887
    %v6891 = vrsqrt.pop %v6806
    %v6892 = vmul.f32 %v6891, %v6806
    %v6893 = vmul.f32 %v6892, %v6891
    %v6894 = vmul.f32 0.5, %v6893
    %v6895 = vsub.f32 1.5, %v6894
    %v6896 = vmul.f32 %v6891, %v6895
    %v6897 = vmul.f32 %v6806, %v6896
    %vm6898 = vcmp.eq.f32.partialorder %v6806, inf
    %v6899 = vsel %vm6898, %v6806, %v6897
    %vm6900 = vcmp.eq.f32.partialorder %v6806, 0.0
    %v6901 = vand.u32 %v6806, 2147483648
    %v6902 = vsel %vm6900, %v6901, %v6899
    %v6903 = vmax.f32 %v6818, 1e-06
    %v6904 = vmax.f32 %v6830, 1e-06
    %v6905 = vmax.f32 %v6842, 1e-06
    %v6906 = vmax.f32 %v6854, 1e-06
    %v6907 = vmax.f32 %v6866, 1e-06
    %v6908 = vmax.f32 %v6878, 1e-06
    %v6909 = vmax.f32 %v6890, 1e-06
    %v6910 = vmax.f32 %v6902, 1e-06
    %v6911 = vmul.f32 %v6903, 1.442695
    %v6912 = vpow.pop %v6911
    %v6913 = vmul.f32 %v6904, 1.442695
    %v6914 = vpow.pop %v6913
    %v6915 = vmul.f32 %v6905, 1.442695
    %v6916 = vpow.pop %v6915
    %v6917 = vmul.f32 %v6906, 1.442695
    %v6918 = vpow.pop %v6917
    %v6919 = vmul.f32 %v6907, 1.442695
    %v6920 = vpow.pop %v6919
    %v6921 = vmul.f32 %v6908, 1.442695
    %v6922 = vpow.pop %v6921
    %v6923 = vmul.f32 %v6909, 1.442695
    %v6924 = vpow.pop %v6923
    %v6925 = vmul.f32 %v6910, 1.442695
    %v6926 = vpow.pop %v6925
    %v6927 = vsub.f32 0.0, %v6903
    %v6928 = vsub.f32 0.0, %v6904
    %v6929 = vsub.f32 0.0, %v6905
    %v6930 = vsub.f32 0.0, %v6906
    %v6931 = vsub.f32 0.0, %v6907
    %v6932 = vsub.f32 0.0, %v6908
    %v6933 = vsub.f32 0.0, %v6909
    %v6934 = vsub.f32 0.0, %v6910
    %v6935 = vmul.f32 %v6927, 1.442695
    %v6936 = vpow.pop %v6935
    %v6937 = vmul.f32 %v6928, 1.442695
    %v6938 = vpow.pop %v6937
    %v6939 = vmul.f32 %v6929, 1.442695
    %v6940 = vpow.pop %v6939
    %v6941 = vmul.f32 %v6930, 1.442695
    %v6942 = vpow.pop %v6941
    %v6943 = vmul.f32 %v6931, 1.442695
    %v6944 = vpow.pop %v6943
    %v6945 = vmul.f32 %v6932, 1.442695
    %v6946 = vpow.pop %v6945
    %v6947 = vmul.f32 %v6933, 1.442695
    %v6948 = vpow.pop %v6947
    %v6949 = vmul.f32 %v6934, 1.442695
    %v6950 = vpow.pop %v6949
    %v6951 = vadd.f32 %v6912, %v6936
    %v6952 = vadd.f32 %v6914, %v6938
    %v6953 = vadd.f32 %v6916, %v6940
    %v6954 = vadd.f32 %v6918, %v6942
    %v6955 = vadd.f32 %v6920, %v6944
    %v6956 = vadd.f32 %v6922, %v6946
    %v6957 = vadd.f32 %v6924, %v6948
    %v6958 = vadd.f32 %v6926, %v6950
    %v6959 = vmul.f32 %v6951, 0.5
    %v6960 = vmul.f32 %v6952, 0.5
    %v6961 = vmul.f32 %v6953, 0.5
    %v6962 = vmul.f32 %v6954, 0.5
    %v6963 = vmul.f32 %v6955, 0.5
    %v6964 = vmul.f32 %v6956, 0.5
    %v6965 = vmul.f32 %v6957, 0.5
    %v6966 = vmul.f32 %v6958, 0.5
    %v6967 = vsub.f32 %v6912, %v6936
    %v6968 = vsub.f32 %v6914, %v6938
    %v6969 = vsub.f32 %v6916, %v6940
    %v6970 = vsub.f32 %v6918, %v6942
    %v6971 = vsub.f32 %v6920, %v6944
    %v6972 = vsub.f32 %v6922, %v6946
    %v6973 = vsub.f32 %v6924, %v6948
    %v6974 = vsub.f32 %v6926, %v6950
    %v6975 = vmul.f32 %v6967, 0.5
    %v6976 = vmul.f32 %v6968, 0.5
    %v6977 = vmul.f32 %v6969, 0.5
    %v6978 = vmul.f32 %v6970, 0.5
    %v6979 = vmul.f32 %v6971, 0.5
    %v6980 = vmul.f32 %v6972, 0.5
    %v6981 = vmul.f32 %v6973, 0.5
    %v6982 = vmul.f32 %v6974, 0.5
    %v6983 = vrcp.pop %v6903
    %v6984 = vmul.f32 %v6903, %v6983
    %v6985 = vsub.f32 1.0, %v6984
    %v6986 = vmul.f32 %v6983, %v6985
    %v6987 = vadd.f32 %v6983, %v6986
    %vm6988 = vweird.f32 %v6903
    %vm6989 = vweird.f32 %v6983
    %vm6990 = vmor %vm6988, %vm6989
    %v6991 = vsel %vm6990, %v6983, %v6987
    %v6992 = vand.u32 2147483647, %v6903
    %vm6993 = vcmp.eq.f32.partialorder %v6992, 8.507059e+37
    %v6994 = vand.u32 %v6903, 2147483648
    %v6995 = vor.u32 1.1754944e-38, %v6994
    %v6996 = vsel %vm6993, %v6995, %v6991
    %v6997 = vmul.f32 %v6975, %v6996
    %v6998 = vrcp.pop %v6904
    %v6999 = vmul.f32 %v6904, %v6998
    %v7000 = vsub.f32 1.0, %v6999
    %v7001 = vmul.f32 %v6998, %v7000
    %v7002 = vadd.f32 %v6998, %v7001
    %vm7003 = vweird.f32 %v6904
    %vm7004 = vweird.f32 %v6998
    %vm7005 = vmor %vm7003, %vm7004
    %v7006 = vsel %vm7005, %v6998, %v7002
    %v7007 = vand.u32 2147483647, %v6904
    %vm7008 = vcmp.eq.f32.partialorder %v7007, 8.507059e+37
    %v7009 = vand.u32 %v6904, 2147483648
    %v7010 = vor.u32 1.1754944e-38, %v7009
    %v7011 = vsel %vm7008, %v7010, %v7006
    %v7012 = vmul.f32 %v6976, %v7011
    %v7013 = vrcp.pop %v6905
    %v7014 = vmul.f32 %v6905, %v7013
    %v7015 = vsub.f32 1.0, %v7014
    %v7016 = vmul.f32 %v7013, %v7015
    %v7017 = vadd.f32 %v7013, %v7016
    %vm7018 = vweird.f32 %v6905
    %vm7019 = vweird.f32 %v7013
    %vm7020 = vmor %vm7018, %vm7019
    %v7021 = vsel %vm7020, %v7013, %v7017
    %v7022 = vand.u32 2147483647, %v6905
    %vm7023 = vcmp.eq.f32.partialorder %v7022, 8.507059e+37
    %v7024 = vand.u32 %v6905, 2147483648
    %v7025 = vor.u32 1.1754944e-38, %v7024
    %v7026 = vsel %vm7023, %v7025, %v7021
    %v7027 = vmul.f32 %v6977, %v7026
    %v7028 = vrcp.pop %v6906
    %v7029 = vmul.f32 %v6906, %v7028
    %v7030 = vsub.f32 1.0, %v7029
    %v7031 = vmul.f32 %v7028, %v7030
    %v7032 = vadd.f32 %v7028, %v7031
    %vm7033 = vweird.f32 %v6906
    %vm7034 = vweird.f32 %v7028
    %vm7035 = vmor %vm7033, %vm7034
    %v7036 = vsel %vm7035, %v7028, %v7032
    %v7037 = vand.u32 2147483647, %v6906
    %vm7038 = vcmp.eq.f32.partialorder %v7037, 8.507059e+37
    %v7039 = vand.u32 %v6906, 2147483648
    %v7040 = vor.u32 1.1754944e-38, %v7039
    %v7041 = vsel %vm7038, %v7040, %v7036
    %v7042 = vmul.f32 %v6978, %v7041
    %v7043 = vrcp.pop %v6907
    %v7044 = vmul.f32 %v6907, %v7043
    %v7045 = vsub.f32 1.0, %v7044
    %v7046 = vmul.f32 %v7043, %v7045
    %v7047 = vadd.f32 %v7043, %v7046
    %vm7048 = vweird.f32 %v6907
    %vm7049 = vweird.f32 %v7043
    %vm7050 = vmor %vm7048, %vm7049
    %v7051 = vsel %vm7050, %v7043, %v7047
    %v7052 = vand.u32 2147483647, %v6907
    %vm7053 = vcmp.eq.f32.partialorder %v7052, 8.507059e+37
    %v7054 = vand.u32 %v6907, 2147483648
    %v7055 = vor.u32 1.1754944e-38, %v7054
    %v7056 = vsel %vm7053, %v7055, %v7051
    %v7057 = vmul.f32 %v6979, %v7056
    %v7058 = vrcp.pop %v6908
    %v7059 = vmul.f32 %v6908, %v7058
    %v7060 = vsub.f32 1.0, %v7059
    %v7061 = vmul.f32 %v7058, %v7060
    %v7062 = vadd.f32 %v7058, %v7061
    %vm7063 = vweird.f32 %v6908
    %vm7064 = vweird.f32 %v7058
    %vm7065 = vmor %vm7063, %vm7064
    %v7066 = vsel %vm7065, %v7058, %v7062
    %v7067 = vand.u32 2147483647, %v6908
    %vm7068 = vcmp.eq.f32.partialorder %v7067, 8.507059e+37
    %v7069 = vand.u32 %v6908, 2147483648
    %v7070 = vor.u32 1.1754944e-38, %v7069
    %v7071 = vsel %vm7068, %v7070, %v7066
    %v7072 = vmul.f32 %v6980, %v7071
    %v7073 = vrcp.pop %v6909
    %v7074 = vmul.f32 %v6909, %v7073
    %v7075 = vsub.f32 1.0, %v7074
    %v7076 = vmul.f32 %v7073, %v7075
    %v7077 = vadd.f32 %v7073, %v7076
    %vm7078 = vweird.f32 %v6909
    %vm7079 = vweird.f32 %v7073
    %vm7080 = vmor %vm7078, %vm7079
    %v7081 = vsel %vm7080, %v7073, %v7077
    %v7082 = vand.u32 2147483647, %v6909
    %vm7083 = vcmp.eq.f32.partialorder %v7082, 8.507059e+37
    %v7084 = vand.u32 %v6909, 2147483648
    %v7085 = vor.u32 1.1754944e-38, %v7084
    %v7086 = vsel %vm7083, %v7085, %v7081
    %v7087 = vmul.f32 %v6981, %v7086
    %v7088 = vrcp.pop %v6910
    %v7089 = vmul.f32 %v6910, %v7088
    %v7090 = vsub.f32 1.0, %v7089
    %v7091 = vmul.f32 %v7088, %v7090
    %v7092 = vadd.f32 %v7088, %v7091
    %vm7093 = vweird.f32 %v6910
    %vm7094 = vweird.f32 %v7088
    %vm7095 = vmor %vm7093, %vm7094
    %v7096 = vsel %vm7095, %v7088, %v7092
    %v7097 = vand.u32 2147483647, %v6910
    %vm7098 = vcmp.eq.f32.partialorder %v7097, 8.507059e+37
    %v7099 = vand.u32 %v6910, 2147483648
    %v7100 = vor.u32 1.1754944e-38, %v7099
    %v7101 = vsel %vm7098, %v7100, %v7096
    %v7102 = vmul.f32 %v6982, %v7101
    %v7103 = vsub.f32 0.0, %v6936
    %v7104 = vsub.f32 0.0, %v6938
    %v7105 = vsub.f32 0.0, %v6940
    %v7106 = vsub.f32 0.0, %v6942
    %v7107 = vsub.f32 0.0, %v6944
    %v7108 = vsub.f32 0.0, %v6946
    %v7109 = vsub.f32 0.0, %v6948
    %v7110 = vsub.f32 0.0, %v6950
    %v7111 = vmul.f32 %v7103, %v6936
    %v7112 = vmul.f32 %v7104, %v6938
    %v7113 = vmul.f32 %v7105, %v6940
    %v7114 = vmul.f32 %v7106, %v6942
    %v7115 = vmul.f32 %v7107, %v6944
    %v7116 = vmul.f32 %v7108, %v6946
    %v7117 = vmul.f32 %v7109, %v6948
    %v7118 = vmul.f32 %v7110, %v6950
    %v7119 = vadd.f32 %v7111, 1.0
    %v7120 = vlog2.pop %v7119
    %v7121 = vmul.f32 %v7120, 0.6931472
    %v7122 = vmul.f32 -0.5, %v7111
    %v7123 = vadd.f32 %v7122, 1.0
    %v7124 = vmul.f32 %v7123, %v7111
    %v7125 = vand.u32 2147483647, %v7111
    %vm7126 = vcmp.lt.f32.partialorder %v7125, 0.0004427343
    %v7127 = vsel %vm7126, %v7124, %v7121
    %v7128 = vadd.f32 %v7112, 1.0
    %v7129 = vlog2.pop %v7128
    %v7130 = vmul.f32 %v7129, 0.6931472
    %v7131 = vmul.f32 -0.5, %v7112
    %v7132 = vadd.f32 %v7131, 1.0
    %v7133 = vmul.f32 %v7132, %v7112
    %v7134 = vand.u32 2147483647, %v7112
    %vm7135 = vcmp.lt.f32.partialorder %v7134, 0.0004427343
    %v7136 = vsel %vm7135, %v7133, %v7130
    %v7137 = vadd.f32 %v7113, 1.0
    %v7138 = vlog2.pop %v7137
    %v7139 = vmul.f32 %v7138, 0.6931472
    %v7140 = vmul.f32 -0.5, %v7113
    %v7141 = vadd.f32 %v7140, 1.0
    %v7142 = vmul.f32 %v7141, %v7113
    %v7143 = vand.u32 2147483647, %v7113
    %vm7144 = vcmp.lt.f32.partialorder %v7143, 0.0004427343
    %v7145 = vsel %vm7144, %v7142, %v7139
    %v7146 = vadd.f32 %v7114, 1.0
    %v7147 = vlog2.pop %v7146
    %v7148 = vmul.f32 %v7147, 0.6931472
    %v7149 = vmul.f32 -0.5, %v7114
    %v7150 = vadd.f32 %v7149, 1.0
    %v7151 = vmul.f32 %v7150, %v7114
    %v7152 = vand.u32 2147483647, %v7114
    %vm7153 = vcmp.lt.f32.partialorder %v7152, 0.0004427343
    %v7154 = vsel %vm7153, %v7151, %v7148
    %v7155 = vadd.f32 %v7115, 1.0
    %v7156 = vlog2.pop %v7155
    %v7157 = vmul.f32 %v7156, 0.6931472
    %v7158 = vmul.f32 -0.5, %v7115
    %v7159 = vadd.f32 %v7158, 1.0
    %v7160 = vmul.f32 %v7159, %v7115
    %v7161 = vand.u32 2147483647, %v7115
    %vm7162 = vcmp.lt.f32.partialorder %v7161, 0.0004427343
    %v7163 = vsel %vm7162, %v7160, %v7157
    %v7164 = vadd.f32 %v7116, 1.0
    %v7165 = vlog2.pop %v7164
    %v7166 = vmul.f32 %v7165, 0.6931472
    %v7167 = vmul.f32 -0.5, %v7116
    %v7168 = vadd.f32 %v7167, 1.0
    %v7169 = vmul.f32 %v7168, %v7116
    %v7170 = vand.u32 2147483647, %v7116
    %vm7171 = vcmp.lt.f32.partialorder %v7170, 0.0004427343
    %v7172 = vsel %vm7171, %v7169, %v7166
    %v7173 = vadd.f32 %v7117, 1.0
    %v7174 = vlog2.pop %v7173
    %v7175 = vmul.f32 %v7174, 0.6931472
    %v7176 = vmul.f32 -0.5, %v7117
    %v7177 = vadd.f32 %v7176, 1.0
    %v7178 = vmul.f32 %v7177, %v7117
    %v7179 = vand.u32 2147483647, %v7117
    %vm7180 = vcmp.lt.f32.partialorder %v7179, 0.0004427343
    %v7181 = vsel %vm7180, %v7178, %v7175
    %v7182 = vadd.f32 %v7118, 1.0
    %v7183 = vlog2.pop %v7182
    %v7184 = vmul.f32 %v7183, 0.6931472
    %v7185 = vmul.f32 -0.5, %v7118
    %v7186 = vadd.f32 %v7185, 1.0
    %v7187 = vmul.f32 %v7186, %v7118
    %v7188 = vand.u32 2147483647, %v7118
    %vm7189 = vcmp.lt.f32.partialorder %v7188, 0.0004427343
    %v7190 = vsel %vm7189, %v7187, %v7184
    %v7191 = vadd.f32 %v6903, %v7127
    %v7192 = vadd.f32 %v6904, %v7136
    %v7193 = vadd.f32 %v6905, %v7145
    %v7194 = vadd.f32 %v6906, %v7154
    %v7195 = vadd.f32 %v6907, %v7163
    %v7196 = vadd.f32 %v6908, %v7172
    %v7197 = vadd.f32 %v6909, %v7181
    %v7198 = vadd.f32 %v6910, %v7190
    %v7199 = vmul.f32 %v6903, 2.0
    %v7200 = vmul.f32 %v6904, 2.0
    %v7201 = vmul.f32 %v6905, 2.0
    %v7202 = vmul.f32 %v6906, 2.0
    %v7203 = vmul.f32 %v6907, 2.0
    %v7204 = vmul.f32 %v6908, 2.0
    %v7205 = vmul.f32 %v6909, 2.0
    %v7206 = vmul.f32 %v6910, 2.0
    %v7207 = vlog2.pop %v7199
    %v7208 = vmul.f32 %v7207, 0.6931472
    %v7209 = vlog2.pop %v7200
    %v7210 = vmul.f32 %v7209, 0.6931472
    %v7211 = vlog2.pop %v7201
    %v7212 = vmul.f32 %v7211, 0.6931472
    %v7213 = vlog2.pop %v7202
    %v7214 = vmul.f32 %v7213, 0.6931472
    %v7215 = vlog2.pop %v7203
    %v7216 = vmul.f32 %v7215, 0.6931472
    %v7217 = vlog2.pop %v7204
    %v7218 = vmul.f32 %v7217, 0.6931472
    %v7219 = vlog2.pop %v7205
    %v7220 = vmul.f32 %v7219, 0.6931472
    %v7221 = vlog2.pop %v7206
    %v7222 = vmul.f32 %v7221, 0.6931472
    %v7223 = vsub.f32 %v7191, %v7208
    %v7224 = vsub.f32 %v7192, %v7210
    %v7225 = vsub.f32 %v7193, %v7212
    %v7226 = vsub.f32 %v7194, %v7214
    %v7227 = vsub.f32 %v7195, %v7216
    %v7228 = vsub.f32 %v7196, %v7218
    %v7229 = vsub.f32 %v7197, %v7220
    %v7230 = vsub.f32 %v7198, %v7222
    %v7231 = vmax.f32 %v7223, 0.0
    %v7232 = vmax.f32 %v7224, 0.0
    %v7233 = vmax.f32 %v7225, 0.0
    %v7234 = vmax.f32 %v7226, 0.0
    %v7235 = vmax.f32 %v7227, 0.0
    %v7236 = vmax.f32 %v7228, 0.0
    %v7237 = vmax.f32 %v7229, 0.0
    %v7238 = vmax.f32 %v7230, 0.0
    %v7247 = vrot.slane %v6960, 7
    %v7248 = vrot.slane %v6961, 6
    %v7249 = vrot.slane %v6962, 5
    %v7250 = vrot.slane %v6963, 4
    %v7251 = vrot.slane %v6964, 3
    %v7252 = vrot.slane %v6965, 2
    %v7253 = vrot.slane %v6966, 1
    %v7254 = vsel %vm2304, %v6959, %v7247
    %v7255 = vsel %vm2306, %v7248, %v7249
    %v7256 = vsel %vm2308, %v7254, %v7255
    %v7257 = vsel %vm2310, %v7250, %v7251
    %v7258 = vsel %vm2312, %v7252, %v7253
    %v7259 = vsel %vm2314, %v7257, %v7258
    %v7260 = vsel %vm2316, %v7256, %v7259
    %7262 = vst [vmem:[#allocation2] sm:$0xff] %v7260
    %v7263 = vmul.f32 %v6997, %v6655
    %v7264 = vmul.f32 %v7012, %v6656
    %v7265 = vmul.f32 %v7027, %v6657
    %v7266 = vmul.f32 %v7042, %v6658
    %v7267 = vmul.f32 %v7057, %v6659
    %v7268 = vmul.f32 %v7072, %v6660
    %v7269 = vmul.f32 %v7087, %v6661
    %v7270 = vmul.f32 %v7102, %v6662
    %7271 = vst [vmem:[#allocation4] sm:$0xff] %v7263
    %7272 = vst [vmem:[#allocation4 + $0x8] sm:$0xff] %v7264
    %7273 = vst [vmem:[#allocation4 + $0x10] sm:$0xff] %v7265
    %7274 = vst [vmem:[#allocation4 + $0x18] sm:$0xff] %v7266
    %7275 = vst [vmem:[#allocation4 + $0x20] sm:$0xff] %v7267
    %7276 = vst [vmem:[#allocation4 + $0x28] sm:$0xff] %v7268
    %7277 = vst [vmem:[#allocation4 + $0x30] sm:$0xff] %v7269
    %7278 = vst [vmem:[#allocation4 + $0x38] sm:$0xff] %v7270
    %v7279 = vmul.f32 %v7231, 7.0
    %v7280 = vmul.f32 %v7232, 7.0
    %v7281 = vmul.f32 %v7233, 7.0
    %v7282 = vmul.f32 %v7234, 7.0
    %v7283 = vmul.f32 %v7235, 7.0
    %v7284 = vmul.f32 %v7236, 7.0
    %v7285 = vmul.f32 %v7237, 7.0
    %v7286 = vmul.f32 %v7238, 7.0
    %v7295 = vrot.slane %v7280, 7
    %v7296 = vrot.slane %v7281, 6
    %v7297 = vrot.slane %v7282, 5
    %v7298 = vrot.slane %v7283, 4
    %v7299 = vrot.slane %v7284, 3
    %v7300 = vrot.slane %v7285, 2
    %v7301 = vrot.slane %v7286, 1
    %v7302 = vsel %vm2304, %v7279, %v7295
    %v7303 = vsel %vm2306, %v7296, %v7297
    %v7304 = vsel %vm2308, %v7302, %v7303
    %v7305 = vsel %vm2310, %v7298, %v7299
    %v7306 = vsel %vm2312, %v7300, %v7301
    %v7307 = vsel %vm2314, %v7305, %v7306
    %v7308 = vsel %vm2316, %v7304, %v7307
    %v7310 = vsub.f32 %v6742, %v7308
    %7311 = vst [vmem:[#allocation6] sm:$0xff] %v7310
    // Predicated region
    $region38: #{tpu_custom_call.1} parent=1 // pred_check
      _
    $region39: #{tpu_custom_call.1} parent=1 // pred_check_branch
      %7313 = sbr.rel (0) target = $region41
    $region40: #{tpu_custom_call.1} parent=1 // pred_region
      %7315 = vsyncadd [#allocation3], 0
      %s7317 = sshll.u32 [#allocation2], 4
      %s7318 = int_to_ptr.vmem [resolvable:$true] %s7317
      %s7319 = sshll.u32 %s9, 4
      %s7320 = int_to_ptr.hbm [resolvable:$true] %s7319
      %7322 = dma.vmem_to_hbm [thread:$0]  %s7318, 128, %s7320, [#allocation3]
    $region41: #{tpu_custom_call.1} parent=1 // pred_fallthru
      _
    // Predicated region
    $region42: #{tpu_custom_call.1} parent=1 // pred_check
      _
    $region43: #{tpu_custom_call.1} parent=1 // pred_check_branch
      %7324 = sbr.rel (0) target = $region45
    $region44: #{tpu_custom_call.1} parent=1 // pred_region
      %7326 = vsyncadd [#allocation5], 0
      %s7328 = sshll.u32 [#allocation4], 4
      %s7329 = int_to_ptr.vmem [resolvable:$true] %s7328
      %s7330 = sshll.u32 %s10, 4
      %s7331 = int_to_ptr.hbm [resolvable:$true] %s7330
      %7333 = dma.vmem_to_hbm [thread:$0]  %s7329, 1024, %s7331, [#allocation5]
    $region45: #{tpu_custom_call.1} parent=1 // pred_fallthru
      _
    // Predicated region
    $region46: #{tpu_custom_call.1} parent=1 // pred_check
      _
    $region47: #{tpu_custom_call.1} parent=1 // pred_check_branch
      %7335 = sbr.rel (0) target = $region49
    $region48: #{tpu_custom_call.1} parent=1 // pred_region
      %7337 = vsyncadd [#allocation5], 0
      %s7339 = sshll.u32 [#allocation6], 4
      %s7340 = int_to_ptr.vmem [resolvable:$true] %s7339
      %s7341 = sshll.u32 %s11, 4
      %s7342 = int_to_ptr.hbm [resolvable:$true] %s7341
      %7344 = dma.vmem_to_hbm [thread:$0]  %s7340, 128, %s7342, [#allocation5]
    $region49: #{tpu_custom_call.1} parent=1 // pred_fallthru
      _
    // Predicated region
    $region50: #{tpu_custom_call.1} parent=1 // pred_check
      _
    $region51: #{tpu_custom_call.1} parent=1 // pred_check_branch
      %7346 = sbr.rel (0) target = $region53
    $region52: #{tpu_custom_call.1} parent=1 // pred_region
      %7348 = dma.done [#allocation3], 128
    $region53: #{tpu_custom_call.1} parent=1 // pred_fallthru
      _
    // Predicated region
    $region54: #{tpu_custom_call.1} parent=1 // pred_check
      _
    $region55: #{tpu_custom_call.1} parent=1 // pred_check_branch
      %7350 = sbr.rel (0) target = $region57
    $region56: #{tpu_custom_call.1} parent=1 // pred_region
      %7352 = dma.done [#allocation5], 1024
    $region57: #{tpu_custom_call.1} parent=1 // pred_fallthru
      _
    // Predicated region
    $region58: #{tpu_custom_call.1} parent=1 // pred_check
      _
    $region59: #{tpu_custom_call.1} parent=1 // pred_check_branch
      %7354 = sbr.rel (0) target = $region61
    $region60: #{tpu_custom_call.1} parent=1 // pred_region
      %7356 = dma.done [#allocation5], 128
    $region61: #{tpu_custom_call.1} parent=1 // pred_fallthru
      _
    %7357 = vsyncpa [#allocation3], 1
    %7358 = vsyncpa [#allocation5], 1

</llo_original>
